<compile_context>
chip_gen: v7x
topology: tpu7x:2x2x1
jax: 0.10.0
libtpu: 0.0.40
codegen_flags: <defaults>
</compile_context>

<pallas_src>
import functools
import math

import numpy as np
import jax
import jax.numpy as jnp
from jax import lax
from jax.experimental import pallas as pl
from jax.experimental.pallas import tpu as pltpu

_EPS = 1e-5            # nn.InstanceNorm2d default eps
_SLOPE = 0.2           # nn.LeakyReLU(0.2)
_INV_SQRT2 = 1.0 / math.sqrt(2.0)


# ----------------------------------------------------------------------------
# Fused Pallas kernel
# ----------------------------------------------------------------------------
def _conv3x3_flat(src_ref, w_ref, Wp, M):
    """3x3 conv as 9 shifted flat matmuls; each LHS is a contiguous row slice."""
    acc = None
    for a in range(3):              # kernel row
        for b in range(3):          # kernel col
            off = (a + 1) * Wp + (b - 1)
            d = jnp.dot(src_ref[pl.ds(off, M), :], w_ref[a, b],
                        preferred_element_type=jnp.float32)
            acc = d if acc is None else acc + d      # first tap initializes
    return acc


def _fused_resblk_kernel(xq_ref, mask_ref, g1_ref, be1_ref, w1_ref, b1_ref,
                         g2_ref, be2_ref, w2_ref, b2_ref, out_ref, s_ref,
                         *, H, W):
    """One image per grid step; every intermediate stays in VMEM.

    xq_ref  : ((H+4)*(W+2), C) f32   zero-padded image, rows flattened
    mask_ref: (H*(W+2), 1)     f32   1.0 on valid columns, 0.0 on the pad cols
    g*/be*  : (1, C)           f32   InstanceNorm affine weight / bias
    w*_ref  : (3, 3, C, C)           HWIO conv weights (compute dtype)
    b*_ref  : (1, C)           f32   conv biases
    out_ref : (H, W, C)        f32   block output
    s_ref   : ((H+4)*(W+2), C)       VMEM scratch: padded conv-input staging
    """
    Wp = W + 2
    M = H * Wp
    inv_hw = 1.0 / float(H * W)
    cdt = s_ref.dtype

    x = xq_ref[pl.ds(2 * Wp, M), :]          # (M, C) f32; pad columns are exact 0
    mask = mask_ref[...]                      # (M, 1)

    # ---- IN1 (affine) + LeakyReLU(0.2); stats over the H*W valid positions ----
    mean1 = jnp.sum(x, axis=0, keepdims=True) * inv_hw      # pads contribute 0
    d1 = (x - mean1) * mask
    var1 = jnp.sum(d1 * d1, axis=0, keepdims=True) * inv_hw
    h = d1 * lax.rsqrt(var1 + _EPS) * g1_ref[...] + be1_ref[...]
    h = jnp.where(h >= 0.0, h, _SLOPE * h) * mask            # re-zero pad columns

    # Stage into the padded conv scratch: zero only the 2-row top/bottom halos,
    # the interior is written exactly once per conv.
    zero_halo = jnp.zeros((2 * Wp, s_ref.shape[1]), dtype=cdt)
    s_ref[pl.ds(0, 2 * Wp), :] = zero_halo
    s_ref[pl.ds((H + 2) * Wp, 2 * Wp), :] = zero_halo
    s_ref[pl.ds(2 * Wp, M), :] = h.astype(cdt)

    # ---- conv1 (3x3, dim -> dim) + bias ----
    y1 = _conv3x3_flat(s_ref, w1_ref, Wp, M) + b1_ref[...]

    # ---- IN2 (affine) + LeakyReLU(0.2); mask the garbage pad columns ----
    y1m = y1 * mask
    mean2 = jnp.sum(y1m, axis=0, keepdims=True) * inv_hw
    d2 = (y1 - mean2) * mask
    var2 = jnp.sum(d2 * d2, axis=0, keepdims=True) * inv_hw
    h2 = d2 * lax.rsqrt(var2 + _EPS) * g2_ref[...] + be2_ref[...]
    h2 = jnp.where(h2 >= 0.0, h2, _SLOPE * h2) * mask
    s_ref[pl.ds(2 * Wp, M), :] = h2.astype(cdt)               # halos still zero

    # ---- conv2 (3x3, dim -> dim) + bias ----
    y2 = _conv3x3_flat(s_ref, w2_ref, Wp, M) + b2_ref[...]

    # ---- identity shortcut + 1/sqrt(2); drop the pad columns, lane-dense store --
    out = (x + y2) * _INV_SQRT2                               # (M, C) f32 values
    out = out.reshape(H, Wp, out.shape[-1])[:, 1:W + 1, :]    # value-level only
    out_ref[...] = out.astype(out_ref.dtype)


# ----------------------------------------------------------------------------
# Forward pass (PyTorch NCHW at the boundary, NHWC inside)
# ----------------------------------------------------------------------------
def res_blk_forward(x_nchw, params, *, compute_dtype=jnp.float32):
    """ResBlk(dim, dim, normalize=True).forward — NCHW in, NCHW out."""
    x = jnp.transpose(x_nchw, (0, 2, 3, 1)).astype(jnp.float32)     # NHWC
    N, H, W, C = x.shape
    Wp, M, R = W + 2, H * (W + 2), (H + 4) * (W + 2)

    w1 = jnp.transpose(params["w1_oihw"], (2, 3, 1, 0))             # HWIO
    w2 = jnp.transpose(params["w2_oihw"], (2, 3, 1, 0))
    b1 = params["b1"].reshape(1, C).astype(jnp.float32)
    b2 = params["b2"].reshape(1, C).astype(jnp.float32)
    g1 = params["in1_w"].reshape(1, C).astype(jnp.float32)
    be1 = params["in1_b"].reshape(1, C).astype(jnp.float32)
    g2 = params["in2_w"].reshape(1, C).astype(jnp.float32)
    be2 = params["in2_b"].reshape(1, C).astype(jnp.float32)

    # Single padded + flattened copy of x; the kernel reads x only through this
    # array (IN1 stats, conv staging and the identity shortcut).
    xq = jnp.pad(x, ((0, 0), (2, 2), (1, 1), (0, 0))).reshape(N, R, C)

    # Static column-validity mask for the padded-width working layout.
    col = np.arange(M) % Wp
    mask = jnp.asarray(((col >= 1) & (col <= W)).astype(np.float32).reshape(M, 1))

    cdt = np.dtype(compute_dtype)
    w1c, w2c = w1.astype(cdt), w2.astype(cdt)          # MXU inputs; acc stays f32

    flops = 4 * N * H * W * 9 * C * C                  # two 3x3 convs (MACs * 2)
    bytes_accessed = int(xq.size * 4 + N * H * W * C * 4 +
                         (w1c.size + w2c.size) * cdt.itemsize + 10 * C * 4)

    out = pl.pallas_call(
        functools.partial(_fused_resblk_kernel, H=H, W=W),
        out_shape=jax.ShapeDtypeStruct((N, H, W, C), jnp.float32),
        grid=(N,),
        in_specs=[
            pl.BlockSpec((None, R, C), lambda n: (n, 0, 0)),        # padded image
            pl.BlockSpec((M, 1), lambda n: (0, 0)),                 # column mask
            pl.BlockSpec((1, C), lambda n: (0, 0)),                 # IN1 weight
            pl.BlockSpec((1, C), lambda n: (0, 0)),                 # IN1 bias
            pl.BlockSpec((3, 3, C, C), lambda n: (0, 0, 0, 0)),     # conv1 w (resident)
            pl.BlockSpec((1, C), lambda n: (0, 0)),                 # conv1 bias
            pl.BlockSpec((1, C), lambda n: (0, 0)),                 # IN2 weight
            pl.BlockSpec((1, C), lambda n: (0, 0)),                 # IN2 bias
            pl.BlockSpec((3, 3, C, C), lambda n: (0, 0, 0, 0)),     # conv2 w (resident)
            pl.BlockSpec((1, C), lambda n: (0, 0)),                 # conv2 bias
        ],
        out_specs=pl.BlockSpec((None, H, W, C), lambda n: (n, 0, 0, 0)),
        scratch_shapes=[pltpu.VMEM((R, C), cdt)],                   # conv-input staging
        compiler_params=pltpu.CompilerParams(
            dimension_semantics=("parallel",),      # batch splits across v7x cores
            vmem_limit_bytes=32 * 1024 * 1024),     # generous but v7x (64 MiB) safe
        cost_estimate=pl.CostEstimate(flops=flops, transcendentals=2 * N * C,
                                      bytes_accessed=bytes_accessed),
    )(xq, mask, g1, be1, w1c, b1, g2, be2, w2c, b2)

    return jnp.transpose(out, (0, 3, 1, 2))                         # back to NCHW


# ----------------------------------------------------------------------------
# Deterministic parameter construction (mirrors the PyTorch module's layers)
# ----------------------------------------------------------------------------
def init_params(key, dim):
    ks = jax.random.split(key, 8)

    def conv_w(k, o, i, kh, kw):
        bound = 1.0 / float(np.sqrt(i * kh * kw))   # ~ kaiming_uniform(a=sqrt(5))
        return jax.random.uniform(k, (o, i, kh, kw), jnp.float32, -bound, bound)

    def conv_b(k, o, fan_in):
        bound = 1.0 / float(np.sqrt(fan_in))
        return jax.random.uniform(k, (o,), jnp.float32, -bound, bound)

    return {
        "w1_oihw": conv_w(ks[0], dim, dim, 3, 3),
        "b1": conv_b(ks[1], dim, dim * 9),
        "w2_oihw": conv_w(ks[2], dim, dim, 3, 3),
        "b2": conv_b(ks[3], dim, dim * 9),
        # InstanceNorm2d(affine=True) params (PyTorch inits them to 1/0;
        # randomized here so the affine path is actually exercised).
        "in1_w": 1.0 + 0.1 * jax.random.normal(ks[4], (dim,), jnp.float32),
        "in1_b": 0.1 * jax.random.normal(ks[5], (dim,), jnp.float32),
        "in2_w": 1.0 + 0.1 * jax.random.normal(ks[6], (dim,), jnp.float32),
        "in2_b": 0.1 * jax.random.normal(ks[7], (dim,), jnp.float32),
    }


# ----------------------------------------------------------------------------
# Pure-JAX reference (exactly mirrors the PyTorch ResBlk forward)
# ----------------------------------------------------------------------------
def _jax_reference(x_nchw, p):
    def inorm(x, w, b, eps=_EPS):
        mean = jnp.mean(x, axis=(2, 3), keepdims=True)
        var = jnp.mean(jnp.square(x - mean), axis=(2, 3), keepdims=True)
        return ((x - mean) * lax.rsqrt(var + eps) * w.reshape(1, -1, 1, 1)
                + b.reshape(1, -1, 1, 1))

    def lrelu(x):
        return jnp.where(x >= 0, x, _SLOPE * x)

    def conv3x3(x, w_oihw, b):
        y = lax.conv_general_dilated(
            x, w_oihw, (1, 1), [(1, 1), (1, 1)],
            dimension_numbers=("NCHW", "OIHW", "NCHW"),
            precision=lax.Precision.HIGHEST)
        return y + b.reshape(1, -1, 1, 1)

    h = conv3x3(lrelu(inorm(x_nchw, p["in1_w"], p["in1_b"])), p["w1_oihw"], p["b1"])
    h = conv3x3(lrelu(inorm(h, p["in2_w"], p["in2_b"])), p["w2_oihw"], p["b2"])
    return (x_nchw + h) / np.sqrt(2.0)          # identity shortcut (dim_in == dim_out)


if __name__ == "__main__":
    key = jax.random.PRNGKey(0)
    # Small, lane-dense instance of the Generator's bottleneck encoder block:
    # ResBlk(dim, dim, normalize=True) on a 16x16 feature map, batch 2.
    dim, N, H, W = 128, 2, 16, 16

    k_x, k_p = jax.random.split(key)
    x = jax.random.normal(k_x, (N, dim, H, W), jnp.float32)     # NCHW like PyTorch
    params = init_params(k_p, dim)

    # f32 path (exact semantics) ------------------------------------------------
    fwd = jax.jit(functools.partial(res_blk_forward, params=params))
    out = jax.block_until_ready(fwd(x))
    assert out.shape == (N, dim, H, W), out.shape

    ref = _jax_reference(x, params)
    np.testing.assert_allclose(np.asarray(out), np.asarray(ref),
                               atol=2e-3, rtol=2e-3)

    # bf16 MXU path (f32 accumulation, f32 norm statistics) — v6e/v7x variant ----
    fwd_bf16 = jax.jit(functools.partial(res_blk_forward, params=params,
                                         compute_dtype=jnp.bfloat16))
    out_bf16 = jax.block_until_ready(fwd_bf16(x))
    np.testing.assert_allclose(np.asarray(out_bf16), np.asarray(ref),
                               atol=2e-1, rtol=1e-1)   # loose: bf16 rounding

    print("KERNEL_OK")
</pallas_src>

<mosaic_0001>
module attributes {stable_mosaic.version = 11 : i64} {
  func.func @_fused_resblk_kernel(%arg0: i32, %arg1: memref<1x360x128xf32, #tpu.memory_space<vmem>>, %arg2: memref<288x1xf32, #tpu.memory_space<vmem>>, %arg3: memref<1x128xf32, #tpu.memory_space<vmem>>, %arg4: memref<1x128xf32, #tpu.memory_space<vmem>>, %arg5: memref<3x3x128x128xf32, #tpu.memory_space<vmem>>, %arg6: memref<1x128xf32, #tpu.memory_space<vmem>>, %arg7: memref<1x128xf32, #tpu.memory_space<vmem>>, %arg8: memref<1x128xf32, #tpu.memory_space<vmem>>, %arg9: memref<3x3x128x128xf32, #tpu.memory_space<vmem>>, %arg10: memref<1x128xf32, #tpu.memory_space<vmem>>, %arg11: memref<1x16x16x128xf32, #tpu.memory_space<vmem>>, %arg12: memref<360x128xf32, #tpu.memory_space<vmem>>) attributes {dimension_semantics = [#tpu.dimension_semantics<parallel>], iteration_bounds = array<i64: 2>, scalar_prefetch = 0 : i64, scratch_operands = 1 : i64, tpu.core_type = #tpu.core_type<tc>, window_params = [{transform_indices = @transform_0, window_bounds = array<i64: 1, 360, 128>}, {pipeline_mode = #tpu.pipeline_mode<synchronous>, transform_indices = @transform_1, window_bounds = array<i64: 288, 1>}, {pipeline_mode = #tpu.pipeline_mode<synchronous>, transform_indices = @transform_2, window_bounds = array<i64: 1, 128>}, {pipeline_mode = #tpu.pipeline_mode<synchronous>, transform_indices = @transform_3, window_bounds = array<i64: 1, 128>}, {pipeline_mode = #tpu.pipeline_mode<synchronous>, transform_indices = @transform_4, window_bounds = array<i64: 3, 3, 128, 128>}, {pipeline_mode = #tpu.pipeline_mode<synchronous>, transform_indices = @transform_5, window_bounds = array<i64: 1, 128>}, {pipeline_mode = #tpu.pipeline_mode<synchronous>, transform_indices = @transform_6, window_bounds = array<i64: 1, 128>}, {pipeline_mode = #tpu.pipeline_mode<synchronous>, transform_indices = @transform_7, window_bounds = array<i64: 1, 128>}, {pipeline_mode = #tpu.pipeline_mode<synchronous>, transform_indices = @transform_8, window_bounds = array<i64: 3, 3, 128, 128>}, {pipeline_mode = #tpu.pipeline_mode<synchronous>, transform_indices = @transform_9, window_bounds = array<i64: 1, 128>}, {transform_indices = @transform_10, window_bounds = array<i64: 1, 16, 16, 128>}]} {
    %c0 = arith.constant 0 : index
    %c36 = arith.constant 36 : index
    %c0_0 = arith.constant 0 : index
    %0 = vector.load %arg1[%c0, %c36, %c0_0] : memref<1x360x128xf32, #tpu.memory_space<vmem>>, vector<1x288x128xf32>
    %1 = vector.shape_cast %0 : vector<1x288x128xf32> to vector<288x128xf32>
    %c0_1 = arith.constant 0 : index
    %c0_2 = arith.constant 0 : index
    %2 = vector.load %arg2[%c0_1, %c0_2] : memref<288x1xf32, #tpu.memory_space<vmem>>, vector<288x1xf32>
    %cst = arith.constant dense<0.000000e+00> : vector<128xf32>
    %3 = vector.multi_reduction <add>, %1, %cst [0] : vector<288x128xf32> to vector<128xf32>
    %4 = vector.shape_cast %3 : vector<128xf32> to vector<1x128xf32>
    %cst_3 = arith.constant 3.906250e-03 : f32
    %5 = vector.broadcast %cst_3 : f32 to vector<1x128xf32>
    %6 = arith.mulf %4, %5 : vector<1x128xf32>
    %7 = vector.broadcast %6 : vector<1x128xf32> to vector<288x128xf32>
    %8 = arith.subf %1, %7 : vector<288x128xf32>
    %9 = vector.broadcast %2 : vector<288x1xf32> to vector<288x128xf32>
    %10 = arith.mulf %8, %9 : vector<288x128xf32>
    %11 = arith.mulf %10, %10 : vector<288x128xf32>
    %cst_4 = arith.constant dense<0.000000e+00> : vector<128xf32>
    %12 = vector.multi_reduction <add>, %11, %cst_4 [0] : vector<288x128xf32> to vector<128xf32>
    %13 = vector.shape_cast %12 : vector<128xf32> to vector<1x128xf32>
    %cst_5 = arith.constant 3.906250e-03 : f32
    %14 = vector.broadcast %cst_5 : f32 to vector<1x128xf32>
    %15 = arith.mulf %13, %14 : vector<1x128xf32>
    %cst_6 = arith.constant 9.99999974E-6 : f32
    %16 = vector.broadcast %cst_6 : f32 to vector<1x128xf32>
    %17 = arith.addf %15, %16 : vector<1x128xf32>
    %18 = math.rsqrt %17 : vector<1x128xf32>
    %19 = vector.broadcast %18 : vector<1x128xf32> to vector<288x128xf32>
    %20 = arith.mulf %10, %19 : vector<288x128xf32>
    %c0_7 = arith.constant 0 : index
    %c0_8 = arith.constant 0 : index
    %21 = vector.load %arg3[%c0_7, %c0_8] : memref<1x128xf32, #tpu.memory_space<vmem>>, vector<1x128xf32>
    %22 = vector.broadcast %21 : vector<1x128xf32> to vector<288x128xf32>
    %23 = arith.mulf %20, %22 : vector<288x128xf32>
    %c0_9 = arith.constant 0 : index
    %c0_10 = arith.constant 0 : index
    %24 = vector.load %arg4[%c0_9, %c0_10] : memref<1x128xf32, #tpu.memory_space<vmem>>, vector<1x128xf32>
    %25 = vector.broadcast %24 : vector<1x128xf32> to vector<288x128xf32>
    %26 = arith.addf %23, %25 : vector<288x128xf32>
    %cst_11 = arith.constant 0.000000e+00 : f32
    %27 = vector.broadcast %cst_11 : f32 to vector<288x128xf32>
    %28 = arith.cmpf oge, %26, %27 : vector<288x128xf32>
    %cst_12 = arith.constant 2.000000e-01 : f32
    %29 = vector.broadcast %cst_12 : f32 to vector<288x128xf32>
    %30 = arith.mulf %29, %26 : vector<288x128xf32>
    %31 = arith.select %28, %26, %30 : vector<288x128xi1>, vector<288x128xf32>
    %32 = vector.broadcast %2 : vector<288x1xf32> to vector<288x128xf32>
    %33 = arith.mulf %31, %32 : vector<288x128xf32>
    %cst_13 = arith.constant 0.000000e+00 : f32
    %34 = vector.broadcast %cst_13 : f32 to vector<36x128xf32>
    %c0_14 = arith.constant 0 : index
    %c0_15 = arith.constant 0 : index
    %35 = vector.load %arg12[%c0_14, %c0_15] : memref<360x128xf32, #tpu.memory_space<vmem>>, vector<36x128xf32>
    tpu.vector_store %arg12[%c0_14, %c0_15], %34 {strides = array<i32>} : memref<360x128xf32, #tpu.memory_space<vmem>>, vector<36x128xf32>,
    %c324 = arith.constant 324 : index
    %c0_16 = arith.constant 0 : index
    %36 = vector.load %arg12[%c324, %c0_16] : memref<360x128xf32, #tpu.memory_space<vmem>>, vector<36x128xf32>
    tpu.vector_store %arg12[%c324, %c0_16], %34 {strides = array<i32>} : memref<360x128xf32, #tpu.memory_space<vmem>>, vector<36x128xf32>,
    %c36_17 = arith.constant 36 : index
    %c0_18 = arith.constant 0 : index
    %37 = vector.load %arg12[%c36_17, %c0_18] : memref<360x128xf32, #tpu.memory_space<vmem>>, vector<288x128xf32>
    tpu.vector_store %arg12[%c36_17, %c0_18], %33 {strides = array<i32>} : memref<360x128xf32, #tpu.memory_space<vmem>>, vector<288x128xf32>,
    %c17 = arith.constant 17 : index
    %c0_19 = arith.constant 0 : index
    %38 = vector.load %arg12[%c17, %c0_19] : memref<360x128xf32, #tpu.memory_space<vmem>>, vector<288x128xf32>
    %c0_20 = arith.constant 0 : index
    %c0_21 = arith.constant 0 : index
    %c0_22 = arith.constant 0 : index
    %c0_23 = arith.constant 0 : index
    %39 = vector.load %arg5[%c0_20, %c0_21, %c0_22, %c0_23] : memref<3x3x128x128xf32, #tpu.memory_space<vmem>>, vector<1x1x128x128xf32>
    %40 = vector.shape_cast %39 : vector<1x1x128x128xf32> to vector<128x128xf32>
    %cst_24 = arith.constant dense<0.000000e+00> : vector<288x128xf32>
    %41 = tpu.matmul %38, %40, %cst_24 {dimension_numbers = #tpu.dot_dimension_numbers<[1], [0], [0], [1], [0, 0, 1, 1], [], []>} : vector<288x128xf32>, vector<128x128xf32>, vector<288x128xf32> -> vector<288x128xf32>
    %c18 = arith.constant 18 : index
    %c0_25 = arith.constant 0 : index
    %42 = vector.load %arg12[%c18, %c0_25] : memref<360x128xf32, #tpu.memory_space<vmem>>, vector<288x128xf32>
    %c0_26 = arith.constant 0 : index
    %c1 = arith.constant 1 : index
    %c0_27 = arith.constant 0 : index
    %c0_28 = arith.constant 0 : index
    %43 = vector.load %arg5[%c0_26, %c1, %c0_27, %c0_28] : memref<3x3x128x128xf32, #tpu.memory_space<vmem>>, vector<1x1x128x128xf32>
    %44 = vector.shape_cast %43 : vector<1x1x128x128xf32> to vector<128x128xf32>
    %cst_29 = arith.constant dense<0.000000e+00> : vector<288x128xf32>
    %45 = tpu.matmul %42, %44, %cst_29 {dimension_numbers = #tpu.dot_dimension_numbers<[1], [0], [0], [1], [0, 0, 1, 1], [], []>} : vector<288x128xf32>, vector<128x128xf32>, vector<288x128xf32> -> vector<288x128xf32>
    %46 = arith.addf %41, %45 : vector<288x128xf32>
    %c19 = arith.constant 19 : index
    %c0_30 = arith.constant 0 : index
    %47 = vector.load %arg12[%c19, %c0_30] : memref<360x128xf32, #tpu.memory_space<vmem>>, vector<288x128xf32>
    %c0_31 = arith.constant 0 : index
    %c2 = arith.constant 2 : index
    %c0_32 = arith.constant 0 : index
    %c0_33 = arith.constant 0 : index
    %48 = vector.load %arg5[%c0_31, %c2, %c0_32, %c0_33] : memref<3x3x128x128xf32, #tpu.memory_space<vmem>>, vector<1x1x128x128xf32>
    %49 = vector.shape_cast %48 : vector<1x1x128x128xf32> to vector<128x128xf32>
    %cst_34 = arith.constant dense<0.000000e+00> : vector<288x128xf32>
    %50 = tpu.matmul %47, %49, %cst_34 {dimension_numbers = #tpu.dot_dimension_numbers<[1], [0], [0], [1], [0, 0, 1, 1], [], []>} : vector<288x128xf32>, vector<128x128xf32>, vector<288x128xf32> -> vector<288x128xf32>
    %51 = arith.addf %46, %50 : vector<288x128xf32>
    %c35 = arith.constant 35 : index
    %c0_35 = arith.constant 0 : index
    %52 = vector.load %arg12[%c35, %c0_35] : memref<360x128xf32, #tpu.memory_space<vmem>>, vector<288x128xf32>
    %c1_36 = arith.constant 1 : index
    %c0_37 = arith.constant 0 : index
    %c0_38 = arith.constant 0 : index
    %c0_39 = arith.constant 0 : index
    %53 = vector.load %arg5[%c1_36, %c0_37, %c0_38, %c0_39] : memref<3x3x128x128xf32, #tpu.memory_space<vmem>>, vector<1x1x128x128xf32>
    %54 = vector.shape_cast %53 : vector<1x1x128x128xf32> to vector<128x128xf32>
    %cst_40 = arith.constant dense<0.000000e+00> : vector<288x128xf32>
    %55 = tpu.matmul %52, %54, %cst_40 {dimension_numbers = #tpu.dot_dimension_numbers<[1], [0], [0], [1], [0, 0, 1, 1], [], []>} : vector<288x128xf32>, vector<128x128xf32>, vector<288x128xf32> -> vector<288x128xf32>
    %56 = arith.addf %51, %55 : vector<288x128xf32>
    %c36_41 = arith.constant 36 : index
    %c0_42 = arith.constant 0 : index
    %57 = vector.load %arg12[%c36_41, %c0_42] : memref<360x128xf32, #tpu.memory_space<vmem>>, vector<288x128xf32>
    %c1_43 = arith.constant 1 : index
    %c1_44 = arith.constant 1 : index
    %c0_45 = arith.constant 0 : index
    %c0_46 = arith.constant 0 : index
    %58 = vector.load %arg5[%c1_43, %c1_44, %c0_45, %c0_46] : memref<3x3x128x128xf32, #tpu.memory_space<vmem>>, vector<1x1x128x128xf32>
    %59 = vector.shape_cast %58 : vector<1x1x128x128xf32> to vector<128x128xf32>
    %cst_47 = arith.constant dense<0.000000e+00> : vector<288x128xf32>
    %60 = tpu.matmul %57, %59, %cst_47 {dimension_numbers = #tpu.dot_dimension_numbers<[1], [0], [0], [1], [0, 0, 1, 1], [], []>} : vector<288x128xf32>, vector<128x128xf32>, vector<288x128xf32> -> vector<288x128xf32>
    %61 = arith.addf %56, %60 : vector<288x128xf32>
    %c37 = arith.constant 37 : index
    %c0_48 = arith.constant 0 : index
    %62 = vector.load %arg12[%c37, %c0_48] : memref<360x128xf32, #tpu.memory_space<vmem>>, vector<288x128xf32>
    %c1_49 = arith.constant 1 : index
    %c2_50 = arith.constant 2 : index
    %c0_51 = arith.constant 0 : index
    %c0_52 = arith.constant 0 : index
    %63 = vector.load %arg5[%c1_49, %c2_50, %c0_51, %c0_52] : memref<3x3x128x128xf32, #tpu.memory_space<vmem>>, vector<1x1x128x128xf32>
    %64 = vector.shape_cast %63 : vector<1x1x128x128xf32> to vector<128x128xf32>
    %cst_53 = arith.constant dense<0.000000e+00> : vector<288x128xf32>
    %65 = tpu.matmul %62, %64, %cst_53 {dimension_numbers = #tpu.dot_dimension_numbers<[1], [0], [0], [1], [0, 0, 1, 1], [], []>} : vector<288x128xf32>, vector<128x128xf32>, vector<288x128xf32> -> vector<288x128xf32>
    %66 = arith.addf %61, %65 : vector<288x128xf32>
    %c53 = arith.constant 53 : index
    %c0_54 = arith.constant 0 : index
    %67 = vector.load %arg12[%c53, %c0_54] : memref<360x128xf32, #tpu.memory_space<vmem>>, vector<288x128xf32>
    %c2_55 = arith.constant 2 : index
    %c0_56 = arith.constant 0 : index
    %c0_57 = arith.constant 0 : index
    %c0_58 = arith.constant 0 : index
    %68 = vector.load %arg5[%c2_55, %c0_56, %c0_57, %c0_58] : memref<3x3x128x128xf32, #tpu.memory_space<vmem>>, vector<1x1x128x128xf32>
    %69 = vector.shape_cast %68 : vector<1x1x128x128xf32> to vector<128x128xf32>
    %cst_59 = arith.constant dense<0.000000e+00> : vector<288x128xf32>
    %70 = tpu.matmul %67, %69, %cst_59 {dimension_numbers = #tpu.dot_dimension_numbers<[1], [0], [0], [1], [0, 0, 1, 1], [], []>} : vector<288x128xf32>, vector<128x128xf32>, vector<288x128xf32> -> vector<288x128xf32>
    %71 = arith.addf %66, %70 : vector<288x128xf32>
    %c54 = arith.constant 54 : index
    %c0_60 = arith.constant 0 : index
    %72 = vector.load %arg12[%c54, %c0_60] : memref<360x128xf32, #tpu.memory_space<vmem>>, vector<288x128xf32>
    %c2_61 = arith.constant 2 : index
    %c1_62 = arith.constant 1 : index
    %c0_63 = arith.constant 0 : index
    %c0_64 = arith.constant 0 : index
    %73 = vector.load %arg5[%c2_61, %c1_62, %c0_63, %c0_64] : memref<3x3x128x128xf32, #tpu.memory_space<vmem>>, vector<1x1x128x128xf32>
    %74 = vector.shape_cast %73 : vector<1x1x128x128xf32> to vector<128x128xf32>
    %cst_65 = arith.constant dense<0.000000e+00> : vector<288x128xf32>
    %75 = tpu.matmul %72, %74, %cst_65 {dimension_numbers = #tpu.dot_dimension_numbers<[1], [0], [0], [1], [0, 0, 1, 1], [], []>} : vector<288x128xf32>, vector<128x128xf32>, vector<288x128xf32> -> vector<288x128xf32>
    %76 = arith.addf %71, %75 : vector<288x128xf32>
    %c55 = arith.constant 55 : index
    %c0_66 = arith.constant 0 : index
    %77 = vector.load %arg12[%c55, %c0_66] : memref<360x128xf32, #tpu.memory_space<vmem>>, vector<288x128xf32>
    %c2_67 = arith.constant 2 : index
    %c2_68 = arith.constant 2 : index
    %c0_69 = arith.constant 0 : index
    %c0_70 = arith.constant 0 : index
    %78 = vector.load %arg5[%c2_67, %c2_68, %c0_69, %c0_70] : memref<3x3x128x128xf32, #tpu.memory_space<vmem>>, vector<1x1x128x128xf32>
    %79 = vector.shape_cast %78 : vector<1x1x128x128xf32> to vector<128x128xf32>
    %cst_71 = arith.constant dense<0.000000e+00> : vector<288x128xf32>
    %80 = tpu.matmul %77, %79, %cst_71 {dimension_numbers = #tpu.dot_dimension_numbers<[1], [0], [0], [1], [0, 0, 1, 1], [], []>} : vector<288x128xf32>, vector<128x128xf32>, vector<288x128xf32> -> vector<288x128xf32>
    %81 = arith.addf %76, %80 : vector<288x128xf32>
    %c0_72 = arith.constant 0 : index
    %c0_73 = arith.constant 0 : index
    %82 = vector.load %arg6[%c0_72, %c0_73] : memref<1x128xf32, #tpu.memory_space<vmem>>, vector<1x128xf32>
    %83 = vector.broadcast %82 : vector<1x128xf32> to vector<288x128xf32>
    %84 = arith.addf %81, %83 : vector<288x128xf32>
    %85 = vector.broadcast %2 : vector<288x1xf32> to vector<288x128xf32>
    %86 = arith.mulf %84, %85 : vector<288x128xf32>
    %cst_74 = arith.constant dense<0.000000e+00> : vector<128xf32>
    %87 = vector.multi_reduction <add>, %86, %cst_74 [0] : vector<288x128xf32> to vector<128xf32>
    %88 = vector.shape_cast %87 : vector<128xf32> to vector<1x128xf32>
    %cst_75 = arith.constant 3.906250e-03 : f32
    %89 = vector.broadcast %cst_75 : f32 to vector<1x128xf32>
    %90 = arith.mulf %88, %89 : vector<1x128xf32>
    %91 = vector.broadcast %90 : vector<1x128xf32> to vector<288x128xf32>
    %92 = arith.subf %84, %91 : vector<288x128xf32>
    %93 = vector.broadcast %2 : vector<288x1xf32> to vector<288x128xf32>
    %94 = arith.mulf %92, %93 : vector<288x128xf32>
    %95 = arith.mulf %94, %94 : vector<288x128xf32>
    %cst_76 = arith.constant dense<0.000000e+00> : vector<128xf32>
    %96 = vector.multi_reduction <add>, %95, %cst_76 [0] : vector<288x128xf32> to vector<128xf32>
    %97 = vector.shape_cast %96 : vector<128xf32> to vector<1x128xf32>
    %cst_77 = arith.constant 3.906250e-03 : f32
    %98 = vector.broadcast %cst_77 : f32 to vector<1x128xf32>
    %99 = arith.mulf %97, %98 : vector<1x128xf32>
    %cst_78 = arith.constant 9.99999974E-6 : f32
    %100 = vector.broadcast %cst_78 : f32 to vector<1x128xf32>
    %101 = arith.addf %99, %100 : vector<1x128xf32>
    %102 = math.rsqrt %101 : vector<1x128xf32>
    %103 = vector.broadcast %102 : vector<1x128xf32> to vector<288x128xf32>
    %104 = arith.mulf %94, %103 : vector<288x128xf32>
    %c0_79 = arith.constant 0 : index
    %c0_80 = arith.constant 0 : index
    %105 = vector.load %arg7[%c0_79, %c0_80] : memref<1x128xf32, #tpu.memory_space<vmem>>, vector<1x128xf32>
    %106 = vector.broadcast %105 : vector<1x128xf32> to vector<288x128xf32>
    %107 = arith.mulf %104, %106 : vector<288x128xf32>
    %c0_81 = arith.constant 0 : index
    %c0_82 = arith.constant 0 : index
    %108 = vector.load %arg8[%c0_81, %c0_82] : memref<1x128xf32, #tpu.memory_space<vmem>>, vector<1x128xf32>
    %109 = vector.broadcast %108 : vector<1x128xf32> to vector<288x128xf32>
    %110 = arith.addf %107, %109 : vector<288x128xf32>
    %cst_83 = arith.constant 0.000000e+00 : f32
    %111 = vector.broadcast %cst_83 : f32 to vector<288x128xf32>
    %112 = arith.cmpf oge, %110, %111 : vector<288x128xf32>
    %cst_84 = arith.constant 2.000000e-01 : f32
    %113 = vector.broadcast %cst_84 : f32 to vector<288x128xf32>
    %114 = arith.mulf %113, %110 : vector<288x128xf32>
    %115 = arith.select %112, %110, %114 : vector<288x128xi1>, vector<288x128xf32>
    %116 = vector.broadcast %2 : vector<288x1xf32> to vector<288x128xf32>
    %117 = arith.mulf %115, %116 : vector<288x128xf32>
    %c36_85 = arith.constant 36 : index
    %c0_86 = arith.constant 0 : index
    %118 = vector.load %arg12[%c36_85, %c0_86] : memref<360x128xf32, #tpu.memory_space<vmem>>, vector<288x128xf32>
    tpu.vector_store %arg12[%c36_85, %c0_86], %117 {strides = array<i32>} : memref<360x128xf32, #tpu.memory_space<vmem>>, vector<288x128xf32>,
    %c17_87 = arith.constant 17 : index
    %c0_88 = arith.constant 0 : index
    %119 = vector.load %arg12[%c17_87, %c0_88] : memref<360x128xf32, #tpu.memory_space<vmem>>, vector<288x128xf32>
    %c0_89 = arith.constant 0 : index
    %c0_90 = arith.constant 0 : index
    %c0_91 = arith.constant 0 : index
    %c0_92 = arith.constant 0 : index
    %120 = vector.load %arg9[%c0_89, %c0_90, %c0_91, %c0_92] : memref<3x3x128x128xf32, #tpu.memory_space<vmem>>, vector<1x1x128x128xf32>
    %121 = vector.shape_cast %120 : vector<1x1x128x128xf32> to vector<128x128xf32>
    %cst_93 = arith.constant dense<0.000000e+00> : vector<288x128xf32>
    %122 = tpu.matmul %119, %121, %cst_93 {dimension_numbers = #tpu.dot_dimension_numbers<[1], [0], [0], [1], [0, 0, 1, 1], [], []>} : vector<288x128xf32>, vector<128x128xf32>, vector<288x128xf32> -> vector<288x128xf32>
    %c18_94 = arith.constant 18 : index
    %c0_95 = arith.constant 0 : index
    %123 = vector.load %arg12[%c18_94, %c0_95] : memref<360x128xf32, #tpu.memory_space<vmem>>, vector<288x128xf32>
    %c0_96 = arith.constant 0 : index
    %c1_97 = arith.constant 1 : index
    %c0_98 = arith.constant 0 : index
    %c0_99 = arith.constant 0 : index
    %124 = vector.load %arg9[%c0_96, %c1_97, %c0_98, %c0_99] : memref<3x3x128x128xf32, #tpu.memory_space<vmem>>, vector<1x1x128x128xf32>
    %125 = vector.shape_cast %124 : vector<1x1x128x128xf32> to vector<128x128xf32>
    %cst_100 = arith.constant dense<0.000000e+00> : vector<288x128xf32>
    %126 = tpu.matmul %123, %125, %cst_100 {dimension_numbers = #tpu.dot_dimension_numbers<[1], [0], [0], [1], [0, 0, 1, 1], [], []>} : vector<288x128xf32>, vector<128x128xf32>, vector<288x128xf32> -> vector<288x128xf32>
    %127 = arith.addf %122, %126 : vector<288x128xf32>
    %c19_101 = arith.constant 19 : index
    %c0_102 = arith.constant 0 : index
    %128 = vector.load %arg12[%c19_101, %c0_102] : memref<360x128xf32, #tpu.memory_space<vmem>>, vector<288x128xf32>
    %c0_103 = arith.constant 0 : index
    %c2_104 = arith.constant 2 : index
    %c0_105 = arith.constant 0 : index
    %c0_106 = arith.constant 0 : index
    %129 = vector.load %arg9[%c0_103, %c2_104, %c0_105, %c0_106] : memref<3x3x128x128xf32, #tpu.memory_space<vmem>>, vector<1x1x128x128xf32>
    %130 = vector.shape_cast %129 : vector<1x1x128x128xf32> to vector<128x128xf32>
    %cst_107 = arith.constant dense<0.000000e+00> : vector<288x128xf32>
    %131 = tpu.matmul %128, %130, %cst_107 {dimension_numbers = #tpu.dot_dimension_numbers<[1], [0], [0], [1], [0, 0, 1, 1], [], []>} : vector<288x128xf32>, vector<128x128xf32>, vector<288x128xf32> -> vector<288x128xf32>
    %132 = arith.addf %127, %131 : vector<288x128xf32>
    %c35_108 = arith.constant 35 : index
    %c0_109 = arith.constant 0 : index
    %133 = vector.load %arg12[%c35_108, %c0_109] : memref<360x128xf32, #tpu.memory_space<vmem>>, vector<288x128xf32>
    %c1_110 = arith.constant 1 : index
    %c0_111 = arith.constant 0 : index
    %c0_112 = arith.constant 0 : index
    %c0_113 = arith.constant 0 : index
    %134 = vector.load %arg9[%c1_110, %c0_111, %c0_112, %c0_113] : memref<3x3x128x128xf32, #tpu.memory_space<vmem>>, vector<1x1x128x128xf32>
    %135 = vector.shape_cast %134 : vector<1x1x128x128xf32> to vector<128x128xf32>
    %cst_114 = arith.constant dense<0.000000e+00> : vector<288x128xf32>
    %136 = tpu.matmul %133, %135, %cst_114 {dimension_numbers = #tpu.dot_dimension_numbers<[1], [0], [0], [1], [0, 0, 1, 1], [], []>} : vector<288x128xf32>, vector<128x128xf32>, vector<288x128xf32> -> vector<288x128xf32>
    %137 = arith.addf %132, %136 : vector<288x128xf32>
    %c36_115 = arith.constant 36 : index
    %c0_116 = arith.constant 0 : index
    %138 = vector.load %arg12[%c36_115, %c0_116] : memref<360x128xf32, #tpu.memory_space<vmem>>, vector<288x128xf32>
    %c1_117 = arith.constant 1 : index
    %c1_118 = arith.constant 1 : index
    %c0_119 = arith.constant 0 : index
    %c0_120 = arith.constant 0 : index
    %139 = vector.load %arg9[%c1_117, %c1_118, %c0_119, %c0_120] : memref<3x3x128x128xf32, #tpu.memory_space<vmem>>, vector<1x1x128x128xf32>
    %140 = vector.shape_cast %139 : vector<1x1x128x128xf32> to vector<128x128xf32>
    %cst_121 = arith.constant dense<0.000000e+00> : vector<288x128xf32>
    %141 = tpu.matmul %138, %140, %cst_121 {dimension_numbers = #tpu.dot_dimension_numbers<[1], [0], [0], [1], [0, 0, 1, 1], [], []>} : vector<288x128xf32>, vector<128x128xf32>, vector<288x128xf32> -> vector<288x128xf32>
    %142 = arith.addf %137, %141 : vector<288x128xf32>
    %c37_122 = arith.constant 37 : index
    %c0_123 = arith.constant 0 : index
    %143 = vector.load %arg12[%c37_122, %c0_123] : memref<360x128xf32, #tpu.memory_space<vmem>>, vector<288x128xf32>
    %c1_124 = arith.constant 1 : index
    %c2_125 = arith.constant 2 : index
    %c0_126 = arith.constant 0 : index
    %c0_127 = arith.constant 0 : index
    %144 = vector.load %arg9[%c1_124, %c2_125, %c0_126, %c0_127] : memref<3x3x128x128xf32, #tpu.memory_space<vmem>>, vector<1x1x128x128xf32>
    %145 = vector.shape_cast %144 : vector<1x1x128x128xf32> to vector<128x128xf32>
    %cst_128 = arith.constant dense<0.000000e+00> : vector<288x128xf32>
    %146 = tpu.matmul %143, %145, %cst_128 {dimension_numbers = #tpu.dot_dimension_numbers<[1], [0], [0], [1], [0, 0, 1, 1], [], []>} : vector<288x128xf32>, vector<128x128xf32>, vector<288x128xf32> -> vector<288x128xf32>
    %147 = arith.addf %142, %146 : vector<288x128xf32>
    %c53_129 = arith.constant 53 : index
    %c0_130 = arith.constant 0 : index
    %148 = vector.load %arg12[%c53_129, %c0_130] : memref<360x128xf32, #tpu.memory_space<vmem>>, vector<288x128xf32>
    %c2_131 = arith.constant 2 : index
    %c0_132 = arith.constant 0 : index
    %c0_133 = arith.constant 0 : index
    %c0_134 = arith.constant 0 : index
    %149 = vector.load %arg9[%c2_131, %c0_132, %c0_133, %c0_134] : memref<3x3x128x128xf32, #tpu.memory_space<vmem>>, vector<1x1x128x128xf32>
    %150 = vector.shape_cast %149 : vector<1x1x128x128xf32> to vector<128x128xf32>
    %cst_135 = arith.constant dense<0.000000e+00> : vector<288x128xf32>
    %151 = tpu.matmul %148, %150, %cst_135 {dimension_numbers = #tpu.dot_dimension_numbers<[1], [0], [0], [1], [0, 0, 1, 1], [], []>} : vector<288x128xf32>, vector<128x128xf32>, vector<288x128xf32> -> vector<288x128xf32>
    %152 = arith.addf %147, %151 : vector<288x128xf32>
    %c54_136 = arith.constant 54 : index
    %c0_137 = arith.constant 0 : index
    %153 = vector.load %arg12[%c54_136, %c0_137] : memref<360x128xf32, #tpu.memory_space<vmem>>, vector<288x128xf32>
    %c2_138 = arith.constant 2 : index
    %c1_139 = arith.constant 1 : index
    %c0_140 = arith.constant 0 : index
    %c0_141 = arith.constant 0 : index
    %154 = vector.load %arg9[%c2_138, %c1_139, %c0_140, %c0_141] : memref<3x3x128x128xf32, #tpu.memory_space<vmem>>, vector<1x1x128x128xf32>
    %155 = vector.shape_cast %154 : vector<1x1x128x128xf32> to vector<128x128xf32>
    %cst_142 = arith.constant dense<0.000000e+00> : vector<288x128xf32>
    %156 = tpu.matmul %153, %155, %cst_142 {dimension_numbers = #tpu.dot_dimension_numbers<[1], [0], [0], [1], [0, 0, 1, 1], [], []>} : vector<288x128xf32>, vector<128x128xf32>, vector<288x128xf32> -> vector<288x128xf32>
    %157 = arith.addf %152, %156 : vector<288x128xf32>
    %c55_143 = arith.constant 55 : index
    %c0_144 = arith.constant 0 : index
    %158 = vector.load %arg12[%c55_143, %c0_144] : memref<360x128xf32, #tpu.memory_space<vmem>>, vector<288x128xf32>
    %c2_145 = arith.constant 2 : index
    %c2_146 = arith.constant 2 : index
    %c0_147 = arith.constant 0 : index
    %c0_148 = arith.constant 0 : index
    %159 = vector.load %arg9[%c2_145, %c2_146, %c0_147, %c0_148] : memref<3x3x128x128xf32, #tpu.memory_space<vmem>>, vector<1x1x128x128xf32>
    %160 = vector.shape_cast %159 : vector<1x1x128x128xf32> to vector<128x128xf32>
    %cst_149 = arith.constant dense<0.000000e+00> : vector<288x128xf32>
    %161 = tpu.matmul %158, %160, %cst_149 {dimension_numbers = #tpu.dot_dimension_numbers<[1], [0], [0], [1], [0, 0, 1, 1], [], []>} : vector<288x128xf32>, vector<128x128xf32>, vector<288x128xf32> -> vector<288x128xf32>
    %162 = arith.addf %157, %161 : vector<288x128xf32>
    %c0_150 = arith.constant 0 : index
    %c0_151 = arith.constant 0 : index
    %163 = vector.load %arg10[%c0_150, %c0_151] : memref<1x128xf32, #tpu.memory_space<vmem>>, vector<1x128xf32>
    %164 = vector.broadcast %163 : vector<1x128xf32> to vector<288x128xf32>
    %165 = arith.addf %162, %164 : vector<288x128xf32>
    %166 = arith.addf %1, %165 : vector<288x128xf32>
    %cst_152 = arith.constant 0.707106769 : f32
    %167 = vector.broadcast %cst_152 : f32 to vector<288x128xf32>
    %168 = arith.mulf %166, %167 : vector<288x128xf32>
    %169 = vector.shape_cast %168 : vector<288x128xf32> to vector<16x18x128xf32>
    %170 = vector.extract_strided_slice %169 {offsets = [0, 1, 0], sizes = [16, 16, 128], strides = [1, 1, 1]} : vector<16x18x128xf32> to vector<16x16x128xf32>
    %c0_153 = arith.constant 0 : index
    %c0_154 = arith.constant 0 : index
    %c0_155 = arith.constant 0 : index
    %c0_156 = arith.constant 0 : index
    %171 = vector.load %arg11[%c0_153, %c0_154, %c0_155, %c0_156] : memref<1x16x16x128xf32, #tpu.memory_space<vmem>>, vector<1x16x16x128xf32>
    %172 = vector.shape_cast %171 : vector<1x16x16x128xf32> to vector<16x16x128xf32>
    %173 = vector.shape_cast %170 : vector<16x16x128xf32> to vector<1x16x16x128xf32>
    tpu.vector_store %arg11[%c0_153, %c0_154, %c0_155, %c0_156], %173 {strides = array<i32>} : memref<1x16x16x128xf32, #tpu.memory_space<vmem>>, vector<1x16x16x128xf32>,
    return
  }
  func.func @transform_0(%arg0: i32) -> (i32, i32, i32) {
    %c0_i32 = arith.constant 0 : i32
    %c0_i32_0 = arith.constant 0 : i32
    %c0_i32_1 = arith.constant 0 : i32
    return %arg0, %c0_i32, %c0_i32_0 : i32, i32, i32
  }
  func.func @transform_1(%arg0: i32) -> (i32, i32) {
    %c0_i32 = arith.constant 0 : i32
    %c0_i32_0 = arith.constant 0 : i32
    %c0_i32_1 = arith.constant 0 : i32
    return %c0_i32, %c0_i32_0 : i32, i32
  }
  func.func @transform_2(%arg0: i32) -> (i32, i32) {
    %c0_i32 = arith.constant 0 : i32
    %c0_i32_0 = arith.constant 0 : i32
    %c0_i32_1 = arith.constant 0 : i32
    return %c0_i32, %c0_i32_0 : i32, i32
  }
  func.func @transform_3(%arg0: i32) -> (i32, i32) {
    %c0_i32 = arith.constant 0 : i32
    %c0_i32_0 = arith.constant 0 : i32
    %c0_i32_1 = arith.constant 0 : i32
    return %c0_i32, %c0_i32_0 : i32, i32
  }
  func.func @transform_4(%arg0: i32) -> (i32, i32, i32, i32) {
    %c0_i32 = arith.constant 0 : i32
    %c0_i32_0 = arith.constant 0 : i32
    %c0_i32_1 = arith.constant 0 : i32
    %c0_i32_2 = arith.constant 0 : i32
    %c0_i32_3 = arith.constant 0 : i32
    return %c0_i32, %c0_i32_0, %c0_i32_1, %c0_i32_2 : i32, i32, i32, i32
  }
  func.func @transform_5(%arg0: i32) -> (i32, i32) {
    %c0_i32 = arith.constant 0 : i32
    %c0_i32_0 = arith.constant 0 : i32
    %c0_i32_1 = arith.constant 0 : i32
    return %c0_i32, %c0_i32_0 : i32, i32
  }
  func.func @transform_6(%arg0: i32) -> (i32, i32) {
    %c0_i32 = arith.constant 0 : i32
    %c0_i32_0 = arith.constant 0 : i32
    %c0_i32_1 = arith.constant 0 : i32
    return %c0_i32, %c0_i32_0 : i32, i32
  }
  func.func @transform_7(%arg0: i32) -> (i32, i32) {
    %c0_i32 = arith.constant 0 : i32
    %c0_i32_0 = arith.constant 0 : i32
    %c0_i32_1 = arith.constant 0 : i32
    return %c0_i32, %c0_i32_0 : i32, i32
  }
  func.func @transform_8(%arg0: i32) -> (i32, i32, i32, i32) {
    %c0_i32 = arith.constant 0 : i32
    %c0_i32_0 = arith.constant 0 : i32
    %c0_i32_1 = arith.constant 0 : i32
    %c0_i32_2 = arith.constant 0 : i32
    %c0_i32_3 = arith.constant 0 : i32
    return %c0_i32, %c0_i32_0, %c0_i32_1, %c0_i32_2 : i32, i32, i32, i32
  }
  func.func @transform_9(%arg0: i32) -> (i32, i32) {
    %c0_i32 = arith.constant 0 : i32
    %c0_i32_0 = arith.constant 0 : i32
    %c0_i32_1 = arith.constant 0 : i32
    return %c0_i32, %c0_i32_0 : i32, i32
  }
  func.func @transform_10(%arg0: i32) -> (i32, i32, i32, i32) {
    %c0_i32 = arith.constant 0 : i32
    %c0_i32_0 = arith.constant 0 : i32
    %c0_i32_1 = arith.constant 0 : i32
    %c0_i32_2 = arith.constant 0 : i32
    return %arg0, %c0_i32, %c0_i32_0, %c0_i32_1 : i32, i32, i32, i32
  }
}

</mosaic_0001>

<llo_original>
// kernel: res_blk_forward.1
$region0: #{res_blk_forward.1}
  #allocation0 [shape = 'u32[]', space=smem, size = 0x4, offset = 0x4, fixed_abs, tag = 'smem constant byte address 0x4 - core index']
  #allocation1 [shape = 'u32[144,128]{1,0:T(1,128)}', space=vmem, size = 0x12000, scoped, tag = 'internal scratch']
  #allocation2 [shape = 'f32[360,128]{1,0:T(8,128)}', space=vmem, size = 0x2d000, scoped, tag = 'scratch operand']
  %s0 = inlined_call_operand.vmem [shape: f32[2,360,128], index: 0, kind: input, shape index: {}]
  %s1 = inlined_call_operand.vmem [shape: f32[288,1], index: 1, kind: input, shape index: {}]
  %s2 = inlined_call_operand.vmem [shape: f32[1,128], index: 2, kind: input, shape index: {}]
  %s3 = inlined_call_operand.vmem [shape: f32[1,128], index: 3, kind: input, shape index: {}]
  %s4 = inlined_call_operand.vmem [shape: f32[3,3,128,128], index: 4, kind: input, shape index: {}]
  %s5 = inlined_call_operand.vmem [shape: f32[1,128], index: 5, kind: input, shape index: {}]
  %s6 = inlined_call_operand.vmem [shape: f32[1,128], index: 6, kind: input, shape index: {}]
  %s7 = inlined_call_operand.vmem [shape: f32[1,128], index: 7, kind: input, shape index: {}]
  %s8 = inlined_call_operand.vmem [shape: f32[3,3,128,128], index: 8, kind: input, shape index: {}]
  %s9 = inlined_call_operand.vmem [shape: f32[1,128], index: 9, kind: input, shape index: {}]
  %s10 = inlined_call_operand.hbm [shape: f32[2,16,16,128], index: 10, kind: output, shape index: {}]
  %s11 = sld [smem:[#allocation0]]
  $region73: #{res_blk_forward.1} parent=0
    _
  %s13 = ssub.s32 1, %s11
  %s14 = scalar_select 0, %s13, %s11
  $region1: #{res_blk_forward.1} parent=0
    #allocation3 [shape = 'u8[262144]{0}', space=vmem, size = 0x40000, scoped, tag = 'output window, operand 0']
    #allocation4 [shape = 's32[2]{0}', space=sflag, size = 0x8, scoped, tag = 'scoped memory for res_blk_forward.1']
    %15 = vsyncpa [#allocation4], 0
    %s16 = scalar_lea.sflag [#allocation4], 1
    %17 = vsyncpa %s16, 0
    loop: start=0, step=1, limit=4
    $region2: #{res_blk_forward.1} parent=1 // loop_pre_header
      _
    $region3: #{res_blk_forward.1} parent=1 // loop_header
      %s19 = sphi 0, %s23
      %p20 = scmp.ge.s32.totalorder %s19, 4
      %s29 = sphi 0, %s31
      %s32 = sphi 0, %s29
      %s33 = sphi 0, %s32
      %s49 = sphi 0, %s33
      %s53 = sphi 0, %s53
      %s55 = sphi 0, %s53
      %s56 = sphi 0, %s55
      %s70 = sphi 0, %s56
      %s74 = sphi 0, %s74
      %s76 = sphi 0, %s74
      %s77 = sphi 0, %s76
      %s91 = sphi 0, %s77
      %s95 = sphi 0, %s95
      %s97 = sphi 0, %s95
      %s98 = sphi 0, %s97
      %s112 = sphi 0, %s98
      %s116 = sphi 0, %s116
      %s118 = sphi 0, %s116
      %s119 = sphi 0, %s118
      %s133 = sphi 0, %s119
      %s137 = sphi 0, %s137
      %s139 = sphi 0, %s137
      %s140 = sphi 0, %s139
      %s154 = sphi 0, %s140
      %s158 = sphi 0, %s158
      %s160 = sphi 0, %s158
      %s161 = sphi 0, %s160
      %s175 = sphi 0, %s161
      %s179 = sphi 0, %s179
      %s181 = sphi 0, %s179
      %s182 = sphi 0, %s181
      %s196 = sphi 0, %s182
      %s200 = sphi 0, %s200
      %s202 = sphi 0, %s200
      %s203 = sphi 0, %s202
      %s217 = sphi 0, %s203
      %s221 = sphi 0, %s221
      %s223 = sphi 0, %s221
      %s224 = sphi 0, %s223
      %s238 = sphi 0, %s224
      %s244 = sphi 0, %s246
      %s247 = sphi 0, %s244
      %s248 = sphi 0, %s247
      %s264 = sphi 0, %s248
    $region4: #{res_blk_forward.1} parent=1 // loop_header_branch
      %22 = sbr.rel (%p20) target = $region8
    $region5: #{res_blk_forward.1} parent=1 // loop_body
      %s24 = ssub.s32 %s19, 1
      %s25 = ssub.s32 %s19, 2
      %s26 = sadd.s32 %s19, 1
      %s27 = ssub.s32 %s19, %s26
      %p28 = scmp.eq.s32.totalorder %s27, 0
      %s30 = sadd.s32 %s29, 1
      %s31 = scalar_select %p28, %s29, %s30
      %p34 = pneg %p28
      %p35 = scmp.eq.s32.totalorder %s19, 1
      %p36 = por %p34, %p35
      %p37 = scmp.ne.s32.totalorder %s29, %s32
      %p38 = scmp.eq.s32.totalorder %s19, 0
      %p39 = por %p37, %p38
      %p40 = scmp.ne.s32.totalorder %s29, %s32
      %p41 = scmp.eq.s32.totalorder %s24, 1
      %p42 = por %p40, %p41
      %p43 = scmp.ne.s32.totalorder %s32, %s33
      %p44 = scmp.eq.s32.totalorder %s24, 0
      %p45 = por %p43, %p44
      %p46 = scmp.ne.s32.totalorder %s32, %s33
      %p47 = scmp.eq.s32.totalorder %s25, 1
      %p48 = por %p46, %p47
      %p50 = scmp.ne.s32.totalorder %s33, %s49
      %p51 = scmp.eq.s32.totalorder %s25, 0
      %p52 = por %p50, %p51
      %s54 = sadd.s32 %s53, 1
      %p57 = scmp.eq.s32.totalorder %s19, 1
      %p58 = scmp.ne.s32.totalorder %s53, %s55
      %p59 = scmp.eq.s32.totalorder %s19, 0
      %p60 = por %p58, %p59
      %p61 = scmp.ne.s32.totalorder %s53, %s55
      %p62 = scmp.eq.s32.totalorder %s24, 1
      %p63 = por %p61, %p62
      %p64 = scmp.ne.s32.totalorder %s55, %s56
      %p65 = scmp.eq.s32.totalorder %s24, 0
      %p66 = por %p64, %p65
      %p67 = scmp.ne.s32.totalorder %s55, %s56
      %p68 = scmp.eq.s32.totalorder %s25, 1
      %p69 = por %p67, %p68
      %p71 = scmp.ne.s32.totalorder %s56, %s70
      %p72 = scmp.eq.s32.totalorder %s25, 0
      %p73 = por %p71, %p72
      %s75 = sadd.s32 %s74, 1
      %p78 = scmp.eq.s32.totalorder %s19, 1
      %p79 = scmp.ne.s32.totalorder %s74, %s76
      %p80 = scmp.eq.s32.totalorder %s19, 0
      %p81 = por %p79, %p80
      %p82 = scmp.ne.s32.totalorder %s74, %s76
      %p83 = scmp.eq.s32.totalorder %s24, 1
      %p84 = por %p82, %p83
      %p85 = scmp.ne.s32.totalorder %s76, %s77
      %p86 = scmp.eq.s32.totalorder %s24, 0
      %p87 = por %p85, %p86
      %p88 = scmp.ne.s32.totalorder %s76, %s77
      %p89 = scmp.eq.s32.totalorder %s25, 1
      %p90 = por %p88, %p89
      %p92 = scmp.ne.s32.totalorder %s77, %s91
      %p93 = scmp.eq.s32.totalorder %s25, 0
      %p94 = por %p92, %p93
      %s96 = sadd.s32 %s95, 1
      %p99 = scmp.eq.s32.totalorder %s19, 1
      %p100 = scmp.ne.s32.totalorder %s95, %s97
      %p101 = scmp.eq.s32.totalorder %s19, 0
      %p102 = por %p100, %p101
      %p103 = scmp.ne.s32.totalorder %s95, %s97
      %p104 = scmp.eq.s32.totalorder %s24, 1
      %p105 = por %p103, %p104
      %p106 = scmp.ne.s32.totalorder %s97, %s98
      %p107 = scmp.eq.s32.totalorder %s24, 0
      %p108 = por %p106, %p107
      %p109 = scmp.ne.s32.totalorder %s97, %s98
      %p110 = scmp.eq.s32.totalorder %s25, 1
      %p111 = por %p109, %p110
      %p113 = scmp.ne.s32.totalorder %s98, %s112
      %p114 = scmp.eq.s32.totalorder %s25, 0
      %p115 = por %p113, %p114
      %s117 = sadd.s32 %s116, 1
      %p120 = scmp.eq.s32.totalorder %s19, 1
      %p121 = scmp.ne.s32.totalorder %s116, %s118
      %p122 = scmp.eq.s32.totalorder %s19, 0
      %p123 = por %p121, %p122
      %p124 = scmp.ne.s32.totalorder %s116, %s118
      %p125 = scmp.eq.s32.totalorder %s24, 1
      %p126 = por %p124, %p125
      %p127 = scmp.ne.s32.totalorder %s118, %s119
      %p128 = scmp.eq.s32.totalorder %s24, 0
      %p129 = por %p127, %p128
      %p130 = scmp.ne.s32.totalorder %s118, %s119
      %p131 = scmp.eq.s32.totalorder %s25, 1
      %p132 = por %p130, %p131
      %p134 = scmp.ne.s32.totalorder %s119, %s133
      %p135 = scmp.eq.s32.totalorder %s25, 0
      %p136 = por %p134, %p135
      %s138 = sadd.s32 %s137, 1
      %p141 = scmp.eq.s32.totalorder %s19, 1
      %p142 = scmp.ne.s32.totalorder %s137, %s139
      %p143 = scmp.eq.s32.totalorder %s19, 0
      %p144 = por %p142, %p143
      %p145 = scmp.ne.s32.totalorder %s137, %s139
      %p146 = scmp.eq.s32.totalorder %s24, 1
      %p147 = por %p145, %p146
      %p148 = scmp.ne.s32.totalorder %s139, %s140
      %p149 = scmp.eq.s32.totalorder %s24, 0
      %p150 = por %p148, %p149
      %p151 = scmp.ne.s32.totalorder %s139, %s140
      %p152 = scmp.eq.s32.totalorder %s25, 1
      %p153 = por %p151, %p152
      %p155 = scmp.ne.s32.totalorder %s140, %s154
      %p156 = scmp.eq.s32.totalorder %s25, 0
      %p157 = por %p155, %p156
      %s159 = sadd.s32 %s158, 1
      %p162 = scmp.eq.s32.totalorder %s19, 1
      %p163 = scmp.ne.s32.totalorder %s158, %s160
      %p164 = scmp.eq.s32.totalorder %s19, 0
      %p165 = por %p163, %p164
      %p166 = scmp.ne.s32.totalorder %s158, %s160
      %p167 = scmp.eq.s32.totalorder %s24, 1
      %p168 = por %p166, %p167
      %p169 = scmp.ne.s32.totalorder %s160, %s161
      %p170 = scmp.eq.s32.totalorder %s24, 0
      %p171 = por %p169, %p170
      %p172 = scmp.ne.s32.totalorder %s160, %s161
      %p173 = scmp.eq.s32.totalorder %s25, 1
      %p174 = por %p172, %p173
      %p176 = scmp.ne.s32.totalorder %s161, %s175
      %p177 = scmp.eq.s32.totalorder %s25, 0
      %p178 = por %p176, %p177
      %s180 = sadd.s32 %s179, 1
      %p183 = scmp.eq.s32.totalorder %s19, 1
      %p184 = scmp.ne.s32.totalorder %s179, %s181
      %p185 = scmp.eq.s32.totalorder %s19, 0
      %p186 = por %p184, %p185
      %p187 = scmp.ne.s32.totalorder %s179, %s181
      %p188 = scmp.eq.s32.totalorder %s24, 1
      %p189 = por %p187, %p188
      %p190 = scmp.ne.s32.totalorder %s181, %s182
      %p191 = scmp.eq.s32.totalorder %s24, 0
      %p192 = por %p190, %p191
      %p193 = scmp.ne.s32.totalorder %s181, %s182
      %p194 = scmp.eq.s32.totalorder %s25, 1
      %p195 = por %p193, %p194
      %p197 = scmp.ne.s32.totalorder %s182, %s196
      %p198 = scmp.eq.s32.totalorder %s25, 0
      %p199 = por %p197, %p198
      %s201 = sadd.s32 %s200, 1
      %p204 = scmp.eq.s32.totalorder %s19, 1
      %p205 = scmp.ne.s32.totalorder %s200, %s202
      %p206 = scmp.eq.s32.totalorder %s19, 0
      %p207 = por %p205, %p206
      %p208 = scmp.ne.s32.totalorder %s200, %s202
      %p209 = scmp.eq.s32.totalorder %s24, 1
      %p210 = por %p208, %p209
      %p211 = scmp.ne.s32.totalorder %s202, %s203
      %p212 = scmp.eq.s32.totalorder %s24, 0
      %p213 = por %p211, %p212
      %p214 = scmp.ne.s32.totalorder %s202, %s203
      %p215 = scmp.eq.s32.totalorder %s25, 1
      %p216 = por %p214, %p215
      %p218 = scmp.ne.s32.totalorder %s203, %s217
      %p219 = scmp.eq.s32.totalorder %s25, 0
      %p220 = por %p218, %p219
      %s222 = sadd.s32 %s221, 1
      %p225 = scmp.eq.s32.totalorder %s19, 1
      %p226 = scmp.ne.s32.totalorder %s221, %s223
      %p227 = scmp.eq.s32.totalorder %s19, 0
      %p228 = por %p226, %p227
      %p229 = scmp.ne.s32.totalorder %s221, %s223
      %p230 = scmp.eq.s32.totalorder %s24, 1
      %p231 = por %p229, %p230
      %p232 = scmp.ne.s32.totalorder %s223, %s224
      %p233 = scmp.eq.s32.totalorder %s24, 0
      %p234 = por %p232, %p233
      %p235 = scmp.ne.s32.totalorder %s223, %s224
      %p236 = scmp.eq.s32.totalorder %s25, 1
      %p237 = por %p235, %p236
      %p239 = scmp.ne.s32.totalorder %s224, %s238
      %p240 = scmp.eq.s32.totalorder %s25, 0
      %p241 = por %p239, %p240
      %s242 = ssub.s32 %s19, %s26
      %p243 = scmp.eq.s32.totalorder %s242, 0
      %s245 = sadd.s32 %s244, 1
      %s246 = scalar_select %p243, %s244, %s245
      %p249 = pneg %p243
      %p250 = scmp.eq.s32.totalorder %s19, 1
      %p251 = por %p249, %p250
      %p252 = scmp.ne.s32.totalorder %s244, %s247
      %p253 = scmp.eq.s32.totalorder %s19, 0
      %p254 = por %p252, %p253
      %p255 = scmp.ne.s32.totalorder %s244, %s247
      %p256 = scmp.eq.s32.totalorder %s24, 1
      %p257 = por %p255, %p256
      %p258 = scmp.ne.s32.totalorder %s247, %s248
      %p259 = scmp.eq.s32.totalorder %s24, 0
      %p260 = por %p258, %p259
      %p261 = scmp.ne.s32.totalorder %s247, %s248
      %p262 = scmp.eq.s32.totalorder %s25, 1
      %p263 = por %p261, %p262
      %p265 = scmp.ne.s32.totalorder %s248, %s264
      %p266 = scmp.eq.s32.totalorder %s25, 0
      %p267 = por %p265, %p266
      %p268 = scmp.le.s32.totalorder 1, %s19
      %p269 = scmp.lt.s32.totalorder %s19, 3
      %p270 = pnand %p268, %p269
      %p271 = pneg %p270
      // Predicated region
      $region9: #{res_blk_forward.1} parent=5 // pred_check
        _
      $region10: #{res_blk_forward.1} parent=5 // pred_check_branch
        %273 = sbr.rel (%p270) target = $region12
      $region11: #{res_blk_forward.1} parent=5 // pred_region
        %s274 = ssub.s32 %s19, 1
        // Predicated region
        $region13: #{res_blk_forward.1} parent=11 // pred_check
          %p275 = pneg %p66
        $region14: #{res_blk_forward.1} parent=11 // pred_check_branch
          %277 = sbr.rel (%p275) target = $region16
        $region15: #{res_blk_forward.1} parent=11 // pred_region
          _
        $region16: #{res_blk_forward.1} parent=11 // pred_fallthru
          _
        // Predicated region
        $region17: #{res_blk_forward.1} parent=11 // pred_check
          %p278 = pneg %p87
        $region18: #{res_blk_forward.1} parent=11 // pred_check_branch
          %280 = sbr.rel (%p278) target = $region20
        $region19: #{res_blk_forward.1} parent=11 // pred_region
          _
        $region20: #{res_blk_forward.1} parent=11 // pred_fallthru
          _
        // Predicated region
        $region21: #{res_blk_forward.1} parent=11 // pred_check
          %p281 = pneg %p108
        $region22: #{res_blk_forward.1} parent=11 // pred_check_branch
          %283 = sbr.rel (%p281) target = $region24
        $region23: #{res_blk_forward.1} parent=11 // pred_region
          _
        $region24: #{res_blk_forward.1} parent=11 // pred_fallthru
          _
        // Predicated region
        $region25: #{res_blk_forward.1} parent=11 // pred_check
          %p284 = pneg %p129
        $region26: #{res_blk_forward.1} parent=11 // pred_check_branch
          %286 = sbr.rel (%p284) target = $region28
        $region27: #{res_blk_forward.1} parent=11 // pred_region
          _
        $region28: #{res_blk_forward.1} parent=11 // pred_fallthru
          _
        // Predicated region
        $region29: #{res_blk_forward.1} parent=11 // pred_check
          %p287 = pneg %p150
        $region30: #{res_blk_forward.1} parent=11 // pred_check_branch
          %289 = sbr.rel (%p287) target = $region32
        $region31: #{res_blk_forward.1} parent=11 // pred_region
          _
        $region32: #{res_blk_forward.1} parent=11 // pred_fallthru
          _
        // Predicated region
        $region33: #{res_blk_forward.1} parent=11 // pred_check
          %p290 = pneg %p171
        $region34: #{res_blk_forward.1} parent=11 // pred_check_branch
          %292 = sbr.rel (%p290) target = $region36
        $region35: #{res_blk_forward.1} parent=11 // pred_region
          _
        $region36: #{res_blk_forward.1} parent=11 // pred_fallthru
          _
        // Predicated region
        $region37: #{res_blk_forward.1} parent=11 // pred_check
          %p293 = pneg %p192
        $region38: #{res_blk_forward.1} parent=11 // pred_check_branch
          %295 = sbr.rel (%p293) target = $region40
        $region39: #{res_blk_forward.1} parent=11 // pred_region
          _
        $region40: #{res_blk_forward.1} parent=11 // pred_fallthru
          _
        // Predicated region
        $region41: #{res_blk_forward.1} parent=11 // pred_check
          %p296 = pneg %p213
        $region42: #{res_blk_forward.1} parent=11 // pred_check_branch
          %298 = sbr.rel (%p296) target = $region44
        $region43: #{res_blk_forward.1} parent=11 // pred_region
          _
        $region44: #{res_blk_forward.1} parent=11 // pred_fallthru
          _
        // Predicated region
        $region45: #{res_blk_forward.1} parent=11 // pred_check
          %p299 = pneg %p234
        $region46: #{res_blk_forward.1} parent=11 // pred_check_branch
          %301 = sbr.rel (%p299) target = $region48
        $region47: #{res_blk_forward.1} parent=11 // pred_region
          _
        $region48: #{res_blk_forward.1} parent=11 // pred_fallthru
          _
      $region12: #{res_blk_forward.1} parent=5 // pred_fallthru
        _
      %p302 = scmp.lt.s32.totalorder %s19, 2
      // Predicated region
      $region49: #{res_blk_forward.1} parent=5 // pred_check
        %p303 = pneg %p302
      $region50: #{res_blk_forward.1} parent=5 // pred_check_branch
        %305 = sbr.rel (%p303) target = $region52
      $region51: #{res_blk_forward.1} parent=5 // pred_region
        // Predicated region
        $region53: #{res_blk_forward.1} parent=51 // pred_check
          %p306 = pneg %p39
        $region54: #{res_blk_forward.1} parent=51 // pred_check_branch
          %308 = sbr.rel (%p306) target = $region56
        $region55: #{res_blk_forward.1} parent=51 // pred_region
          %p309 = scmp.lt.s32.totalorder %s19, 1
          %s310 = scalar_select %p309, %s19, 1
          %s311 = smul.addr %s310, 45
          %s312 = smul.addr %s311, 8
          %s313 = scalar_lea.vmem %s0, %s312
        $region56: #{res_blk_forward.1} parent=51 // pred_fallthru
          _
      $region52: #{res_blk_forward.1} parent=5 // pred_fallthru
        _
      %p314 = scmp.le.s32.totalorder 1, %s19
      %p315 = scmp.lt.s32.totalorder %s19, 3
      %p316 = pnand %p314, %p315
      %p317 = pneg %p316
      // Predicated region
      $region57: #{res_blk_forward.1} parent=5 // pred_check
        _
      $region58: #{res_blk_forward.1} parent=5 // pred_check_branch
        %319 = sbr.rel (%p316) target = $region60
      $region59: #{res_blk_forward.1} parent=5 // pred_region
        %s320 = ssub.s32 %s19, 1
        %p321 = scmp.lt.s32.totalorder %s24, 1
        %s322 = scalar_select %p321, %s24, 1
        %s323 = smul.addr %s322, 45
        %s324 = smul.addr %s323, 8
        %s325 = scalar_lea.vmem %s0, %s324
        %p326 = pneg %p45
        %p327 = pneg %p42
        %p328 = pneg %p66
        %p329 = pneg %p63
        %p330 = pneg %p87
        %p331 = pneg %p84
        %p332 = pneg %p108
        %p333 = pneg %p105
        %p334 = pneg %p129
        %p335 = pneg %p126
        %p336 = pneg %p150
        %p337 = pneg %p147
        %p338 = pneg %p171
        %p339 = pneg %p168
        %p340 = pneg %p192
        %p341 = pneg %p189
        %p342 = pneg %p213
        %p343 = pneg %p210
        %p344 = pneg %p234
        %p345 = pneg %p231
        %p346 = pneg %p260
        %p347 = pneg %p257
        %s348 = sand.u32 %s247, 1
        %s349 = scalar_lea.sflag [#allocation4], %s348
        %s350 = sand.u32 %s247, 1
        %s351 = smul.addr %s350, 256
        %s352 = scalar_lea.vmem [#allocation3], %s351
        %p353 = scmp.lt.s32.totalorder %s24, 1
        %s354 = scalar_select %p353, %s24, 1
        %s355 = smul.addr %s354, 45
        %s356 = smul.addr %s355, 8
        %s357 = scalar_lea.vmem %s0, %s356
        %v358 = vld [vmem:[%s357 + $0x24] sm:$0xff]
        %v359 = vld [vmem:[%s357 + $0x2c] sm:$0xff]
        %v360 = vld [vmem:[%s357 + $0x34] sm:$0xff]
        %v361 = vld [vmem:[%s357 + $0x3c] sm:$0xff]
        %v362 = vld [vmem:[%s357 + $0x44] sm:$0xff]
        %v363 = vld [vmem:[%s357 + $0x4c] sm:$0xff]
        %v364 = vld [vmem:[%s357 + $0x54] sm:$0xff]
        %v365 = vld [vmem:[%s357 + $0x5c] sm:$0xff]
        %v366 = vld [vmem:[%s357 + $0x64] sm:$0xff]
        %v367 = vld [vmem:[%s357 + $0x6c] sm:$0xff]
        %v368 = vld [vmem:[%s357 + $0x74] sm:$0xff]
        %v369 = vld [vmem:[%s357 + $0x7c] sm:$0xff]
        %v370 = vld [vmem:[%s357 + $0x84] sm:$0xff]
        %v371 = vld [vmem:[%s357 + $0x8c] sm:$0xff]
        %v372 = vld [vmem:[%s357 + $0x94] sm:$0xff]
        %v373 = vld [vmem:[%s357 + $0x9c] sm:$0xff]
        %v374 = vld [vmem:[%s357 + $0xa4] sm:$0xff]
        %v375 = vld [vmem:[%s357 + $0xac] sm:$0xff]
        %v376 = vld [vmem:[%s357 + $0xb4] sm:$0xff]
        %v377 = vld [vmem:[%s357 + $0xbc] sm:$0xff]
        %v378 = vld [vmem:[%s357 + $0xc4] sm:$0xff]
        %v379 = vld [vmem:[%s357 + $0xcc] sm:$0xff]
        %v380 = vld [vmem:[%s357 + $0xd4] sm:$0xff]
        %v381 = vld [vmem:[%s357 + $0xdc] sm:$0xff]
        %v382 = vld [vmem:[%s357 + $0xe4] sm:$0xff]
        %v383 = vld [vmem:[%s357 + $0xec] sm:$0xff]
        %v384 = vld [vmem:[%s357 + $0xf4] sm:$0xff]
        %v385 = vld [vmem:[%s357 + $0xfc] sm:$0xff]
        %v386 = vld [vmem:[%s357 + $0x104] sm:$0xff]
        %v387 = vld [vmem:[%s357 + $0x10c] sm:$0xff]
        %v388 = vld [vmem:[%s357 + $0x114] sm:$0xff]
        %v389 = vld [vmem:[%s357 + $0x11c] sm:$0xff]
        %v390 = vld [vmem:[%s357 + $0x124] sm:$0xff]
        %v391 = vld [vmem:[%s357 + $0x12c] sm:$0xff]
        %v392 = vld [vmem:[%s357 + $0x134] sm:$0xff]
        %v393 = vld [vmem:[%s357 + $0x13c] sm:$0xff]
        %v394 = vld [vmem:[%s1] sm:$0xff]
        %v395 = vld [vmem:[%s1 + $0x8] sm:$0xff]
        %v396 = vld [vmem:[%s1 + $0x10] sm:$0xff]
        %v397 = vld [vmem:[%s1 + $0x18] sm:$0xff]
        %v398 = vld [vmem:[%s1 + $0x20] sm:$0xff]
        %v399 = vld [vmem:[%s1 + $0x28] sm:$0xff]
        %v400 = vld [vmem:[%s1 + $0x30] sm:$0xff]
        %v401 = vld [vmem:[%s1 + $0x38] sm:$0xff]
        %v402 = vld [vmem:[%s1 + $0x40] sm:$0xff]
        %v403 = vld [vmem:[%s1 + $0x48] sm:$0xff]
        %v404 = vld [vmem:[%s1 + $0x50] sm:$0xff]
        %v405 = vld [vmem:[%s1 + $0x58] sm:$0xff]
        %v406 = vld [vmem:[%s1 + $0x60] sm:$0xff]
        %v407 = vld [vmem:[%s1 + $0x68] sm:$0xff]
        %v408 = vld [vmem:[%s1 + $0x70] sm:$0xff]
        %v409 = vld [vmem:[%s1 + $0x78] sm:$0xff]
        %v410 = vld [vmem:[%s1 + $0x80] sm:$0xff]
        %v411 = vld [vmem:[%s1 + $0x88] sm:$0xff]
        %v412 = vld [vmem:[%s1 + $0x90] sm:$0xff]
        %v413 = vld [vmem:[%s1 + $0x98] sm:$0xff]
        %v414 = vld [vmem:[%s1 + $0xa0] sm:$0xff]
        %v415 = vld [vmem:[%s1 + $0xa8] sm:$0xff]
        %v416 = vld [vmem:[%s1 + $0xb0] sm:$0xff]
        %v417 = vld [vmem:[%s1 + $0xb8] sm:$0xff]
        %v418 = vld [vmem:[%s1 + $0xc0] sm:$0xff]
        %v419 = vld [vmem:[%s1 + $0xc8] sm:$0xff]
        %v420 = vld [vmem:[%s1 + $0xd0] sm:$0xff]
        %v421 = vld [vmem:[%s1 + $0xd8] sm:$0xff]
        %v422 = vld [vmem:[%s1 + $0xe0] sm:$0xff]
        %v423 = vld [vmem:[%s1 + $0xe8] sm:$0xff]
        %v424 = vld [vmem:[%s1 + $0xf0] sm:$0xff]
        %v425 = vld [vmem:[%s1 + $0xf8] sm:$0xff]
        %v426 = vld [vmem:[%s1 + $0x100] sm:$0xff]
        %v427 = vld [vmem:[%s1 + $0x108] sm:$0xff]
        %v428 = vld [vmem:[%s1 + $0x110] sm:$0xff]
        %v429 = vld [vmem:[%s1 + $0x118] sm:$0xff]
        %v430 = vadd.f32 %v358, %v359
        %v431 = vadd.f32 %v430, %v360
        %v432 = vadd.f32 %v431, %v361
        %v433 = vadd.f32 %v432, %v362
        %v434 = vadd.f32 %v433, %v363
        %v435 = vadd.f32 %v434, %v364
        %v436 = vadd.f32 %v435, %v365
        %v437 = vadd.f32 %v436, %v366
        %v438 = vadd.f32 %v437, %v367
        %v439 = vadd.f32 %v438, %v368
        %v440 = vadd.f32 %v439, %v369
        %v441 = vadd.f32 %v440, %v370
        %v442 = vadd.f32 %v441, %v371
        %v443 = vadd.f32 %v442, %v372
        %v444 = vadd.f32 %v443, %v373
        %v445 = vadd.f32 %v444, %v374
        %v446 = vadd.f32 %v445, %v375
        %v447 = vadd.f32 %v446, %v376
        %v448 = vadd.f32 %v447, %v377
        %v449 = vadd.f32 %v448, %v378
        %v450 = vadd.f32 %v449, %v379
        %v451 = vadd.f32 %v450, %v380
        %v452 = vadd.f32 %v451, %v381
        %v453 = vadd.f32 %v452, %v382
        %v454 = vadd.f32 %v453, %v383
        %v455 = vadd.f32 %v454, %v384
        %v456 = vadd.f32 %v455, %v385
        %v457 = vadd.f32 %v456, %v386
        %v458 = vadd.f32 %v457, %v387
        %v459 = vadd.f32 %v458, %v388
        %v460 = vadd.f32 %v459, %v389
        %v461 = vadd.f32 %v460, %v390
        %v462 = vadd.f32 %v461, %v391
        %v463 = vadd.f32 %v462, %v392
        %v464 = vadd.f32 %v463, %v393
        %v465 = vrot.slane %v464, 4
        %v466 = vadd.f32 %v464, %v465
        %v467 = vrot.slane %v466, 2
        %v468 = vadd.f32 %v466, %v467
        %v469 = vrot.slane %v468, 1
        %v470 = vadd.f32 %v468, %v469
        %v471 = vmul.f32 %v470, 0.00390625
        %v472 = vsub.f32 %v358, %v471
        %v473 = vsub.f32 %v359, %v471
        %v474 = vsub.f32 %v360, %v471
        %v475 = vsub.f32 %v361, %v471
        %v476 = vsub.f32 %v362, %v471
        %v477 = vsub.f32 %v363, %v471
        %v478 = vsub.f32 %v364, %v471
        %v479 = vsub.f32 %v365, %v471
        %v480 = vsub.f32 %v366, %v471
        %v481 = vsub.f32 %v367, %v471
        %v482 = vsub.f32 %v368, %v471
        %v483 = vsub.f32 %v369, %v471
        %v484 = vsub.f32 %v370, %v471
        %v485 = vsub.f32 %v371, %v471
        %v486 = vsub.f32 %v372, %v471
        %v487 = vsub.f32 %v373, %v471
        %v488 = vsub.f32 %v374, %v471
        %v489 = vsub.f32 %v375, %v471
        %v490 = vsub.f32 %v376, %v471
        %v491 = vsub.f32 %v377, %v471
        %v492 = vsub.f32 %v378, %v471
        %v493 = vsub.f32 %v379, %v471
        %v494 = vsub.f32 %v380, %v471
        %v495 = vsub.f32 %v381, %v471
        %v496 = vsub.f32 %v382, %v471
        %v497 = vsub.f32 %v383, %v471
        %v498 = vsub.f32 %v384, %v471
        %v499 = vsub.f32 %v385, %v471
        %v500 = vsub.f32 %v386, %v471
        %v501 = vsub.f32 %v387, %v471
        %v502 = vsub.f32 %v388, %v471
        %v503 = vsub.f32 %v389, %v471
        %v504 = vsub.f32 %v390, %v471
        %v505 = vsub.f32 %v391, %v471
        %v506 = vsub.f32 %v392, %v471
        %v507 = vsub.f32 %v393, %v471
        %509 = vset.pattern.permute.xlu0 0
        %510 = vperm.xlu0 %509, %v394
        %v511 = vpop.permute.xlu0 %510
        %514 = vset.pattern.permute.xlu0 0
        %515 = vperm.xlu0 %514, %v395
        %v516 = vpop.permute.xlu0 %515
        %519 = vset.pattern.permute.xlu0 0
        %520 = vperm.xlu0 %519, %v396
        %v521 = vpop.permute.xlu0 %520
        %524 = vset.pattern.permute.xlu0 0
        %525 = vperm.xlu0 %524, %v397
        %v526 = vpop.permute.xlu0 %525
        %529 = vset.pattern.permute.xlu0 0
        %530 = vperm.xlu0 %529, %v398
        %v531 = vpop.permute.xlu0 %530
        %534 = vset.pattern.permute.xlu0 0
        %535 = vperm.xlu0 %534, %v399
        %v536 = vpop.permute.xlu0 %535
        %539 = vset.pattern.permute.xlu0 0
        %540 = vperm.xlu0 %539, %v400
        %v541 = vpop.permute.xlu0 %540
        %544 = vset.pattern.permute.xlu0 0
        %545 = vperm.xlu0 %544, %v401
        %v546 = vpop.permute.xlu0 %545
        %549 = vset.pattern.permute.xlu0 0
        %550 = vperm.xlu0 %549, %v402
        %v551 = vpop.permute.xlu0 %550
        %554 = vset.pattern.permute.xlu0 0
        %555 = vperm.xlu0 %554, %v403
        %v556 = vpop.permute.xlu0 %555
        %559 = vset.pattern.permute.xlu0 0
        %560 = vperm.xlu0 %559, %v404
        %v561 = vpop.permute.xlu0 %560
        %564 = vset.pattern.permute.xlu0 0
        %565 = vperm.xlu0 %564, %v405
        %v566 = vpop.permute.xlu0 %565
        %569 = vset.pattern.permute.xlu0 0
        %570 = vperm.xlu0 %569, %v406
        %v571 = vpop.permute.xlu0 %570
        %574 = vset.pattern.permute.xlu0 0
        %575 = vperm.xlu0 %574, %v407
        %v576 = vpop.permute.xlu0 %575
        %579 = vset.pattern.permute.xlu0 0
        %580 = vperm.xlu0 %579, %v408
        %v581 = vpop.permute.xlu0 %580
        %584 = vset.pattern.permute.xlu0 0
        %585 = vperm.xlu0 %584, %v409
        %v586 = vpop.permute.xlu0 %585
        %589 = vset.pattern.permute.xlu0 0
        %590 = vperm.xlu0 %589, %v410
        %v591 = vpop.permute.xlu0 %590
        %594 = vset.pattern.permute.xlu0 0
        %595 = vperm.xlu0 %594, %v411
        %v596 = vpop.permute.xlu0 %595
        %599 = vset.pattern.permute.xlu0 0
        %600 = vperm.xlu0 %599, %v412
        %v601 = vpop.permute.xlu0 %600
        %604 = vset.pattern.permute.xlu0 0
        %605 = vperm.xlu0 %604, %v413
        %v606 = vpop.permute.xlu0 %605
        %609 = vset.pattern.permute.xlu0 0
        %610 = vperm.xlu0 %609, %v414
        %v611 = vpop.permute.xlu0 %610
        %614 = vset.pattern.permute.xlu0 0
        %615 = vperm.xlu0 %614, %v415
        %v616 = vpop.permute.xlu0 %615
        %619 = vset.pattern.permute.xlu0 0
        %620 = vperm.xlu0 %619, %v416
        %v621 = vpop.permute.xlu0 %620
        %624 = vset.pattern.permute.xlu0 0
        %625 = vperm.xlu0 %624, %v417
        %v626 = vpop.permute.xlu0 %625
        %629 = vset.pattern.permute.xlu0 0
        %630 = vperm.xlu0 %629, %v418
        %v631 = vpop.permute.xlu0 %630
        %634 = vset.pattern.permute.xlu0 0
        %635 = vperm.xlu0 %634, %v419
        %v636 = vpop.permute.xlu0 %635
        %639 = vset.pattern.permute.xlu0 0
        %640 = vperm.xlu0 %639, %v420
        %v641 = vpop.permute.xlu0 %640
        %644 = vset.pattern.permute.xlu0 0
        %645 = vperm.xlu0 %644, %v421
        %v646 = vpop.permute.xlu0 %645
        %649 = vset.pattern.permute.xlu0 0
        %650 = vperm.xlu0 %649, %v422
        %v651 = vpop.permute.xlu0 %650
        %654 = vset.pattern.permute.xlu0 0
        %655 = vperm.xlu0 %654, %v423
        %v656 = vpop.permute.xlu0 %655
        %659 = vset.pattern.permute.xlu0 0
        %660 = vperm.xlu0 %659, %v424
        %v661 = vpop.permute.xlu0 %660
        %664 = vset.pattern.permute.xlu0 0
        %665 = vperm.xlu0 %664, %v425
        %v666 = vpop.permute.xlu0 %665
        %669 = vset.pattern.permute.xlu0 0
        %670 = vperm.xlu0 %669, %v426
        %v671 = vpop.permute.xlu0 %670
        %674 = vset.pattern.permute.xlu0 0
        %675 = vperm.xlu0 %674, %v427
        %v676 = vpop.permute.xlu0 %675
        %679 = vset.pattern.permute.xlu0 0
        %680 = vperm.xlu0 %679, %v428
        %v681 = vpop.permute.xlu0 %680
        %684 = vset.pattern.permute.xlu0 0
        %685 = vperm.xlu0 %684, %v429
        %v686 = vpop.permute.xlu0 %685
        %v688 = vmul.f32 %v472, %v511
        %v689 = vmul.f32 %v473, %v516
        %v690 = vmul.f32 %v474, %v521
        %v691 = vmul.f32 %v475, %v526
        %v692 = vmul.f32 %v476, %v531
        %v693 = vmul.f32 %v477, %v536
        %v694 = vmul.f32 %v478, %v541
        %v695 = vmul.f32 %v479, %v546
        %v696 = vmul.f32 %v480, %v551
        %v697 = vmul.f32 %v481, %v556
        %v698 = vmul.f32 %v482, %v561
        %v699 = vmul.f32 %v483, %v566
        %v700 = vmul.f32 %v484, %v571
        %v701 = vmul.f32 %v485, %v576
        %v702 = vmul.f32 %v486, %v581
        %v703 = vmul.f32 %v487, %v586
        %v704 = vmul.f32 %v488, %v591
        %v705 = vmul.f32 %v489, %v596
        %v706 = vmul.f32 %v490, %v601
        %v707 = vmul.f32 %v491, %v606
        %v708 = vmul.f32 %v492, %v611
        %v709 = vmul.f32 %v493, %v616
        %v710 = vmul.f32 %v494, %v621
        %v711 = vmul.f32 %v495, %v626
        %v712 = vmul.f32 %v496, %v631
        %v713 = vmul.f32 %v497, %v636
        %v714 = vmul.f32 %v498, %v641
        %v715 = vmul.f32 %v499, %v646
        %v716 = vmul.f32 %v500, %v651
        %v717 = vmul.f32 %v501, %v656
        %v718 = vmul.f32 %v502, %v661
        %v719 = vmul.f32 %v503, %v666
        %v720 = vmul.f32 %v504, %v671
        %v721 = vmul.f32 %v505, %v676
        %v722 = vmul.f32 %v506, %v681
        %v723 = vmul.f32 %v507, %v686
        %v724 = vmul.f32 %v688, %v688
        %v725 = vmul.f32 %v689, %v689
        %v726 = vmul.f32 %v690, %v690
        %v727 = vmul.f32 %v691, %v691
        %v728 = vmul.f32 %v692, %v692
        %v729 = vmul.f32 %v693, %v693
        %v730 = vmul.f32 %v694, %v694
        %v731 = vmul.f32 %v695, %v695
        %v732 = vmul.f32 %v696, %v696
        %v733 = vmul.f32 %v697, %v697
        %v734 = vmul.f32 %v698, %v698
        %v735 = vmul.f32 %v699, %v699
        %v736 = vmul.f32 %v700, %v700
        %v737 = vmul.f32 %v701, %v701
        %v738 = vmul.f32 %v702, %v702
        %v739 = vmul.f32 %v703, %v703
        %v740 = vmul.f32 %v704, %v704
        %v741 = vmul.f32 %v705, %v705
        %v742 = vmul.f32 %v706, %v706
        %v743 = vmul.f32 %v707, %v707
        %v744 = vmul.f32 %v708, %v708
        %v745 = vmul.f32 %v709, %v709
        %v746 = vmul.f32 %v710, %v710
        %v747 = vmul.f32 %v711, %v711
        %v748 = vmul.f32 %v712, %v712
        %v749 = vmul.f32 %v713, %v713
        %v750 = vmul.f32 %v714, %v714
        %v751 = vmul.f32 %v715, %v715
        %v752 = vmul.f32 %v716, %v716
        %v753 = vmul.f32 %v717, %v717
        %v754 = vmul.f32 %v718, %v718
        %v755 = vmul.f32 %v719, %v719
        %v756 = vmul.f32 %v720, %v720
        %v757 = vmul.f32 %v721, %v721
        %v758 = vmul.f32 %v722, %v722
        %v759 = vmul.f32 %v723, %v723
        %v760 = vadd.f32 %v724, %v725
        %v761 = vadd.f32 %v760, %v726
        %v762 = vadd.f32 %v761, %v727
        %v763 = vadd.f32 %v762, %v728
        %v764 = vadd.f32 %v763, %v729
        %v765 = vadd.f32 %v764, %v730
        %v766 = vadd.f32 %v765, %v731
        %v767 = vadd.f32 %v766, %v732
        %v768 = vadd.f32 %v767, %v733
        %v769 = vadd.f32 %v768, %v734
        %v770 = vadd.f32 %v769, %v735
        %v771 = vadd.f32 %v770, %v736
        %v772 = vadd.f32 %v771, %v737
        %v773 = vadd.f32 %v772, %v738
        %v774 = vadd.f32 %v773, %v739
        %v775 = vadd.f32 %v774, %v740
        %v776 = vadd.f32 %v775, %v741
        %v777 = vadd.f32 %v776, %v742
        %v778 = vadd.f32 %v777, %v743
        %v779 = vadd.f32 %v778, %v744
        %v780 = vadd.f32 %v779, %v745
        %v781 = vadd.f32 %v780, %v746
        %v782 = vadd.f32 %v781, %v747
        %v783 = vadd.f32 %v782, %v748
        %v784 = vadd.f32 %v783, %v749
        %v785 = vadd.f32 %v784, %v750
        %v786 = vadd.f32 %v785, %v751
        %v787 = vadd.f32 %v786, %v752
        %v788 = vadd.f32 %v787, %v753
        %v789 = vadd.f32 %v788, %v754
        %v790 = vadd.f32 %v789, %v755
        %v791 = vadd.f32 %v790, %v756
        %v792 = vadd.f32 %v791, %v757
        %v793 = vadd.f32 %v792, %v758
        %v794 = vadd.f32 %v793, %v759
        %v795 = vrot.slane %v794, 4
        %v796 = vadd.f32 %v794, %v795
        %v797 = vrot.slane %v796, 2
        %v798 = vadd.f32 %v796, %v797
        %v799 = vrot.slane %v798, 1
        %v800 = vadd.f32 %v798, %v799
        %v801 = vmul.f32 %v800, 0.00390625
        %v802 = vadd.f32 %v801, 1e-05
        %v803 = vrsqrt.pop %v802
        %v804 = vmul.f32 %v688, %v803
        %v805 = vmul.f32 %v689, %v803
        %v806 = vmul.f32 %v690, %v803
        %v807 = vmul.f32 %v691, %v803
        %v808 = vmul.f32 %v692, %v803
        %v809 = vmul.f32 %v693, %v803
        %v810 = vmul.f32 %v694, %v803
        %v811 = vmul.f32 %v695, %v803
        %v812 = vmul.f32 %v696, %v803
        %v813 = vmul.f32 %v697, %v803
        %v814 = vmul.f32 %v698, %v803
        %v815 = vmul.f32 %v699, %v803
        %v816 = vmul.f32 %v700, %v803
        %v817 = vmul.f32 %v701, %v803
        %v818 = vmul.f32 %v702, %v803
        %v819 = vmul.f32 %v703, %v803
        %v820 = vmul.f32 %v704, %v803
        %v821 = vmul.f32 %v705, %v803
        %v822 = vmul.f32 %v706, %v803
        %v823 = vmul.f32 %v707, %v803
        %v824 = vmul.f32 %v708, %v803
        %v825 = vmul.f32 %v709, %v803
        %v826 = vmul.f32 %v710, %v803
        %v827 = vmul.f32 %v711, %v803
        %v828 = vmul.f32 %v712, %v803
        %v829 = vmul.f32 %v713, %v803
        %v830 = vmul.f32 %v714, %v803
        %v831 = vmul.f32 %v715, %v803
        %v832 = vmul.f32 %v716, %v803
        %v833 = vmul.f32 %v717, %v803
        %v834 = vmul.f32 %v718, %v803
        %v835 = vmul.f32 %v719, %v803
        %v836 = vmul.f32 %v720, %v803
        %v837 = vmul.f32 %v721, %v803
        %v838 = vmul.f32 %v722, %v803
        %v839 = vmul.f32 %v723, %v803
        %v840 = vld [vmem:[%s2] sm:$0x1]
        %v842 = vlaneseq
        %v843 = vshrl.u32 %v842, 7
        %v844 = vsub.s32 0, %v843
        %v845 = vrot.slane %v840, %v844
        %v847 = vmul.f32 %v804, %v845
        %v848 = vmul.f32 %v805, %v845
        %v849 = vmul.f32 %v806, %v845
        %v850 = vmul.f32 %v807, %v845
        %v851 = vmul.f32 %v808, %v845
        %v852 = vmul.f32 %v809, %v845
        %v853 = vmul.f32 %v810, %v845
        %v854 = vmul.f32 %v811, %v845
        %v855 = vmul.f32 %v812, %v845
        %v856 = vmul.f32 %v813, %v845
        %v857 = vmul.f32 %v814, %v845
        %v858 = vmul.f32 %v815, %v845
        %v859 = vmul.f32 %v816, %v845
        %v860 = vmul.f32 %v817, %v845
        %v861 = vmul.f32 %v818, %v845
        %v862 = vmul.f32 %v819, %v845
        %v863 = vmul.f32 %v820, %v845
        %v864 = vmul.f32 %v821, %v845
        %v865 = vmul.f32 %v822, %v845
        %v866 = vmul.f32 %v823, %v845
        %v867 = vmul.f32 %v824, %v845
        %v868 = vmul.f32 %v825, %v845
        %v869 = vmul.f32 %v826, %v845
        %v870 = vmul.f32 %v827, %v845
        %v871 = vmul.f32 %v828, %v845
        %v872 = vmul.f32 %v829, %v845
        %v873 = vmul.f32 %v830, %v845
        %v874 = vmul.f32 %v831, %v845
        %v875 = vmul.f32 %v832, %v845
        %v876 = vmul.f32 %v833, %v845
        %v877 = vmul.f32 %v834, %v845
        %v878 = vmul.f32 %v835, %v845
        %v879 = vmul.f32 %v836, %v845
        %v880 = vmul.f32 %v837, %v845
        %v881 = vmul.f32 %v838, %v845
        %v882 = vmul.f32 %v839, %v845
        %v883 = vld [vmem:[%s3] sm:$0x1]
        %v885 = vlaneseq
        %v886 = vshrl.u32 %v885, 7
        %v887 = vsub.s32 0, %v886
        %v888 = vrot.slane %v883, %v887
        %v890 = vadd.f32 %v847, %v888
        %v891 = vadd.f32 %v848, %v888
        %v892 = vadd.f32 %v849, %v888
        %v893 = vadd.f32 %v850, %v888
        %v894 = vadd.f32 %v851, %v888
        %v895 = vadd.f32 %v852, %v888
        %v896 = vadd.f32 %v853, %v888
        %v897 = vadd.f32 %v854, %v888
        %v898 = vadd.f32 %v855, %v888
        %v899 = vadd.f32 %v856, %v888
        %v900 = vadd.f32 %v857, %v888
        %v901 = vadd.f32 %v858, %v888
        %v902 = vadd.f32 %v859, %v888
        %v903 = vadd.f32 %v860, %v888
        %v904 = vadd.f32 %v861, %v888
        %v905 = vadd.f32 %v862, %v888
        %v906 = vadd.f32 %v863, %v888
        %v907 = vadd.f32 %v864, %v888
        %v908 = vadd.f32 %v865, %v888
        %v909 = vadd.f32 %v866, %v888
        %v910 = vadd.f32 %v867, %v888
        %v911 = vadd.f32 %v868, %v888
        %v912 = vadd.f32 %v869, %v888
        %v913 = vadd.f32 %v870, %v888
        %v914 = vadd.f32 %v871, %v888
        %v915 = vadd.f32 %v872, %v888
        %v916 = vadd.f32 %v873, %v888
        %v917 = vadd.f32 %v874, %v888
        %v918 = vadd.f32 %v875, %v888
        %v919 = vadd.f32 %v876, %v888
        %v920 = vadd.f32 %v877, %v888
        %v921 = vadd.f32 %v878, %v888
        %v922 = vadd.f32 %v879, %v888
        %v923 = vadd.f32 %v880, %v888
        %v924 = vadd.f32 %v881, %v888
        %v925 = vadd.f32 %v882, %v888
        %vm926 = vcmp.ge.f32.partialorder %v890, 0.0
        %vm927 = vcmp.ge.f32.partialorder %v891, 0.0
        %vm928 = vcmp.ge.f32.partialorder %v892, 0.0
        %vm929 = vcmp.ge.f32.partialorder %v893, 0.0
        %vm930 = vcmp.ge.f32.partialorder %v894, 0.0
        %vm931 = vcmp.ge.f32.partialorder %v895, 0.0
        %vm932 = vcmp.ge.f32.partialorder %v896, 0.0
        %vm933 = vcmp.ge.f32.partialorder %v897, 0.0
        %vm934 = vcmp.ge.f32.partialorder %v898, 0.0
        %vm935 = vcmp.ge.f32.partialorder %v899, 0.0
        %vm936 = vcmp.ge.f32.partialorder %v900, 0.0
        %vm937 = vcmp.ge.f32.partialorder %v901, 0.0
        %vm938 = vcmp.ge.f32.partialorder %v902, 0.0
        %vm939 = vcmp.ge.f32.partialorder %v903, 0.0
        %vm940 = vcmp.ge.f32.partialorder %v904, 0.0
        %vm941 = vcmp.ge.f32.partialorder %v905, 0.0
        %vm942 = vcmp.ge.f32.partialorder %v906, 0.0
        %vm943 = vcmp.ge.f32.partialorder %v907, 0.0
        %vm944 = vcmp.ge.f32.partialorder %v908, 0.0
        %vm945 = vcmp.ge.f32.partialorder %v909, 0.0
        %vm946 = vcmp.ge.f32.partialorder %v910, 0.0
        %vm947 = vcmp.ge.f32.partialorder %v911, 0.0
        %vm948 = vcmp.ge.f32.partialorder %v912, 0.0
        %vm949 = vcmp.ge.f32.partialorder %v913, 0.0
        %vm950 = vcmp.ge.f32.partialorder %v914, 0.0
        %vm951 = vcmp.ge.f32.partialorder %v915, 0.0
        %vm952 = vcmp.ge.f32.partialorder %v916, 0.0
        %vm953 = vcmp.ge.f32.partialorder %v917, 0.0
        %vm954 = vcmp.ge.f32.partialorder %v918, 0.0
        %vm955 = vcmp.ge.f32.partialorder %v919, 0.0
        %vm956 = vcmp.ge.f32.partialorder %v920, 0.0
        %vm957 = vcmp.ge.f32.partialorder %v921, 0.0
        %vm958 = vcmp.ge.f32.partialorder %v922, 0.0
        %vm959 = vcmp.ge.f32.partialorder %v923, 0.0
        %vm960 = vcmp.ge.f32.partialorder %v924, 0.0
        %vm961 = vcmp.ge.f32.partialorder %v925, 0.0
        %v962 = vmul.f32 %v890, 0.2
        %v963 = vmul.f32 %v891, 0.2
        %v964 = vmul.f32 %v892, 0.2
        %v965 = vmul.f32 %v893, 0.2
        %v966 = vmul.f32 %v894, 0.2
        %v967 = vmul.f32 %v895, 0.2
        %v968 = vmul.f32 %v896, 0.2
        %v969 = vmul.f32 %v897, 0.2
        %v970 = vmul.f32 %v898, 0.2
        %v971 = vmul.f32 %v899, 0.2
        %v972 = vmul.f32 %v900, 0.2
        %v973 = vmul.f32 %v901, 0.2
        %v974 = vmul.f32 %v902, 0.2
        %v975 = vmul.f32 %v903, 0.2
        %v976 = vmul.f32 %v904, 0.2
        %v977 = vmul.f32 %v905, 0.2
        %v978 = vmul.f32 %v906, 0.2
        %v979 = vmul.f32 %v907, 0.2
        %v980 = vmul.f32 %v908, 0.2
        %v981 = vmul.f32 %v909, 0.2
        %v982 = vmul.f32 %v910, 0.2
        %v983 = vmul.f32 %v911, 0.2
        %v984 = vmul.f32 %v912, 0.2
        %v985 = vmul.f32 %v913, 0.2
        %v986 = vmul.f32 %v914, 0.2
        %v987 = vmul.f32 %v915, 0.2
        %v988 = vmul.f32 %v916, 0.2
        %v989 = vmul.f32 %v917, 0.2
        %v990 = vmul.f32 %v918, 0.2
        %v991 = vmul.f32 %v919, 0.2
        %v992 = vmul.f32 %v920, 0.2
        %v993 = vmul.f32 %v921, 0.2
        %v994 = vmul.f32 %v922, 0.2
        %v995 = vmul.f32 %v923, 0.2
        %v996 = vmul.f32 %v924, 0.2
        %v997 = vmul.f32 %v925, 0.2
        %v998 = vsel %vm926, %v890, %v962
        %v999 = vsel %vm927, %v891, %v963
        %v1000 = vsel %vm928, %v892, %v964
        %v1001 = vsel %vm929, %v893, %v965
        %v1002 = vsel %vm930, %v894, %v966
        %v1003 = vsel %vm931, %v895, %v967
        %v1004 = vsel %vm932, %v896, %v968
        %v1005 = vsel %vm933, %v897, %v969
        %v1006 = vsel %vm934, %v898, %v970
        %v1007 = vsel %vm935, %v899, %v971
        %v1008 = vsel %vm936, %v900, %v972
        %v1009 = vsel %vm937, %v901, %v973
        %v1010 = vsel %vm938, %v902, %v974
        %v1011 = vsel %vm939, %v903, %v975
        %v1012 = vsel %vm940, %v904, %v976
        %v1013 = vsel %vm941, %v905, %v977
        %v1014 = vsel %vm942, %v906, %v978
        %v1015 = vsel %vm943, %v907, %v979
        %v1016 = vsel %vm944, %v908, %v980
        %v1017 = vsel %vm945, %v909, %v981
        %v1018 = vsel %vm946, %v910, %v982
        %v1019 = vsel %vm947, %v911, %v983
        %v1020 = vsel %vm948, %v912, %v984
        %v1021 = vsel %vm949, %v913, %v985
        %v1022 = vsel %vm950, %v914, %v986
        %v1023 = vsel %vm951, %v915, %v987
        %v1024 = vsel %vm952, %v916, %v988
        %v1025 = vsel %vm953, %v917, %v989
        %v1026 = vsel %vm954, %v918, %v990
        %v1027 = vsel %vm955, %v919, %v991
        %v1028 = vsel %vm956, %v920, %v992
        %v1029 = vsel %vm957, %v921, %v993
        %v1030 = vsel %vm958, %v922, %v994
        %v1031 = vsel %vm959, %v923, %v995
        %v1032 = vsel %vm960, %v924, %v996
        %v1033 = vsel %vm961, %v925, %v997
        %v1034 = vmul.f32 %v998, %v511
        %v1035 = vmul.f32 %v999, %v516
        %v1036 = vmul.f32 %v1000, %v521
        %v1037 = vmul.f32 %v1001, %v526
        %v1038 = vmul.f32 %v1002, %v531
        %v1039 = vmul.f32 %v1003, %v536
        %v1040 = vmul.f32 %v1004, %v541
        %v1041 = vmul.f32 %v1005, %v546
        %v1042 = vmul.f32 %v1006, %v551
        %v1043 = vmul.f32 %v1007, %v556
        %v1044 = vmul.f32 %v1008, %v561
        %v1045 = vmul.f32 %v1009, %v566
        %v1046 = vmul.f32 %v1010, %v571
        %v1047 = vmul.f32 %v1011, %v576
        %v1048 = vmul.f32 %v1012, %v581
        %v1049 = vmul.f32 %v1013, %v586
        %v1050 = vmul.f32 %v1014, %v591
        %v1051 = vmul.f32 %v1015, %v596
        %v1052 = vmul.f32 %v1016, %v601
        %v1053 = vmul.f32 %v1017, %v606
        %v1054 = vmul.f32 %v1018, %v611
        %v1055 = vmul.f32 %v1019, %v616
        %v1056 = vmul.f32 %v1020, %v621
        %v1057 = vmul.f32 %v1021, %v626
        %v1058 = vmul.f32 %v1022, %v631
        %v1059 = vmul.f32 %v1023, %v636
        %v1060 = vmul.f32 %v1024, %v641
        %v1061 = vmul.f32 %v1025, %v646
        %v1062 = vmul.f32 %v1026, %v651
        %v1063 = vmul.f32 %v1027, %v656
        %v1064 = vmul.f32 %v1028, %v661
        %v1065 = vmul.f32 %v1029, %v666
        %v1066 = vmul.f32 %v1030, %v671
        %v1067 = vmul.f32 %v1031, %v676
        %v1068 = vmul.f32 %v1032, %v681
        %v1069 = vmul.f32 %v1033, %v686
        %1070 = vst [vmem:[#allocation2] sm:$0xff] 0.0
        %1071 = vst [vmem:[#allocation2 + $0x8] sm:$0xff] 0.0
        %1072 = vst [vmem:[#allocation2 + $0x10] sm:$0xff] 0.0
        %1073 = vst [vmem:[#allocation2 + $0x18] sm:$0xff] 0.0
        %1074 = vst [vmem:[#allocation2 + $0x20] sm:$0xf] 0.0
        %1075 = vst [vmem:[#allocation2 + $0x144] sm:$0xff] 0.0
        %1076 = vst [vmem:[#allocation2 + $0x14c] sm:$0xff] 0.0
        %1077 = vst [vmem:[#allocation2 + $0x154] sm:$0xff] 0.0
        %1078 = vst [vmem:[#allocation2 + $0x15c] sm:$0xff] 0.0
        %1079 = vst [vmem:[#allocation2 + $0x164] sm:$0xf] 0.0
        %1080 = vst [vmem:[#allocation2 + $0x24] sm:$0xff] %v1034
        %1081 = vst [vmem:[#allocation2 + $0x2c] sm:$0xff] %v1035
        %1082 = vst [vmem:[#allocation2 + $0x34] sm:$0xff] %v1036
        %1083 = vst [vmem:[#allocation2 + $0x3c] sm:$0xff] %v1037
        %1084 = vst [vmem:[#allocation2 + $0x44] sm:$0xff] %v1038
        %1085 = vst [vmem:[#allocation2 + $0x4c] sm:$0xff] %v1039
        %1086 = vst [vmem:[#allocation2 + $0x54] sm:$0xff] %v1040
        %1087 = vst [vmem:[#allocation2 + $0x5c] sm:$0xff] %v1041
        %1088 = vst [vmem:[#allocation2 + $0x64] sm:$0xff] %v1042
        %1089 = vst [vmem:[#allocation2 + $0x6c] sm:$0xff] %v1043
        %1090 = vst [vmem:[#allocation2 + $0x74] sm:$0xff] %v1044
        %1091 = vst [vmem:[#allocation2 + $0x7c] sm:$0xff] %v1045
        %1092 = vst [vmem:[#allocation2 + $0x84] sm:$0xff] %v1046
        %1093 = vst [vmem:[#allocation2 + $0x8c] sm:$0xff] %v1047
        %1094 = vst [vmem:[#allocation2 + $0x94] sm:$0xff] %v1048
        %1095 = vst [vmem:[#allocation2 + $0x9c] sm:$0xff] %v1049
        %1096 = vst [vmem:[#allocation2 + $0xa4] sm:$0xff] %v1050
        %1097 = vst [vmem:[#allocation2 + $0xac] sm:$0xff] %v1051
        %1098 = vst [vmem:[#allocation2 + $0xb4] sm:$0xff] %v1052
        %1099 = vst [vmem:[#allocation2 + $0xbc] sm:$0xff] %v1053
        %1100 = vst [vmem:[#allocation2 + $0xc4] sm:$0xff] %v1054
        %1101 = vst [vmem:[#allocation2 + $0xcc] sm:$0xff] %v1055
        %1102 = vst [vmem:[#allocation2 + $0xd4] sm:$0xff] %v1056
        %1103 = vst [vmem:[#allocation2 + $0xdc] sm:$0xff] %v1057
        %1104 = vst [vmem:[#allocation2 + $0xe4] sm:$0xff] %v1058
        %1105 = vst [vmem:[#allocation2 + $0xec] sm:$0xff] %v1059
        %1106 = vst [vmem:[#allocation2 + $0xf4] sm:$0xff] %v1060
        %1107 = vst [vmem:[#allocation2 + $0xfc] sm:$0xff] %v1061
        %1108 = vst [vmem:[#allocation2 + $0x104] sm:$0xff] %v1062
        %1109 = vst [vmem:[#allocation2 + $0x10c] sm:$0xff] %v1063
        %1110 = vst [vmem:[#allocation2 + $0x114] sm:$0xff] %v1064
        %1111 = vst [vmem:[#allocation2 + $0x11c] sm:$0xff] %v1065
        %1112 = vst [vmem:[#allocation2 + $0x124] sm:$0xff] %v1066
        %1113 = vst [vmem:[#allocation2 + $0x12c] sm:$0xff] %v1067
        %1114 = vst [vmem:[#allocation2 + $0x134] sm:$0xff] %v1068
        %1115 = vst [vmem:[#allocation2 + $0x13c] sm:$0xff] %v1069
        %v1116 = vld [vmem:[#allocation2 + $0x11] sm:$0xff]
        %v1117 = vld [vmem:[#allocation2 + $0x19] sm:$0xff]
        %v1118 = vld [vmem:[#allocation2 + $0x21] sm:$0xff]
        %v1119 = vld [vmem:[#allocation2 + $0x29] sm:$0xff]
        %v1120 = vld [vmem:[#allocation2 + $0x31] sm:$0xff]
        %v1121 = vld [vmem:[#allocation2 + $0x39] sm:$0xff]
        %v1122 = vld [vmem:[#allocation2 + $0x41] sm:$0xff]
        %v1123 = vld [vmem:[#allocation2 + $0x49] sm:$0xff]
        %v1124 = vld [vmem:[#allocation2 + $0x51] sm:$0xff]
        %v1125 = vld [vmem:[#allocation2 + $0x59] sm:$0xff]
        %v1126 = vld [vmem:[#allocation2 + $0x61] sm:$0xff]
        %v1127 = vld [vmem:[#allocation2 + $0x69] sm:$0xff]
        %v1128 = vld [vmem:[#allocation2 + $0x71] sm:$0xff]
        %v1129 = vld [vmem:[#allocation2 + $0x79] sm:$0xff]
        %v1130 = vld [vmem:[#allocation2 + $0x81] sm:$0xff]
        %v1131 = vld [vmem:[#allocation2 + $0x89] sm:$0xff]
        %v1132 = vld [vmem:[#allocation2 + $0x91] sm:$0xff]
        %v1133 = vld [vmem:[#allocation2 + $0x99] sm:$0xff]
        %v1134 = vld [vmem:[#allocation2 + $0xa1] sm:$0xff]
        %v1135 = vld [vmem:[#allocation2 + $0xa9] sm:$0xff]
        %v1136 = vld [vmem:[#allocation2 + $0xb1] sm:$0xff]
        %v1137 = vld [vmem:[#allocation2 + $0xb9] sm:$0xff]
        %v1138 = vld [vmem:[#allocation2 + $0xc1] sm:$0xff]
        %v1139 = vld [vmem:[#allocation2 + $0xc9] sm:$0xff]
        %v1140 = vld [vmem:[#allocation2 + $0xd1] sm:$0xff]
        %v1141 = vld [vmem:[#allocation2 + $0xd9] sm:$0xff]
        %v1142 = vld [vmem:[#allocation2 + $0xe1] sm:$0xff]
        %v1143 = vld [vmem:[#allocation2 + $0xe9] sm:$0xff]
        %v1144 = vld [vmem:[#allocation2 + $0xf1] sm:$0xff]
        %v1145 = vld [vmem:[#allocation2 + $0xf9] sm:$0xff]
        %v1146 = vld [vmem:[#allocation2 + $0x101] sm:$0xff]
        %v1147 = vld [vmem:[#allocation2 + $0x109] sm:$0xff]
        %v1148 = vld [vmem:[#allocation2 + $0x111] sm:$0xff]
        %v1149 = vld [vmem:[#allocation2 + $0x119] sm:$0xff]
        %v1150 = vld [vmem:[#allocation2 + $0x121] sm:$0xff]
        %v1151 = vld [vmem:[#allocation2 + $0x129] sm:$0xff]
        %v1152 = vld [vmem:[%s4] sm:$0xff]
        %v1153 = vld [vmem:[%s4 + $0x8] sm:$0xff]
        %v1154 = vld [vmem:[%s4 + $0x10] sm:$0xff]
        %v1155 = vld [vmem:[%s4 + $0x18] sm:$0xff]
        %v1156 = vld [vmem:[%s4 + $0x20] sm:$0xff]
        %v1157 = vld [vmem:[%s4 + $0x28] sm:$0xff]
        %v1158 = vld [vmem:[%s4 + $0x30] sm:$0xff]
        %v1159 = vld [vmem:[%s4 + $0x38] sm:$0xff]
        %v1160 = vld [vmem:[%s4 + $0x40] sm:$0xff]
        %v1161 = vld [vmem:[%s4 + $0x48] sm:$0xff]
        %v1162 = vld [vmem:[%s4 + $0x50] sm:$0xff]
        %v1163 = vld [vmem:[%s4 + $0x58] sm:$0xff]
        %v1164 = vld [vmem:[%s4 + $0x60] sm:$0xff]
        %v1165 = vld [vmem:[%s4 + $0x68] sm:$0xff]
        %v1166 = vld [vmem:[%s4 + $0x70] sm:$0xff]
        %v1167 = vld [vmem:[%s4 + $0x78] sm:$0xff]
        %v1168 = vld [vmem:[#allocation2 + $0x12] sm:$0xff]
        %v1169 = vld [vmem:[#allocation2 + $0x1a] sm:$0xff]
        %v1170 = vld [vmem:[#allocation2 + $0x22] sm:$0xff]
        %v1171 = vld [vmem:[#allocation2 + $0x2a] sm:$0xff]
        %v1172 = vld [vmem:[#allocation2 + $0x32] sm:$0xff]
        %v1173 = vld [vmem:[#allocation2 + $0x3a] sm:$0xff]
        %v1174 = vld [vmem:[#allocation2 + $0x42] sm:$0xff]
        %v1175 = vld [vmem:[#allocation2 + $0x4a] sm:$0xff]
        %v1176 = vld [vmem:[#allocation2 + $0x52] sm:$0xff]
        %v1177 = vld [vmem:[#allocation2 + $0x5a] sm:$0xff]
        %v1178 = vld [vmem:[#allocation2 + $0x62] sm:$0xff]
        %v1179 = vld [vmem:[#allocation2 + $0x6a] sm:$0xff]
        %v1180 = vld [vmem:[#allocation2 + $0x72] sm:$0xff]
        %v1181 = vld [vmem:[#allocation2 + $0x7a] sm:$0xff]
        %v1182 = vld [vmem:[#allocation2 + $0x82] sm:$0xff]
        %v1183 = vld [vmem:[#allocation2 + $0x8a] sm:$0xff]
        %v1184 = vld [vmem:[#allocation2 + $0x92] sm:$0xff]
        %v1185 = vld [vmem:[#allocation2 + $0x9a] sm:$0xff]
        %v1186 = vld [vmem:[#allocation2 + $0xa2] sm:$0xff]
        %v1187 = vld [vmem:[#allocation2 + $0xaa] sm:$0xff]
        %v1188 = vld [vmem:[#allocation2 + $0xb2] sm:$0xff]
        %v1189 = vld [vmem:[#allocation2 + $0xba] sm:$0xff]
        %v1190 = vld [vmem:[#allocation2 + $0xc2] sm:$0xff]
        %v1191 = vld [vmem:[#allocation2 + $0xca] sm:$0xff]
        %v1192 = vld [vmem:[#allocation2 + $0xd2] sm:$0xff]
        %v1193 = vld [vmem:[#allocation2 + $0xda] sm:$0xff]
        %v1194 = vld [vmem:[#allocation2 + $0xe2] sm:$0xff]
        %v1195 = vld [vmem:[#allocation2 + $0xea] sm:$0xff]
        %v1196 = vld [vmem:[#allocation2 + $0xf2] sm:$0xff]
        %v1197 = vld [vmem:[#allocation2 + $0xfa] sm:$0xff]
        %v1198 = vld [vmem:[#allocation2 + $0x102] sm:$0xff]
        %v1199 = vld [vmem:[#allocation2 + $0x10a] sm:$0xff]
        %v1200 = vld [vmem:[#allocation2 + $0x112] sm:$0xff]
        %v1201 = vld [vmem:[#allocation2 + $0x11a] sm:$0xff]
        %v1202 = vld [vmem:[#allocation2 + $0x122] sm:$0xff]
        %v1203 = vld [vmem:[#allocation2 + $0x12a] sm:$0xff]
        %s1204 = scalar_lea.vmem %s4, 128
        %v1205 = vld [vmem:[%s1204] sm:$0xff]
        %v1206 = vld [vmem:[%s1204 + $0x8] sm:$0xff]
        %v1207 = vld [vmem:[%s1204 + $0x10] sm:$0xff]
        %v1208 = vld [vmem:[%s1204 + $0x18] sm:$0xff]
        %v1209 = vld [vmem:[%s1204 + $0x20] sm:$0xff]
        %v1210 = vld [vmem:[%s1204 + $0x28] sm:$0xff]
        %v1211 = vld [vmem:[%s1204 + $0x30] sm:$0xff]
        %v1212 = vld [vmem:[%s1204 + $0x38] sm:$0xff]
        %v1213 = vld [vmem:[%s1204 + $0x40] sm:$0xff]
        %v1214 = vld [vmem:[%s1204 + $0x48] sm:$0xff]
        %v1215 = vld [vmem:[%s1204 + $0x50] sm:$0xff]
        %v1216 = vld [vmem:[%s1204 + $0x58] sm:$0xff]
        %v1217 = vld [vmem:[%s1204 + $0x60] sm:$0xff]
        %v1218 = vld [vmem:[%s1204 + $0x68] sm:$0xff]
        %v1219 = vld [vmem:[%s1204 + $0x70] sm:$0xff]
        %v1220 = vld [vmem:[%s1204 + $0x78] sm:$0xff]
        %1221 = vmatprep.subr.mxu0 0.0
        %1222 = vmatpush1.msra.mxu0 %v1205
        %1223 = vmatprep.subr.mxu0 0.0
        %1224 = vmatpush1.msra.mxu0 %v1206
        %1225 = vmatprep.subr.mxu0 0.0
        %1226 = vmatpush1.msra.mxu0 %v1207
        %1227 = vmatprep.subr.mxu0 0.0
        %1228 = vmatpush1.msra.mxu0 %v1208
        %1229 = vmatprep.subr.mxu0 0.0
        %1230 = vmatpush1.msra.mxu0 %v1209
        %1231 = vmatprep.subr.mxu0 0.0
        %1232 = vmatpush1.msra.mxu0 %v1210
        %1233 = vmatprep.subr.mxu0 0.0
        %1234 = vmatpush1.msra.mxu0 %v1211
        %1235 = vmatprep.subr.mxu0 0.0
        %1236 = vmatpush1.msra.mxu0 %v1212
        %1237 = vmatprep.subr.mxu0 0.0
        %1238 = vmatpush1.msra.mxu0 %v1213
        %1239 = vmatprep.subr.mxu0 0.0
        %1240 = vmatpush1.msra.mxu0 %v1214
        %1241 = vmatprep.subr.mxu0 0.0
        %1242 = vmatpush1.msra.mxu0 %v1215
        %1243 = vmatprep.subr.mxu0 0.0
        %1244 = vmatpush1.msra.mxu0 %v1216
        %1245 = vmatprep.subr.mxu0 0.0
        %1246 = vmatpush1.msra.mxu0 %v1217
        %1247 = vmatprep.subr.mxu0 0.0
        %1248 = vmatpush1.msra.mxu0 %v1218
        %1249 = vmatprep.subr.mxu0 0.0
        %1250 = vmatpush1.msra.mxu0 %v1219
        %1251 = vmatprep.subr.mxu0 0.0
        %1252 = vmatpush1.msra.mxu0 %v1220
        %1253 = vmatprep.subr.mxu0 0.0
        %1254 = vmatpush1.msra.mxu0 0.0
        %1255 = vmatprep.subr.mxu0 0.0
        %1256 = vmatpush1.msra.mxu0 0.0
        %1257 = vmatprep.subr.mxu0 0.0
        %1258 = vmatpush1.msra.mxu0 0.0
        %1259 = vmatprep.subr.mxu0 0.0
        %1260 = vmatpush1.msra.mxu0 0.0
        %1261 = vmatprep.subr.mxu0 0.0
        %1262 = vmatpush1.msra.mxu0 0.0
        %1263 = vmatprep.subr.mxu0 0.0
        %1264 = vmatpush1.msra.mxu0 0.0
        %1265 = vmatprep.subr.mxu0 0.0
        %1266 = vmatpush1.msra.mxu0 0.0
        %1267 = vmatprep.subr.mxu0 0.0
        %1268 = vmatpush1.msra.mxu0 0.0
        %1269 = vmatprep.subr.mxu0 0.0
        %1270 = vmatpush1.msra.mxu0 0.0
        %1271 = vmatprep.subr.mxu0 0.0
        %1272 = vmatpush1.msra.mxu0 0.0
        %1273 = vmatprep.subr.mxu0 0.0
        %1274 = vmatpush1.msra.mxu0 0.0
        %1275 = vmatprep.subr.mxu0 0.0
        %1276 = vmatpush1.msra.mxu0 0.0
        %1277 = vmatprep.subr.mxu0 0.0
        %1278 = vmatpush1.msra.mxu0 0.0
        %1279 = vmatprep.subr.mxu0 0.0
        %1280 = vmatpush1.msra.mxu0 0.0
        %1281 = vmatprep.subr.mxu0 0.0
        %1282 = vmatpush1.msra.mxu0 0.0
        %1283 = vmatprep.subr.mxu0 0.0
        %1284 = vmatpush1.msra.mxu0 0.0
        %1285 = vmatprep.mubr.f32.mxu0 0.0
        %1286 = vmatmul.mubr.f32.gmra.mrb[0].mxu0 %v1168
        %v1287 = vpop.f32.mrb[0].mxu0
        %v1288 = vadd.f32 0.0, %v1287
        %v1289 = vpop.f32.mrb[0].mxu0
        %1290 = vmatprep.mubr.f32.mxu0 0.0
        %1291 = vmatmul.mubr.f32.gmra.mrb[0].mxu0 %v1169
        %v1292 = vpop.f32.mrb[0].mxu0
        %v1293 = vadd.f32 0.0, %v1292
        %v1294 = vpop.f32.mrb[0].mxu0
        %1295 = vmatprep.mubr.f32.mxu0 0.0
        %1296 = vmatmul.mubr.f32.gmra.mrb[0].mxu0 %v1170
        %v1297 = vpop.f32.mrb[0].mxu0
        %v1298 = vadd.f32 0.0, %v1297
        %v1299 = vpop.f32.mrb[0].mxu0
        %1300 = vmatprep.mubr.f32.mxu0 0.0
        %1301 = vmatmul.mubr.f32.gmra.mrb[0].mxu0 %v1171
        %v1302 = vpop.f32.mrb[0].mxu0
        %v1303 = vadd.f32 0.0, %v1302
        %v1304 = vpop.f32.mrb[0].mxu0
        %1305 = vmatprep.mubr.f32.mxu0 0.0
        %1306 = vmatmul.mubr.f32.gmra.mrb[0].mxu0 %v1172
        %v1307 = vpop.f32.mrb[0].mxu0
        %v1308 = vadd.f32 0.0, %v1307
        %v1309 = vpop.f32.mrb[0].mxu0
        %1310 = vmatprep.mubr.f32.mxu0 0.0
        %1311 = vmatmul.mubr.f32.gmra.mrb[0].mxu0 %v1173
        %v1312 = vpop.f32.mrb[0].mxu0
        %v1313 = vadd.f32 0.0, %v1312
        %v1314 = vpop.f32.mrb[0].mxu0
        %1315 = vmatprep.mubr.f32.mxu0 0.0
        %1316 = vmatmul.mubr.f32.gmra.mrb[0].mxu0 %v1174
        %v1317 = vpop.f32.mrb[0].mxu0
        %v1318 = vadd.f32 0.0, %v1317
        %v1319 = vpop.f32.mrb[0].mxu0
        %1320 = vmatprep.mubr.f32.mxu0 0.0
        %1321 = vmatmul.mubr.f32.gmra.mrb[0].mxu0 %v1175
        %v1322 = vpop.f32.mrb[0].mxu0
        %v1323 = vadd.f32 0.0, %v1322
        %v1324 = vpop.f32.mrb[0].mxu0
        %1325 = vmatprep.mubr.f32.mxu0 0.0
        %1326 = vmatmul.mubr.f32.gmra.mrb[0].mxu0 %v1176
        %v1327 = vpop.f32.mrb[0].mxu0
        %v1328 = vadd.f32 0.0, %v1327
        %v1329 = vpop.f32.mrb[0].mxu0
        %1330 = vmatprep.mubr.f32.mxu0 0.0
        %1331 = vmatmul.mubr.f32.gmra.mrb[0].mxu0 %v1177
        %v1332 = vpop.f32.mrb[0].mxu0
        %v1333 = vadd.f32 0.0, %v1332
        %v1334 = vpop.f32.mrb[0].mxu0
        %1335 = vmatprep.mubr.f32.mxu0 0.0
        %1336 = vmatmul.mubr.f32.gmra.mrb[0].mxu0 %v1178
        %v1337 = vpop.f32.mrb[0].mxu0
        %v1338 = vadd.f32 0.0, %v1337
        %v1339 = vpop.f32.mrb[0].mxu0
        %1340 = vmatprep.mubr.f32.mxu0 0.0
        %1341 = vmatmul.mubr.f32.gmra.mrb[0].mxu0 %v1179
        %v1342 = vpop.f32.mrb[0].mxu0
        %v1343 = vadd.f32 0.0, %v1342
        %v1344 = vpop.f32.mrb[0].mxu0
        %1345 = vmatprep.mubr.f32.mxu0 0.0
        %1346 = vmatmul.mubr.f32.gmra.mrb[0].mxu0 %v1180
        %v1347 = vpop.f32.mrb[0].mxu0
        %v1348 = vadd.f32 0.0, %v1347
        %v1349 = vpop.f32.mrb[0].mxu0
        %1350 = vmatprep.mubr.f32.mxu0 0.0
        %1351 = vmatmul.mubr.f32.gmra.mrb[0].mxu0 %v1181
        %v1352 = vpop.f32.mrb[0].mxu0
        %v1353 = vadd.f32 0.0, %v1352
        %v1354 = vpop.f32.mrb[0].mxu0
        %1355 = vmatprep.mubr.f32.mxu0 0.0
        %1356 = vmatmul.mubr.f32.gmra.mrb[0].mxu0 %v1182
        %v1357 = vpop.f32.mrb[0].mxu0
        %v1358 = vadd.f32 0.0, %v1357
        %v1359 = vpop.f32.mrb[0].mxu0
        %1360 = vmatprep.mubr.f32.mxu0 0.0
        %1361 = vmatmul.mubr.f32.gmra.mrb[0].mxu0 %v1183
        %v1362 = vpop.f32.mrb[0].mxu0
        %v1363 = vadd.f32 0.0, %v1362
        %v1364 = vpop.f32.mrb[0].mxu0
        %1365 = vmatprep.mubr.f32.mxu0 0.0
        %1366 = vmatmul.mubr.f32.gmra.mrb[0].mxu0 %v1184
        %v1367 = vpop.f32.mrb[0].mxu0
        %v1368 = vadd.f32 0.0, %v1367
        %v1369 = vpop.f32.mrb[0].mxu0
        %1370 = vmatprep.mubr.f32.mxu0 0.0
        %1371 = vmatmul.mubr.f32.gmra.mrb[0].mxu0 %v1185
        %v1372 = vpop.f32.mrb[0].mxu0
        %v1373 = vadd.f32 0.0, %v1372
        %v1374 = vpop.f32.mrb[0].mxu0
        %1375 = vmatprep.mubr.f32.mxu0 0.0
        %1376 = vmatmul.mubr.f32.gmra.mrb[0].mxu0 %v1186
        %v1377 = vpop.f32.mrb[0].mxu0
        %v1378 = vadd.f32 0.0, %v1377
        %v1379 = vpop.f32.mrb[0].mxu0
        %1380 = vmatprep.mubr.f32.mxu0 0.0
        %1381 = vmatmul.mubr.f32.gmra.mrb[0].mxu0 %v1187
        %v1382 = vpop.f32.mrb[0].mxu0
        %v1383 = vadd.f32 0.0, %v1382
        %v1384 = vpop.f32.mrb[0].mxu0
        %1385 = vmatprep.mubr.f32.mxu0 0.0
        %1386 = vmatmul.mubr.f32.gmra.mrb[0].mxu0 %v1188
        %v1387 = vpop.f32.mrb[0].mxu0
        %v1388 = vadd.f32 0.0, %v1387
        %v1389 = vpop.f32.mrb[0].mxu0
        %1390 = vmatprep.mubr.f32.mxu0 0.0
        %1391 = vmatmul.mubr.f32.gmra.mrb[0].mxu0 %v1189
        %v1392 = vpop.f32.mrb[0].mxu0
        %v1393 = vadd.f32 0.0, %v1392
        %v1394 = vpop.f32.mrb[0].mxu0
        %1395 = vmatprep.mubr.f32.mxu0 0.0
        %1396 = vmatmul.mubr.f32.gmra.mrb[0].mxu0 %v1190
        %v1397 = vpop.f32.mrb[0].mxu0
        %v1398 = vadd.f32 0.0, %v1397
        %v1399 = vpop.f32.mrb[0].mxu0
        %1400 = vmatprep.mubr.f32.mxu0 0.0
        %1401 = vmatmul.mubr.f32.gmra.mrb[0].mxu0 %v1191
        %v1402 = vpop.f32.mrb[0].mxu0
        %v1403 = vadd.f32 0.0, %v1402
        %v1404 = vpop.f32.mrb[0].mxu0
        %1405 = vmatprep.mubr.f32.mxu0 0.0
        %1406 = vmatmul.mubr.f32.gmra.mrb[0].mxu0 %v1192
        %v1407 = vpop.f32.mrb[0].mxu0
        %v1408 = vadd.f32 0.0, %v1407
        %v1409 = vpop.f32.mrb[0].mxu0
        %1410 = vmatprep.mubr.f32.mxu0 0.0
        %1411 = vmatmul.mubr.f32.gmra.mrb[0].mxu0 %v1193
        %v1412 = vpop.f32.mrb[0].mxu0
        %v1413 = vadd.f32 0.0, %v1412
        %v1414 = vpop.f32.mrb[0].mxu0
        %1415 = vmatprep.mubr.f32.mxu0 0.0
        %1416 = vmatmul.mubr.f32.gmra.mrb[0].mxu0 %v1194
        %v1417 = vpop.f32.mrb[0].mxu0
        %v1418 = vadd.f32 0.0, %v1417
        %v1419 = vpop.f32.mrb[0].mxu0
        %1420 = vmatprep.mubr.f32.mxu0 0.0
        %1421 = vmatmul.mubr.f32.gmra.mrb[0].mxu0 %v1195
        %v1422 = vpop.f32.mrb[0].mxu0
        %v1423 = vadd.f32 0.0, %v1422
        %v1424 = vpop.f32.mrb[0].mxu0
        %1425 = vmatprep.mubr.f32.mxu0 0.0
        %1426 = vmatmul.mubr.f32.gmra.mrb[0].mxu0 %v1196
        %v1427 = vpop.f32.mrb[0].mxu0
        %v1428 = vadd.f32 0.0, %v1427
        %v1429 = vpop.f32.mrb[0].mxu0
        %1430 = vmatprep.mubr.f32.mxu0 0.0
        %1431 = vmatmul.mubr.f32.gmra.mrb[0].mxu0 %v1197
        %v1432 = vpop.f32.mrb[0].mxu0
        %v1433 = vadd.f32 0.0, %v1432
        %v1434 = vpop.f32.mrb[0].mxu0
        %1435 = vmatprep.mubr.f32.mxu0 0.0
        %1436 = vmatmul.mubr.f32.gmra.mrb[0].mxu0 %v1198
        %v1437 = vpop.f32.mrb[0].mxu0
        %v1438 = vadd.f32 0.0, %v1437
        %v1439 = vpop.f32.mrb[0].mxu0
        %1440 = vmatprep.mubr.f32.mxu0 0.0
        %1441 = vmatmul.mubr.f32.gmra.mrb[0].mxu0 %v1199
        %v1442 = vpop.f32.mrb[0].mxu0
        %v1443 = vadd.f32 0.0, %v1442
        %v1444 = vpop.f32.mrb[0].mxu0
        %1445 = vmatprep.mubr.f32.mxu0 0.0
        %1446 = vmatmul.mubr.f32.gmra.mrb[0].mxu0 %v1200
        %v1447 = vpop.f32.mrb[0].mxu0
        %v1448 = vadd.f32 0.0, %v1447
        %v1449 = vpop.f32.mrb[0].mxu0
        %1450 = vmatprep.mubr.f32.mxu0 0.0
        %1451 = vmatmul.mubr.f32.gmra.mrb[0].mxu0 %v1201
        %v1452 = vpop.f32.mrb[0].mxu0
        %v1453 = vadd.f32 0.0, %v1452
        %v1454 = vpop.f32.mrb[0].mxu0
        %1455 = vmatprep.mubr.f32.mxu0 0.0
        %1456 = vmatmul.mubr.f32.gmra.mrb[0].mxu0 %v1202
        %v1457 = vpop.f32.mrb[0].mxu0
        %v1458 = vadd.f32 0.0, %v1457
        %v1459 = vpop.f32.mrb[0].mxu0
        %1460 = vmatprep.mubr.f32.mxu0 0.0
        %1461 = vmatmul.mubr.f32.gmra.mrb[0].mxu0 %v1203
        %v1462 = vpop.f32.mrb[0].mxu0
        %v1463 = vadd.f32 0.0, %v1462
        %v1464 = vpop.f32.mrb[0].mxu0
        %1465 = vdwg.mxu0
        %1466 = vmatprep.subr.mxu0 0.0
        %1467 = vmatpush1.msra.mxu0 %v1152
        %1468 = vmatprep.subr.mxu0 0.0
        %1469 = vmatpush1.msra.mxu0 %v1153
        %1470 = vmatprep.subr.mxu0 0.0
        %1471 = vmatpush1.msra.mxu0 %v1154
        %1472 = vmatprep.subr.mxu0 0.0
        %1473 = vmatpush1.msra.mxu0 %v1155
        %1474 = vmatprep.subr.mxu0 0.0
        %1475 = vmatpush1.msra.mxu0 %v1156
        %1476 = vmatprep.subr.mxu0 0.0
        %1477 = vmatpush1.msra.mxu0 %v1157
        %1478 = vmatprep.subr.mxu0 0.0
        %1479 = vmatpush1.msra.mxu0 %v1158
        %1480 = vmatprep.subr.mxu0 0.0
        %1481 = vmatpush1.msra.mxu0 %v1159
        %1482 = vmatprep.subr.mxu0 0.0
        %1483 = vmatpush1.msra.mxu0 %v1160
        %1484 = vmatprep.subr.mxu0 0.0
        %1485 = vmatpush1.msra.mxu0 %v1161
        %1486 = vmatprep.subr.mxu0 0.0
        %1487 = vmatpush1.msra.mxu0 %v1162
        %1488 = vmatprep.subr.mxu0 0.0
        %1489 = vmatpush1.msra.mxu0 %v1163
        %1490 = vmatprep.subr.mxu0 0.0
        %1491 = vmatpush1.msra.mxu0 %v1164
        %1492 = vmatprep.subr.mxu0 0.0
        %1493 = vmatpush1.msra.mxu0 %v1165
        %1494 = vmatprep.subr.mxu0 0.0
        %1495 = vmatpush1.msra.mxu0 %v1166
        %1496 = vmatprep.subr.mxu0 0.0
        %1497 = vmatpush1.msra.mxu0 %v1167
        %1498 = vmatprep.subr.mxu0 0.0
        %1499 = vmatpush1.msra.mxu0 0.0
        %1500 = vmatprep.subr.mxu0 0.0
        %1501 = vmatpush1.msra.mxu0 0.0
        %1502 = vmatprep.subr.mxu0 0.0
        %1503 = vmatpush1.msra.mxu0 0.0
        %1504 = vmatprep.subr.mxu0 0.0
        %1505 = vmatpush1.msra.mxu0 0.0
        %1506 = vmatprep.subr.mxu0 0.0
        %1507 = vmatpush1.msra.mxu0 0.0
        %1508 = vmatprep.subr.mxu0 0.0
        %1509 = vmatpush1.msra.mxu0 0.0
        %1510 = vmatprep.subr.mxu0 0.0
        %1511 = vmatpush1.msra.mxu0 0.0
        %1512 = vmatprep.subr.mxu0 0.0
        %1513 = vmatpush1.msra.mxu0 0.0
        %1514 = vmatprep.subr.mxu0 0.0
        %1515 = vmatpush1.msra.mxu0 0.0
        %1516 = vmatprep.subr.mxu0 0.0
        %1517 = vmatpush1.msra.mxu0 0.0
        %1518 = vmatprep.subr.mxu0 0.0
        %1519 = vmatpush1.msra.mxu0 0.0
        %1520 = vmatprep.subr.mxu0 0.0
        %1521 = vmatpush1.msra.mxu0 0.0
        %1522 = vmatprep.subr.mxu0 0.0
        %1523 = vmatpush1.msra.mxu0 0.0
        %1524 = vmatprep.subr.mxu0 0.0
        %1525 = vmatpush1.msra.mxu0 0.0
        %1526 = vmatprep.subr.mxu0 0.0
        %1527 = vmatpush1.msra.mxu0 0.0
        %1528 = vmatprep.subr.mxu0 0.0
        %1529 = vmatpush1.msra.mxu0 0.0
        %1530 = vmatprep.mubr.f32.mxu0 0.0
        %1531 = vmatmul.mubr.f32.gmra.mrb[0].mxu0 %v1116
        %v1532 = vpop.f32.mrb[0].mxu0
        %v1533 = vadd.f32 %v1288, %v1532
        %v1534 = vpop.f32.mrb[0].mxu0
        %1535 = vmatprep.mubr.f32.mxu0 0.0
        %1536 = vmatmul.mubr.f32.gmra.mrb[0].mxu0 %v1117
        %v1537 = vpop.f32.mrb[0].mxu0
        %v1538 = vadd.f32 %v1293, %v1537
        %v1539 = vpop.f32.mrb[0].mxu0
        %1540 = vmatprep.mubr.f32.mxu0 0.0
        %1541 = vmatmul.mubr.f32.gmra.mrb[0].mxu0 %v1118
        %v1542 = vpop.f32.mrb[0].mxu0
        %v1543 = vadd.f32 %v1298, %v1542
        %v1544 = vpop.f32.mrb[0].mxu0
        %1545 = vmatprep.mubr.f32.mxu0 0.0
        %1546 = vmatmul.mubr.f32.gmra.mrb[0].mxu0 %v1119
        %v1547 = vpop.f32.mrb[0].mxu0
        %v1548 = vadd.f32 %v1303, %v1547
        %v1549 = vpop.f32.mrb[0].mxu0
        %1550 = vmatprep.mubr.f32.mxu0 0.0
        %1551 = vmatmul.mubr.f32.gmra.mrb[0].mxu0 %v1120
        %v1552 = vpop.f32.mrb[0].mxu0
        %v1553 = vadd.f32 %v1308, %v1552
        %v1554 = vpop.f32.mrb[0].mxu0
        %1555 = vmatprep.mubr.f32.mxu0 0.0
        %1556 = vmatmul.mubr.f32.gmra.mrb[0].mxu0 %v1121
        %v1557 = vpop.f32.mrb[0].mxu0
        %v1558 = vadd.f32 %v1313, %v1557
        %v1559 = vpop.f32.mrb[0].mxu0
        %1560 = vmatprep.mubr.f32.mxu0 0.0
        %1561 = vmatmul.mubr.f32.gmra.mrb[0].mxu0 %v1122
        %v1562 = vpop.f32.mrb[0].mxu0
        %v1563 = vadd.f32 %v1318, %v1562
        %v1564 = vpop.f32.mrb[0].mxu0
        %1565 = vmatprep.mubr.f32.mxu0 0.0
        %1566 = vmatmul.mubr.f32.gmra.mrb[0].mxu0 %v1123
        %v1567 = vpop.f32.mrb[0].mxu0
        %v1568 = vadd.f32 %v1323, %v1567
        %v1569 = vpop.f32.mrb[0].mxu0
        %1570 = vmatprep.mubr.f32.mxu0 0.0
        %1571 = vmatmul.mubr.f32.gmra.mrb[0].mxu0 %v1124
        %v1572 = vpop.f32.mrb[0].mxu0
        %v1573 = vadd.f32 %v1328, %v1572
        %v1574 = vpop.f32.mrb[0].mxu0
        %1575 = vmatprep.mubr.f32.mxu0 0.0
        %1576 = vmatmul.mubr.f32.gmra.mrb[0].mxu0 %v1125
        %v1577 = vpop.f32.mrb[0].mxu0
        %v1578 = vadd.f32 %v1333, %v1577
        %v1579 = vpop.f32.mrb[0].mxu0
        %1580 = vmatprep.mubr.f32.mxu0 0.0
        %1581 = vmatmul.mubr.f32.gmra.mrb[0].mxu0 %v1126
        %v1582 = vpop.f32.mrb[0].mxu0
        %v1583 = vadd.f32 %v1338, %v1582
        %v1584 = vpop.f32.mrb[0].mxu0
        %1585 = vmatprep.mubr.f32.mxu0 0.0
        %1586 = vmatmul.mubr.f32.gmra.mrb[0].mxu0 %v1127
        %v1587 = vpop.f32.mrb[0].mxu0
        %v1588 = vadd.f32 %v1343, %v1587
        %v1589 = vpop.f32.mrb[0].mxu0
        %1590 = vmatprep.mubr.f32.mxu0 0.0
        %1591 = vmatmul.mubr.f32.gmra.mrb[0].mxu0 %v1128
        %v1592 = vpop.f32.mrb[0].mxu0
        %v1593 = vadd.f32 %v1348, %v1592
        %v1594 = vpop.f32.mrb[0].mxu0
        %1595 = vmatprep.mubr.f32.mxu0 0.0
        %1596 = vmatmul.mubr.f32.gmra.mrb[0].mxu0 %v1129
        %v1597 = vpop.f32.mrb[0].mxu0
        %v1598 = vadd.f32 %v1353, %v1597
        %v1599 = vpop.f32.mrb[0].mxu0
        %1600 = vmatprep.mubr.f32.mxu0 0.0
        %1601 = vmatmul.mubr.f32.gmra.mrb[0].mxu0 %v1130
        %v1602 = vpop.f32.mrb[0].mxu0
        %v1603 = vadd.f32 %v1358, %v1602
        %v1604 = vpop.f32.mrb[0].mxu0
        %1605 = vmatprep.mubr.f32.mxu0 0.0
        %1606 = vmatmul.mubr.f32.gmra.mrb[0].mxu0 %v1131
        %v1607 = vpop.f32.mrb[0].mxu0
        %v1608 = vadd.f32 %v1363, %v1607
        %v1609 = vpop.f32.mrb[0].mxu0
        %1610 = vmatprep.mubr.f32.mxu0 0.0
        %1611 = vmatmul.mubr.f32.gmra.mrb[0].mxu0 %v1132
        %v1612 = vpop.f32.mrb[0].mxu0
        %v1613 = vadd.f32 %v1368, %v1612
        %v1614 = vpop.f32.mrb[0].mxu0
        %1615 = vmatprep.mubr.f32.mxu0 0.0
        %1616 = vmatmul.mubr.f32.gmra.mrb[0].mxu0 %v1133
        %v1617 = vpop.f32.mrb[0].mxu0
        %v1618 = vadd.f32 %v1373, %v1617
        %v1619 = vpop.f32.mrb[0].mxu0
        %1620 = vmatprep.mubr.f32.mxu0 0.0
        %1621 = vmatmul.mubr.f32.gmra.mrb[0].mxu0 %v1134
        %v1622 = vpop.f32.mrb[0].mxu0
        %v1623 = vadd.f32 %v1378, %v1622
        %v1624 = vpop.f32.mrb[0].mxu0
        %1625 = vmatprep.mubr.f32.mxu0 0.0
        %1626 = vmatmul.mubr.f32.gmra.mrb[0].mxu0 %v1135
        %v1627 = vpop.f32.mrb[0].mxu0
        %v1628 = vadd.f32 %v1383, %v1627
        %v1629 = vpop.f32.mrb[0].mxu0
        %1630 = vmatprep.mubr.f32.mxu0 0.0
        %1631 = vmatmul.mubr.f32.gmra.mrb[0].mxu0 %v1136
        %v1632 = vpop.f32.mrb[0].mxu0
        %v1633 = vadd.f32 %v1388, %v1632
        %v1634 = vpop.f32.mrb[0].mxu0
        %1635 = vmatprep.mubr.f32.mxu0 0.0
        %1636 = vmatmul.mubr.f32.gmra.mrb[0].mxu0 %v1137
        %v1637 = vpop.f32.mrb[0].mxu0
        %v1638 = vadd.f32 %v1393, %v1637
        %v1639 = vpop.f32.mrb[0].mxu0
        %1640 = vmatprep.mubr.f32.mxu0 0.0
        %1641 = vmatmul.mubr.f32.gmra.mrb[0].mxu0 %v1138
        %v1642 = vpop.f32.mrb[0].mxu0
        %v1643 = vadd.f32 %v1398, %v1642
        %v1644 = vpop.f32.mrb[0].mxu0
        %1645 = vmatprep.mubr.f32.mxu0 0.0
        %1646 = vmatmul.mubr.f32.gmra.mrb[0].mxu0 %v1139
        %v1647 = vpop.f32.mrb[0].mxu0
        %v1648 = vadd.f32 %v1403, %v1647
        %v1649 = vpop.f32.mrb[0].mxu0
        %1650 = vmatprep.mubr.f32.mxu0 0.0
        %1651 = vmatmul.mubr.f32.gmra.mrb[0].mxu0 %v1140
        %v1652 = vpop.f32.mrb[0].mxu0
        %v1653 = vadd.f32 %v1408, %v1652
        %v1654 = vpop.f32.mrb[0].mxu0
        %1655 = vmatprep.mubr.f32.mxu0 0.0
        %1656 = vmatmul.mubr.f32.gmra.mrb[0].mxu0 %v1141
        %v1657 = vpop.f32.mrb[0].mxu0
        %v1658 = vadd.f32 %v1413, %v1657
        %v1659 = vpop.f32.mrb[0].mxu0
        %1660 = vmatprep.mubr.f32.mxu0 0.0
        %1661 = vmatmul.mubr.f32.gmra.mrb[0].mxu0 %v1142
        %v1662 = vpop.f32.mrb[0].mxu0
        %v1663 = vadd.f32 %v1418, %v1662
        %v1664 = vpop.f32.mrb[0].mxu0
        %1665 = vmatprep.mubr.f32.mxu0 0.0
        %1666 = vmatmul.mubr.f32.gmra.mrb[0].mxu0 %v1143
        %v1667 = vpop.f32.mrb[0].mxu0
        %v1668 = vadd.f32 %v1423, %v1667
        %v1669 = vpop.f32.mrb[0].mxu0
        %1670 = vmatprep.mubr.f32.mxu0 0.0
        %1671 = vmatmul.mubr.f32.gmra.mrb[0].mxu0 %v1144
        %v1672 = vpop.f32.mrb[0].mxu0
        %v1673 = vadd.f32 %v1428, %v1672
        %v1674 = vpop.f32.mrb[0].mxu0
        %1675 = vmatprep.mubr.f32.mxu0 0.0
        %1676 = vmatmul.mubr.f32.gmra.mrb[0].mxu0 %v1145
        %v1677 = vpop.f32.mrb[0].mxu0
        %v1678 = vadd.f32 %v1433, %v1677
        %v1679 = vpop.f32.mrb[0].mxu0
        %1680 = vmatprep.mubr.f32.mxu0 0.0
        %1681 = vmatmul.mubr.f32.gmra.mrb[0].mxu0 %v1146
        %v1682 = vpop.f32.mrb[0].mxu0
        %v1683 = vadd.f32 %v1438, %v1682
        %v1684 = vpop.f32.mrb[0].mxu0
        %1685 = vmatprep.mubr.f32.mxu0 0.0
        %1686 = vmatmul.mubr.f32.gmra.mrb[0].mxu0 %v1147
        %v1687 = vpop.f32.mrb[0].mxu0
        %v1688 = vadd.f32 %v1443, %v1687
        %v1689 = vpop.f32.mrb[0].mxu0
        %1690 = vmatprep.mubr.f32.mxu0 0.0
        %1691 = vmatmul.mubr.f32.gmra.mrb[0].mxu0 %v1148
        %v1692 = vpop.f32.mrb[0].mxu0
        %v1693 = vadd.f32 %v1448, %v1692
        %v1694 = vpop.f32.mrb[0].mxu0
        %1695 = vmatprep.mubr.f32.mxu0 0.0
        %1696 = vmatmul.mubr.f32.gmra.mrb[0].mxu0 %v1149
        %v1697 = vpop.f32.mrb[0].mxu0
        %v1698 = vadd.f32 %v1453, %v1697
        %v1699 = vpop.f32.mrb[0].mxu0
        %1700 = vmatprep.mubr.f32.mxu0 0.0
        %1701 = vmatmul.mubr.f32.gmra.mrb[0].mxu0 %v1150
        %v1702 = vpop.f32.mrb[0].mxu0
        %v1703 = vadd.f32 %v1458, %v1702
        %v1704 = vpop.f32.mrb[0].mxu0
        %1705 = vmatprep.mubr.f32.mxu0 0.0
        %1706 = vmatmul.mubr.f32.gmra.mrb[0].mxu0 %v1151
        %v1707 = vpop.f32.mrb[0].mxu0
        %v1708 = vadd.f32 %v1463, %v1707
        %v1709 = vpop.f32.mrb[0].mxu0
        %1710 = vdwg.mxu0
        %v1711 = vld [vmem:[#allocation2 + $0x13] sm:$0xff]
        %v1712 = vld [vmem:[#allocation2 + $0x1b] sm:$0xff]
        %v1713 = vld [vmem:[#allocation2 + $0x23] sm:$0xff]
        %v1714 = vld [vmem:[#allocation2 + $0x2b] sm:$0xff]
        %v1715 = vld [vmem:[#allocation2 + $0x33] sm:$0xff]
        %v1716 = vld [vmem:[#allocation2 + $0x3b] sm:$0xff]
        %v1717 = vld [vmem:[#allocation2 + $0x43] sm:$0xff]
        %v1718 = vld [vmem:[#allocation2 + $0x4b] sm:$0xff]
        %v1719 = vld [vmem:[#allocation2 + $0x53] sm:$0xff]
        %v1720 = vld [vmem:[#allocation2 + $0x5b] sm:$0xff]
        %v1721 = vld [vmem:[#allocation2 + $0x63] sm:$0xff]
        %v1722 = vld [vmem:[#allocation2 + $0x6b] sm:$0xff]
        %v1723 = vld [vmem:[#allocation2 + $0x73] sm:$0xff]
        %v1724 = vld [vmem:[#allocation2 + $0x7b] sm:$0xff]
        %v1725 = vld [vmem:[#allocation2 + $0x83] sm:$0xff]
        %v1726 = vld [vmem:[#allocation2 + $0x8b] sm:$0xff]
        %v1727 = vld [vmem:[#allocation2 + $0x93] sm:$0xff]
        %v1728 = vld [vmem:[#allocation2 + $0x9b] sm:$0xff]
        %v1729 = vld [vmem:[#allocation2 + $0xa3] sm:$0xff]
        %v1730 = vld [vmem:[#allocation2 + $0xab] sm:$0xff]
        %v1731 = vld [vmem:[#allocation2 + $0xb3] sm:$0xff]
        %v1732 = vld [vmem:[#allocation2 + $0xbb] sm:$0xff]
        %v1733 = vld [vmem:[#allocation2 + $0xc3] sm:$0xff]
        %v1734 = vld [vmem:[#allocation2 + $0xcb] sm:$0xff]
        %v1735 = vld [vmem:[#allocation2 + $0xd3] sm:$0xff]
        %v1736 = vld [vmem:[#allocation2 + $0xdb] sm:$0xff]
        %v1737 = vld [vmem:[#allocation2 + $0xe3] sm:$0xff]
        %v1738 = vld [vmem:[#allocation2 + $0xeb] sm:$0xff]
        %v1739 = vld [vmem:[#allocation2 + $0xf3] sm:$0xff]
        %v1740 = vld [vmem:[#allocation2 + $0xfb] sm:$0xff]
        %v1741 = vld [vmem:[#allocation2 + $0x103] sm:$0xff]
        %v1742 = vld [vmem:[#allocation2 + $0x10b] sm:$0xff]
        %v1743 = vld [vmem:[#allocation2 + $0x113] sm:$0xff]
        %v1744 = vld [vmem:[#allocation2 + $0x11b] sm:$0xff]
        %v1745 = vld [vmem:[#allocation2 + $0x123] sm:$0xff]
        %v1746 = vld [vmem:[#allocation2 + $0x12b] sm:$0xff]
        %s1747 = scalar_lea.vmem %s4, 256
        %v1748 = vld [vmem:[%s1747] sm:$0xff]
        %v1749 = vld [vmem:[%s1747 + $0x8] sm:$0xff]
        %v1750 = vld [vmem:[%s1747 + $0x10] sm:$0xff]
        %v1751 = vld [vmem:[%s1747 + $0x18] sm:$0xff]
        %v1752 = vld [vmem:[%s1747 + $0x20] sm:$0xff]
        %v1753 = vld [vmem:[%s1747 + $0x28] sm:$0xff]
        %v1754 = vld [vmem:[%s1747 + $0x30] sm:$0xff]
        %v1755 = vld [vmem:[%s1747 + $0x38] sm:$0xff]
        %v1756 = vld [vmem:[%s1747 + $0x40] sm:$0xff]
        %v1757 = vld [vmem:[%s1747 + $0x48] sm:$0xff]
        %v1758 = vld [vmem:[%s1747 + $0x50] sm:$0xff]
        %v1759 = vld [vmem:[%s1747 + $0x58] sm:$0xff]
        %v1760 = vld [vmem:[%s1747 + $0x60] sm:$0xff]
        %v1761 = vld [vmem:[%s1747 + $0x68] sm:$0xff]
        %v1762 = vld [vmem:[%s1747 + $0x70] sm:$0xff]
        %v1763 = vld [vmem:[%s1747 + $0x78] sm:$0xff]
        %1764 = vmatprep.subr.mxu0 0.0
        %1765 = vmatpush1.msra.mxu0 %v1748
        %1766 = vmatprep.subr.mxu0 0.0
        %1767 = vmatpush1.msra.mxu0 %v1749
        %1768 = vmatprep.subr.mxu0 0.0
        %1769 = vmatpush1.msra.mxu0 %v1750
        %1770 = vmatprep.subr.mxu0 0.0
        %1771 = vmatpush1.msra.mxu0 %v1751
        %1772 = vmatprep.subr.mxu0 0.0
        %1773 = vmatpush1.msra.mxu0 %v1752
        %1774 = vmatprep.subr.mxu0 0.0
        %1775 = vmatpush1.msra.mxu0 %v1753
        %1776 = vmatprep.subr.mxu0 0.0
        %1777 = vmatpush1.msra.mxu0 %v1754
        %1778 = vmatprep.subr.mxu0 0.0
        %1779 = vmatpush1.msra.mxu0 %v1755
        %1780 = vmatprep.subr.mxu0 0.0
        %1781 = vmatpush1.msra.mxu0 %v1756
        %1782 = vmatprep.subr.mxu0 0.0
        %1783 = vmatpush1.msra.mxu0 %v1757
        %1784 = vmatprep.subr.mxu0 0.0
        %1785 = vmatpush1.msra.mxu0 %v1758
        %1786 = vmatprep.subr.mxu0 0.0
        %1787 = vmatpush1.msra.mxu0 %v1759
        %1788 = vmatprep.subr.mxu0 0.0
        %1789 = vmatpush1.msra.mxu0 %v1760
        %1790 = vmatprep.subr.mxu0 0.0
        %1791 = vmatpush1.msra.mxu0 %v1761
        %1792 = vmatprep.subr.mxu0 0.0
        %1793 = vmatpush1.msra.mxu0 %v1762
        %1794 = vmatprep.subr.mxu0 0.0
        %1795 = vmatpush1.msra.mxu0 %v1763
        %1796 = vmatprep.subr.mxu0 0.0
        %1797 = vmatpush1.msra.mxu0 0.0
        %1798 = vmatprep.subr.mxu0 0.0
        %1799 = vmatpush1.msra.mxu0 0.0
        %1800 = vmatprep.subr.mxu0 0.0
        %1801 = vmatpush1.msra.mxu0 0.0
        %1802 = vmatprep.subr.mxu0 0.0
        %1803 = vmatpush1.msra.mxu0 0.0
        %1804 = vmatprep.subr.mxu0 0.0
        %1805 = vmatpush1.msra.mxu0 0.0
        %1806 = vmatprep.subr.mxu0 0.0
        %1807 = vmatpush1.msra.mxu0 0.0
        %1808 = vmatprep.subr.mxu0 0.0
        %1809 = vmatpush1.msra.mxu0 0.0
        %1810 = vmatprep.subr.mxu0 0.0
        %1811 = vmatpush1.msra.mxu0 0.0
        %1812 = vmatprep.subr.mxu0 0.0
        %1813 = vmatpush1.msra.mxu0 0.0
        %1814 = vmatprep.subr.mxu0 0.0
        %1815 = vmatpush1.msra.mxu0 0.0
        %1816 = vmatprep.subr.mxu0 0.0
        %1817 = vmatpush1.msra.mxu0 0.0
        %1818 = vmatprep.subr.mxu0 0.0
        %1819 = vmatpush1.msra.mxu0 0.0
        %1820 = vmatprep.subr.mxu0 0.0
        %1821 = vmatpush1.msra.mxu0 0.0
        %1822 = vmatprep.subr.mxu0 0.0
        %1823 = vmatpush1.msra.mxu0 0.0
        %1824 = vmatprep.subr.mxu0 0.0
        %1825 = vmatpush1.msra.mxu0 0.0
        %1826 = vmatprep.subr.mxu0 0.0
        %1827 = vmatpush1.msra.mxu0 0.0
        %1828 = vmatprep.mubr.f32.mxu0 0.0
        %1829 = vmatmul.mubr.f32.gmra.mrb[0].mxu0 %v1711
        %v1830 = vpop.f32.mrb[0].mxu0
        %v1831 = vadd.f32 0.0, %v1830
        %v1832 = vpop.f32.mrb[0].mxu0
        %1833 = vmatprep.mubr.f32.mxu0 0.0
        %1834 = vmatmul.mubr.f32.gmra.mrb[0].mxu0 %v1712
        %v1835 = vpop.f32.mrb[0].mxu0
        %v1836 = vadd.f32 0.0, %v1835
        %v1837 = vpop.f32.mrb[0].mxu0
        %1838 = vmatprep.mubr.f32.mxu0 0.0
        %1839 = vmatmul.mubr.f32.gmra.mrb[0].mxu0 %v1713
        %v1840 = vpop.f32.mrb[0].mxu0
        %v1841 = vadd.f32 0.0, %v1840
        %v1842 = vpop.f32.mrb[0].mxu0
        %1843 = vmatprep.mubr.f32.mxu0 0.0
        %1844 = vmatmul.mubr.f32.gmra.mrb[0].mxu0 %v1714
        %v1845 = vpop.f32.mrb[0].mxu0
        %v1846 = vadd.f32 0.0, %v1845
        %v1847 = vpop.f32.mrb[0].mxu0
        %1848 = vmatprep.mubr.f32.mxu0 0.0
        %1849 = vmatmul.mubr.f32.gmra.mrb[0].mxu0 %v1715
        %v1850 = vpop.f32.mrb[0].mxu0
        %v1851 = vadd.f32 0.0, %v1850
        %v1852 = vpop.f32.mrb[0].mxu0
        %1853 = vmatprep.mubr.f32.mxu0 0.0
        %1854 = vmatmul.mubr.f32.gmra.mrb[0].mxu0 %v1716
        %v1855 = vpop.f32.mrb[0].mxu0
        %v1856 = vadd.f32 0.0, %v1855
        %v1857 = vpop.f32.mrb[0].mxu0
        %1858 = vmatprep.mubr.f32.mxu0 0.0
        %1859 = vmatmul.mubr.f32.gmra.mrb[0].mxu0 %v1717
        %v1860 = vpop.f32.mrb[0].mxu0
        %v1861 = vadd.f32 0.0, %v1860
        %v1862 = vpop.f32.mrb[0].mxu0
        %1863 = vmatprep.mubr.f32.mxu0 0.0
        %1864 = vmatmul.mubr.f32.gmra.mrb[0].mxu0 %v1718
        %v1865 = vpop.f32.mrb[0].mxu0
        %v1866 = vadd.f32 0.0, %v1865
        %v1867 = vpop.f32.mrb[0].mxu0
        %1868 = vmatprep.mubr.f32.mxu0 0.0
        %1869 = vmatmul.mubr.f32.gmra.mrb[0].mxu0 %v1719
        %v1870 = vpop.f32.mrb[0].mxu0
        %v1871 = vadd.f32 0.0, %v1870
        %v1872 = vpop.f32.mrb[0].mxu0
        %1873 = vmatprep.mubr.f32.mxu0 0.0
        %1874 = vmatmul.mubr.f32.gmra.mrb[0].mxu0 %v1720
        %v1875 = vpop.f32.mrb[0].mxu0
        %v1876 = vadd.f32 0.0, %v1875
        %v1877 = vpop.f32.mrb[0].mxu0
        %1878 = vmatprep.mubr.f32.mxu0 0.0
        %1879 = vmatmul.mubr.f32.gmra.mrb[0].mxu0 %v1721
        %v1880 = vpop.f32.mrb[0].mxu0
        %v1881 = vadd.f32 0.0, %v1880
        %v1882 = vpop.f32.mrb[0].mxu0
        %1883 = vmatprep.mubr.f32.mxu0 0.0
        %1884 = vmatmul.mubr.f32.gmra.mrb[0].mxu0 %v1722
        %v1885 = vpop.f32.mrb[0].mxu0
        %v1886 = vadd.f32 0.0, %v1885
        %v1887 = vpop.f32.mrb[0].mxu0
        %1888 = vmatprep.mubr.f32.mxu0 0.0
        %1889 = vmatmul.mubr.f32.gmra.mrb[0].mxu0 %v1723
        %v1890 = vpop.f32.mrb[0].mxu0
        %v1891 = vadd.f32 0.0, %v1890
        %v1892 = vpop.f32.mrb[0].mxu0
        %1893 = vmatprep.mubr.f32.mxu0 0.0
        %1894 = vmatmul.mubr.f32.gmra.mrb[0].mxu0 %v1724
        %v1895 = vpop.f32.mrb[0].mxu0
        %v1896 = vadd.f32 0.0, %v1895
        %v1897 = vpop.f32.mrb[0].mxu0
        %1898 = vmatprep.mubr.f32.mxu0 0.0
        %1899 = vmatmul.mubr.f32.gmra.mrb[0].mxu0 %v1725
        %v1900 = vpop.f32.mrb[0].mxu0
        %v1901 = vadd.f32 0.0, %v1900
        %v1902 = vpop.f32.mrb[0].mxu0
        %1903 = vmatprep.mubr.f32.mxu0 0.0
        %1904 = vmatmul.mubr.f32.gmra.mrb[0].mxu0 %v1726
        %v1905 = vpop.f32.mrb[0].mxu0
        %v1906 = vadd.f32 0.0, %v1905
        %v1907 = vpop.f32.mrb[0].mxu0
        %1908 = vmatprep.mubr.f32.mxu0 0.0
        %1909 = vmatmul.mubr.f32.gmra.mrb[0].mxu0 %v1727
        %v1910 = vpop.f32.mrb[0].mxu0
        %v1911 = vadd.f32 0.0, %v1910
        %v1912 = vpop.f32.mrb[0].mxu0
        %1913 = vmatprep.mubr.f32.mxu0 0.0
        %1914 = vmatmul.mubr.f32.gmra.mrb[0].mxu0 %v1728
        %v1915 = vpop.f32.mrb[0].mxu0
        %v1916 = vadd.f32 0.0, %v1915
        %v1917 = vpop.f32.mrb[0].mxu0
        %1918 = vmatprep.mubr.f32.mxu0 0.0
        %1919 = vmatmul.mubr.f32.gmra.mrb[0].mxu0 %v1729
        %v1920 = vpop.f32.mrb[0].mxu0
        %v1921 = vadd.f32 0.0, %v1920
        %v1922 = vpop.f32.mrb[0].mxu0
        %1923 = vmatprep.mubr.f32.mxu0 0.0
        %1924 = vmatmul.mubr.f32.gmra.mrb[0].mxu0 %v1730
        %v1925 = vpop.f32.mrb[0].mxu0
        %v1926 = vadd.f32 0.0, %v1925
        %v1927 = vpop.f32.mrb[0].mxu0
        %1928 = vmatprep.mubr.f32.mxu0 0.0
        %1929 = vmatmul.mubr.f32.gmra.mrb[0].mxu0 %v1731
        %v1930 = vpop.f32.mrb[0].mxu0
        %v1931 = vadd.f32 0.0, %v1930
        %v1932 = vpop.f32.mrb[0].mxu0
        %1933 = vmatprep.mubr.f32.mxu0 0.0
        %1934 = vmatmul.mubr.f32.gmra.mrb[0].mxu0 %v1732
        %v1935 = vpop.f32.mrb[0].mxu0
        %v1936 = vadd.f32 0.0, %v1935
        %v1937 = vpop.f32.mrb[0].mxu0
        %1938 = vmatprep.mubr.f32.mxu0 0.0
        %1939 = vmatmul.mubr.f32.gmra.mrb[0].mxu0 %v1733
        %v1940 = vpop.f32.mrb[0].mxu0
        %v1941 = vadd.f32 0.0, %v1940
        %v1942 = vpop.f32.mrb[0].mxu0
        %1943 = vmatprep.mubr.f32.mxu0 0.0
        %1944 = vmatmul.mubr.f32.gmra.mrb[0].mxu0 %v1734
        %v1945 = vpop.f32.mrb[0].mxu0
        %v1946 = vadd.f32 0.0, %v1945
        %v1947 = vpop.f32.mrb[0].mxu0
        %1948 = vmatprep.mubr.f32.mxu0 0.0
        %1949 = vmatmul.mubr.f32.gmra.mrb[0].mxu0 %v1735
        %v1950 = vpop.f32.mrb[0].mxu0
        %v1951 = vadd.f32 0.0, %v1950
        %v1952 = vpop.f32.mrb[0].mxu0
        %1953 = vmatprep.mubr.f32.mxu0 0.0
        %1954 = vmatmul.mubr.f32.gmra.mrb[0].mxu0 %v1736
        %v1955 = vpop.f32.mrb[0].mxu0
        %v1956 = vadd.f32 0.0, %v1955
        %v1957 = vpop.f32.mrb[0].mxu0
        %1958 = vmatprep.mubr.f32.mxu0 0.0
        %1959 = vmatmul.mubr.f32.gmra.mrb[0].mxu0 %v1737
        %v1960 = vpop.f32.mrb[0].mxu0
        %v1961 = vadd.f32 0.0, %v1960
        %v1962 = vpop.f32.mrb[0].mxu0
        %1963 = vmatprep.mubr.f32.mxu0 0.0
        %1964 = vmatmul.mubr.f32.gmra.mrb[0].mxu0 %v1738
        %v1965 = vpop.f32.mrb[0].mxu0
        %v1966 = vadd.f32 0.0, %v1965
        %v1967 = vpop.f32.mrb[0].mxu0
        %1968 = vmatprep.mubr.f32.mxu0 0.0
        %1969 = vmatmul.mubr.f32.gmra.mrb[0].mxu0 %v1739
        %v1970 = vpop.f32.mrb[0].mxu0
        %v1971 = vadd.f32 0.0, %v1970
        %v1972 = vpop.f32.mrb[0].mxu0
        %1973 = vmatprep.mubr.f32.mxu0 0.0
        %1974 = vmatmul.mubr.f32.gmra.mrb[0].mxu0 %v1740
        %v1975 = vpop.f32.mrb[0].mxu0
        %v1976 = vadd.f32 0.0, %v1975
        %v1977 = vpop.f32.mrb[0].mxu0
        %1978 = vmatprep.mubr.f32.mxu0 0.0
        %1979 = vmatmul.mubr.f32.gmra.mrb[0].mxu0 %v1741
        %v1980 = vpop.f32.mrb[0].mxu0
        %v1981 = vadd.f32 0.0, %v1980
        %v1982 = vpop.f32.mrb[0].mxu0
        %1983 = vmatprep.mubr.f32.mxu0 0.0
        %1984 = vmatmul.mubr.f32.gmra.mrb[0].mxu0 %v1742
        %v1985 = vpop.f32.mrb[0].mxu0
        %v1986 = vadd.f32 0.0, %v1985
        %v1987 = vpop.f32.mrb[0].mxu0
        %1988 = vmatprep.mubr.f32.mxu0 0.0
        %1989 = vmatmul.mubr.f32.gmra.mrb[0].mxu0 %v1743
        %v1990 = vpop.f32.mrb[0].mxu0
        %v1991 = vadd.f32 0.0, %v1990
        %v1992 = vpop.f32.mrb[0].mxu0
        %1993 = vmatprep.mubr.f32.mxu0 0.0
        %1994 = vmatmul.mubr.f32.gmra.mrb[0].mxu0 %v1744
        %v1995 = vpop.f32.mrb[0].mxu0
        %v1996 = vadd.f32 0.0, %v1995
        %v1997 = vpop.f32.mrb[0].mxu0
        %1998 = vmatprep.mubr.f32.mxu0 0.0
        %1999 = vmatmul.mubr.f32.gmra.mrb[0].mxu0 %v1745
        %v2000 = vpop.f32.mrb[0].mxu0
        %v2001 = vadd.f32 0.0, %v2000
        %v2002 = vpop.f32.mrb[0].mxu0
        %2003 = vmatprep.mubr.f32.mxu0 0.0
        %2004 = vmatmul.mubr.f32.gmra.mrb[0].mxu0 %v1746
        %v2005 = vpop.f32.mrb[0].mxu0
        %v2006 = vadd.f32 0.0, %v2005
        %v2007 = vpop.f32.mrb[0].mxu0
        %2008 = vdwg.mxu0
        %v2009 = vadd.f32 %v1533, %v1831
        %v2010 = vadd.f32 %v1538, %v1836
        %v2011 = vadd.f32 %v1543, %v1841
        %v2012 = vadd.f32 %v1548, %v1846
        %v2013 = vadd.f32 %v1553, %v1851
        %v2014 = vadd.f32 %v1558, %v1856
        %v2015 = vadd.f32 %v1563, %v1861
        %v2016 = vadd.f32 %v1568, %v1866
        %v2017 = vadd.f32 %v1573, %v1871
        %v2018 = vadd.f32 %v1578, %v1876
        %v2019 = vadd.f32 %v1583, %v1881
        %v2020 = vadd.f32 %v1588, %v1886
        %v2021 = vadd.f32 %v1593, %v1891
        %v2022 = vadd.f32 %v1598, %v1896
        %v2023 = vadd.f32 %v1603, %v1901
        %v2024 = vadd.f32 %v1608, %v1906
        %v2025 = vadd.f32 %v1613, %v1911
        %v2026 = vadd.f32 %v1618, %v1916
        %v2027 = vadd.f32 %v1623, %v1921
        %v2028 = vadd.f32 %v1628, %v1926
        %v2029 = vadd.f32 %v1633, %v1931
        %v2030 = vadd.f32 %v1638, %v1936
        %v2031 = vadd.f32 %v1643, %v1941
        %v2032 = vadd.f32 %v1648, %v1946
        %v2033 = vadd.f32 %v1653, %v1951
        %v2034 = vadd.f32 %v1658, %v1956
        %v2035 = vadd.f32 %v1663, %v1961
        %v2036 = vadd.f32 %v1668, %v1966
        %v2037 = vadd.f32 %v1673, %v1971
        %v2038 = vadd.f32 %v1678, %v1976
        %v2039 = vadd.f32 %v1683, %v1981
        %v2040 = vadd.f32 %v1688, %v1986
        %v2041 = vadd.f32 %v1693, %v1991
        %v2042 = vadd.f32 %v1698, %v1996
        %v2043 = vadd.f32 %v1703, %v2001
        %v2044 = vadd.f32 %v1708, %v2006
        %v2045 = vld [vmem:[#allocation2 + $0x23] sm:$0xff]
        %v2046 = vld [vmem:[#allocation2 + $0x2b] sm:$0xff]
        %v2047 = vld [vmem:[#allocation2 + $0x33] sm:$0xff]
        %v2048 = vld [vmem:[#allocation2 + $0x3b] sm:$0xff]
        %v2049 = vld [vmem:[#allocation2 + $0x43] sm:$0xff]
        %v2050 = vld [vmem:[#allocation2 + $0x4b] sm:$0xff]
        %v2051 = vld [vmem:[#allocation2 + $0x53] sm:$0xff]
        %v2052 = vld [vmem:[#allocation2 + $0x5b] sm:$0xff]
        %v2053 = vld [vmem:[#allocation2 + $0x63] sm:$0xff]
        %v2054 = vld [vmem:[#allocation2 + $0x6b] sm:$0xff]
        %v2055 = vld [vmem:[#allocation2 + $0x73] sm:$0xff]
        %v2056 = vld [vmem:[#allocation2 + $0x7b] sm:$0xff]
        %v2057 = vld [vmem:[#allocation2 + $0x83] sm:$0xff]
        %v2058 = vld [vmem:[#allocation2 + $0x8b] sm:$0xff]
        %v2059 = vld [vmem:[#allocation2 + $0x93] sm:$0xff]
        %v2060 = vld [vmem:[#allocation2 + $0x9b] sm:$0xff]
        %v2061 = vld [vmem:[#allocation2 + $0xa3] sm:$0xff]
        %v2062 = vld [vmem:[#allocation2 + $0xab] sm:$0xff]
        %v2063 = vld [vmem:[#allocation2 + $0xb3] sm:$0xff]
        %v2064 = vld [vmem:[#allocation2 + $0xbb] sm:$0xff]
        %v2065 = vld [vmem:[#allocation2 + $0xc3] sm:$0xff]
        %v2066 = vld [vmem:[#allocation2 + $0xcb] sm:$0xff]
        %v2067 = vld [vmem:[#allocation2 + $0xd3] sm:$0xff]
        %v2068 = vld [vmem:[#allocation2 + $0xdb] sm:$0xff]
        %v2069 = vld [vmem:[#allocation2 + $0xe3] sm:$0xff]
        %v2070 = vld [vmem:[#allocation2 + $0xeb] sm:$0xff]
        %v2071 = vld [vmem:[#allocation2 + $0xf3] sm:$0xff]
        %v2072 = vld [vmem:[#allocation2 + $0xfb] sm:$0xff]
        %v2073 = vld [vmem:[#allocation2 + $0x103] sm:$0xff]
        %v2074 = vld [vmem:[#allocation2 + $0x10b] sm:$0xff]
        %v2075 = vld [vmem:[#allocation2 + $0x113] sm:$0xff]
        %v2076 = vld [vmem:[#allocation2 + $0x11b] sm:$0xff]
        %v2077 = vld [vmem:[#allocation2 + $0x123] sm:$0xff]
        %v2078 = vld [vmem:[#allocation2 + $0x12b] sm:$0xff]
        %v2079 = vld [vmem:[#allocation2 + $0x133] sm:$0xff]
        %v2080 = vld [vmem:[#allocation2 + $0x13b] sm:$0xff]
        %s2081 = scalar_lea.vmem %s4, 384
        %v2082 = vld [vmem:[%s2081] sm:$0xff]
        %v2083 = vld [vmem:[%s2081 + $0x8] sm:$0xff]
        %v2084 = vld [vmem:[%s2081 + $0x10] sm:$0xff]
        %v2085 = vld [vmem:[%s2081 + $0x18] sm:$0xff]
        %v2086 = vld [vmem:[%s2081 + $0x20] sm:$0xff]
        %v2087 = vld [vmem:[%s2081 + $0x28] sm:$0xff]
        %v2088 = vld [vmem:[%s2081 + $0x30] sm:$0xff]
        %v2089 = vld [vmem:[%s2081 + $0x38] sm:$0xff]
        %v2090 = vld [vmem:[%s2081 + $0x40] sm:$0xff]
        %v2091 = vld [vmem:[%s2081 + $0x48] sm:$0xff]
        %v2092 = vld [vmem:[%s2081 + $0x50] sm:$0xff]
        %v2093 = vld [vmem:[%s2081 + $0x58] sm:$0xff]
        %v2094 = vld [vmem:[%s2081 + $0x60] sm:$0xff]
        %v2095 = vld [vmem:[%s2081 + $0x68] sm:$0xff]
        %v2096 = vld [vmem:[%s2081 + $0x70] sm:$0xff]
        %v2097 = vld [vmem:[%s2081 + $0x78] sm:$0xff]
        %2098 = vmatprep.subr.mxu0 0.0
        %2099 = vmatpush1.msra.mxu0 %v2082
        %2100 = vmatprep.subr.mxu0 0.0
        %2101 = vmatpush1.msra.mxu0 %v2083
        %2102 = vmatprep.subr.mxu0 0.0
        %2103 = vmatpush1.msra.mxu0 %v2084
        %2104 = vmatprep.subr.mxu0 0.0
        %2105 = vmatpush1.msra.mxu0 %v2085
        %2106 = vmatprep.subr.mxu0 0.0
        %2107 = vmatpush1.msra.mxu0 %v2086
        %2108 = vmatprep.subr.mxu0 0.0
        %2109 = vmatpush1.msra.mxu0 %v2087
        %2110 = vmatprep.subr.mxu0 0.0
        %2111 = vmatpush1.msra.mxu0 %v2088
        %2112 = vmatprep.subr.mxu0 0.0
        %2113 = vmatpush1.msra.mxu0 %v2089
        %2114 = vmatprep.subr.mxu0 0.0
        %2115 = vmatpush1.msra.mxu0 %v2090
        %2116 = vmatprep.subr.mxu0 0.0
        %2117 = vmatpush1.msra.mxu0 %v2091
        %2118 = vmatprep.subr.mxu0 0.0
        %2119 = vmatpush1.msra.mxu0 %v2092
        %2120 = vmatprep.subr.mxu0 0.0
        %2121 = vmatpush1.msra.mxu0 %v2093
        %2122 = vmatprep.subr.mxu0 0.0
        %2123 = vmatpush1.msra.mxu0 %v2094
        %2124 = vmatprep.subr.mxu0 0.0
        %2125 = vmatpush1.msra.mxu0 %v2095
        %2126 = vmatprep.subr.mxu0 0.0
        %2127 = vmatpush1.msra.mxu0 %v2096
        %2128 = vmatprep.subr.mxu0 0.0
        %2129 = vmatpush1.msra.mxu0 %v2097
        %2130 = vmatprep.subr.mxu0 0.0
        %2131 = vmatpush1.msra.mxu0 0.0
        %2132 = vmatprep.subr.mxu0 0.0
        %2133 = vmatpush1.msra.mxu0 0.0
        %2134 = vmatprep.subr.mxu0 0.0
        %2135 = vmatpush1.msra.mxu0 0.0
        %2136 = vmatprep.subr.mxu0 0.0
        %2137 = vmatpush1.msra.mxu0 0.0
        %2138 = vmatprep.subr.mxu0 0.0
        %2139 = vmatpush1.msra.mxu0 0.0
        %2140 = vmatprep.subr.mxu0 0.0
        %2141 = vmatpush1.msra.mxu0 0.0
        %2142 = vmatprep.subr.mxu0 0.0
        %2143 = vmatpush1.msra.mxu0 0.0
        %2144 = vmatprep.subr.mxu0 0.0
        %2145 = vmatpush1.msra.mxu0 0.0
        %2146 = vmatprep.subr.mxu0 0.0
        %2147 = vmatpush1.msra.mxu0 0.0
        %2148 = vmatprep.subr.mxu0 0.0
        %2149 = vmatpush1.msra.mxu0 0.0
        %2150 = vmatprep.subr.mxu0 0.0
        %2151 = vmatpush1.msra.mxu0 0.0
        %2152 = vmatprep.subr.mxu0 0.0
        %2153 = vmatpush1.msra.mxu0 0.0
        %2154 = vmatprep.subr.mxu0 0.0
        %2155 = vmatpush1.msra.mxu0 0.0
        %2156 = vmatprep.subr.mxu0 0.0
        %2157 = vmatpush1.msra.mxu0 0.0
        %2158 = vmatprep.subr.mxu0 0.0
        %2159 = vmatpush1.msra.mxu0 0.0
        %2160 = vmatprep.subr.mxu0 0.0
        %2161 = vmatpush1.msra.mxu0 0.0
        %2162 = vmatprep.mubr.f32.mxu0 0.0
        %2163 = vmatmul.mubr.f32.gmra.mrb[0].mxu0 %v2045
        %v2164 = vpop.f32.mrb[0].mxu0
        %v2165 = vadd.f32 0.0, %v2164
        %v2166 = vpop.f32.mrb[0].mxu0
        %2167 = vmatprep.mubr.f32.mxu0 0.0
        %2168 = vmatmul.mubr.f32.gmra.mrb[0].mxu0 %v2046
        %v2169 = vpop.f32.mrb[0].mxu0
        %v2170 = vadd.f32 0.0, %v2169
        %v2171 = vpop.f32.mrb[0].mxu0
        %2172 = vmatprep.mubr.f32.mxu0 0.0
        %2173 = vmatmul.mubr.f32.gmra.mrb[0].mxu0 %v2047
        %v2174 = vpop.f32.mrb[0].mxu0
        %v2175 = vadd.f32 0.0, %v2174
        %v2176 = vpop.f32.mrb[0].mxu0
        %2177 = vmatprep.mubr.f32.mxu0 0.0
        %2178 = vmatmul.mubr.f32.gmra.mrb[0].mxu0 %v2048
        %v2179 = vpop.f32.mrb[0].mxu0
        %v2180 = vadd.f32 0.0, %v2179
        %v2181 = vpop.f32.mrb[0].mxu0
        %2182 = vmatprep.mubr.f32.mxu0 0.0
        %2183 = vmatmul.mubr.f32.gmra.mrb[0].mxu0 %v2049
        %v2184 = vpop.f32.mrb[0].mxu0
        %v2185 = vadd.f32 0.0, %v2184
        %v2186 = vpop.f32.mrb[0].mxu0
        %2187 = vmatprep.mubr.f32.mxu0 0.0
        %2188 = vmatmul.mubr.f32.gmra.mrb[0].mxu0 %v2050
        %v2189 = vpop.f32.mrb[0].mxu0
        %v2190 = vadd.f32 0.0, %v2189
        %v2191 = vpop.f32.mrb[0].mxu0
        %2192 = vmatprep.mubr.f32.mxu0 0.0
        %2193 = vmatmul.mubr.f32.gmra.mrb[0].mxu0 %v2051
        %v2194 = vpop.f32.mrb[0].mxu0
        %v2195 = vadd.f32 0.0, %v2194
        %v2196 = vpop.f32.mrb[0].mxu0
        %2197 = vmatprep.mubr.f32.mxu0 0.0
        %2198 = vmatmul.mubr.f32.gmra.mrb[0].mxu0 %v2052
        %v2199 = vpop.f32.mrb[0].mxu0
        %v2200 = vadd.f32 0.0, %v2199
        %v2201 = vpop.f32.mrb[0].mxu0
        %2202 = vmatprep.mubr.f32.mxu0 0.0
        %2203 = vmatmul.mubr.f32.gmra.mrb[0].mxu0 %v2053
        %v2204 = vpop.f32.mrb[0].mxu0
        %v2205 = vadd.f32 0.0, %v2204
        %v2206 = vpop.f32.mrb[0].mxu0
        %2207 = vmatprep.mubr.f32.mxu0 0.0
        %2208 = vmatmul.mubr.f32.gmra.mrb[0].mxu0 %v2054
        %v2209 = vpop.f32.mrb[0].mxu0
        %v2210 = vadd.f32 0.0, %v2209
        %v2211 = vpop.f32.mrb[0].mxu0
        %2212 = vmatprep.mubr.f32.mxu0 0.0
        %2213 = vmatmul.mubr.f32.gmra.mrb[0].mxu0 %v2055
        %v2214 = vpop.f32.mrb[0].mxu0
        %v2215 = vadd.f32 0.0, %v2214
        %v2216 = vpop.f32.mrb[0].mxu0
        %2217 = vmatprep.mubr.f32.mxu0 0.0
        %2218 = vmatmul.mubr.f32.gmra.mrb[0].mxu0 %v2056
        %v2219 = vpop.f32.mrb[0].mxu0
        %v2220 = vadd.f32 0.0, %v2219
        %v2221 = vpop.f32.mrb[0].mxu0
        %2222 = vmatprep.mubr.f32.mxu0 0.0
        %2223 = vmatmul.mubr.f32.gmra.mrb[0].mxu0 %v2057
        %v2224 = vpop.f32.mrb[0].mxu0
        %v2225 = vadd.f32 0.0, %v2224
        %v2226 = vpop.f32.mrb[0].mxu0
        %2227 = vmatprep.mubr.f32.mxu0 0.0
        %2228 = vmatmul.mubr.f32.gmra.mrb[0].mxu0 %v2058
        %v2229 = vpop.f32.mrb[0].mxu0
        %v2230 = vadd.f32 0.0, %v2229
        %v2231 = vpop.f32.mrb[0].mxu0
        %2232 = vmatprep.mubr.f32.mxu0 0.0
        %2233 = vmatmul.mubr.f32.gmra.mrb[0].mxu0 %v2059
        %v2234 = vpop.f32.mrb[0].mxu0
        %v2235 = vadd.f32 0.0, %v2234
        %v2236 = vpop.f32.mrb[0].mxu0
        %2237 = vmatprep.mubr.f32.mxu0 0.0
        %2238 = vmatmul.mubr.f32.gmra.mrb[0].mxu0 %v2060
        %v2239 = vpop.f32.mrb[0].mxu0
        %v2240 = vadd.f32 0.0, %v2239
        %v2241 = vpop.f32.mrb[0].mxu0
        %2242 = vmatprep.mubr.f32.mxu0 0.0
        %2243 = vmatmul.mubr.f32.gmra.mrb[0].mxu0 %v2061
        %v2244 = vpop.f32.mrb[0].mxu0
        %v2245 = vadd.f32 0.0, %v2244
        %v2246 = vpop.f32.mrb[0].mxu0
        %2247 = vmatprep.mubr.f32.mxu0 0.0
        %2248 = vmatmul.mubr.f32.gmra.mrb[0].mxu0 %v2062
        %v2249 = vpop.f32.mrb[0].mxu0
        %v2250 = vadd.f32 0.0, %v2249
        %v2251 = vpop.f32.mrb[0].mxu0
        %2252 = vmatprep.mubr.f32.mxu0 0.0
        %2253 = vmatmul.mubr.f32.gmra.mrb[0].mxu0 %v2063
        %v2254 = vpop.f32.mrb[0].mxu0
        %v2255 = vadd.f32 0.0, %v2254
        %v2256 = vpop.f32.mrb[0].mxu0
        %2257 = vmatprep.mubr.f32.mxu0 0.0
        %2258 = vmatmul.mubr.f32.gmra.mrb[0].mxu0 %v2064
        %v2259 = vpop.f32.mrb[0].mxu0
        %v2260 = vadd.f32 0.0, %v2259
        %v2261 = vpop.f32.mrb[0].mxu0
        %2262 = vmatprep.mubr.f32.mxu0 0.0
        %2263 = vmatmul.mubr.f32.gmra.mrb[0].mxu0 %v2065
        %v2264 = vpop.f32.mrb[0].mxu0
        %v2265 = vadd.f32 0.0, %v2264
        %v2266 = vpop.f32.mrb[0].mxu0
        %2267 = vmatprep.mubr.f32.mxu0 0.0
        %2268 = vmatmul.mubr.f32.gmra.mrb[0].mxu0 %v2066
        %v2269 = vpop.f32.mrb[0].mxu0
        %v2270 = vadd.f32 0.0, %v2269
        %v2271 = vpop.f32.mrb[0].mxu0
        %2272 = vmatprep.mubr.f32.mxu0 0.0
        %2273 = vmatmul.mubr.f32.gmra.mrb[0].mxu0 %v2067
        %v2274 = vpop.f32.mrb[0].mxu0
        %v2275 = vadd.f32 0.0, %v2274
        %v2276 = vpop.f32.mrb[0].mxu0
        %2277 = vmatprep.mubr.f32.mxu0 0.0
        %2278 = vmatmul.mubr.f32.gmra.mrb[0].mxu0 %v2068
        %v2279 = vpop.f32.mrb[0].mxu0
        %v2280 = vadd.f32 0.0, %v2279
        %v2281 = vpop.f32.mrb[0].mxu0
        %2282 = vmatprep.mubr.f32.mxu0 0.0
        %2283 = vmatmul.mubr.f32.gmra.mrb[0].mxu0 %v2069
        %v2284 = vpop.f32.mrb[0].mxu0
        %v2285 = vadd.f32 0.0, %v2284
        %v2286 = vpop.f32.mrb[0].mxu0
        %2287 = vmatprep.mubr.f32.mxu0 0.0
        %2288 = vmatmul.mubr.f32.gmra.mrb[0].mxu0 %v2070
        %v2289 = vpop.f32.mrb[0].mxu0
        %v2290 = vadd.f32 0.0, %v2289
        %v2291 = vpop.f32.mrb[0].mxu0
        %2292 = vmatprep.mubr.f32.mxu0 0.0
        %2293 = vmatmul.mubr.f32.gmra.mrb[0].mxu0 %v2071
        %v2294 = vpop.f32.mrb[0].mxu0
        %v2295 = vadd.f32 0.0, %v2294
        %v2296 = vpop.f32.mrb[0].mxu0
        %2297 = vmatprep.mubr.f32.mxu0 0.0
        %2298 = vmatmul.mubr.f32.gmra.mrb[0].mxu0 %v2072
        %v2299 = vpop.f32.mrb[0].mxu0
        %v2300 = vadd.f32 0.0, %v2299
        %v2301 = vpop.f32.mrb[0].mxu0
        %2302 = vmatprep.mubr.f32.mxu0 0.0
        %2303 = vmatmul.mubr.f32.gmra.mrb[0].mxu0 %v2073
        %v2304 = vpop.f32.mrb[0].mxu0
        %v2305 = vadd.f32 0.0, %v2304
        %v2306 = vpop.f32.mrb[0].mxu0
        %2307 = vmatprep.mubr.f32.mxu0 0.0
        %2308 = vmatmul.mubr.f32.gmra.mrb[0].mxu0 %v2074
        %v2309 = vpop.f32.mrb[0].mxu0
        %v2310 = vadd.f32 0.0, %v2309
        %v2311 = vpop.f32.mrb[0].mxu0
        %2312 = vmatprep.mubr.f32.mxu0 0.0
        %2313 = vmatmul.mubr.f32.gmra.mrb[0].mxu0 %v2075
        %v2314 = vpop.f32.mrb[0].mxu0
        %v2315 = vadd.f32 0.0, %v2314
        %v2316 = vpop.f32.mrb[0].mxu0
        %2317 = vmatprep.mubr.f32.mxu0 0.0
        %2318 = vmatmul.mubr.f32.gmra.mrb[0].mxu0 %v2076
        %v2319 = vpop.f32.mrb[0].mxu0
        %v2320 = vadd.f32 0.0, %v2319
        %v2321 = vpop.f32.mrb[0].mxu0
        %2322 = vmatprep.mubr.f32.mxu0 0.0
        %2323 = vmatmul.mubr.f32.gmra.mrb[0].mxu0 %v2077
        %v2324 = vpop.f32.mrb[0].mxu0
        %v2325 = vadd.f32 0.0, %v2324
        %v2326 = vpop.f32.mrb[0].mxu0
        %2327 = vmatprep.mubr.f32.mxu0 0.0
        %2328 = vmatmul.mubr.f32.gmra.mrb[0].mxu0 %v2078
        %v2329 = vpop.f32.mrb[0].mxu0
        %v2330 = vadd.f32 0.0, %v2329
        %v2331 = vpop.f32.mrb[0].mxu0
        %2332 = vmatprep.mubr.f32.mxu0 0.0
        %2333 = vmatmul.mubr.f32.gmra.mrb[0].mxu0 %v2079
        %v2334 = vpop.f32.mrb[0].mxu0
        %v2335 = vadd.f32 0.0, %v2334
        %v2336 = vpop.f32.mrb[0].mxu0
        %2337 = vmatprep.mubr.f32.mxu0 0.0
        %2338 = vmatmul.mubr.f32.gmra.mrb[0].mxu0 %v2080
        %v2339 = vpop.f32.mrb[0].mxu0
        %v2340 = vadd.f32 0.0, %v2339
        %v2341 = vpop.f32.mrb[0].mxu0
        %2342 = vdwg.mxu0
        %v2343 = vadd.f32 %v2009, %v2165
        %v2344 = vadd.f32 %v2010, %v2170
        %v2345 = vadd.f32 %v2011, %v2175
        %v2346 = vadd.f32 %v2012, %v2180
        %v2347 = vadd.f32 %v2013, %v2185
        %v2348 = vadd.f32 %v2014, %v2190
        %v2349 = vadd.f32 %v2015, %v2195
        %v2350 = vadd.f32 %v2016, %v2200
        %v2351 = vadd.f32 %v2017, %v2205
        %v2352 = vadd.f32 %v2018, %v2210
        %v2353 = vadd.f32 %v2019, %v2215
        %v2354 = vadd.f32 %v2020, %v2220
        %v2355 = vadd.f32 %v2021, %v2225
        %v2356 = vadd.f32 %v2022, %v2230
        %v2357 = vadd.f32 %v2023, %v2235
        %v2358 = vadd.f32 %v2024, %v2240
        %v2359 = vadd.f32 %v2025, %v2245
        %v2360 = vadd.f32 %v2026, %v2250
        %v2361 = vadd.f32 %v2027, %v2255
        %v2362 = vadd.f32 %v2028, %v2260
        %v2363 = vadd.f32 %v2029, %v2265
        %v2364 = vadd.f32 %v2030, %v2270
        %v2365 = vadd.f32 %v2031, %v2275
        %v2366 = vadd.f32 %v2032, %v2280
        %v2367 = vadd.f32 %v2033, %v2285
        %v2368 = vadd.f32 %v2034, %v2290
        %v2369 = vadd.f32 %v2035, %v2295
        %v2370 = vadd.f32 %v2036, %v2300
        %v2371 = vadd.f32 %v2037, %v2305
        %v2372 = vadd.f32 %v2038, %v2310
        %v2373 = vadd.f32 %v2039, %v2315
        %v2374 = vadd.f32 %v2040, %v2320
        %v2375 = vadd.f32 %v2041, %v2325
        %v2376 = vadd.f32 %v2042, %v2330
        %v2377 = vadd.f32 %v2043, %v2335
        %v2378 = vadd.f32 %v2044, %v2340
        %v2379 = vld [vmem:[#allocation2 + $0x24] sm:$0xff]
        %v2380 = vld [vmem:[#allocation2 + $0x2c] sm:$0xff]
        %v2381 = vld [vmem:[#allocation2 + $0x34] sm:$0xff]
        %v2382 = vld [vmem:[#allocation2 + $0x3c] sm:$0xff]
        %v2383 = vld [vmem:[#allocation2 + $0x44] sm:$0xff]
        %v2384 = vld [vmem:[#allocation2 + $0x4c] sm:$0xff]
        %v2385 = vld [vmem:[#allocation2 + $0x54] sm:$0xff]
        %v2386 = vld [vmem:[#allocation2 + $0x5c] sm:$0xff]
        %v2387 = vld [vmem:[#allocation2 + $0x64] sm:$0xff]
        %v2388 = vld [vmem:[#allocation2 + $0x6c] sm:$0xff]
        %v2389 = vld [vmem:[#allocation2 + $0x74] sm:$0xff]
        %v2390 = vld [vmem:[#allocation2 + $0x7c] sm:$0xff]
        %v2391 = vld [vmem:[#allocation2 + $0x84] sm:$0xff]
        %v2392 = vld [vmem:[#allocation2 + $0x8c] sm:$0xff]
        %v2393 = vld [vmem:[#allocation2 + $0x94] sm:$0xff]
        %v2394 = vld [vmem:[#allocation2 + $0x9c] sm:$0xff]
        %v2395 = vld [vmem:[#allocation2 + $0xa4] sm:$0xff]
        %v2396 = vld [vmem:[#allocation2 + $0xac] sm:$0xff]
        %v2397 = vld [vmem:[#allocation2 + $0xb4] sm:$0xff]
        %v2398 = vld [vmem:[#allocation2 + $0xbc] sm:$0xff]
        %v2399 = vld [vmem:[#allocation2 + $0xc4] sm:$0xff]
        %v2400 = vld [vmem:[#allocation2 + $0xcc] sm:$0xff]
        %v2401 = vld [vmem:[#allocation2 + $0xd4] sm:$0xff]
        %v2402 = vld [vmem:[#allocation2 + $0xdc] sm:$0xff]
        %v2403 = vld [vmem:[#allocation2 + $0xe4] sm:$0xff]
        %v2404 = vld [vmem:[#allocation2 + $0xec] sm:$0xff]
        %v2405 = vld [vmem:[#allocation2 + $0xf4] sm:$0xff]
        %v2406 = vld [vmem:[#allocation2 + $0xfc] sm:$0xff]
        %v2407 = vld [vmem:[#allocation2 + $0x104] sm:$0xff]
        %v2408 = vld [vmem:[#allocation2 + $0x10c] sm:$0xff]
        %v2409 = vld [vmem:[#allocation2 + $0x114] sm:$0xff]
        %v2410 = vld [vmem:[#allocation2 + $0x11c] sm:$0xff]
        %v2411 = vld [vmem:[#allocation2 + $0x124] sm:$0xff]
        %v2412 = vld [vmem:[#allocation2 + $0x12c] sm:$0xff]
        %v2413 = vld [vmem:[#allocation2 + $0x134] sm:$0xff]
        %v2414 = vld [vmem:[#allocation2 + $0x13c] sm:$0xff]
        %s2415 = scalar_lea.vmem %s4, 512
        %v2416 = vld [vmem:[%s2415] sm:$0xff]
        %v2417 = vld [vmem:[%s2415 + $0x8] sm:$0xff]
        %v2418 = vld [vmem:[%s2415 + $0x10] sm:$0xff]
        %v2419 = vld [vmem:[%s2415 + $0x18] sm:$0xff]
        %v2420 = vld [vmem:[%s2415 + $0x20] sm:$0xff]
        %v2421 = vld [vmem:[%s2415 + $0x28] sm:$0xff]
        %v2422 = vld [vmem:[%s2415 + $0x30] sm:$0xff]
        %v2423 = vld [vmem:[%s2415 + $0x38] sm:$0xff]
        %v2424 = vld [vmem:[%s2415 + $0x40] sm:$0xff]
        %v2425 = vld [vmem:[%s2415 + $0x48] sm:$0xff]
        %v2426 = vld [vmem:[%s2415 + $0x50] sm:$0xff]
        %v2427 = vld [vmem:[%s2415 + $0x58] sm:$0xff]
        %v2428 = vld [vmem:[%s2415 + $0x60] sm:$0xff]
        %v2429 = vld [vmem:[%s2415 + $0x68] sm:$0xff]
        %v2430 = vld [vmem:[%s2415 + $0x70] sm:$0xff]
        %v2431 = vld [vmem:[%s2415 + $0x78] sm:$0xff]
        %2432 = vmatprep.subr.mxu0 0.0
        %2433 = vmatpush1.msra.mxu0 %v2416
        %2434 = vmatprep.subr.mxu0 0.0
        %2435 = vmatpush1.msra.mxu0 %v2417
        %2436 = vmatprep.subr.mxu0 0.0
        %2437 = vmatpush1.msra.mxu0 %v2418
        %2438 = vmatprep.subr.mxu0 0.0
        %2439 = vmatpush1.msra.mxu0 %v2419
        %2440 = vmatprep.subr.mxu0 0.0
        %2441 = vmatpush1.msra.mxu0 %v2420
        %2442 = vmatprep.subr.mxu0 0.0
        %2443 = vmatpush1.msra.mxu0 %v2421
        %2444 = vmatprep.subr.mxu0 0.0
        %2445 = vmatpush1.msra.mxu0 %v2422
        %2446 = vmatprep.subr.mxu0 0.0
        %2447 = vmatpush1.msra.mxu0 %v2423
        %2448 = vmatprep.subr.mxu0 0.0
        %2449 = vmatpush1.msra.mxu0 %v2424
        %2450 = vmatprep.subr.mxu0 0.0
        %2451 = vmatpush1.msra.mxu0 %v2425
        %2452 = vmatprep.subr.mxu0 0.0
        %2453 = vmatpush1.msra.mxu0 %v2426
        %2454 = vmatprep.subr.mxu0 0.0
        %2455 = vmatpush1.msra.mxu0 %v2427
        %2456 = vmatprep.subr.mxu0 0.0
        %2457 = vmatpush1.msra.mxu0 %v2428
        %2458 = vmatprep.subr.mxu0 0.0
        %2459 = vmatpush1.msra.mxu0 %v2429
        %2460 = vmatprep.subr.mxu0 0.0
        %2461 = vmatpush1.msra.mxu0 %v2430
        %2462 = vmatprep.subr.mxu0 0.0
        %2463 = vmatpush1.msra.mxu0 %v2431
        %2464 = vmatprep.subr.mxu0 0.0
        %2465 = vmatpush1.msra.mxu0 0.0
        %2466 = vmatprep.subr.mxu0 0.0
        %2467 = vmatpush1.msra.mxu0 0.0
        %2468 = vmatprep.subr.mxu0 0.0
        %2469 = vmatpush1.msra.mxu0 0.0
        %2470 = vmatprep.subr.mxu0 0.0
        %2471 = vmatpush1.msra.mxu0 0.0
        %2472 = vmatprep.subr.mxu0 0.0
        %2473 = vmatpush1.msra.mxu0 0.0
        %2474 = vmatprep.subr.mxu0 0.0
        %2475 = vmatpush1.msra.mxu0 0.0
        %2476 = vmatprep.subr.mxu0 0.0
        %2477 = vmatpush1.msra.mxu0 0.0
        %2478 = vmatprep.subr.mxu0 0.0
        %2479 = vmatpush1.msra.mxu0 0.0
        %2480 = vmatprep.subr.mxu0 0.0
        %2481 = vmatpush1.msra.mxu0 0.0
        %2482 = vmatprep.subr.mxu0 0.0
        %2483 = vmatpush1.msra.mxu0 0.0
        %2484 = vmatprep.subr.mxu0 0.0
        %2485 = vmatpush1.msra.mxu0 0.0
        %2486 = vmatprep.subr.mxu0 0.0
        %2487 = vmatpush1.msra.mxu0 0.0
        %2488 = vmatprep.subr.mxu0 0.0
        %2489 = vmatpush1.msra.mxu0 0.0
        %2490 = vmatprep.subr.mxu0 0.0
        %2491 = vmatpush1.msra.mxu0 0.0
        %2492 = vmatprep.subr.mxu0 0.0
        %2493 = vmatpush1.msra.mxu0 0.0
        %2494 = vmatprep.subr.mxu0 0.0
        %2495 = vmatpush1.msra.mxu0 0.0
        %2496 = vmatprep.mubr.f32.mxu0 0.0
        %2497 = vmatmul.mubr.f32.gmra.mrb[0].mxu0 %v2379
        %v2498 = vpop.f32.mrb[0].mxu0
        %v2499 = vadd.f32 0.0, %v2498
        %v2500 = vpop.f32.mrb[0].mxu0
        %2501 = vmatprep.mubr.f32.mxu0 0.0
        %2502 = vmatmul.mubr.f32.gmra.mrb[0].mxu0 %v2380
        %v2503 = vpop.f32.mrb[0].mxu0
        %v2504 = vadd.f32 0.0, %v2503
        %v2505 = vpop.f32.mrb[0].mxu0
        %2506 = vmatprep.mubr.f32.mxu0 0.0
        %2507 = vmatmul.mubr.f32.gmra.mrb[0].mxu0 %v2381
        %v2508 = vpop.f32.mrb[0].mxu0
        %v2509 = vadd.f32 0.0, %v2508
        %v2510 = vpop.f32.mrb[0].mxu0
        %2511 = vmatprep.mubr.f32.mxu0 0.0
        %2512 = vmatmul.mubr.f32.gmra.mrb[0].mxu0 %v2382
        %v2513 = vpop.f32.mrb[0].mxu0
        %v2514 = vadd.f32 0.0, %v2513
        %v2515 = vpop.f32.mrb[0].mxu0
        %2516 = vmatprep.mubr.f32.mxu0 0.0
        %2517 = vmatmul.mubr.f32.gmra.mrb[0].mxu0 %v2383
        %v2518 = vpop.f32.mrb[0].mxu0
        %v2519 = vadd.f32 0.0, %v2518
        %v2520 = vpop.f32.mrb[0].mxu0
        %2521 = vmatprep.mubr.f32.mxu0 0.0
        %2522 = vmatmul.mubr.f32.gmra.mrb[0].mxu0 %v2384
        %v2523 = vpop.f32.mrb[0].mxu0
        %v2524 = vadd.f32 0.0, %v2523
        %v2525 = vpop.f32.mrb[0].mxu0
        %2526 = vmatprep.mubr.f32.mxu0 0.0
        %2527 = vmatmul.mubr.f32.gmra.mrb[0].mxu0 %v2385
        %v2528 = vpop.f32.mrb[0].mxu0
        %v2529 = vadd.f32 0.0, %v2528
        %v2530 = vpop.f32.mrb[0].mxu0
        %2531 = vmatprep.mubr.f32.mxu0 0.0
        %2532 = vmatmul.mubr.f32.gmra.mrb[0].mxu0 %v2386
        %v2533 = vpop.f32.mrb[0].mxu0
        %v2534 = vadd.f32 0.0, %v2533
        %v2535 = vpop.f32.mrb[0].mxu0
        %2536 = vmatprep.mubr.f32.mxu0 0.0
        %2537 = vmatmul.mubr.f32.gmra.mrb[0].mxu0 %v2387
        %v2538 = vpop.f32.mrb[0].mxu0
        %v2539 = vadd.f32 0.0, %v2538
        %v2540 = vpop.f32.mrb[0].mxu0
        %2541 = vmatprep.mubr.f32.mxu0 0.0
        %2542 = vmatmul.mubr.f32.gmra.mrb[0].mxu0 %v2388
        %v2543 = vpop.f32.mrb[0].mxu0
        %v2544 = vadd.f32 0.0, %v2543
        %v2545 = vpop.f32.mrb[0].mxu0
        %2546 = vmatprep.mubr.f32.mxu0 0.0
        %2547 = vmatmul.mubr.f32.gmra.mrb[0].mxu0 %v2389
        %v2548 = vpop.f32.mrb[0].mxu0
        %v2549 = vadd.f32 0.0, %v2548
        %v2550 = vpop.f32.mrb[0].mxu0
        %2551 = vmatprep.mubr.f32.mxu0 0.0
        %2552 = vmatmul.mubr.f32.gmra.mrb[0].mxu0 %v2390
        %v2553 = vpop.f32.mrb[0].mxu0
        %v2554 = vadd.f32 0.0, %v2553
        %v2555 = vpop.f32.mrb[0].mxu0
        %2556 = vmatprep.mubr.f32.mxu0 0.0
        %2557 = vmatmul.mubr.f32.gmra.mrb[0].mxu0 %v2391
        %v2558 = vpop.f32.mrb[0].mxu0
        %v2559 = vadd.f32 0.0, %v2558
        %v2560 = vpop.f32.mrb[0].mxu0
        %2561 = vmatprep.mubr.f32.mxu0 0.0
        %2562 = vmatmul.mubr.f32.gmra.mrb[0].mxu0 %v2392
        %v2563 = vpop.f32.mrb[0].mxu0
        %v2564 = vadd.f32 0.0, %v2563
        %v2565 = vpop.f32.mrb[0].mxu0
        %2566 = vmatprep.mubr.f32.mxu0 0.0
        %2567 = vmatmul.mubr.f32.gmra.mrb[0].mxu0 %v2393
        %v2568 = vpop.f32.mrb[0].mxu0
        %v2569 = vadd.f32 0.0, %v2568
        %v2570 = vpop.f32.mrb[0].mxu0
        %2571 = vmatprep.mubr.f32.mxu0 0.0
        %2572 = vmatmul.mubr.f32.gmra.mrb[0].mxu0 %v2394
        %v2573 = vpop.f32.mrb[0].mxu0
        %v2574 = vadd.f32 0.0, %v2573
        %v2575 = vpop.f32.mrb[0].mxu0
        %2576 = vmatprep.mubr.f32.mxu0 0.0
        %2577 = vmatmul.mubr.f32.gmra.mrb[0].mxu0 %v2395
        %v2578 = vpop.f32.mrb[0].mxu0
        %v2579 = vadd.f32 0.0, %v2578
        %v2580 = vpop.f32.mrb[0].mxu0
        %2581 = vmatprep.mubr.f32.mxu0 0.0
        %2582 = vmatmul.mubr.f32.gmra.mrb[0].mxu0 %v2396
        %v2583 = vpop.f32.mrb[0].mxu0
        %v2584 = vadd.f32 0.0, %v2583
        %v2585 = vpop.f32.mrb[0].mxu0
        %2586 = vmatprep.mubr.f32.mxu0 0.0
        %2587 = vmatmul.mubr.f32.gmra.mrb[0].mxu0 %v2397
        %v2588 = vpop.f32.mrb[0].mxu0
        %v2589 = vadd.f32 0.0, %v2588
        %v2590 = vpop.f32.mrb[0].mxu0
        %2591 = vmatprep.mubr.f32.mxu0 0.0
        %2592 = vmatmul.mubr.f32.gmra.mrb[0].mxu0 %v2398
        %v2593 = vpop.f32.mrb[0].mxu0
        %v2594 = vadd.f32 0.0, %v2593
        %v2595 = vpop.f32.mrb[0].mxu0
        %2596 = vmatprep.mubr.f32.mxu0 0.0
        %2597 = vmatmul.mubr.f32.gmra.mrb[0].mxu0 %v2399
        %v2598 = vpop.f32.mrb[0].mxu0
        %v2599 = vadd.f32 0.0, %v2598
        %v2600 = vpop.f32.mrb[0].mxu0
        %2601 = vmatprep.mubr.f32.mxu0 0.0
        %2602 = vmatmul.mubr.f32.gmra.mrb[0].mxu0 %v2400
        %v2603 = vpop.f32.mrb[0].mxu0
        %v2604 = vadd.f32 0.0, %v2603
        %v2605 = vpop.f32.mrb[0].mxu0
        %2606 = vmatprep.mubr.f32.mxu0 0.0
        %2607 = vmatmul.mubr.f32.gmra.mrb[0].mxu0 %v2401
        %v2608 = vpop.f32.mrb[0].mxu0
        %v2609 = vadd.f32 0.0, %v2608
        %v2610 = vpop.f32.mrb[0].mxu0
        %2611 = vmatprep.mubr.f32.mxu0 0.0
        %2612 = vmatmul.mubr.f32.gmra.mrb[0].mxu0 %v2402
        %v2613 = vpop.f32.mrb[0].mxu0
        %v2614 = vadd.f32 0.0, %v2613
        %v2615 = vpop.f32.mrb[0].mxu0
        %2616 = vmatprep.mubr.f32.mxu0 0.0
        %2617 = vmatmul.mubr.f32.gmra.mrb[0].mxu0 %v2403
        %v2618 = vpop.f32.mrb[0].mxu0
        %v2619 = vadd.f32 0.0, %v2618
        %v2620 = vpop.f32.mrb[0].mxu0
        %2621 = vmatprep.mubr.f32.mxu0 0.0
        %2622 = vmatmul.mubr.f32.gmra.mrb[0].mxu0 %v2404
        %v2623 = vpop.f32.mrb[0].mxu0
        %v2624 = vadd.f32 0.0, %v2623
        %v2625 = vpop.f32.mrb[0].mxu0
        %2626 = vmatprep.mubr.f32.mxu0 0.0
        %2627 = vmatmul.mubr.f32.gmra.mrb[0].mxu0 %v2405
        %v2628 = vpop.f32.mrb[0].mxu0
        %v2629 = vadd.f32 0.0, %v2628
        %v2630 = vpop.f32.mrb[0].mxu0
        %2631 = vmatprep.mubr.f32.mxu0 0.0
        %2632 = vmatmul.mubr.f32.gmra.mrb[0].mxu0 %v2406
        %v2633 = vpop.f32.mrb[0].mxu0
        %v2634 = vadd.f32 0.0, %v2633
        %v2635 = vpop.f32.mrb[0].mxu0
        %2636 = vmatprep.mubr.f32.mxu0 0.0
        %2637 = vmatmul.mubr.f32.gmra.mrb[0].mxu0 %v2407
        %v2638 = vpop.f32.mrb[0].mxu0
        %v2639 = vadd.f32 0.0, %v2638
        %v2640 = vpop.f32.mrb[0].mxu0
        %2641 = vmatprep.mubr.f32.mxu0 0.0
        %2642 = vmatmul.mubr.f32.gmra.mrb[0].mxu0 %v2408
        %v2643 = vpop.f32.mrb[0].mxu0
        %v2644 = vadd.f32 0.0, %v2643
        %v2645 = vpop.f32.mrb[0].mxu0
        %2646 = vmatprep.mubr.f32.mxu0 0.0
        %2647 = vmatmul.mubr.f32.gmra.mrb[0].mxu0 %v2409
        %v2648 = vpop.f32.mrb[0].mxu0
        %v2649 = vadd.f32 0.0, %v2648
        %v2650 = vpop.f32.mrb[0].mxu0
        %2651 = vmatprep.mubr.f32.mxu0 0.0
        %2652 = vmatmul.mubr.f32.gmra.mrb[0].mxu0 %v2410
        %v2653 = vpop.f32.mrb[0].mxu0
        %v2654 = vadd.f32 0.0, %v2653
        %v2655 = vpop.f32.mrb[0].mxu0
        %2656 = vmatprep.mubr.f32.mxu0 0.0
        %2657 = vmatmul.mubr.f32.gmra.mrb[0].mxu0 %v2411
        %v2658 = vpop.f32.mrb[0].mxu0
        %v2659 = vadd.f32 0.0, %v2658
        %v2660 = vpop.f32.mrb[0].mxu0
        %2661 = vmatprep.mubr.f32.mxu0 0.0
        %2662 = vmatmul.mubr.f32.gmra.mrb[0].mxu0 %v2412
        %v2663 = vpop.f32.mrb[0].mxu0
        %v2664 = vadd.f32 0.0, %v2663
        %v2665 = vpop.f32.mrb[0].mxu0
        %2666 = vmatprep.mubr.f32.mxu0 0.0
        %2667 = vmatmul.mubr.f32.gmra.mrb[0].mxu0 %v2413
        %v2668 = vpop.f32.mrb[0].mxu0
        %v2669 = vadd.f32 0.0, %v2668
        %v2670 = vpop.f32.mrb[0].mxu0
        %2671 = vmatprep.mubr.f32.mxu0 0.0
        %2672 = vmatmul.mubr.f32.gmra.mrb[0].mxu0 %v2414
        %v2673 = vpop.f32.mrb[0].mxu0
        %v2674 = vadd.f32 0.0, %v2673
        %v2675 = vpop.f32.mrb[0].mxu0
        %2676 = vdwg.mxu0
        %v2677 = vadd.f32 %v2343, %v2499
        %v2678 = vadd.f32 %v2344, %v2504
        %v2679 = vadd.f32 %v2345, %v2509
        %v2680 = vadd.f32 %v2346, %v2514
        %v2681 = vadd.f32 %v2347, %v2519
        %v2682 = vadd.f32 %v2348, %v2524
        %v2683 = vadd.f32 %v2349, %v2529
        %v2684 = vadd.f32 %v2350, %v2534
        %v2685 = vadd.f32 %v2351, %v2539
        %v2686 = vadd.f32 %v2352, %v2544
        %v2687 = vadd.f32 %v2353, %v2549
        %v2688 = vadd.f32 %v2354, %v2554
        %v2689 = vadd.f32 %v2355, %v2559
        %v2690 = vadd.f32 %v2356, %v2564
        %v2691 = vadd.f32 %v2357, %v2569
        %v2692 = vadd.f32 %v2358, %v2574
        %v2693 = vadd.f32 %v2359, %v2579
        %v2694 = vadd.f32 %v2360, %v2584
        %v2695 = vadd.f32 %v2361, %v2589
        %v2696 = vadd.f32 %v2362, %v2594
        %v2697 = vadd.f32 %v2363, %v2599
        %v2698 = vadd.f32 %v2364, %v2604
        %v2699 = vadd.f32 %v2365, %v2609
        %v2700 = vadd.f32 %v2366, %v2614
        %v2701 = vadd.f32 %v2367, %v2619
        %v2702 = vadd.f32 %v2368, %v2624
        %v2703 = vadd.f32 %v2369, %v2629
        %v2704 = vadd.f32 %v2370, %v2634
        %v2705 = vadd.f32 %v2371, %v2639
        %v2706 = vadd.f32 %v2372, %v2644
        %v2707 = vadd.f32 %v2373, %v2649
        %v2708 = vadd.f32 %v2374, %v2654
        %v2709 = vadd.f32 %v2375, %v2659
        %v2710 = vadd.f32 %v2376, %v2664
        %v2711 = vadd.f32 %v2377, %v2669
        %v2712 = vadd.f32 %v2378, %v2674
        %v2713 = vld [vmem:[#allocation2 + $0x25] sm:$0xff]
        %v2714 = vld [vmem:[#allocation2 + $0x2d] sm:$0xff]
        %v2715 = vld [vmem:[#allocation2 + $0x35] sm:$0xff]
        %v2716 = vld [vmem:[#allocation2 + $0x3d] sm:$0xff]
        %v2717 = vld [vmem:[#allocation2 + $0x45] sm:$0xff]
        %v2718 = vld [vmem:[#allocation2 + $0x4d] sm:$0xff]
        %v2719 = vld [vmem:[#allocation2 + $0x55] sm:$0xff]
        %v2720 = vld [vmem:[#allocation2 + $0x5d] sm:$0xff]
        %v2721 = vld [vmem:[#allocation2 + $0x65] sm:$0xff]
        %v2722 = vld [vmem:[#allocation2 + $0x6d] sm:$0xff]
        %v2723 = vld [vmem:[#allocation2 + $0x75] sm:$0xff]
        %v2724 = vld [vmem:[#allocation2 + $0x7d] sm:$0xff]
        %v2725 = vld [vmem:[#allocation2 + $0x85] sm:$0xff]
        %v2726 = vld [vmem:[#allocation2 + $0x8d] sm:$0xff]
        %v2727 = vld [vmem:[#allocation2 + $0x95] sm:$0xff]
        %v2728 = vld [vmem:[#allocation2 + $0x9d] sm:$0xff]
        %v2729 = vld [vmem:[#allocation2 + $0xa5] sm:$0xff]
        %v2730 = vld [vmem:[#allocation2 + $0xad] sm:$0xff]
        %v2731 = vld [vmem:[#allocation2 + $0xb5] sm:$0xff]
        %v2732 = vld [vmem:[#allocation2 + $0xbd] sm:$0xff]
        %v2733 = vld [vmem:[#allocation2 + $0xc5] sm:$0xff]
        %v2734 = vld [vmem:[#allocation2 + $0xcd] sm:$0xff]
        %v2735 = vld [vmem:[#allocation2 + $0xd5] sm:$0xff]
        %v2736 = vld [vmem:[#allocation2 + $0xdd] sm:$0xff]
        %v2737 = vld [vmem:[#allocation2 + $0xe5] sm:$0xff]
        %v2738 = vld [vmem:[#allocation2 + $0xed] sm:$0xff]
        %v2739 = vld [vmem:[#allocation2 + $0xf5] sm:$0xff]
        %v2740 = vld [vmem:[#allocation2 + $0xfd] sm:$0xff]
        %v2741 = vld [vmem:[#allocation2 + $0x105] sm:$0xff]
        %v2742 = vld [vmem:[#allocation2 + $0x10d] sm:$0xff]
        %v2743 = vld [vmem:[#allocation2 + $0x115] sm:$0xff]
        %v2744 = vld [vmem:[#allocation2 + $0x11d] sm:$0xff]
        %v2745 = vld [vmem:[#allocation2 + $0x125] sm:$0xff]
        %v2746 = vld [vmem:[#allocation2 + $0x12d] sm:$0xff]
        %v2747 = vld [vmem:[#allocation2 + $0x135] sm:$0xff]
        %v2748 = vld [vmem:[#allocation2 + $0x13d] sm:$0xff]
        %s2749 = scalar_lea.vmem %s4, 640
        %v2750 = vld [vmem:[%s2749] sm:$0xff]
        %v2751 = vld [vmem:[%s2749 + $0x8] sm:$0xff]
        %v2752 = vld [vmem:[%s2749 + $0x10] sm:$0xff]
        %v2753 = vld [vmem:[%s2749 + $0x18] sm:$0xff]
        %v2754 = vld [vmem:[%s2749 + $0x20] sm:$0xff]
        %v2755 = vld [vmem:[%s2749 + $0x28] sm:$0xff]
        %v2756 = vld [vmem:[%s2749 + $0x30] sm:$0xff]
        %v2757 = vld [vmem:[%s2749 + $0x38] sm:$0xff]
        %v2758 = vld [vmem:[%s2749 + $0x40] sm:$0xff]
        %v2759 = vld [vmem:[%s2749 + $0x48] sm:$0xff]
        %v2760 = vld [vmem:[%s2749 + $0x50] sm:$0xff]
        %v2761 = vld [vmem:[%s2749 + $0x58] sm:$0xff]
        %v2762 = vld [vmem:[%s2749 + $0x60] sm:$0xff]
        %v2763 = vld [vmem:[%s2749 + $0x68] sm:$0xff]
        %v2764 = vld [vmem:[%s2749 + $0x70] sm:$0xff]
        %v2765 = vld [vmem:[%s2749 + $0x78] sm:$0xff]
        %2766 = vmatprep.subr.mxu0 0.0
        %2767 = vmatpush1.msra.mxu0 %v2750
        %2768 = vmatprep.subr.mxu0 0.0
        %2769 = vmatpush1.msra.mxu0 %v2751
        %2770 = vmatprep.subr.mxu0 0.0
        %2771 = vmatpush1.msra.mxu0 %v2752
        %2772 = vmatprep.subr.mxu0 0.0
        %2773 = vmatpush1.msra.mxu0 %v2753
        %2774 = vmatprep.subr.mxu0 0.0
        %2775 = vmatpush1.msra.mxu0 %v2754
        %2776 = vmatprep.subr.mxu0 0.0
        %2777 = vmatpush1.msra.mxu0 %v2755
        %2778 = vmatprep.subr.mxu0 0.0
        %2779 = vmatpush1.msra.mxu0 %v2756
        %2780 = vmatprep.subr.mxu0 0.0
        %2781 = vmatpush1.msra.mxu0 %v2757
        %2782 = vmatprep.subr.mxu0 0.0
        %2783 = vmatpush1.msra.mxu0 %v2758
        %2784 = vmatprep.subr.mxu0 0.0
        %2785 = vmatpush1.msra.mxu0 %v2759
        %2786 = vmatprep.subr.mxu0 0.0
        %2787 = vmatpush1.msra.mxu0 %v2760
        %2788 = vmatprep.subr.mxu0 0.0
        %2789 = vmatpush1.msra.mxu0 %v2761
        %2790 = vmatprep.subr.mxu0 0.0
        %2791 = vmatpush1.msra.mxu0 %v2762
        %2792 = vmatprep.subr.mxu0 0.0
        %2793 = vmatpush1.msra.mxu0 %v2763
        %2794 = vmatprep.subr.mxu0 0.0
        %2795 = vmatpush1.msra.mxu0 %v2764
        %2796 = vmatprep.subr.mxu0 0.0
        %2797 = vmatpush1.msra.mxu0 %v2765
        %2798 = vmatprep.subr.mxu0 0.0
        %2799 = vmatpush1.msra.mxu0 0.0
        %2800 = vmatprep.subr.mxu0 0.0
        %2801 = vmatpush1.msra.mxu0 0.0
        %2802 = vmatprep.subr.mxu0 0.0
        %2803 = vmatpush1.msra.mxu0 0.0
        %2804 = vmatprep.subr.mxu0 0.0
        %2805 = vmatpush1.msra.mxu0 0.0
        %2806 = vmatprep.subr.mxu0 0.0
        %2807 = vmatpush1.msra.mxu0 0.0
        %2808 = vmatprep.subr.mxu0 0.0
        %2809 = vmatpush1.msra.mxu0 0.0
        %2810 = vmatprep.subr.mxu0 0.0
        %2811 = vmatpush1.msra.mxu0 0.0
        %2812 = vmatprep.subr.mxu0 0.0
        %2813 = vmatpush1.msra.mxu0 0.0
        %2814 = vmatprep.subr.mxu0 0.0
        %2815 = vmatpush1.msra.mxu0 0.0
        %2816 = vmatprep.subr.mxu0 0.0
        %2817 = vmatpush1.msra.mxu0 0.0
        %2818 = vmatprep.subr.mxu0 0.0
        %2819 = vmatpush1.msra.mxu0 0.0
        %2820 = vmatprep.subr.mxu0 0.0
        %2821 = vmatpush1.msra.mxu0 0.0
        %2822 = vmatprep.subr.mxu0 0.0
        %2823 = vmatpush1.msra.mxu0 0.0
        %2824 = vmatprep.subr.mxu0 0.0
        %2825 = vmatpush1.msra.mxu0 0.0
        %2826 = vmatprep.subr.mxu0 0.0
        %2827 = vmatpush1.msra.mxu0 0.0
        %2828 = vmatprep.subr.mxu0 0.0
        %2829 = vmatpush1.msra.mxu0 0.0
        %2830 = vmatprep.mubr.f32.mxu0 0.0
        %2831 = vmatmul.mubr.f32.gmra.mrb[0].mxu0 %v2713
        %v2832 = vpop.f32.mrb[0].mxu0
        %v2833 = vadd.f32 0.0, %v2832
        %v2834 = vpop.f32.mrb[0].mxu0
        %2835 = vmatprep.mubr.f32.mxu0 0.0
        %2836 = vmatmul.mubr.f32.gmra.mrb[0].mxu0 %v2714
        %v2837 = vpop.f32.mrb[0].mxu0
        %v2838 = vadd.f32 0.0, %v2837
        %v2839 = vpop.f32.mrb[0].mxu0
        %2840 = vmatprep.mubr.f32.mxu0 0.0
        %2841 = vmatmul.mubr.f32.gmra.mrb[0].mxu0 %v2715
        %v2842 = vpop.f32.mrb[0].mxu0
        %v2843 = vadd.f32 0.0, %v2842
        %v2844 = vpop.f32.mrb[0].mxu0
        %2845 = vmatprep.mubr.f32.mxu0 0.0
        %2846 = vmatmul.mubr.f32.gmra.mrb[0].mxu0 %v2716
        %v2847 = vpop.f32.mrb[0].mxu0
        %v2848 = vadd.f32 0.0, %v2847
        %v2849 = vpop.f32.mrb[0].mxu0
        %2850 = vmatprep.mubr.f32.mxu0 0.0
        %2851 = vmatmul.mubr.f32.gmra.mrb[0].mxu0 %v2717
        %v2852 = vpop.f32.mrb[0].mxu0
        %v2853 = vadd.f32 0.0, %v2852
        %v2854 = vpop.f32.mrb[0].mxu0
        %2855 = vmatprep.mubr.f32.mxu0 0.0
        %2856 = vmatmul.mubr.f32.gmra.mrb[0].mxu0 %v2718
        %v2857 = vpop.f32.mrb[0].mxu0
        %v2858 = vadd.f32 0.0, %v2857
        %v2859 = vpop.f32.mrb[0].mxu0
        %2860 = vmatprep.mubr.f32.mxu0 0.0
        %2861 = vmatmul.mubr.f32.gmra.mrb[0].mxu0 %v2719
        %v2862 = vpop.f32.mrb[0].mxu0
        %v2863 = vadd.f32 0.0, %v2862
        %v2864 = vpop.f32.mrb[0].mxu0
        %2865 = vmatprep.mubr.f32.mxu0 0.0
        %2866 = vmatmul.mubr.f32.gmra.mrb[0].mxu0 %v2720
        %v2867 = vpop.f32.mrb[0].mxu0
        %v2868 = vadd.f32 0.0, %v2867
        %v2869 = vpop.f32.mrb[0].mxu0
        %2870 = vmatprep.mubr.f32.mxu0 0.0
        %2871 = vmatmul.mubr.f32.gmra.mrb[0].mxu0 %v2721
        %v2872 = vpop.f32.mrb[0].mxu0
        %v2873 = vadd.f32 0.0, %v2872
        %v2874 = vpop.f32.mrb[0].mxu0
        %2875 = vmatprep.mubr.f32.mxu0 0.0
        %2876 = vmatmul.mubr.f32.gmra.mrb[0].mxu0 %v2722
        %v2877 = vpop.f32.mrb[0].mxu0
        %v2878 = vadd.f32 0.0, %v2877
        %v2879 = vpop.f32.mrb[0].mxu0
        %2880 = vmatprep.mubr.f32.mxu0 0.0
        %2881 = vmatmul.mubr.f32.gmra.mrb[0].mxu0 %v2723
        %v2882 = vpop.f32.mrb[0].mxu0
        %v2883 = vadd.f32 0.0, %v2882
        %v2884 = vpop.f32.mrb[0].mxu0
        %2885 = vmatprep.mubr.f32.mxu0 0.0
        %2886 = vmatmul.mubr.f32.gmra.mrb[0].mxu0 %v2724
        %v2887 = vpop.f32.mrb[0].mxu0
        %v2888 = vadd.f32 0.0, %v2887
        %v2889 = vpop.f32.mrb[0].mxu0
        %2890 = vmatprep.mubr.f32.mxu0 0.0
        %2891 = vmatmul.mubr.f32.gmra.mrb[0].mxu0 %v2725
        %v2892 = vpop.f32.mrb[0].mxu0
        %v2893 = vadd.f32 0.0, %v2892
        %v2894 = vpop.f32.mrb[0].mxu0
        %2895 = vmatprep.mubr.f32.mxu0 0.0
        %2896 = vmatmul.mubr.f32.gmra.mrb[0].mxu0 %v2726
        %v2897 = vpop.f32.mrb[0].mxu0
        %v2898 = vadd.f32 0.0, %v2897
        %v2899 = vpop.f32.mrb[0].mxu0
        %2900 = vmatprep.mubr.f32.mxu0 0.0
        %2901 = vmatmul.mubr.f32.gmra.mrb[0].mxu0 %v2727
        %v2902 = vpop.f32.mrb[0].mxu0
        %v2903 = vadd.f32 0.0, %v2902
        %v2904 = vpop.f32.mrb[0].mxu0
        %2905 = vmatprep.mubr.f32.mxu0 0.0
        %2906 = vmatmul.mubr.f32.gmra.mrb[0].mxu0 %v2728
        %v2907 = vpop.f32.mrb[0].mxu0
        %v2908 = vadd.f32 0.0, %v2907
        %v2909 = vpop.f32.mrb[0].mxu0
        %2910 = vmatprep.mubr.f32.mxu0 0.0
        %2911 = vmatmul.mubr.f32.gmra.mrb[0].mxu0 %v2729
        %v2912 = vpop.f32.mrb[0].mxu0
        %v2913 = vadd.f32 0.0, %v2912
        %v2914 = vpop.f32.mrb[0].mxu0
        %2915 = vmatprep.mubr.f32.mxu0 0.0
        %2916 = vmatmul.mubr.f32.gmra.mrb[0].mxu0 %v2730
        %v2917 = vpop.f32.mrb[0].mxu0
        %v2918 = vadd.f32 0.0, %v2917
        %v2919 = vpop.f32.mrb[0].mxu0
        %2920 = vmatprep.mubr.f32.mxu0 0.0
        %2921 = vmatmul.mubr.f32.gmra.mrb[0].mxu0 %v2731
        %v2922 = vpop.f32.mrb[0].mxu0
        %v2923 = vadd.f32 0.0, %v2922
        %v2924 = vpop.f32.mrb[0].mxu0
        %2925 = vmatprep.mubr.f32.mxu0 0.0
        %2926 = vmatmul.mubr.f32.gmra.mrb[0].mxu0 %v2732
        %v2927 = vpop.f32.mrb[0].mxu0
        %v2928 = vadd.f32 0.0, %v2927
        %v2929 = vpop.f32.mrb[0].mxu0
        %2930 = vmatprep.mubr.f32.mxu0 0.0
        %2931 = vmatmul.mubr.f32.gmra.mrb[0].mxu0 %v2733
        %v2932 = vpop.f32.mrb[0].mxu0
        %v2933 = vadd.f32 0.0, %v2932
        %v2934 = vpop.f32.mrb[0].mxu0
        %2935 = vmatprep.mubr.f32.mxu0 0.0
        %2936 = vmatmul.mubr.f32.gmra.mrb[0].mxu0 %v2734
        %v2937 = vpop.f32.mrb[0].mxu0
        %v2938 = vadd.f32 0.0, %v2937
        %v2939 = vpop.f32.mrb[0].mxu0
        %2940 = vmatprep.mubr.f32.mxu0 0.0
        %2941 = vmatmul.mubr.f32.gmra.mrb[0].mxu0 %v2735
        %v2942 = vpop.f32.mrb[0].mxu0
        %v2943 = vadd.f32 0.0, %v2942
        %v2944 = vpop.f32.mrb[0].mxu0
        %2945 = vmatprep.mubr.f32.mxu0 0.0
        %2946 = vmatmul.mubr.f32.gmra.mrb[0].mxu0 %v2736
        %v2947 = vpop.f32.mrb[0].mxu0
        %v2948 = vadd.f32 0.0, %v2947
        %v2949 = vpop.f32.mrb[0].mxu0
        %2950 = vmatprep.mubr.f32.mxu0 0.0
        %2951 = vmatmul.mubr.f32.gmra.mrb[0].mxu0 %v2737
        %v2952 = vpop.f32.mrb[0].mxu0
        %v2953 = vadd.f32 0.0, %v2952
        %v2954 = vpop.f32.mrb[0].mxu0
        %2955 = vmatprep.mubr.f32.mxu0 0.0
        %2956 = vmatmul.mubr.f32.gmra.mrb[0].mxu0 %v2738
        %v2957 = vpop.f32.mrb[0].mxu0
        %v2958 = vadd.f32 0.0, %v2957
        %v2959 = vpop.f32.mrb[0].mxu0
        %2960 = vmatprep.mubr.f32.mxu0 0.0
        %2961 = vmatmul.mubr.f32.gmra.mrb[0].mxu0 %v2739
        %v2962 = vpop.f32.mrb[0].mxu0
        %v2963 = vadd.f32 0.0, %v2962
        %v2964 = vpop.f32.mrb[0].mxu0
        %2965 = vmatprep.mubr.f32.mxu0 0.0
        %2966 = vmatmul.mubr.f32.gmra.mrb[0].mxu0 %v2740
        %v2967 = vpop.f32.mrb[0].mxu0
        %v2968 = vadd.f32 0.0, %v2967
        %v2969 = vpop.f32.mrb[0].mxu0
        %2970 = vmatprep.mubr.f32.mxu0 0.0
        %2971 = vmatmul.mubr.f32.gmra.mrb[0].mxu0 %v2741
        %v2972 = vpop.f32.mrb[0].mxu0
        %v2973 = vadd.f32 0.0, %v2972
        %v2974 = vpop.f32.mrb[0].mxu0
        %2975 = vmatprep.mubr.f32.mxu0 0.0
        %2976 = vmatmul.mubr.f32.gmra.mrb[0].mxu0 %v2742
        %v2977 = vpop.f32.mrb[0].mxu0
        %v2978 = vadd.f32 0.0, %v2977
        %v2979 = vpop.f32.mrb[0].mxu0
        %2980 = vmatprep.mubr.f32.mxu0 0.0
        %2981 = vmatmul.mubr.f32.gmra.mrb[0].mxu0 %v2743
        %v2982 = vpop.f32.mrb[0].mxu0
        %v2983 = vadd.f32 0.0, %v2982
        %v2984 = vpop.f32.mrb[0].mxu0
        %2985 = vmatprep.mubr.f32.mxu0 0.0
        %2986 = vmatmul.mubr.f32.gmra.mrb[0].mxu0 %v2744
        %v2987 = vpop.f32.mrb[0].mxu0
        %v2988 = vadd.f32 0.0, %v2987
        %v2989 = vpop.f32.mrb[0].mxu0
        %2990 = vmatprep.mubr.f32.mxu0 0.0
        %2991 = vmatmul.mubr.f32.gmra.mrb[0].mxu0 %v2745
        %v2992 = vpop.f32.mrb[0].mxu0
        %v2993 = vadd.f32 0.0, %v2992
        %v2994 = vpop.f32.mrb[0].mxu0
        %2995 = vmatprep.mubr.f32.mxu0 0.0
        %2996 = vmatmul.mubr.f32.gmra.mrb[0].mxu0 %v2746
        %v2997 = vpop.f32.mrb[0].mxu0
        %v2998 = vadd.f32 0.0, %v2997
        %v2999 = vpop.f32.mrb[0].mxu0
        %3000 = vmatprep.mubr.f32.mxu0 0.0
        %3001 = vmatmul.mubr.f32.gmra.mrb[0].mxu0 %v2747
        %v3002 = vpop.f32.mrb[0].mxu0
        %v3003 = vadd.f32 0.0, %v3002
        %v3004 = vpop.f32.mrb[0].mxu0
        %3005 = vmatprep.mubr.f32.mxu0 0.0
        %3006 = vmatmul.mubr.f32.gmra.mrb[0].mxu0 %v2748
        %v3007 = vpop.f32.mrb[0].mxu0
        %v3008 = vadd.f32 0.0, %v3007
        %v3009 = vpop.f32.mrb[0].mxu0
        %3010 = vdwg.mxu0
        %v3011 = vadd.f32 %v2677, %v2833
        %v3012 = vadd.f32 %v2678, %v2838
        %v3013 = vadd.f32 %v2679, %v2843
        %v3014 = vadd.f32 %v2680, %v2848
        %v3015 = vadd.f32 %v2681, %v2853
        %v3016 = vadd.f32 %v2682, %v2858
        %v3017 = vadd.f32 %v2683, %v2863
        %v3018 = vadd.f32 %v2684, %v2868
        %v3019 = vadd.f32 %v2685, %v2873
        %v3020 = vadd.f32 %v2686, %v2878
        %v3021 = vadd.f32 %v2687, %v2883
        %v3022 = vadd.f32 %v2688, %v2888
        %v3023 = vadd.f32 %v2689, %v2893
        %v3024 = vadd.f32 %v2690, %v2898
        %v3025 = vadd.f32 %v2691, %v2903
        %v3026 = vadd.f32 %v2692, %v2908
        %v3027 = vadd.f32 %v2693, %v2913
        %v3028 = vadd.f32 %v2694, %v2918
        %v3029 = vadd.f32 %v2695, %v2923
        %v3030 = vadd.f32 %v2696, %v2928
        %v3031 = vadd.f32 %v2697, %v2933
        %v3032 = vadd.f32 %v2698, %v2938
        %v3033 = vadd.f32 %v2699, %v2943
        %v3034 = vadd.f32 %v2700, %v2948
        %v3035 = vadd.f32 %v2701, %v2953
        %v3036 = vadd.f32 %v2702, %v2958
        %v3037 = vadd.f32 %v2703, %v2963
        %v3038 = vadd.f32 %v2704, %v2968
        %v3039 = vadd.f32 %v2705, %v2973
        %v3040 = vadd.f32 %v2706, %v2978
        %v3041 = vadd.f32 %v2707, %v2983
        %v3042 = vadd.f32 %v2708, %v2988
        %v3043 = vadd.f32 %v2709, %v2993
        %v3044 = vadd.f32 %v2710, %v2998
        %v3045 = vadd.f32 %v2711, %v3003
        %v3046 = vadd.f32 %v2712, %v3008
        %v3047 = vld [vmem:[#allocation2 + $0x35] sm:$0xff]
        %v3048 = vld [vmem:[#allocation2 + $0x3d] sm:$0xff]
        %v3049 = vld [vmem:[#allocation2 + $0x45] sm:$0xff]
        %v3050 = vld [vmem:[#allocation2 + $0x4d] sm:$0xff]
        %v3051 = vld [vmem:[#allocation2 + $0x55] sm:$0xff]
        %v3052 = vld [vmem:[#allocation2 + $0x5d] sm:$0xff]
        %v3053 = vld [vmem:[#allocation2 + $0x65] sm:$0xff]
        %v3054 = vld [vmem:[#allocation2 + $0x6d] sm:$0xff]
        %v3055 = vld [vmem:[#allocation2 + $0x75] sm:$0xff]
        %v3056 = vld [vmem:[#allocation2 + $0x7d] sm:$0xff]
        %v3057 = vld [vmem:[#allocation2 + $0x85] sm:$0xff]
        %v3058 = vld [vmem:[#allocation2 + $0x8d] sm:$0xff]
        %v3059 = vld [vmem:[#allocation2 + $0x95] sm:$0xff]
        %v3060 = vld [vmem:[#allocation2 + $0x9d] sm:$0xff]
        %v3061 = vld [vmem:[#allocation2 + $0xa5] sm:$0xff]
        %v3062 = vld [vmem:[#allocation2 + $0xad] sm:$0xff]
        %v3063 = vld [vmem:[#allocation2 + $0xb5] sm:$0xff]
        %v3064 = vld [vmem:[#allocation2 + $0xbd] sm:$0xff]
        %v3065 = vld [vmem:[#allocation2 + $0xc5] sm:$0xff]
        %v3066 = vld [vmem:[#allocation2 + $0xcd] sm:$0xff]
        %v3067 = vld [vmem:[#allocation2 + $0xd5] sm:$0xff]
        %v3068 = vld [vmem:[#allocation2 + $0xdd] sm:$0xff]
        %v3069 = vld [vmem:[#allocation2 + $0xe5] sm:$0xff]
        %v3070 = vld [vmem:[#allocation2 + $0xed] sm:$0xff]
        %v3071 = vld [vmem:[#allocation2 + $0xf5] sm:$0xff]
        %v3072 = vld [vmem:[#allocation2 + $0xfd] sm:$0xff]
        %v3073 = vld [vmem:[#allocation2 + $0x105] sm:$0xff]
        %v3074 = vld [vmem:[#allocation2 + $0x10d] sm:$0xff]
        %v3075 = vld [vmem:[#allocation2 + $0x115] sm:$0xff]
        %v3076 = vld [vmem:[#allocation2 + $0x11d] sm:$0xff]
        %v3077 = vld [vmem:[#allocation2 + $0x125] sm:$0xff]
        %v3078 = vld [vmem:[#allocation2 + $0x12d] sm:$0xff]
        %v3079 = vld [vmem:[#allocation2 + $0x135] sm:$0xff]
        %v3080 = vld [vmem:[#allocation2 + $0x13d] sm:$0xff]
        %v3081 = vld [vmem:[#allocation2 + $0x145] sm:$0xff]
        %v3082 = vld [vmem:[#allocation2 + $0x14d] sm:$0xff]
        %s3083 = scalar_lea.vmem %s4, 768
        %v3084 = vld [vmem:[%s3083] sm:$0xff]
        %v3085 = vld [vmem:[%s3083 + $0x8] sm:$0xff]
        %v3086 = vld [vmem:[%s3083 + $0x10] sm:$0xff]
        %v3087 = vld [vmem:[%s3083 + $0x18] sm:$0xff]
        %v3088 = vld [vmem:[%s3083 + $0x20] sm:$0xff]
        %v3089 = vld [vmem:[%s3083 + $0x28] sm:$0xff]
        %v3090 = vld [vmem:[%s3083 + $0x30] sm:$0xff]
        %v3091 = vld [vmem:[%s3083 + $0x38] sm:$0xff]
        %v3092 = vld [vmem:[%s3083 + $0x40] sm:$0xff]
        %v3093 = vld [vmem:[%s3083 + $0x48] sm:$0xff]
        %v3094 = vld [vmem:[%s3083 + $0x50] sm:$0xff]
        %v3095 = vld [vmem:[%s3083 + $0x58] sm:$0xff]
        %v3096 = vld [vmem:[%s3083 + $0x60] sm:$0xff]
        %v3097 = vld [vmem:[%s3083 + $0x68] sm:$0xff]
        %v3098 = vld [vmem:[%s3083 + $0x70] sm:$0xff]
        %v3099 = vld [vmem:[%s3083 + $0x78] sm:$0xff]
        %3100 = vmatprep.subr.mxu0 0.0
        %3101 = vmatpush1.msra.mxu0 %v3084
        %3102 = vmatprep.subr.mxu0 0.0
        %3103 = vmatpush1.msra.mxu0 %v3085
        %3104 = vmatprep.subr.mxu0 0.0
        %3105 = vmatpush1.msra.mxu0 %v3086
        %3106 = vmatprep.subr.mxu0 0.0
        %3107 = vmatpush1.msra.mxu0 %v3087
        %3108 = vmatprep.subr.mxu0 0.0
        %3109 = vmatpush1.msra.mxu0 %v3088
        %3110 = vmatprep.subr.mxu0 0.0
        %3111 = vmatpush1.msra.mxu0 %v3089
        %3112 = vmatprep.subr.mxu0 0.0
        %3113 = vmatpush1.msra.mxu0 %v3090
        %3114 = vmatprep.subr.mxu0 0.0
        %3115 = vmatpush1.msra.mxu0 %v3091
        %3116 = vmatprep.subr.mxu0 0.0
        %3117 = vmatpush1.msra.mxu0 %v3092
        %3118 = vmatprep.subr.mxu0 0.0
        %3119 = vmatpush1.msra.mxu0 %v3093
        %3120 = vmatprep.subr.mxu0 0.0
        %3121 = vmatpush1.msra.mxu0 %v3094
        %3122 = vmatprep.subr.mxu0 0.0
        %3123 = vmatpush1.msra.mxu0 %v3095
        %3124 = vmatprep.subr.mxu0 0.0
        %3125 = vmatpush1.msra.mxu0 %v3096
        %3126 = vmatprep.subr.mxu0 0.0
        %3127 = vmatpush1.msra.mxu0 %v3097
        %3128 = vmatprep.subr.mxu0 0.0
        %3129 = vmatpush1.msra.mxu0 %v3098
        %3130 = vmatprep.subr.mxu0 0.0
        %3131 = vmatpush1.msra.mxu0 %v3099
        %3132 = vmatprep.subr.mxu0 0.0
        %3133 = vmatpush1.msra.mxu0 0.0
        %3134 = vmatprep.subr.mxu0 0.0
        %3135 = vmatpush1.msra.mxu0 0.0
        %3136 = vmatprep.subr.mxu0 0.0
        %3137 = vmatpush1.msra.mxu0 0.0
        %3138 = vmatprep.subr.mxu0 0.0
        %3139 = vmatpush1.msra.mxu0 0.0
        %3140 = vmatprep.subr.mxu0 0.0
        %3141 = vmatpush1.msra.mxu0 0.0
        %3142 = vmatprep.subr.mxu0 0.0
        %3143 = vmatpush1.msra.mxu0 0.0
        %3144 = vmatprep.subr.mxu0 0.0
        %3145 = vmatpush1.msra.mxu0 0.0
        %3146 = vmatprep.subr.mxu0 0.0
        %3147 = vmatpush1.msra.mxu0 0.0
        %3148 = vmatprep.subr.mxu0 0.0
        %3149 = vmatpush1.msra.mxu0 0.0
        %3150 = vmatprep.subr.mxu0 0.0
        %3151 = vmatpush1.msra.mxu0 0.0
        %3152 = vmatprep.subr.mxu0 0.0
        %3153 = vmatpush1.msra.mxu0 0.0
        %3154 = vmatprep.subr.mxu0 0.0
        %3155 = vmatpush1.msra.mxu0 0.0
        %3156 = vmatprep.subr.mxu0 0.0
        %3157 = vmatpush1.msra.mxu0 0.0
        %3158 = vmatprep.subr.mxu0 0.0
        %3159 = vmatpush1.msra.mxu0 0.0
        %3160 = vmatprep.subr.mxu0 0.0
        %3161 = vmatpush1.msra.mxu0 0.0
        %3162 = vmatprep.subr.mxu0 0.0
        %3163 = vmatpush1.msra.mxu0 0.0
        %3164 = vmatprep.mubr.f32.mxu0 0.0
        %3165 = vmatmul.mubr.f32.gmra.mrb[0].mxu0 %v3047
        %v3166 = vpop.f32.mrb[0].mxu0
        %v3167 = vadd.f32 0.0, %v3166
        %v3168 = vpop.f32.mrb[0].mxu0
        %3169 = vmatprep.mubr.f32.mxu0 0.0
        %3170 = vmatmul.mubr.f32.gmra.mrb[0].mxu0 %v3048
        %v3171 = vpop.f32.mrb[0].mxu0
        %v3172 = vadd.f32 0.0, %v3171
        %v3173 = vpop.f32.mrb[0].mxu0
        %3174 = vmatprep.mubr.f32.mxu0 0.0
        %3175 = vmatmul.mubr.f32.gmra.mrb[0].mxu0 %v3049
        %v3176 = vpop.f32.mrb[0].mxu0
        %v3177 = vadd.f32 0.0, %v3176
        %v3178 = vpop.f32.mrb[0].mxu0
        %3179 = vmatprep.mubr.f32.mxu0 0.0
        %3180 = vmatmul.mubr.f32.gmra.mrb[0].mxu0 %v3050
        %v3181 = vpop.f32.mrb[0].mxu0
        %v3182 = vadd.f32 0.0, %v3181
        %v3183 = vpop.f32.mrb[0].mxu0
        %3184 = vmatprep.mubr.f32.mxu0 0.0
        %3185 = vmatmul.mubr.f32.gmra.mrb[0].mxu0 %v3051
        %v3186 = vpop.f32.mrb[0].mxu0
        %v3187 = vadd.f32 0.0, %v3186
        %v3188 = vpop.f32.mrb[0].mxu0
        %3189 = vmatprep.mubr.f32.mxu0 0.0
        %3190 = vmatmul.mubr.f32.gmra.mrb[0].mxu0 %v3052
        %v3191 = vpop.f32.mrb[0].mxu0
        %v3192 = vadd.f32 0.0, %v3191
        %v3193 = vpop.f32.mrb[0].mxu0
        %3194 = vmatprep.mubr.f32.mxu0 0.0
        %3195 = vmatmul.mubr.f32.gmra.mrb[0].mxu0 %v3053
        %v3196 = vpop.f32.mrb[0].mxu0
        %v3197 = vadd.f32 0.0, %v3196
        %v3198 = vpop.f32.mrb[0].mxu0
        %3199 = vmatprep.mubr.f32.mxu0 0.0
        %3200 = vmatmul.mubr.f32.gmra.mrb[0].mxu0 %v3054
        %v3201 = vpop.f32.mrb[0].mxu0
        %v3202 = vadd.f32 0.0, %v3201
        %v3203 = vpop.f32.mrb[0].mxu0
        %3204 = vmatprep.mubr.f32.mxu0 0.0
        %3205 = vmatmul.mubr.f32.gmra.mrb[0].mxu0 %v3055
        %v3206 = vpop.f32.mrb[0].mxu0
        %v3207 = vadd.f32 0.0, %v3206
        %v3208 = vpop.f32.mrb[0].mxu0
        %3209 = vmatprep.mubr.f32.mxu0 0.0
        %3210 = vmatmul.mubr.f32.gmra.mrb[0].mxu0 %v3056
        %v3211 = vpop.f32.mrb[0].mxu0
        %v3212 = vadd.f32 0.0, %v3211
        %v3213 = vpop.f32.mrb[0].mxu0
        %3214 = vmatprep.mubr.f32.mxu0 0.0
        %3215 = vmatmul.mubr.f32.gmra.mrb[0].mxu0 %v3057
        %v3216 = vpop.f32.mrb[0].mxu0
        %v3217 = vadd.f32 0.0, %v3216
        %v3218 = vpop.f32.mrb[0].mxu0
        %3219 = vmatprep.mubr.f32.mxu0 0.0
        %3220 = vmatmul.mubr.f32.gmra.mrb[0].mxu0 %v3058
        %v3221 = vpop.f32.mrb[0].mxu0
        %v3222 = vadd.f32 0.0, %v3221
        %v3223 = vpop.f32.mrb[0].mxu0
        %3224 = vmatprep.mubr.f32.mxu0 0.0
        %3225 = vmatmul.mubr.f32.gmra.mrb[0].mxu0 %v3059
        %v3226 = vpop.f32.mrb[0].mxu0
        %v3227 = vadd.f32 0.0, %v3226
        %v3228 = vpop.f32.mrb[0].mxu0
        %3229 = vmatprep.mubr.f32.mxu0 0.0
        %3230 = vmatmul.mubr.f32.gmra.mrb[0].mxu0 %v3060
        %v3231 = vpop.f32.mrb[0].mxu0
        %v3232 = vadd.f32 0.0, %v3231
        %v3233 = vpop.f32.mrb[0].mxu0
        %3234 = vmatprep.mubr.f32.mxu0 0.0
        %3235 = vmatmul.mubr.f32.gmra.mrb[0].mxu0 %v3061
        %v3236 = vpop.f32.mrb[0].mxu0
        %v3237 = vadd.f32 0.0, %v3236
        %v3238 = vpop.f32.mrb[0].mxu0
        %3239 = vmatprep.mubr.f32.mxu0 0.0
        %3240 = vmatmul.mubr.f32.gmra.mrb[0].mxu0 %v3062
        %v3241 = vpop.f32.mrb[0].mxu0
        %v3242 = vadd.f32 0.0, %v3241
        %v3243 = vpop.f32.mrb[0].mxu0
        %3244 = vmatprep.mubr.f32.mxu0 0.0
        %3245 = vmatmul.mubr.f32.gmra.mrb[0].mxu0 %v3063
        %v3246 = vpop.f32.mrb[0].mxu0
        %v3247 = vadd.f32 0.0, %v3246
        %v3248 = vpop.f32.mrb[0].mxu0
        %3249 = vmatprep.mubr.f32.mxu0 0.0
        %3250 = vmatmul.mubr.f32.gmra.mrb[0].mxu0 %v3064
        %v3251 = vpop.f32.mrb[0].mxu0
        %v3252 = vadd.f32 0.0, %v3251
        %v3253 = vpop.f32.mrb[0].mxu0
        %3254 = vmatprep.mubr.f32.mxu0 0.0
        %3255 = vmatmul.mubr.f32.gmra.mrb[0].mxu0 %v3065
        %v3256 = vpop.f32.mrb[0].mxu0
        %v3257 = vadd.f32 0.0, %v3256
        %v3258 = vpop.f32.mrb[0].mxu0
        %3259 = vmatprep.mubr.f32.mxu0 0.0
        %3260 = vmatmul.mubr.f32.gmra.mrb[0].mxu0 %v3066
        %v3261 = vpop.f32.mrb[0].mxu0
        %v3262 = vadd.f32 0.0, %v3261
        %v3263 = vpop.f32.mrb[0].mxu0
        %3264 = vmatprep.mubr.f32.mxu0 0.0
        %3265 = vmatmul.mubr.f32.gmra.mrb[0].mxu0 %v3067
        %v3266 = vpop.f32.mrb[0].mxu0
        %v3267 = vadd.f32 0.0, %v3266
        %v3268 = vpop.f32.mrb[0].mxu0
        %3269 = vmatprep.mubr.f32.mxu0 0.0
        %3270 = vmatmul.mubr.f32.gmra.mrb[0].mxu0 %v3068
        %v3271 = vpop.f32.mrb[0].mxu0
        %v3272 = vadd.f32 0.0, %v3271
        %v3273 = vpop.f32.mrb[0].mxu0
        %3274 = vmatprep.mubr.f32.mxu0 0.0
        %3275 = vmatmul.mubr.f32.gmra.mrb[0].mxu0 %v3069
        %v3276 = vpop.f32.mrb[0].mxu0
        %v3277 = vadd.f32 0.0, %v3276
        %v3278 = vpop.f32.mrb[0].mxu0
        %3279 = vmatprep.mubr.f32.mxu0 0.0
        %3280 = vmatmul.mubr.f32.gmra.mrb[0].mxu0 %v3070
        %v3281 = vpop.f32.mrb[0].mxu0
        %v3282 = vadd.f32 0.0, %v3281
        %v3283 = vpop.f32.mrb[0].mxu0
        %3284 = vmatprep.mubr.f32.mxu0 0.0
        %3285 = vmatmul.mubr.f32.gmra.mrb[0].mxu0 %v3071
        %v3286 = vpop.f32.mrb[0].mxu0
        %v3287 = vadd.f32 0.0, %v3286
        %v3288 = vpop.f32.mrb[0].mxu0
        %3289 = vmatprep.mubr.f32.mxu0 0.0
        %3290 = vmatmul.mubr.f32.gmra.mrb[0].mxu0 %v3072
        %v3291 = vpop.f32.mrb[0].mxu0
        %v3292 = vadd.f32 0.0, %v3291
        %v3293 = vpop.f32.mrb[0].mxu0
        %3294 = vmatprep.mubr.f32.mxu0 0.0
        %3295 = vmatmul.mubr.f32.gmra.mrb[0].mxu0 %v3073
        %v3296 = vpop.f32.mrb[0].mxu0
        %v3297 = vadd.f32 0.0, %v3296
        %v3298 = vpop.f32.mrb[0].mxu0
        %3299 = vmatprep.mubr.f32.mxu0 0.0
        %3300 = vmatmul.mubr.f32.gmra.mrb[0].mxu0 %v3074
        %v3301 = vpop.f32.mrb[0].mxu0
        %v3302 = vadd.f32 0.0, %v3301
        %v3303 = vpop.f32.mrb[0].mxu0
        %3304 = vmatprep.mubr.f32.mxu0 0.0
        %3305 = vmatmul.mubr.f32.gmra.mrb[0].mxu0 %v3075
        %v3306 = vpop.f32.mrb[0].mxu0
        %v3307 = vadd.f32 0.0, %v3306
        %v3308 = vpop.f32.mrb[0].mxu0
        %3309 = vmatprep.mubr.f32.mxu0 0.0
        %3310 = vmatmul.mubr.f32.gmra.mrb[0].mxu0 %v3076
        %v3311 = vpop.f32.mrb[0].mxu0
        %v3312 = vadd.f32 0.0, %v3311
        %v3313 = vpop.f32.mrb[0].mxu0
        %3314 = vmatprep.mubr.f32.mxu0 0.0
        %3315 = vmatmul.mubr.f32.gmra.mrb[0].mxu0 %v3077
        %v3316 = vpop.f32.mrb[0].mxu0
        %v3317 = vadd.f32 0.0, %v3316
        %v3318 = vpop.f32.mrb[0].mxu0
        %3319 = vmatprep.mubr.f32.mxu0 0.0
        %3320 = vmatmul.mubr.f32.gmra.mrb[0].mxu0 %v3078
        %v3321 = vpop.f32.mrb[0].mxu0
        %v3322 = vadd.f32 0.0, %v3321
        %v3323 = vpop.f32.mrb[0].mxu0
        %3324 = vmatprep.mubr.f32.mxu0 0.0
        %3325 = vmatmul.mubr.f32.gmra.mrb[0].mxu0 %v3079
        %v3326 = vpop.f32.mrb[0].mxu0
        %v3327 = vadd.f32 0.0, %v3326
        %v3328 = vpop.f32.mrb[0].mxu0
        %3329 = vmatprep.mubr.f32.mxu0 0.0
        %3330 = vmatmul.mubr.f32.gmra.mrb[0].mxu0 %v3080
        %v3331 = vpop.f32.mrb[0].mxu0
        %v3332 = vadd.f32 0.0, %v3331
        %v3333 = vpop.f32.mrb[0].mxu0
        %3334 = vmatprep.mubr.f32.mxu0 0.0
        %3335 = vmatmul.mubr.f32.gmra.mrb[0].mxu0 %v3081
        %v3336 = vpop.f32.mrb[0].mxu0
        %v3337 = vadd.f32 0.0, %v3336
        %v3338 = vpop.f32.mrb[0].mxu0
        %3339 = vmatprep.mubr.f32.mxu0 0.0
        %3340 = vmatmul.mubr.f32.gmra.mrb[0].mxu0 %v3082
        %v3341 = vpop.f32.mrb[0].mxu0
        %v3342 = vadd.f32 0.0, %v3341
        %v3343 = vpop.f32.mrb[0].mxu0
        %3344 = vdwg.mxu0
        %v3345 = vadd.f32 %v3011, %v3167
        %v3346 = vadd.f32 %v3012, %v3172
        %v3347 = vadd.f32 %v3013, %v3177
        %v3348 = vadd.f32 %v3014, %v3182
        %v3349 = vadd.f32 %v3015, %v3187
        %v3350 = vadd.f32 %v3016, %v3192
        %v3351 = vadd.f32 %v3017, %v3197
        %v3352 = vadd.f32 %v3018, %v3202
        %v3353 = vadd.f32 %v3019, %v3207
        %v3354 = vadd.f32 %v3020, %v3212
        %v3355 = vadd.f32 %v3021, %v3217
        %v3356 = vadd.f32 %v3022, %v3222
        %v3357 = vadd.f32 %v3023, %v3227
        %v3358 = vadd.f32 %v3024, %v3232
        %v3359 = vadd.f32 %v3025, %v3237
        %v3360 = vadd.f32 %v3026, %v3242
        %v3361 = vadd.f32 %v3027, %v3247
        %v3362 = vadd.f32 %v3028, %v3252
        %v3363 = vadd.f32 %v3029, %v3257
        %v3364 = vadd.f32 %v3030, %v3262
        %v3365 = vadd.f32 %v3031, %v3267
        %v3366 = vadd.f32 %v3032, %v3272
        %v3367 = vadd.f32 %v3033, %v3277
        %v3368 = vadd.f32 %v3034, %v3282
        %v3369 = vadd.f32 %v3035, %v3287
        %v3370 = vadd.f32 %v3036, %v3292
        %v3371 = vadd.f32 %v3037, %v3297
        %v3372 = vadd.f32 %v3038, %v3302
        %v3373 = vadd.f32 %v3039, %v3307
        %v3374 = vadd.f32 %v3040, %v3312
        %v3375 = vadd.f32 %v3041, %v3317
        %v3376 = vadd.f32 %v3042, %v3322
        %v3377 = vadd.f32 %v3043, %v3327
        %v3378 = vadd.f32 %v3044, %v3332
        %v3379 = vadd.f32 %v3045, %v3337
        %v3380 = vadd.f32 %v3046, %v3342
        %v3381 = vld [vmem:[#allocation2 + $0x36] sm:$0xff]
        %v3382 = vld [vmem:[#allocation2 + $0x3e] sm:$0xff]
        %v3383 = vld [vmem:[#allocation2 + $0x46] sm:$0xff]
        %v3384 = vld [vmem:[#allocation2 + $0x4e] sm:$0xff]
        %v3385 = vld [vmem:[#allocation2 + $0x56] sm:$0xff]
        %v3386 = vld [vmem:[#allocation2 + $0x5e] sm:$0xff]
        %v3387 = vld [vmem:[#allocation2 + $0x66] sm:$0xff]
        %v3388 = vld [vmem:[#allocation2 + $0x6e] sm:$0xff]
        %v3389 = vld [vmem:[#allocation2 + $0x76] sm:$0xff]
        %v3390 = vld [vmem:[#allocation2 + $0x7e] sm:$0xff]
        %v3391 = vld [vmem:[#allocation2 + $0x86] sm:$0xff]
        %v3392 = vld [vmem:[#allocation2 + $0x8e] sm:$0xff]
        %v3393 = vld [vmem:[#allocation2 + $0x96] sm:$0xff]
        %v3394 = vld [vmem:[#allocation2 + $0x9e] sm:$0xff]
        %v3395 = vld [vmem:[#allocation2 + $0xa6] sm:$0xff]
        %v3396 = vld [vmem:[#allocation2 + $0xae] sm:$0xff]
        %v3397 = vld [vmem:[#allocation2 + $0xb6] sm:$0xff]
        %v3398 = vld [vmem:[#allocation2 + $0xbe] sm:$0xff]
        %v3399 = vld [vmem:[#allocation2 + $0xc6] sm:$0xff]
        %v3400 = vld [vmem:[#allocation2 + $0xce] sm:$0xff]
        %v3401 = vld [vmem:[#allocation2 + $0xd6] sm:$0xff]
        %v3402 = vld [vmem:[#allocation2 + $0xde] sm:$0xff]
        %v3403 = vld [vmem:[#allocation2 + $0xe6] sm:$0xff]
        %v3404 = vld [vmem:[#allocation2 + $0xee] sm:$0xff]
        %v3405 = vld [vmem:[#allocation2 + $0xf6] sm:$0xff]
        %v3406 = vld [vmem:[#allocation2 + $0xfe] sm:$0xff]
        %v3407 = vld [vmem:[#allocation2 + $0x106] sm:$0xff]
        %v3408 = vld [vmem:[#allocation2 + $0x10e] sm:$0xff]
        %v3409 = vld [vmem:[#allocation2 + $0x116] sm:$0xff]
        %v3410 = vld [vmem:[#allocation2 + $0x11e] sm:$0xff]
        %v3411 = vld [vmem:[#allocation2 + $0x126] sm:$0xff]
        %v3412 = vld [vmem:[#allocation2 + $0x12e] sm:$0xff]
        %v3413 = vld [vmem:[#allocation2 + $0x136] sm:$0xff]
        %v3414 = vld [vmem:[#allocation2 + $0x13e] sm:$0xff]
        %v3415 = vld [vmem:[#allocation2 + $0x146] sm:$0xff]
        %v3416 = vld [vmem:[#allocation2 + $0x14e] sm:$0xff]
        %s3417 = scalar_lea.vmem %s4, 896
        %v3418 = vld [vmem:[%s3417] sm:$0xff]
        %v3419 = vld [vmem:[%s3417 + $0x8] sm:$0xff]
        %v3420 = vld [vmem:[%s3417 + $0x10] sm:$0xff]
        %v3421 = vld [vmem:[%s3417 + $0x18] sm:$0xff]
        %v3422 = vld [vmem:[%s3417 + $0x20] sm:$0xff]
        %v3423 = vld [vmem:[%s3417 + $0x28] sm:$0xff]
        %v3424 = vld [vmem:[%s3417 + $0x30] sm:$0xff]
        %v3425 = vld [vmem:[%s3417 + $0x38] sm:$0xff]
        %v3426 = vld [vmem:[%s3417 + $0x40] sm:$0xff]
        %v3427 = vld [vmem:[%s3417 + $0x48] sm:$0xff]
        %v3428 = vld [vmem:[%s3417 + $0x50] sm:$0xff]
        %v3429 = vld [vmem:[%s3417 + $0x58] sm:$0xff]
        %v3430 = vld [vmem:[%s3417 + $0x60] sm:$0xff]
        %v3431 = vld [vmem:[%s3417 + $0x68] sm:$0xff]
        %v3432 = vld [vmem:[%s3417 + $0x70] sm:$0xff]
        %v3433 = vld [vmem:[%s3417 + $0x78] sm:$0xff]
        %3434 = vmatprep.subr.mxu0 0.0
        %3435 = vmatpush1.msra.mxu0 %v3418
        %3436 = vmatprep.subr.mxu0 0.0
        %3437 = vmatpush1.msra.mxu0 %v3419
        %3438 = vmatprep.subr.mxu0 0.0
        %3439 = vmatpush1.msra.mxu0 %v3420
        %3440 = vmatprep.subr.mxu0 0.0
        %3441 = vmatpush1.msra.mxu0 %v3421
        %3442 = vmatprep.subr.mxu0 0.0
        %3443 = vmatpush1.msra.mxu0 %v3422
        %3444 = vmatprep.subr.mxu0 0.0
        %3445 = vmatpush1.msra.mxu0 %v3423
        %3446 = vmatprep.subr.mxu0 0.0
        %3447 = vmatpush1.msra.mxu0 %v3424
        %3448 = vmatprep.subr.mxu0 0.0
        %3449 = vmatpush1.msra.mxu0 %v3425
        %3450 = vmatprep.subr.mxu0 0.0
        %3451 = vmatpush1.msra.mxu0 %v3426
        %3452 = vmatprep.subr.mxu0 0.0
        %3453 = vmatpush1.msra.mxu0 %v3427
        %3454 = vmatprep.subr.mxu0 0.0
        %3455 = vmatpush1.msra.mxu0 %v3428
        %3456 = vmatprep.subr.mxu0 0.0
        %3457 = vmatpush1.msra.mxu0 %v3429
        %3458 = vmatprep.subr.mxu0 0.0
        %3459 = vmatpush1.msra.mxu0 %v3430
        %3460 = vmatprep.subr.mxu0 0.0
        %3461 = vmatpush1.msra.mxu0 %v3431
        %3462 = vmatprep.subr.mxu0 0.0
        %3463 = vmatpush1.msra.mxu0 %v3432
        %3464 = vmatprep.subr.mxu0 0.0
        %3465 = vmatpush1.msra.mxu0 %v3433
        %3466 = vmatprep.subr.mxu0 0.0
        %3467 = vmatpush1.msra.mxu0 0.0
        %3468 = vmatprep.subr.mxu0 0.0
        %3469 = vmatpush1.msra.mxu0 0.0
        %3470 = vmatprep.subr.mxu0 0.0
        %3471 = vmatpush1.msra.mxu0 0.0
        %3472 = vmatprep.subr.mxu0 0.0
        %3473 = vmatpush1.msra.mxu0 0.0
        %3474 = vmatprep.subr.mxu0 0.0
        %3475 = vmatpush1.msra.mxu0 0.0
        %3476 = vmatprep.subr.mxu0 0.0
        %3477 = vmatpush1.msra.mxu0 0.0
        %3478 = vmatprep.subr.mxu0 0.0
        %3479 = vmatpush1.msra.mxu0 0.0
        %3480 = vmatprep.subr.mxu0 0.0
        %3481 = vmatpush1.msra.mxu0 0.0
        %3482 = vmatprep.subr.mxu0 0.0
        %3483 = vmatpush1.msra.mxu0 0.0
        %3484 = vmatprep.subr.mxu0 0.0
        %3485 = vmatpush1.msra.mxu0 0.0
        %3486 = vmatprep.subr.mxu0 0.0
        %3487 = vmatpush1.msra.mxu0 0.0
        %3488 = vmatprep.subr.mxu0 0.0
        %3489 = vmatpush1.msra.mxu0 0.0
        %3490 = vmatprep.subr.mxu0 0.0
        %3491 = vmatpush1.msra.mxu0 0.0
        %3492 = vmatprep.subr.mxu0 0.0
        %3493 = vmatpush1.msra.mxu0 0.0
        %3494 = vmatprep.subr.mxu0 0.0
        %3495 = vmatpush1.msra.mxu0 0.0
        %3496 = vmatprep.subr.mxu0 0.0
        %3497 = vmatpush1.msra.mxu0 0.0
        %3498 = vmatprep.mubr.f32.mxu0 0.0
        %3499 = vmatmul.mubr.f32.gmra.mrb[0].mxu0 %v3381
        %v3500 = vpop.f32.mrb[0].mxu0
        %v3501 = vadd.f32 0.0, %v3500
        %v3502 = vpop.f32.mrb[0].mxu0
        %3503 = vmatprep.mubr.f32.mxu0 0.0
        %3504 = vmatmul.mubr.f32.gmra.mrb[0].mxu0 %v3382
        %v3505 = vpop.f32.mrb[0].mxu0
        %v3506 = vadd.f32 0.0, %v3505
        %v3507 = vpop.f32.mrb[0].mxu0
        %3508 = vmatprep.mubr.f32.mxu0 0.0
        %3509 = vmatmul.mubr.f32.gmra.mrb[0].mxu0 %v3383
        %v3510 = vpop.f32.mrb[0].mxu0
        %v3511 = vadd.f32 0.0, %v3510
        %v3512 = vpop.f32.mrb[0].mxu0
        %3513 = vmatprep.mubr.f32.mxu0 0.0
        %3514 = vmatmul.mubr.f32.gmra.mrb[0].mxu0 %v3384
        %v3515 = vpop.f32.mrb[0].mxu0
        %v3516 = vadd.f32 0.0, %v3515
        %v3517 = vpop.f32.mrb[0].mxu0
        %3518 = vmatprep.mubr.f32.mxu0 0.0
        %3519 = vmatmul.mubr.f32.gmra.mrb[0].mxu0 %v3385
        %v3520 = vpop.f32.mrb[0].mxu0
        %v3521 = vadd.f32 0.0, %v3520
        %v3522 = vpop.f32.mrb[0].mxu0
        %3523 = vmatprep.mubr.f32.mxu0 0.0
        %3524 = vmatmul.mubr.f32.gmra.mrb[0].mxu0 %v3386
        %v3525 = vpop.f32.mrb[0].mxu0
        %v3526 = vadd.f32 0.0, %v3525
        %v3527 = vpop.f32.mrb[0].mxu0
        %3528 = vmatprep.mubr.f32.mxu0 0.0
        %3529 = vmatmul.mubr.f32.gmra.mrb[0].mxu0 %v3387
        %v3530 = vpop.f32.mrb[0].mxu0
        %v3531 = vadd.f32 0.0, %v3530
        %v3532 = vpop.f32.mrb[0].mxu0
        %3533 = vmatprep.mubr.f32.mxu0 0.0
        %3534 = vmatmul.mubr.f32.gmra.mrb[0].mxu0 %v3388
        %v3535 = vpop.f32.mrb[0].mxu0
        %v3536 = vadd.f32 0.0, %v3535
        %v3537 = vpop.f32.mrb[0].mxu0
        %3538 = vmatprep.mubr.f32.mxu0 0.0
        %3539 = vmatmul.mubr.f32.gmra.mrb[0].mxu0 %v3389
        %v3540 = vpop.f32.mrb[0].mxu0
        %v3541 = vadd.f32 0.0, %v3540
        %v3542 = vpop.f32.mrb[0].mxu0
        %3543 = vmatprep.mubr.f32.mxu0 0.0
        %3544 = vmatmul.mubr.f32.gmra.mrb[0].mxu0 %v3390
        %v3545 = vpop.f32.mrb[0].mxu0
        %v3546 = vadd.f32 0.0, %v3545
        %v3547 = vpop.f32.mrb[0].mxu0
        %3548 = vmatprep.mubr.f32.mxu0 0.0
        %3549 = vmatmul.mubr.f32.gmra.mrb[0].mxu0 %v3391
        %v3550 = vpop.f32.mrb[0].mxu0
        %v3551 = vadd.f32 0.0, %v3550
        %v3552 = vpop.f32.mrb[0].mxu0
        %3553 = vmatprep.mubr.f32.mxu0 0.0
        %3554 = vmatmul.mubr.f32.gmra.mrb[0].mxu0 %v3392
        %v3555 = vpop.f32.mrb[0].mxu0
        %v3556 = vadd.f32 0.0, %v3555
        %v3557 = vpop.f32.mrb[0].mxu0
        %3558 = vmatprep.mubr.f32.mxu0 0.0
        %3559 = vmatmul.mubr.f32.gmra.mrb[0].mxu0 %v3393
        %v3560 = vpop.f32.mrb[0].mxu0
        %v3561 = vadd.f32 0.0, %v3560
        %v3562 = vpop.f32.mrb[0].mxu0
        %3563 = vmatprep.mubr.f32.mxu0 0.0
        %3564 = vmatmul.mubr.f32.gmra.mrb[0].mxu0 %v3394
        %v3565 = vpop.f32.mrb[0].mxu0
        %v3566 = vadd.f32 0.0, %v3565
        %v3567 = vpop.f32.mrb[0].mxu0
        %3568 = vmatprep.mubr.f32.mxu0 0.0
        %3569 = vmatmul.mubr.f32.gmra.mrb[0].mxu0 %v3395
        %v3570 = vpop.f32.mrb[0].mxu0
        %v3571 = vadd.f32 0.0, %v3570
        %v3572 = vpop.f32.mrb[0].mxu0
        %3573 = vmatprep.mubr.f32.mxu0 0.0
        %3574 = vmatmul.mubr.f32.gmra.mrb[0].mxu0 %v3396
        %v3575 = vpop.f32.mrb[0].mxu0
        %v3576 = vadd.f32 0.0, %v3575
        %v3577 = vpop.f32.mrb[0].mxu0
        %3578 = vmatprep.mubr.f32.mxu0 0.0
        %3579 = vmatmul.mubr.f32.gmra.mrb[0].mxu0 %v3397
        %v3580 = vpop.f32.mrb[0].mxu0
        %v3581 = vadd.f32 0.0, %v3580
        %v3582 = vpop.f32.mrb[0].mxu0
        %3583 = vmatprep.mubr.f32.mxu0 0.0
        %3584 = vmatmul.mubr.f32.gmra.mrb[0].mxu0 %v3398
        %v3585 = vpop.f32.mrb[0].mxu0
        %v3586 = vadd.f32 0.0, %v3585
        %v3587 = vpop.f32.mrb[0].mxu0
        %3588 = vmatprep.mubr.f32.mxu0 0.0
        %3589 = vmatmul.mubr.f32.gmra.mrb[0].mxu0 %v3399
        %v3590 = vpop.f32.mrb[0].mxu0
        %v3591 = vadd.f32 0.0, %v3590
        %v3592 = vpop.f32.mrb[0].mxu0
        %3593 = vmatprep.mubr.f32.mxu0 0.0
        %3594 = vmatmul.mubr.f32.gmra.mrb[0].mxu0 %v3400
        %v3595 = vpop.f32.mrb[0].mxu0
        %v3596 = vadd.f32 0.0, %v3595
        %v3597 = vpop.f32.mrb[0].mxu0
        %3598 = vmatprep.mubr.f32.mxu0 0.0
        %3599 = vmatmul.mubr.f32.gmra.mrb[0].mxu0 %v3401
        %v3600 = vpop.f32.mrb[0].mxu0
        %v3601 = vadd.f32 0.0, %v3600
        %v3602 = vpop.f32.mrb[0].mxu0
        %3603 = vmatprep.mubr.f32.mxu0 0.0
        %3604 = vmatmul.mubr.f32.gmra.mrb[0].mxu0 %v3402
        %v3605 = vpop.f32.mrb[0].mxu0
        %v3606 = vadd.f32 0.0, %v3605
        %v3607 = vpop.f32.mrb[0].mxu0
        %3608 = vmatprep.mubr.f32.mxu0 0.0
        %3609 = vmatmul.mubr.f32.gmra.mrb[0].mxu0 %v3403
        %v3610 = vpop.f32.mrb[0].mxu0
        %v3611 = vadd.f32 0.0, %v3610
        %v3612 = vpop.f32.mrb[0].mxu0
        %3613 = vmatprep.mubr.f32.mxu0 0.0
        %3614 = vmatmul.mubr.f32.gmra.mrb[0].mxu0 %v3404
        %v3615 = vpop.f32.mrb[0].mxu0
        %v3616 = vadd.f32 0.0, %v3615
        %v3617 = vpop.f32.mrb[0].mxu0
        %3618 = vmatprep.mubr.f32.mxu0 0.0
        %3619 = vmatmul.mubr.f32.gmra.mrb[0].mxu0 %v3405
        %v3620 = vpop.f32.mrb[0].mxu0
        %v3621 = vadd.f32 0.0, %v3620
        %v3622 = vpop.f32.mrb[0].mxu0
        %3623 = vmatprep.mubr.f32.mxu0 0.0
        %3624 = vmatmul.mubr.f32.gmra.mrb[0].mxu0 %v3406
        %v3625 = vpop.f32.mrb[0].mxu0
        %v3626 = vadd.f32 0.0, %v3625
        %v3627 = vpop.f32.mrb[0].mxu0
        %3628 = vmatprep.mubr.f32.mxu0 0.0
        %3629 = vmatmul.mubr.f32.gmra.mrb[0].mxu0 %v3407
        %v3630 = vpop.f32.mrb[0].mxu0
        %v3631 = vadd.f32 0.0, %v3630
        %v3632 = vpop.f32.mrb[0].mxu0
        %3633 = vmatprep.mubr.f32.mxu0 0.0
        %3634 = vmatmul.mubr.f32.gmra.mrb[0].mxu0 %v3408
        %v3635 = vpop.f32.mrb[0].mxu0
        %v3636 = vadd.f32 0.0, %v3635
        %v3637 = vpop.f32.mrb[0].mxu0
        %3638 = vmatprep.mubr.f32.mxu0 0.0
        %3639 = vmatmul.mubr.f32.gmra.mrb[0].mxu0 %v3409
        %v3640 = vpop.f32.mrb[0].mxu0
        %v3641 = vadd.f32 0.0, %v3640
        %v3642 = vpop.f32.mrb[0].mxu0
        %3643 = vmatprep.mubr.f32.mxu0 0.0
        %3644 = vmatmul.mubr.f32.gmra.mrb[0].mxu0 %v3410
        %v3645 = vpop.f32.mrb[0].mxu0
        %v3646 = vadd.f32 0.0, %v3645
        %v3647 = vpop.f32.mrb[0].mxu0
        %3648 = vmatprep.mubr.f32.mxu0 0.0
        %3649 = vmatmul.mubr.f32.gmra.mrb[0].mxu0 %v3411
        %v3650 = vpop.f32.mrb[0].mxu0
        %v3651 = vadd.f32 0.0, %v3650
        %v3652 = vpop.f32.mrb[0].mxu0
        %3653 = vmatprep.mubr.f32.mxu0 0.0
        %3654 = vmatmul.mubr.f32.gmra.mrb[0].mxu0 %v3412
        %v3655 = vpop.f32.mrb[0].mxu0
        %v3656 = vadd.f32 0.0, %v3655
        %v3657 = vpop.f32.mrb[0].mxu0
        %3658 = vmatprep.mubr.f32.mxu0 0.0
        %3659 = vmatmul.mubr.f32.gmra.mrb[0].mxu0 %v3413
        %v3660 = vpop.f32.mrb[0].mxu0
        %v3661 = vadd.f32 0.0, %v3660
        %v3662 = vpop.f32.mrb[0].mxu0
        %3663 = vmatprep.mubr.f32.mxu0 0.0
        %3664 = vmatmul.mubr.f32.gmra.mrb[0].mxu0 %v3414
        %v3665 = vpop.f32.mrb[0].mxu0
        %v3666 = vadd.f32 0.0, %v3665
        %v3667 = vpop.f32.mrb[0].mxu0
        %3668 = vmatprep.mubr.f32.mxu0 0.0
        %3669 = vmatmul.mubr.f32.gmra.mrb[0].mxu0 %v3415
        %v3670 = vpop.f32.mrb[0].mxu0
        %v3671 = vadd.f32 0.0, %v3670
        %v3672 = vpop.f32.mrb[0].mxu0
        %3673 = vmatprep.mubr.f32.mxu0 0.0
        %3674 = vmatmul.mubr.f32.gmra.mrb[0].mxu0 %v3416
        %v3675 = vpop.f32.mrb[0].mxu0
        %v3676 = vadd.f32 0.0, %v3675
        %v3677 = vpop.f32.mrb[0].mxu0
        %3678 = vdwg.mxu0
        %v3679 = vadd.f32 %v3345, %v3501
        %v3680 = vadd.f32 %v3346, %v3506
        %v3681 = vadd.f32 %v3347, %v3511
        %v3682 = vadd.f32 %v3348, %v3516
        %v3683 = vadd.f32 %v3349, %v3521
        %v3684 = vadd.f32 %v3350, %v3526
        %v3685 = vadd.f32 %v3351, %v3531
        %v3686 = vadd.f32 %v3352, %v3536
        %v3687 = vadd.f32 %v3353, %v3541
        %v3688 = vadd.f32 %v3354, %v3546
        %v3689 = vadd.f32 %v3355, %v3551
        %v3690 = vadd.f32 %v3356, %v3556
        %v3691 = vadd.f32 %v3357, %v3561
        %v3692 = vadd.f32 %v3358, %v3566
        %v3693 = vadd.f32 %v3359, %v3571
        %v3694 = vadd.f32 %v3360, %v3576
        %v3695 = vadd.f32 %v3361, %v3581
        %v3696 = vadd.f32 %v3362, %v3586
        %v3697 = vadd.f32 %v3363, %v3591
        %v3698 = vadd.f32 %v3364, %v3596
        %v3699 = vadd.f32 %v3365, %v3601
        %v3700 = vadd.f32 %v3366, %v3606
        %v3701 = vadd.f32 %v3367, %v3611
        %v3702 = vadd.f32 %v3368, %v3616
        %v3703 = vadd.f32 %v3369, %v3621
        %v3704 = vadd.f32 %v3370, %v3626
        %v3705 = vadd.f32 %v3371, %v3631
        %v3706 = vadd.f32 %v3372, %v3636
        %v3707 = vadd.f32 %v3373, %v3641
        %v3708 = vadd.f32 %v3374, %v3646
        %v3709 = vadd.f32 %v3375, %v3651
        %v3710 = vadd.f32 %v3376, %v3656
        %v3711 = vadd.f32 %v3377, %v3661
        %v3712 = vadd.f32 %v3378, %v3666
        %v3713 = vadd.f32 %v3379, %v3671
        %v3714 = vadd.f32 %v3380, %v3676
        %v3715 = vld [vmem:[#allocation2 + $0x37] sm:$0xff]
        %v3716 = vld [vmem:[#allocation2 + $0x3f] sm:$0xff]
        %v3717 = vld [vmem:[#allocation2 + $0x47] sm:$0xff]
        %v3718 = vld [vmem:[#allocation2 + $0x4f] sm:$0xff]
        %v3719 = vld [vmem:[#allocation2 + $0x57] sm:$0xff]
        %v3720 = vld [vmem:[#allocation2 + $0x5f] sm:$0xff]
        %v3721 = vld [vmem:[#allocation2 + $0x67] sm:$0xff]
        %v3722 = vld [vmem:[#allocation2 + $0x6f] sm:$0xff]
        %v3723 = vld [vmem:[#allocation2 + $0x77] sm:$0xff]
        %v3724 = vld [vmem:[#allocation2 + $0x7f] sm:$0xff]
        %v3725 = vld [vmem:[#allocation2 + $0x87] sm:$0xff]
        %v3726 = vld [vmem:[#allocation2 + $0x8f] sm:$0xff]
        %v3727 = vld [vmem:[#allocation2 + $0x97] sm:$0xff]
        %v3728 = vld [vmem:[#allocation2 + $0x9f] sm:$0xff]
        %v3729 = vld [vmem:[#allocation2 + $0xa7] sm:$0xff]
        %v3730 = vld [vmem:[#allocation2 + $0xaf] sm:$0xff]
        %v3731 = vld [vmem:[#allocation2 + $0xb7] sm:$0xff]
        %v3732 = vld [vmem:[#allocation2 + $0xbf] sm:$0xff]
        %v3733 = vld [vmem:[#allocation2 + $0xc7] sm:$0xff]
        %v3734 = vld [vmem:[#allocation2 + $0xcf] sm:$0xff]
        %v3735 = vld [vmem:[#allocation2 + $0xd7] sm:$0xff]
        %v3736 = vld [vmem:[#allocation2 + $0xdf] sm:$0xff]
        %v3737 = vld [vmem:[#allocation2 + $0xe7] sm:$0xff]
        %v3738 = vld [vmem:[#allocation2 + $0xef] sm:$0xff]
        %v3739 = vld [vmem:[#allocation2 + $0xf7] sm:$0xff]
        %v3740 = vld [vmem:[#allocation2 + $0xff] sm:$0xff]
        %v3741 = vld [vmem:[#allocation2 + $0x107] sm:$0xff]
        %v3742 = vld [vmem:[#allocation2 + $0x10f] sm:$0xff]
        %v3743 = vld [vmem:[#allocation2 + $0x117] sm:$0xff]
        %v3744 = vld [vmem:[#allocation2 + $0x11f] sm:$0xff]
        %v3745 = vld [vmem:[#allocation2 + $0x127] sm:$0xff]
        %v3746 = vld [vmem:[#allocation2 + $0x12f] sm:$0xff]
        %v3747 = vld [vmem:[#allocation2 + $0x137] sm:$0xff]
        %v3748 = vld [vmem:[#allocation2 + $0x13f] sm:$0xff]
        %v3749 = vld [vmem:[#allocation2 + $0x147] sm:$0xff]
        %v3750 = vld [vmem:[#allocation2 + $0x14f] sm:$0xff]
        %s3751 = scalar_lea.vmem %s4, 1024
        %v3752 = vld [vmem:[%s3751] sm:$0xff]
        %v3753 = vld [vmem:[%s3751 + $0x8] sm:$0xff]
        %v3754 = vld [vmem:[%s3751 + $0x10] sm:$0xff]
        %v3755 = vld [vmem:[%s3751 + $0x18] sm:$0xff]
        %v3756 = vld [vmem:[%s3751 + $0x20] sm:$0xff]
        %v3757 = vld [vmem:[%s3751 + $0x28] sm:$0xff]
        %v3758 = vld [vmem:[%s3751 + $0x30] sm:$0xff]
        %v3759 = vld [vmem:[%s3751 + $0x38] sm:$0xff]
        %v3760 = vld [vmem:[%s3751 + $0x40] sm:$0xff]
        %v3761 = vld [vmem:[%s3751 + $0x48] sm:$0xff]
        %v3762 = vld [vmem:[%s3751 + $0x50] sm:$0xff]
        %v3763 = vld [vmem:[%s3751 + $0x58] sm:$0xff]
        %v3764 = vld [vmem:[%s3751 + $0x60] sm:$0xff]
        %v3765 = vld [vmem:[%s3751 + $0x68] sm:$0xff]
        %v3766 = vld [vmem:[%s3751 + $0x70] sm:$0xff]
        %v3767 = vld [vmem:[%s3751 + $0x78] sm:$0xff]
        %3768 = vmatprep.subr.mxu0 0.0
        %3769 = vmatpush1.msra.mxu0 %v3752
        %3770 = vmatprep.subr.mxu0 0.0
        %3771 = vmatpush1.msra.mxu0 %v3753
        %3772 = vmatprep.subr.mxu0 0.0
        %3773 = vmatpush1.msra.mxu0 %v3754
        %3774 = vmatprep.subr.mxu0 0.0
        %3775 = vmatpush1.msra.mxu0 %v3755
        %3776 = vmatprep.subr.mxu0 0.0
        %3777 = vmatpush1.msra.mxu0 %v3756
        %3778 = vmatprep.subr.mxu0 0.0
        %3779 = vmatpush1.msra.mxu0 %v3757
        %3780 = vmatprep.subr.mxu0 0.0
        %3781 = vmatpush1.msra.mxu0 %v3758
        %3782 = vmatprep.subr.mxu0 0.0
        %3783 = vmatpush1.msra.mxu0 %v3759
        %3784 = vmatprep.subr.mxu0 0.0
        %3785 = vmatpush1.msra.mxu0 %v3760
        %3786 = vmatprep.subr.mxu0 0.0
        %3787 = vmatpush1.msra.mxu0 %v3761
        %3788 = vmatprep.subr.mxu0 0.0
        %3789 = vmatpush1.msra.mxu0 %v3762
        %3790 = vmatprep.subr.mxu0 0.0
        %3791 = vmatpush1.msra.mxu0 %v3763
        %3792 = vmatprep.subr.mxu0 0.0
        %3793 = vmatpush1.msra.mxu0 %v3764
        %3794 = vmatprep.subr.mxu0 0.0
        %3795 = vmatpush1.msra.mxu0 %v3765
        %3796 = vmatprep.subr.mxu0 0.0
        %3797 = vmatpush1.msra.mxu0 %v3766
        %3798 = vmatprep.subr.mxu0 0.0
        %3799 = vmatpush1.msra.mxu0 %v3767
        %3800 = vmatprep.subr.mxu0 0.0
        %3801 = vmatpush1.msra.mxu0 0.0
        %3802 = vmatprep.subr.mxu0 0.0
        %3803 = vmatpush1.msra.mxu0 0.0
        %3804 = vmatprep.subr.mxu0 0.0
        %3805 = vmatpush1.msra.mxu0 0.0
        %3806 = vmatprep.subr.mxu0 0.0
        %3807 = vmatpush1.msra.mxu0 0.0
        %3808 = vmatprep.subr.mxu0 0.0
        %3809 = vmatpush1.msra.mxu0 0.0
        %3810 = vmatprep.subr.mxu0 0.0
        %3811 = vmatpush1.msra.mxu0 0.0
        %3812 = vmatprep.subr.mxu0 0.0
        %3813 = vmatpush1.msra.mxu0 0.0
        %3814 = vmatprep.subr.mxu0 0.0
        %3815 = vmatpush1.msra.mxu0 0.0
        %3816 = vmatprep.subr.mxu0 0.0
        %3817 = vmatpush1.msra.mxu0 0.0
        %3818 = vmatprep.subr.mxu0 0.0
        %3819 = vmatpush1.msra.mxu0 0.0
        %3820 = vmatprep.subr.mxu0 0.0
        %3821 = vmatpush1.msra.mxu0 0.0
        %3822 = vmatprep.subr.mxu0 0.0
        %3823 = vmatpush1.msra.mxu0 0.0
        %3824 = vmatprep.subr.mxu0 0.0
        %3825 = vmatpush1.msra.mxu0 0.0
        %3826 = vmatprep.subr.mxu0 0.0
        %3827 = vmatpush1.msra.mxu0 0.0
        %3828 = vmatprep.subr.mxu0 0.0
        %3829 = vmatpush1.msra.mxu0 0.0
        %3830 = vmatprep.subr.mxu0 0.0
        %3831 = vmatpush1.msra.mxu0 0.0
        %3832 = vmatprep.mubr.f32.mxu0 0.0
        %3833 = vmatmul.mubr.f32.gmra.mrb[0].mxu0 %v3715
        %v3834 = vpop.f32.mrb[0].mxu0
        %v3835 = vadd.f32 0.0, %v3834
        %v3836 = vpop.f32.mrb[0].mxu0
        %3837 = vmatprep.mubr.f32.mxu0 0.0
        %3838 = vmatmul.mubr.f32.gmra.mrb[0].mxu0 %v3716
        %v3839 = vpop.f32.mrb[0].mxu0
        %v3840 = vadd.f32 0.0, %v3839
        %v3841 = vpop.f32.mrb[0].mxu0
        %3842 = vmatprep.mubr.f32.mxu0 0.0
        %3843 = vmatmul.mubr.f32.gmra.mrb[0].mxu0 %v3717
        %v3844 = vpop.f32.mrb[0].mxu0
        %v3845 = vadd.f32 0.0, %v3844
        %v3846 = vpop.f32.mrb[0].mxu0
        %3847 = vmatprep.mubr.f32.mxu0 0.0
        %3848 = vmatmul.mubr.f32.gmra.mrb[0].mxu0 %v3718
        %v3849 = vpop.f32.mrb[0].mxu0
        %v3850 = vadd.f32 0.0, %v3849
        %v3851 = vpop.f32.mrb[0].mxu0
        %3852 = vmatprep.mubr.f32.mxu0 0.0
        %3853 = vmatmul.mubr.f32.gmra.mrb[0].mxu0 %v3719
        %v3854 = vpop.f32.mrb[0].mxu0
        %v3855 = vadd.f32 0.0, %v3854
        %v3856 = vpop.f32.mrb[0].mxu0
        %3857 = vmatprep.mubr.f32.mxu0 0.0
        %3858 = vmatmul.mubr.f32.gmra.mrb[0].mxu0 %v3720
        %v3859 = vpop.f32.mrb[0].mxu0
        %v3860 = vadd.f32 0.0, %v3859
        %v3861 = vpop.f32.mrb[0].mxu0
        %3862 = vmatprep.mubr.f32.mxu0 0.0
        %3863 = vmatmul.mubr.f32.gmra.mrb[0].mxu0 %v3721
        %v3864 = vpop.f32.mrb[0].mxu0
        %v3865 = vadd.f32 0.0, %v3864
        %v3866 = vpop.f32.mrb[0].mxu0
        %3867 = vmatprep.mubr.f32.mxu0 0.0
        %3868 = vmatmul.mubr.f32.gmra.mrb[0].mxu0 %v3722
        %v3869 = vpop.f32.mrb[0].mxu0
        %v3870 = vadd.f32 0.0, %v3869
        %v3871 = vpop.f32.mrb[0].mxu0
        %3872 = vmatprep.mubr.f32.mxu0 0.0
        %3873 = vmatmul.mubr.f32.gmra.mrb[0].mxu0 %v3723
        %v3874 = vpop.f32.mrb[0].mxu0
        %v3875 = vadd.f32 0.0, %v3874
        %v3876 = vpop.f32.mrb[0].mxu0
        %3877 = vmatprep.mubr.f32.mxu0 0.0
        %3878 = vmatmul.mubr.f32.gmra.mrb[0].mxu0 %v3724
        %v3879 = vpop.f32.mrb[0].mxu0
        %v3880 = vadd.f32 0.0, %v3879
        %v3881 = vpop.f32.mrb[0].mxu0
        %3882 = vmatprep.mubr.f32.mxu0 0.0
        %3883 = vmatmul.mubr.f32.gmra.mrb[0].mxu0 %v3725
        %v3884 = vpop.f32.mrb[0].mxu0
        %v3885 = vadd.f32 0.0, %v3884
        %v3886 = vpop.f32.mrb[0].mxu0
        %3887 = vmatprep.mubr.f32.mxu0 0.0
        %3888 = vmatmul.mubr.f32.gmra.mrb[0].mxu0 %v3726
        %v3889 = vpop.f32.mrb[0].mxu0
        %v3890 = vadd.f32 0.0, %v3889
        %v3891 = vpop.f32.mrb[0].mxu0
        %3892 = vmatprep.mubr.f32.mxu0 0.0
        %3893 = vmatmul.mubr.f32.gmra.mrb[0].mxu0 %v3727
        %v3894 = vpop.f32.mrb[0].mxu0
        %v3895 = vadd.f32 0.0, %v3894
        %v3896 = vpop.f32.mrb[0].mxu0
        %3897 = vmatprep.mubr.f32.mxu0 0.0
        %3898 = vmatmul.mubr.f32.gmra.mrb[0].mxu0 %v3728
        %v3899 = vpop.f32.mrb[0].mxu0
        %v3900 = vadd.f32 0.0, %v3899
        %v3901 = vpop.f32.mrb[0].mxu0
        %3902 = vmatprep.mubr.f32.mxu0 0.0
        %3903 = vmatmul.mubr.f32.gmra.mrb[0].mxu0 %v3729
        %v3904 = vpop.f32.mrb[0].mxu0
        %v3905 = vadd.f32 0.0, %v3904
        %v3906 = vpop.f32.mrb[0].mxu0
        %3907 = vmatprep.mubr.f32.mxu0 0.0
        %3908 = vmatmul.mubr.f32.gmra.mrb[0].mxu0 %v3730
        %v3909 = vpop.f32.mrb[0].mxu0
        %v3910 = vadd.f32 0.0, %v3909
        %v3911 = vpop.f32.mrb[0].mxu0
        %3912 = vmatprep.mubr.f32.mxu0 0.0
        %3913 = vmatmul.mubr.f32.gmra.mrb[0].mxu0 %v3731
        %v3914 = vpop.f32.mrb[0].mxu0
        %v3915 = vadd.f32 0.0, %v3914
        %v3916 = vpop.f32.mrb[0].mxu0
        %3917 = vmatprep.mubr.f32.mxu0 0.0
        %3918 = vmatmul.mubr.f32.gmra.mrb[0].mxu0 %v3732
        %v3919 = vpop.f32.mrb[0].mxu0
        %v3920 = vadd.f32 0.0, %v3919
        %v3921 = vpop.f32.mrb[0].mxu0
        %3922 = vmatprep.mubr.f32.mxu0 0.0
        %3923 = vmatmul.mubr.f32.gmra.mrb[0].mxu0 %v3733
        %v3924 = vpop.f32.mrb[0].mxu0
        %v3925 = vadd.f32 0.0, %v3924
        %v3926 = vpop.f32.mrb[0].mxu0
        %3927 = vmatprep.mubr.f32.mxu0 0.0
        %3928 = vmatmul.mubr.f32.gmra.mrb[0].mxu0 %v3734
        %v3929 = vpop.f32.mrb[0].mxu0
        %v3930 = vadd.f32 0.0, %v3929
        %v3931 = vpop.f32.mrb[0].mxu0
        %3932 = vmatprep.mubr.f32.mxu0 0.0
        %3933 = vmatmul.mubr.f32.gmra.mrb[0].mxu0 %v3735
        %v3934 = vpop.f32.mrb[0].mxu0
        %v3935 = vadd.f32 0.0, %v3934
        %v3936 = vpop.f32.mrb[0].mxu0
        %3937 = vmatprep.mubr.f32.mxu0 0.0
        %3938 = vmatmul.mubr.f32.gmra.mrb[0].mxu0 %v3736
        %v3939 = vpop.f32.mrb[0].mxu0
        %v3940 = vadd.f32 0.0, %v3939
        %v3941 = vpop.f32.mrb[0].mxu0
        %3942 = vmatprep.mubr.f32.mxu0 0.0
        %3943 = vmatmul.mubr.f32.gmra.mrb[0].mxu0 %v3737
        %v3944 = vpop.f32.mrb[0].mxu0
        %v3945 = vadd.f32 0.0, %v3944
        %v3946 = vpop.f32.mrb[0].mxu0
        %3947 = vmatprep.mubr.f32.mxu0 0.0
        %3948 = vmatmul.mubr.f32.gmra.mrb[0].mxu0 %v3738
        %v3949 = vpop.f32.mrb[0].mxu0
        %v3950 = vadd.f32 0.0, %v3949
        %v3951 = vpop.f32.mrb[0].mxu0
        %3952 = vmatprep.mubr.f32.mxu0 0.0
        %3953 = vmatmul.mubr.f32.gmra.mrb[0].mxu0 %v3739
        %v3954 = vpop.f32.mrb[0].mxu0
        %v3955 = vadd.f32 0.0, %v3954
        %v3956 = vpop.f32.mrb[0].mxu0
        %3957 = vmatprep.mubr.f32.mxu0 0.0
        %3958 = vmatmul.mubr.f32.gmra.mrb[0].mxu0 %v3740
        %v3959 = vpop.f32.mrb[0].mxu0
        %v3960 = vadd.f32 0.0, %v3959
        %v3961 = vpop.f32.mrb[0].mxu0
        %3962 = vmatprep.mubr.f32.mxu0 0.0
        %3963 = vmatmul.mubr.f32.gmra.mrb[0].mxu0 %v3741
        %v3964 = vpop.f32.mrb[0].mxu0
        %v3965 = vadd.f32 0.0, %v3964
        %v3966 = vpop.f32.mrb[0].mxu0
        %3967 = vmatprep.mubr.f32.mxu0 0.0
        %3968 = vmatmul.mubr.f32.gmra.mrb[0].mxu0 %v3742
        %v3969 = vpop.f32.mrb[0].mxu0
        %v3970 = vadd.f32 0.0, %v3969
        %v3971 = vpop.f32.mrb[0].mxu0
        %3972 = vmatprep.mubr.f32.mxu0 0.0
        %3973 = vmatmul.mubr.f32.gmra.mrb[0].mxu0 %v3743
        %v3974 = vpop.f32.mrb[0].mxu0
        %v3975 = vadd.f32 0.0, %v3974
        %v3976 = vpop.f32.mrb[0].mxu0
        %3977 = vmatprep.mubr.f32.mxu0 0.0
        %3978 = vmatmul.mubr.f32.gmra.mrb[0].mxu0 %v3744
        %v3979 = vpop.f32.mrb[0].mxu0
        %v3980 = vadd.f32 0.0, %v3979
        %v3981 = vpop.f32.mrb[0].mxu0
        %3982 = vmatprep.mubr.f32.mxu0 0.0
        %3983 = vmatmul.mubr.f32.gmra.mrb[0].mxu0 %v3745
        %v3984 = vpop.f32.mrb[0].mxu0
        %v3985 = vadd.f32 0.0, %v3984
        %v3986 = vpop.f32.mrb[0].mxu0
        %3987 = vmatprep.mubr.f32.mxu0 0.0
        %3988 = vmatmul.mubr.f32.gmra.mrb[0].mxu0 %v3746
        %v3989 = vpop.f32.mrb[0].mxu0
        %v3990 = vadd.f32 0.0, %v3989
        %v3991 = vpop.f32.mrb[0].mxu0
        %3992 = vmatprep.mubr.f32.mxu0 0.0
        %3993 = vmatmul.mubr.f32.gmra.mrb[0].mxu0 %v3747
        %v3994 = vpop.f32.mrb[0].mxu0
        %v3995 = vadd.f32 0.0, %v3994
        %v3996 = vpop.f32.mrb[0].mxu0
        %3997 = vmatprep.mubr.f32.mxu0 0.0
        %3998 = vmatmul.mubr.f32.gmra.mrb[0].mxu0 %v3748
        %v3999 = vpop.f32.mrb[0].mxu0
        %v4000 = vadd.f32 0.0, %v3999
        %v4001 = vpop.f32.mrb[0].mxu0
        %4002 = vmatprep.mubr.f32.mxu0 0.0
        %4003 = vmatmul.mubr.f32.gmra.mrb[0].mxu0 %v3749
        %v4004 = vpop.f32.mrb[0].mxu0
        %v4005 = vadd.f32 0.0, %v4004
        %v4006 = vpop.f32.mrb[0].mxu0
        %4007 = vmatprep.mubr.f32.mxu0 0.0
        %4008 = vmatmul.mubr.f32.gmra.mrb[0].mxu0 %v3750
        %v4009 = vpop.f32.mrb[0].mxu0
        %v4010 = vadd.f32 0.0, %v4009
        %v4011 = vpop.f32.mrb[0].mxu0
        %4012 = vdwg.mxu0
        %v4013 = vadd.f32 %v3679, %v3835
        %v4014 = vadd.f32 %v3680, %v3840
        %v4015 = vadd.f32 %v3681, %v3845
        %v4016 = vadd.f32 %v3682, %v3850
        %v4017 = vadd.f32 %v3683, %v3855
        %v4018 = vadd.f32 %v3684, %v3860
        %v4019 = vadd.f32 %v3685, %v3865
        %v4020 = vadd.f32 %v3686, %v3870
        %v4021 = vadd.f32 %v3687, %v3875
        %v4022 = vadd.f32 %v3688, %v3880
        %v4023 = vadd.f32 %v3689, %v3885
        %v4024 = vadd.f32 %v3690, %v3890
        %v4025 = vadd.f32 %v3691, %v3895
        %v4026 = vadd.f32 %v3692, %v3900
        %v4027 = vadd.f32 %v3693, %v3905
        %v4028 = vadd.f32 %v3694, %v3910
        %v4029 = vadd.f32 %v3695, %v3915
        %v4030 = vadd.f32 %v3696, %v3920
        %v4031 = vadd.f32 %v3697, %v3925
        %v4032 = vadd.f32 %v3698, %v3930
        %v4033 = vadd.f32 %v3699, %v3935
        %v4034 = vadd.f32 %v3700, %v3940
        %v4035 = vadd.f32 %v3701, %v3945
        %v4036 = vadd.f32 %v3702, %v3950
        %v4037 = vadd.f32 %v3703, %v3955
        %v4038 = vadd.f32 %v3704, %v3960
        %v4039 = vadd.f32 %v3705, %v3965
        %v4040 = vadd.f32 %v3706, %v3970
        %v4041 = vadd.f32 %v3707, %v3975
        %v4042 = vadd.f32 %v3708, %v3980
        %v4043 = vadd.f32 %v3709, %v3985
        %v4044 = vadd.f32 %v3710, %v3990
        %v4045 = vadd.f32 %v3711, %v3995
        %v4046 = vadd.f32 %v3712, %v4000
        %v4047 = vadd.f32 %v3713, %v4005
        %v4048 = vadd.f32 %v3714, %v4010
        %v4049 = vld [vmem:[%s5] sm:$0x1]
        %v4051 = vlaneseq
        %v4052 = vshrl.u32 %v4051, 7
        %v4053 = vsub.s32 0, %v4052
        %v4054 = vrot.slane %v4049, %v4053
        %v4056 = vadd.f32 %v4013, %v4054
        %v4057 = vadd.f32 %v4014, %v4054
        %v4058 = vadd.f32 %v4015, %v4054
        %v4059 = vadd.f32 %v4016, %v4054
        %v4060 = vadd.f32 %v4017, %v4054
        %v4061 = vadd.f32 %v4018, %v4054
        %v4062 = vadd.f32 %v4019, %v4054
        %v4063 = vadd.f32 %v4020, %v4054
        %v4064 = vadd.f32 %v4021, %v4054
        %v4065 = vadd.f32 %v4022, %v4054
        %v4066 = vadd.f32 %v4023, %v4054
        %v4067 = vadd.f32 %v4024, %v4054
        %v4068 = vadd.f32 %v4025, %v4054
        %v4069 = vadd.f32 %v4026, %v4054
        %v4070 = vadd.f32 %v4027, %v4054
        %v4071 = vadd.f32 %v4028, %v4054
        %v4072 = vadd.f32 %v4029, %v4054
        %v4073 = vadd.f32 %v4030, %v4054
        %v4074 = vadd.f32 %v4031, %v4054
        %v4075 = vadd.f32 %v4032, %v4054
        %v4076 = vadd.f32 %v4033, %v4054
        %v4077 = vadd.f32 %v4034, %v4054
        %v4078 = vadd.f32 %v4035, %v4054
        %v4079 = vadd.f32 %v4036, %v4054
        %v4080 = vadd.f32 %v4037, %v4054
        %v4081 = vadd.f32 %v4038, %v4054
        %v4082 = vadd.f32 %v4039, %v4054
        %v4083 = vadd.f32 %v4040, %v4054
        %v4084 = vadd.f32 %v4041, %v4054
        %v4085 = vadd.f32 %v4042, %v4054
        %v4086 = vadd.f32 %v4043, %v4054
        %v4087 = vadd.f32 %v4044, %v4054
        %v4088 = vadd.f32 %v4045, %v4054
        %v4089 = vadd.f32 %v4046, %v4054
        %v4090 = vadd.f32 %v4047, %v4054
        %v4091 = vadd.f32 %v4048, %v4054
        %v4092 = vmul.f32 %v4056, %v511
        %v4093 = vmul.f32 %v4057, %v516
        %v4094 = vmul.f32 %v4058, %v521
        %v4095 = vmul.f32 %v4059, %v526
        %v4096 = vmul.f32 %v4060, %v531
        %v4097 = vmul.f32 %v4061, %v536
        %v4098 = vmul.f32 %v4062, %v541
        %v4099 = vmul.f32 %v4063, %v546
        %v4100 = vmul.f32 %v4064, %v551
        %v4101 = vmul.f32 %v4065, %v556
        %v4102 = vmul.f32 %v4066, %v561
        %v4103 = vmul.f32 %v4067, %v566
        %v4104 = vmul.f32 %v4068, %v571
        %v4105 = vmul.f32 %v4069, %v576
        %v4106 = vmul.f32 %v4070, %v581
        %v4107 = vmul.f32 %v4071, %v586
        %v4108 = vmul.f32 %v4072, %v591
        %v4109 = vmul.f32 %v4073, %v596
        %v4110 = vmul.f32 %v4074, %v601
        %v4111 = vmul.f32 %v4075, %v606
        %v4112 = vmul.f32 %v4076, %v611
        %v4113 = vmul.f32 %v4077, %v616
        %v4114 = vmul.f32 %v4078, %v621
        %v4115 = vmul.f32 %v4079, %v626
        %v4116 = vmul.f32 %v4080, %v631
        %v4117 = vmul.f32 %v4081, %v636
        %v4118 = vmul.f32 %v4082, %v641
        %v4119 = vmul.f32 %v4083, %v646
        %v4120 = vmul.f32 %v4084, %v651
        %v4121 = vmul.f32 %v4085, %v656
        %v4122 = vmul.f32 %v4086, %v661
        %v4123 = vmul.f32 %v4087, %v666
        %v4124 = vmul.f32 %v4088, %v671
        %v4125 = vmul.f32 %v4089, %v676
        %v4126 = vmul.f32 %v4090, %v681
        %v4127 = vmul.f32 %v4091, %v686
        %v4128 = vadd.f32 %v4092, %v4093
        %v4129 = vadd.f32 %v4128, %v4094
        %v4130 = vadd.f32 %v4129, %v4095
        %v4131 = vadd.f32 %v4130, %v4096
        %v4132 = vadd.f32 %v4131, %v4097
        %v4133 = vadd.f32 %v4132, %v4098
        %v4134 = vadd.f32 %v4133, %v4099
        %v4135 = vadd.f32 %v4134, %v4100
        %v4136 = vadd.f32 %v4135, %v4101
        %v4137 = vadd.f32 %v4136, %v4102
        %v4138 = vadd.f32 %v4137, %v4103
        %v4139 = vadd.f32 %v4138, %v4104
        %v4140 = vadd.f32 %v4139, %v4105
        %v4141 = vadd.f32 %v4140, %v4106
        %v4142 = vadd.f32 %v4141, %v4107
        %v4143 = vadd.f32 %v4142, %v4108
        %v4144 = vadd.f32 %v4143, %v4109
        %v4145 = vadd.f32 %v4144, %v4110
        %v4146 = vadd.f32 %v4145, %v4111
        %v4147 = vadd.f32 %v4146, %v4112
        %v4148 = vadd.f32 %v4147, %v4113
        %v4149 = vadd.f32 %v4148, %v4114
        %v4150 = vadd.f32 %v4149, %v4115
        %v4151 = vadd.f32 %v4150, %v4116
        %v4152 = vadd.f32 %v4151, %v4117
        %v4153 = vadd.f32 %v4152, %v4118
        %v4154 = vadd.f32 %v4153, %v4119
        %v4155 = vadd.f32 %v4154, %v4120
        %v4156 = vadd.f32 %v4155, %v4121
        %v4157 = vadd.f32 %v4156, %v4122
        %v4158 = vadd.f32 %v4157, %v4123
        %v4159 = vadd.f32 %v4158, %v4124
        %v4160 = vadd.f32 %v4159, %v4125
        %v4161 = vadd.f32 %v4160, %v4126
        %v4162 = vadd.f32 %v4161, %v4127
        %v4163 = vrot.slane %v4162, 4
        %v4164 = vadd.f32 %v4162, %v4163
        %v4165 = vrot.slane %v4164, 2
        %v4166 = vadd.f32 %v4164, %v4165
        %v4167 = vrot.slane %v4166, 1
        %v4168 = vadd.f32 %v4166, %v4167
        %v4169 = vmul.f32 %v4168, 0.00390625
        %v4170 = vsub.f32 %v4056, %v4169
        %v4171 = vsub.f32 %v4057, %v4169
        %v4172 = vsub.f32 %v4058, %v4169
        %v4173 = vsub.f32 %v4059, %v4169
        %v4174 = vsub.f32 %v4060, %v4169
        %v4175 = vsub.f32 %v4061, %v4169
        %v4176 = vsub.f32 %v4062, %v4169
        %v4177 = vsub.f32 %v4063, %v4169
        %v4178 = vsub.f32 %v4064, %v4169
        %v4179 = vsub.f32 %v4065, %v4169
        %v4180 = vsub.f32 %v4066, %v4169
        %v4181 = vsub.f32 %v4067, %v4169
        %v4182 = vsub.f32 %v4068, %v4169
        %v4183 = vsub.f32 %v4069, %v4169
        %v4184 = vsub.f32 %v4070, %v4169
        %v4185 = vsub.f32 %v4071, %v4169
        %v4186 = vsub.f32 %v4072, %v4169
        %v4187 = vsub.f32 %v4073, %v4169
        %v4188 = vsub.f32 %v4074, %v4169
        %v4189 = vsub.f32 %v4075, %v4169
        %v4190 = vsub.f32 %v4076, %v4169
        %v4191 = vsub.f32 %v4077, %v4169
        %v4192 = vsub.f32 %v4078, %v4169
        %v4193 = vsub.f32 %v4079, %v4169
        %v4194 = vsub.f32 %v4080, %v4169
        %v4195 = vsub.f32 %v4081, %v4169
        %v4196 = vsub.f32 %v4082, %v4169
        %v4197 = vsub.f32 %v4083, %v4169
        %v4198 = vsub.f32 %v4084, %v4169
        %v4199 = vsub.f32 %v4085, %v4169
        %v4200 = vsub.f32 %v4086, %v4169
        %v4201 = vsub.f32 %v4087, %v4169
        %v4202 = vsub.f32 %v4088, %v4169
        %v4203 = vsub.f32 %v4089, %v4169
        %v4204 = vsub.f32 %v4090, %v4169
        %v4205 = vsub.f32 %v4091, %v4169
        %v4206 = vmul.f32 %v4170, %v511
        %v4207 = vmul.f32 %v4171, %v516
        %v4208 = vmul.f32 %v4172, %v521
        %v4209 = vmul.f32 %v4173, %v526
        %v4210 = vmul.f32 %v4174, %v531
        %v4211 = vmul.f32 %v4175, %v536
        %v4212 = vmul.f32 %v4176, %v541
        %v4213 = vmul.f32 %v4177, %v546
        %v4214 = vmul.f32 %v4178, %v551
        %v4215 = vmul.f32 %v4179, %v556
        %v4216 = vmul.f32 %v4180, %v561
        %v4217 = vmul.f32 %v4181, %v566
        %v4218 = vmul.f32 %v4182, %v571
        %v4219 = vmul.f32 %v4183, %v576
        %v4220 = vmul.f32 %v4184, %v581
        %v4221 = vmul.f32 %v4185, %v586
        %v4222 = vmul.f32 %v4186, %v591
        %v4223 = vmul.f32 %v4187, %v596
        %v4224 = vmul.f32 %v4188, %v601
        %v4225 = vmul.f32 %v4189, %v606
        %v4226 = vmul.f32 %v4190, %v611
        %v4227 = vmul.f32 %v4191, %v616
        %v4228 = vmul.f32 %v4192, %v621
        %v4229 = vmul.f32 %v4193, %v626
        %v4230 = vmul.f32 %v4194, %v631
        %v4231 = vmul.f32 %v4195, %v636
        %v4232 = vmul.f32 %v4196, %v641
        %v4233 = vmul.f32 %v4197, %v646
        %v4234 = vmul.f32 %v4198, %v651
        %v4235 = vmul.f32 %v4199, %v656
        %v4236 = vmul.f32 %v4200, %v661
        %v4237 = vmul.f32 %v4201, %v666
        %v4238 = vmul.f32 %v4202, %v671
        %v4239 = vmul.f32 %v4203, %v676
        %v4240 = vmul.f32 %v4204, %v681
        %v4241 = vmul.f32 %v4205, %v686
        %v4242 = vmul.f32 %v4206, %v4206
        %v4243 = vmul.f32 %v4207, %v4207
        %v4244 = vmul.f32 %v4208, %v4208
        %v4245 = vmul.f32 %v4209, %v4209
        %v4246 = vmul.f32 %v4210, %v4210
        %v4247 = vmul.f32 %v4211, %v4211
        %v4248 = vmul.f32 %v4212, %v4212
        %v4249 = vmul.f32 %v4213, %v4213
        %v4250 = vmul.f32 %v4214, %v4214
        %v4251 = vmul.f32 %v4215, %v4215
        %v4252 = vmul.f32 %v4216, %v4216
        %v4253 = vmul.f32 %v4217, %v4217
        %v4254 = vmul.f32 %v4218, %v4218
        %v4255 = vmul.f32 %v4219, %v4219
        %v4256 = vmul.f32 %v4220, %v4220
        %v4257 = vmul.f32 %v4221, %v4221
        %v4258 = vmul.f32 %v4222, %v4222
        %v4259 = vmul.f32 %v4223, %v4223
        %v4260 = vmul.f32 %v4224, %v4224
        %v4261 = vmul.f32 %v4225, %v4225
        %v4262 = vmul.f32 %v4226, %v4226
        %v4263 = vmul.f32 %v4227, %v4227
        %v4264 = vmul.f32 %v4228, %v4228
        %v4265 = vmul.f32 %v4229, %v4229
        %v4266 = vmul.f32 %v4230, %v4230
        %v4267 = vmul.f32 %v4231, %v4231
        %v4268 = vmul.f32 %v4232, %v4232
        %v4269 = vmul.f32 %v4233, %v4233
        %v4270 = vmul.f32 %v4234, %v4234
        %v4271 = vmul.f32 %v4235, %v4235
        %v4272 = vmul.f32 %v4236, %v4236
        %v4273 = vmul.f32 %v4237, %v4237
        %v4274 = vmul.f32 %v4238, %v4238
        %v4275 = vmul.f32 %v4239, %v4239
        %v4276 = vmul.f32 %v4240, %v4240
        %v4277 = vmul.f32 %v4241, %v4241
        %v4278 = vadd.f32 %v4242, %v4243
        %v4279 = vadd.f32 %v4278, %v4244
        %v4280 = vadd.f32 %v4279, %v4245
        %v4281 = vadd.f32 %v4280, %v4246
        %v4282 = vadd.f32 %v4281, %v4247
        %v4283 = vadd.f32 %v4282, %v4248
        %v4284 = vadd.f32 %v4283, %v4249
        %v4285 = vadd.f32 %v4284, %v4250
        %v4286 = vadd.f32 %v4285, %v4251
        %v4287 = vadd.f32 %v4286, %v4252
        %v4288 = vadd.f32 %v4287, %v4253
        %v4289 = vadd.f32 %v4288, %v4254
        %v4290 = vadd.f32 %v4289, %v4255
        %v4291 = vadd.f32 %v4290, %v4256
        %v4292 = vadd.f32 %v4291, %v4257
        %v4293 = vadd.f32 %v4292, %v4258
        %v4294 = vadd.f32 %v4293, %v4259
        %v4295 = vadd.f32 %v4294, %v4260
        %v4296 = vadd.f32 %v4295, %v4261
        %v4297 = vadd.f32 %v4296, %v4262
        %v4298 = vadd.f32 %v4297, %v4263
        %v4299 = vadd.f32 %v4298, %v4264
        %v4300 = vadd.f32 %v4299, %v4265
        %v4301 = vadd.f32 %v4300, %v4266
        %v4302 = vadd.f32 %v4301, %v4267
        %v4303 = vadd.f32 %v4302, %v4268
        %v4304 = vadd.f32 %v4303, %v4269
        %v4305 = vadd.f32 %v4304, %v4270
        %v4306 = vadd.f32 %v4305, %v4271
        %v4307 = vadd.f32 %v4306, %v4272
        %v4308 = vadd.f32 %v4307, %v4273
        %v4309 = vadd.f32 %v4308, %v4274
        %v4310 = vadd.f32 %v4309, %v4275
        %v4311 = vadd.f32 %v4310, %v4276
        %v4312 = vadd.f32 %v4311, %v4277
        %v4313 = vrot.slane %v4312, 4
        %v4314 = vadd.f32 %v4312, %v4313
        %v4315 = vrot.slane %v4314, 2
        %v4316 = vadd.f32 %v4314, %v4315
        %v4317 = vrot.slane %v4316, 1
        %v4318 = vadd.f32 %v4316, %v4317
        %v4319 = vmul.f32 %v4318, 0.00390625
        %v4320 = vadd.f32 %v4319, 1e-05
        %v4321 = vrsqrt.pop %v4320
        %v4322 = vmul.f32 %v4206, %v4321
        %v4323 = vmul.f32 %v4207, %v4321
        %v4324 = vmul.f32 %v4208, %v4321
        %v4325 = vmul.f32 %v4209, %v4321
        %v4326 = vmul.f32 %v4210, %v4321
        %v4327 = vmul.f32 %v4211, %v4321
        %v4328 = vmul.f32 %v4212, %v4321
        %v4329 = vmul.f32 %v4213, %v4321
        %v4330 = vmul.f32 %v4214, %v4321
        %v4331 = vmul.f32 %v4215, %v4321
        %v4332 = vmul.f32 %v4216, %v4321
        %v4333 = vmul.f32 %v4217, %v4321
        %v4334 = vmul.f32 %v4218, %v4321
        %v4335 = vmul.f32 %v4219, %v4321
        %v4336 = vmul.f32 %v4220, %v4321
        %v4337 = vmul.f32 %v4221, %v4321
        %v4338 = vmul.f32 %v4222, %v4321
        %v4339 = vmul.f32 %v4223, %v4321
        %v4340 = vmul.f32 %v4224, %v4321
        %v4341 = vmul.f32 %v4225, %v4321
        %v4342 = vmul.f32 %v4226, %v4321
        %v4343 = vmul.f32 %v4227, %v4321
        %v4344 = vmul.f32 %v4228, %v4321
        %v4345 = vmul.f32 %v4229, %v4321
        %v4346 = vmul.f32 %v4230, %v4321
        %v4347 = vmul.f32 %v4231, %v4321
        %v4348 = vmul.f32 %v4232, %v4321
        %v4349 = vmul.f32 %v4233, %v4321
        %v4350 = vmul.f32 %v4234, %v4321
        %v4351 = vmul.f32 %v4235, %v4321
        %v4352 = vmul.f32 %v4236, %v4321
        %v4353 = vmul.f32 %v4237, %v4321
        %v4354 = vmul.f32 %v4238, %v4321
        %v4355 = vmul.f32 %v4239, %v4321
        %v4356 = vmul.f32 %v4240, %v4321
        %v4357 = vmul.f32 %v4241, %v4321
        %v4358 = vld [vmem:[%s6] sm:$0x1]
        %v4360 = vlaneseq
        %v4361 = vshrl.u32 %v4360, 7
        %v4362 = vsub.s32 0, %v4361
        %v4363 = vrot.slane %v4358, %v4362
        %v4365 = vmul.f32 %v4322, %v4363
        %v4366 = vmul.f32 %v4323, %v4363
        %v4367 = vmul.f32 %v4324, %v4363
        %v4368 = vmul.f32 %v4325, %v4363
        %v4369 = vmul.f32 %v4326, %v4363
        %v4370 = vmul.f32 %v4327, %v4363
        %v4371 = vmul.f32 %v4328, %v4363
        %v4372 = vmul.f32 %v4329, %v4363
        %v4373 = vmul.f32 %v4330, %v4363
        %v4374 = vmul.f32 %v4331, %v4363
        %v4375 = vmul.f32 %v4332, %v4363
        %v4376 = vmul.f32 %v4333, %v4363
        %v4377 = vmul.f32 %v4334, %v4363
        %v4378 = vmul.f32 %v4335, %v4363
        %v4379 = vmul.f32 %v4336, %v4363
        %v4380 = vmul.f32 %v4337, %v4363
        %v4381 = vmul.f32 %v4338, %v4363
        %v4382 = vmul.f32 %v4339, %v4363
        %v4383 = vmul.f32 %v4340, %v4363
        %v4384 = vmul.f32 %v4341, %v4363
        %v4385 = vmul.f32 %v4342, %v4363
        %v4386 = vmul.f32 %v4343, %v4363
        %v4387 = vmul.f32 %v4344, %v4363
        %v4388 = vmul.f32 %v4345, %v4363
        %v4389 = vmul.f32 %v4346, %v4363
        %v4390 = vmul.f32 %v4347, %v4363
        %v4391 = vmul.f32 %v4348, %v4363
        %v4392 = vmul.f32 %v4349, %v4363
        %v4393 = vmul.f32 %v4350, %v4363
        %v4394 = vmul.f32 %v4351, %v4363
        %v4395 = vmul.f32 %v4352, %v4363
        %v4396 = vmul.f32 %v4353, %v4363
        %v4397 = vmul.f32 %v4354, %v4363
        %v4398 = vmul.f32 %v4355, %v4363
        %v4399 = vmul.f32 %v4356, %v4363
        %v4400 = vmul.f32 %v4357, %v4363
        %v4401 = vld [vmem:[%s7] sm:$0x1]
        %v4403 = vlaneseq
        %v4404 = vshrl.u32 %v4403, 7
        %v4405 = vsub.s32 0, %v4404
        %v4406 = vrot.slane %v4401, %v4405
        %v4408 = vadd.f32 %v4365, %v4406
        %v4409 = vadd.f32 %v4366, %v4406
        %v4410 = vadd.f32 %v4367, %v4406
        %v4411 = vadd.f32 %v4368, %v4406
        %v4412 = vadd.f32 %v4369, %v4406
        %v4413 = vadd.f32 %v4370, %v4406
        %v4414 = vadd.f32 %v4371, %v4406
        %v4415 = vadd.f32 %v4372, %v4406
        %v4416 = vadd.f32 %v4373, %v4406
        %v4417 = vadd.f32 %v4374, %v4406
        %v4418 = vadd.f32 %v4375, %v4406
        %v4419 = vadd.f32 %v4376, %v4406
        %v4420 = vadd.f32 %v4377, %v4406
        %v4421 = vadd.f32 %v4378, %v4406
        %v4422 = vadd.f32 %v4379, %v4406
        %v4423 = vadd.f32 %v4380, %v4406
        %v4424 = vadd.f32 %v4381, %v4406
        %v4425 = vadd.f32 %v4382, %v4406
        %v4426 = vadd.f32 %v4383, %v4406
        %v4427 = vadd.f32 %v4384, %v4406
        %v4428 = vadd.f32 %v4385, %v4406
        %v4429 = vadd.f32 %v4386, %v4406
        %v4430 = vadd.f32 %v4387, %v4406
        %v4431 = vadd.f32 %v4388, %v4406
        %v4432 = vadd.f32 %v4389, %v4406
        %v4433 = vadd.f32 %v4390, %v4406
        %v4434 = vadd.f32 %v4391, %v4406
        %v4435 = vadd.f32 %v4392, %v4406
        %v4436 = vadd.f32 %v4393, %v4406
        %v4437 = vadd.f32 %v4394, %v4406
        %v4438 = vadd.f32 %v4395, %v4406
        %v4439 = vadd.f32 %v4396, %v4406
        %v4440 = vadd.f32 %v4397, %v4406
        %v4441 = vadd.f32 %v4398, %v4406
        %v4442 = vadd.f32 %v4399, %v4406
        %v4443 = vadd.f32 %v4400, %v4406
        %vm4444 = vcmp.ge.f32.partialorder %v4408, 0.0
        %vm4445 = vcmp.ge.f32.partialorder %v4409, 0.0
        %vm4446 = vcmp.ge.f32.partialorder %v4410, 0.0
        %vm4447 = vcmp.ge.f32.partialorder %v4411, 0.0
        %vm4448 = vcmp.ge.f32.partialorder %v4412, 0.0
        %vm4449 = vcmp.ge.f32.partialorder %v4413, 0.0
        %vm4450 = vcmp.ge.f32.partialorder %v4414, 0.0
        %vm4451 = vcmp.ge.f32.partialorder %v4415, 0.0
        %vm4452 = vcmp.ge.f32.partialorder %v4416, 0.0
        %vm4453 = vcmp.ge.f32.partialorder %v4417, 0.0
        %vm4454 = vcmp.ge.f32.partialorder %v4418, 0.0
        %vm4455 = vcmp.ge.f32.partialorder %v4419, 0.0
        %vm4456 = vcmp.ge.f32.partialorder %v4420, 0.0
        %vm4457 = vcmp.ge.f32.partialorder %v4421, 0.0
        %vm4458 = vcmp.ge.f32.partialorder %v4422, 0.0
        %vm4459 = vcmp.ge.f32.partialorder %v4423, 0.0
        %vm4460 = vcmp.ge.f32.partialorder %v4424, 0.0
        %vm4461 = vcmp.ge.f32.partialorder %v4425, 0.0
        %vm4462 = vcmp.ge.f32.partialorder %v4426, 0.0
        %vm4463 = vcmp.ge.f32.partialorder %v4427, 0.0
        %vm4464 = vcmp.ge.f32.partialorder %v4428, 0.0
        %vm4465 = vcmp.ge.f32.partialorder %v4429, 0.0
        %vm4466 = vcmp.ge.f32.partialorder %v4430, 0.0
        %vm4467 = vcmp.ge.f32.partialorder %v4431, 0.0
        %vm4468 = vcmp.ge.f32.partialorder %v4432, 0.0
        %vm4469 = vcmp.ge.f32.partialorder %v4433, 0.0
        %vm4470 = vcmp.ge.f32.partialorder %v4434, 0.0
        %vm4471 = vcmp.ge.f32.partialorder %v4435, 0.0
        %vm4472 = vcmp.ge.f32.partialorder %v4436, 0.0
        %vm4473 = vcmp.ge.f32.partialorder %v4437, 0.0
        %vm4474 = vcmp.ge.f32.partialorder %v4438, 0.0
        %vm4475 = vcmp.ge.f32.partialorder %v4439, 0.0
        %vm4476 = vcmp.ge.f32.partialorder %v4440, 0.0
        %vm4477 = vcmp.ge.f32.partialorder %v4441, 0.0
        %vm4478 = vcmp.ge.f32.partialorder %v4442, 0.0
        %vm4479 = vcmp.ge.f32.partialorder %v4443, 0.0
        %v4480 = vmul.f32 %v4408, 0.2
        %v4481 = vmul.f32 %v4409, 0.2
        %v4482 = vmul.f32 %v4410, 0.2
        %v4483 = vmul.f32 %v4411, 0.2
        %v4484 = vmul.f32 %v4412, 0.2
        %v4485 = vmul.f32 %v4413, 0.2
        %v4486 = vmul.f32 %v4414, 0.2
        %v4487 = vmul.f32 %v4415, 0.2
        %v4488 = vmul.f32 %v4416, 0.2
        %v4489 = vmul.f32 %v4417, 0.2
        %v4490 = vmul.f32 %v4418, 0.2
        %v4491 = vmul.f32 %v4419, 0.2
        %v4492 = vmul.f32 %v4420, 0.2
        %v4493 = vmul.f32 %v4421, 0.2
        %v4494 = vmul.f32 %v4422, 0.2
        %v4495 = vmul.f32 %v4423, 0.2
        %v4496 = vmul.f32 %v4424, 0.2
        %v4497 = vmul.f32 %v4425, 0.2
        %v4498 = vmul.f32 %v4426, 0.2
        %v4499 = vmul.f32 %v4427, 0.2
        %v4500 = vmul.f32 %v4428, 0.2
        %v4501 = vmul.f32 %v4429, 0.2
        %v4502 = vmul.f32 %v4430, 0.2
        %v4503 = vmul.f32 %v4431, 0.2
        %v4504 = vmul.f32 %v4432, 0.2
        %v4505 = vmul.f32 %v4433, 0.2
        %v4506 = vmul.f32 %v4434, 0.2
        %v4507 = vmul.f32 %v4435, 0.2
        %v4508 = vmul.f32 %v4436, 0.2
        %v4509 = vmul.f32 %v4437, 0.2
        %v4510 = vmul.f32 %v4438, 0.2
        %v4511 = vmul.f32 %v4439, 0.2
        %v4512 = vmul.f32 %v4440, 0.2
        %v4513 = vmul.f32 %v4441, 0.2
        %v4514 = vmul.f32 %v4442, 0.2
        %v4515 = vmul.f32 %v4443, 0.2
        %v4516 = vsel %vm4444, %v4408, %v4480
        %v4517 = vsel %vm4445, %v4409, %v4481
        %v4518 = vsel %vm4446, %v4410, %v4482
        %v4519 = vsel %vm4447, %v4411, %v4483
        %v4520 = vsel %vm4448, %v4412, %v4484
        %v4521 = vsel %vm4449, %v4413, %v4485
        %v4522 = vsel %vm4450, %v4414, %v4486
        %v4523 = vsel %vm4451, %v4415, %v4487
        %v4524 = vsel %vm4452, %v4416, %v4488
        %v4525 = vsel %vm4453, %v4417, %v4489
        %v4526 = vsel %vm4454, %v4418, %v4490
        %v4527 = vsel %vm4455, %v4419, %v4491
        %v4528 = vsel %vm4456, %v4420, %v4492
        %v4529 = vsel %vm4457, %v4421, %v4493
        %v4530 = vsel %vm4458, %v4422, %v4494
        %v4531 = vsel %vm4459, %v4423, %v4495
        %v4532 = vsel %vm4460, %v4424, %v4496
        %v4533 = vsel %vm4461, %v4425, %v4497
        %v4534 = vsel %vm4462, %v4426, %v4498
        %v4535 = vsel %vm4463, %v4427, %v4499
        %v4536 = vsel %vm4464, %v4428, %v4500
        %v4537 = vsel %vm4465, %v4429, %v4501
        %v4538 = vsel %vm4466, %v4430, %v4502
        %v4539 = vsel %vm4467, %v4431, %v4503
        %v4540 = vsel %vm4468, %v4432, %v4504
        %v4541 = vsel %vm4469, %v4433, %v4505
        %v4542 = vsel %vm4470, %v4434, %v4506
        %v4543 = vsel %vm4471, %v4435, %v4507
        %v4544 = vsel %vm4472, %v4436, %v4508
        %v4545 = vsel %vm4473, %v4437, %v4509
        %v4546 = vsel %vm4474, %v4438, %v4510
        %v4547 = vsel %vm4475, %v4439, %v4511
        %v4548 = vsel %vm4476, %v4440, %v4512
        %v4549 = vsel %vm4477, %v4441, %v4513
        %v4550 = vsel %vm4478, %v4442, %v4514
        %v4551 = vsel %vm4479, %v4443, %v4515
        %v4552 = vmul.f32 %v4516, %v511
        %v4553 = vmul.f32 %v4517, %v516
        %v4554 = vmul.f32 %v4518, %v521
        %v4555 = vmul.f32 %v4519, %v526
        %v4556 = vmul.f32 %v4520, %v531
        %v4557 = vmul.f32 %v4521, %v536
        %v4558 = vmul.f32 %v4522, %v541
        %v4559 = vmul.f32 %v4523, %v546
        %v4560 = vmul.f32 %v4524, %v551
        %v4561 = vmul.f32 %v4525, %v556
        %v4562 = vmul.f32 %v4526, %v561
        %v4563 = vmul.f32 %v4527, %v566
        %v4564 = vmul.f32 %v4528, %v571
        %v4565 = vmul.f32 %v4529, %v576
        %v4566 = vmul.f32 %v4530, %v581
        %v4567 = vmul.f32 %v4531, %v586
        %v4568 = vmul.f32 %v4532, %v591
        %v4569 = vmul.f32 %v4533, %v596
        %v4570 = vmul.f32 %v4534, %v601
        %v4571 = vmul.f32 %v4535, %v606
        %v4572 = vmul.f32 %v4536, %v611
        %v4573 = vmul.f32 %v4537, %v616
        %v4574 = vmul.f32 %v4538, %v621
        %v4575 = vmul.f32 %v4539, %v626
        %v4576 = vmul.f32 %v4540, %v631
        %v4577 = vmul.f32 %v4541, %v636
        %v4578 = vmul.f32 %v4542, %v641
        %v4579 = vmul.f32 %v4543, %v646
        %v4580 = vmul.f32 %v4544, %v651
        %v4581 = vmul.f32 %v4545, %v656
        %v4582 = vmul.f32 %v4546, %v661
        %v4583 = vmul.f32 %v4547, %v666
        %v4584 = vmul.f32 %v4548, %v671
        %v4585 = vmul.f32 %v4549, %v676
        %v4586 = vmul.f32 %v4550, %v681
        %v4587 = vmul.f32 %v4551, %v686
        %4588 = vst [vmem:[#allocation2 + $0x24] sm:$0xff] %v4552
        %4589 = vst [vmem:[#allocation2 + $0x2c] sm:$0xff] %v4553
        %4590 = vst [vmem:[#allocation2 + $0x34] sm:$0xff] %v4554
        %4591 = vst [vmem:[#allocation2 + $0x3c] sm:$0xff] %v4555
        %4592 = vst [vmem:[#allocation2 + $0x44] sm:$0xff] %v4556
        %4593 = vst [vmem:[#allocation2 + $0x4c] sm:$0xff] %v4557
        %4594 = vst [vmem:[#allocation2 + $0x54] sm:$0xff] %v4558
        %4595 = vst [vmem:[#allocation2 + $0x5c] sm:$0xff] %v4559
        %4596 = vst [vmem:[#allocation2 + $0x64] sm:$0xff] %v4560
        %4597 = vst [vmem:[#allocation2 + $0x6c] sm:$0xff] %v4561
        %4598 = vst [vmem:[#allocation2 + $0x74] sm:$0xff] %v4562
        %4599 = vst [vmem:[#allocation2 + $0x7c] sm:$0xff] %v4563
        %4600 = vst [vmem:[#allocation2 + $0x84] sm:$0xff] %v4564
        %4601 = vst [vmem:[#allocation2 + $0x8c] sm:$0xff] %v4565
        %4602 = vst [vmem:[#allocation2 + $0x94] sm:$0xff] %v4566
        %4603 = vst [vmem:[#allocation2 + $0x9c] sm:$0xff] %v4567
        %4604 = vst [vmem:[#allocation2 + $0xa4] sm:$0xff] %v4568
        %4605 = vst [vmem:[#allocation2 + $0xac] sm:$0xff] %v4569
        %4606 = vst [vmem:[#allocation2 + $0xb4] sm:$0xff] %v4570
        %4607 = vst [vmem:[#allocation2 + $0xbc] sm:$0xff] %v4571
        %4608 = vst [vmem:[#allocation2 + $0xc4] sm:$0xff] %v4572
        %4609 = vst [vmem:[#allocation2 + $0xcc] sm:$0xff] %v4573
        %4610 = vst [vmem:[#allocation2 + $0xd4] sm:$0xff] %v4574
        %4611 = vst [vmem:[#allocation2 + $0xdc] sm:$0xff] %v4575
        %4612 = vst [vmem:[#allocation2 + $0xe4] sm:$0xff] %v4576
        %4613 = vst [vmem:[#allocation2 + $0xec] sm:$0xff] %v4577
        %4614 = vst [vmem:[#allocation2 + $0xf4] sm:$0xff] %v4578
        %4615 = vst [vmem:[#allocation2 + $0xfc] sm:$0xff] %v4579
        %4616 = vst [vmem:[#allocation2 + $0x104] sm:$0xff] %v4580
        %4617 = vst [vmem:[#allocation2 + $0x10c] sm:$0xff] %v4581
        %4618 = vst [vmem:[#allocation2 + $0x114] sm:$0xff] %v4582
        %4619 = vst [vmem:[#allocation2 + $0x11c] sm:$0xff] %v4583
        %4620 = vst [vmem:[#allocation2 + $0x124] sm:$0xff] %v4584
        %4621 = vst [vmem:[#allocation2 + $0x12c] sm:$0xff] %v4585
        %4622 = vst [vmem:[#allocation2 + $0x134] sm:$0xff] %v4586
        %4623 = vst [vmem:[#allocation2 + $0x13c] sm:$0xff] %v4587
        %v4624 = vld [vmem:[#allocation2 + $0x11] sm:$0xff]
        %v4625 = vld [vmem:[#allocation2 + $0x19] sm:$0xff]
        %v4626 = vld [vmem:[#allocation2 + $0x21] sm:$0xff]
        %v4627 = vld [vmem:[#allocation2 + $0x29] sm:$0xff]
        %v4628 = vld [vmem:[#allocation2 + $0x31] sm:$0xff]
        %v4629 = vld [vmem:[#allocation2 + $0x39] sm:$0xff]
        %v4630 = vld [vmem:[#allocation2 + $0x41] sm:$0xff]
        %v4631 = vld [vmem:[#allocation2 + $0x49] sm:$0xff]
        %v4632 = vld [vmem:[#allocation2 + $0x51] sm:$0xff]
        %v4633 = vld [vmem:[#allocation2 + $0x59] sm:$0xff]
        %v4634 = vld [vmem:[#allocation2 + $0x61] sm:$0xff]
        %v4635 = vld [vmem:[#allocation2 + $0x69] sm:$0xff]
        %v4636 = vld [vmem:[#allocation2 + $0x71] sm:$0xff]
        %v4637 = vld [vmem:[#allocation2 + $0x79] sm:$0xff]
        %v4638 = vld [vmem:[#allocation2 + $0x81] sm:$0xff]
        %v4639 = vld [vmem:[#allocation2 + $0x89] sm:$0xff]
        %v4640 = vld [vmem:[#allocation2 + $0x91] sm:$0xff]
        %v4641 = vld [vmem:[#allocation2 + $0x99] sm:$0xff]
        %v4642 = vld [vmem:[#allocation2 + $0xa1] sm:$0xff]
        %v4643 = vld [vmem:[#allocation2 + $0xa9] sm:$0xff]
        %v4644 = vld [vmem:[#allocation2 + $0xb1] sm:$0xff]
        %v4645 = vld [vmem:[#allocation2 + $0xb9] sm:$0xff]
        %v4646 = vld [vmem:[#allocation2 + $0xc1] sm:$0xff]
        %v4647 = vld [vmem:[#allocation2 + $0xc9] sm:$0xff]
        %v4648 = vld [vmem:[#allocation2 + $0xd1] sm:$0xff]
        %v4649 = vld [vmem:[#allocation2 + $0xd9] sm:$0xff]
        %v4650 = vld [vmem:[#allocation2 + $0xe1] sm:$0xff]
        %v4651 = vld [vmem:[#allocation2 + $0xe9] sm:$0xff]
        %v4652 = vld [vmem:[#allocation2 + $0xf1] sm:$0xff]
        %v4653 = vld [vmem:[#allocation2 + $0xf9] sm:$0xff]
        %v4654 = vld [vmem:[#allocation2 + $0x101] sm:$0xff]
        %v4655 = vld [vmem:[#allocation2 + $0x109] sm:$0xff]
        %v4656 = vld [vmem:[#allocation2 + $0x111] sm:$0xff]
        %v4657 = vld [vmem:[#allocation2 + $0x119] sm:$0xff]
        %v4658 = vld [vmem:[#allocation2 + $0x121] sm:$0xff]
        %v4659 = vld [vmem:[#allocation2 + $0x129] sm:$0xff]
        %v4660 = vld [vmem:[%s8] sm:$0xff]
        %v4661 = vld [vmem:[%s8 + $0x8] sm:$0xff]
        %v4662 = vld [vmem:[%s8 + $0x10] sm:$0xff]
        %v4663 = vld [vmem:[%s8 + $0x18] sm:$0xff]
        %v4664 = vld [vmem:[%s8 + $0x20] sm:$0xff]
        %v4665 = vld [vmem:[%s8 + $0x28] sm:$0xff]
        %v4666 = vld [vmem:[%s8 + $0x30] sm:$0xff]
        %v4667 = vld [vmem:[%s8 + $0x38] sm:$0xff]
        %v4668 = vld [vmem:[%s8 + $0x40] sm:$0xff]
        %v4669 = vld [vmem:[%s8 + $0x48] sm:$0xff]
        %v4670 = vld [vmem:[%s8 + $0x50] sm:$0xff]
        %v4671 = vld [vmem:[%s8 + $0x58] sm:$0xff]
        %v4672 = vld [vmem:[%s8 + $0x60] sm:$0xff]
        %v4673 = vld [vmem:[%s8 + $0x68] sm:$0xff]
        %v4674 = vld [vmem:[%s8 + $0x70] sm:$0xff]
        %v4675 = vld [vmem:[%s8 + $0x78] sm:$0xff]
        %v4676 = vld [vmem:[#allocation2 + $0x12] sm:$0xff]
        %v4677 = vld [vmem:[#allocation2 + $0x1a] sm:$0xff]
        %v4678 = vld [vmem:[#allocation2 + $0x22] sm:$0xff]
        %v4679 = vld [vmem:[#allocation2 + $0x2a] sm:$0xff]
        %v4680 = vld [vmem:[#allocation2 + $0x32] sm:$0xff]
        %v4681 = vld [vmem:[#allocation2 + $0x3a] sm:$0xff]
        %v4682 = vld [vmem:[#allocation2 + $0x42] sm:$0xff]
        %v4683 = vld [vmem:[#allocation2 + $0x4a] sm:$0xff]
        %v4684 = vld [vmem:[#allocation2 + $0x52] sm:$0xff]
        %v4685 = vld [vmem:[#allocation2 + $0x5a] sm:$0xff]
        %v4686 = vld [vmem:[#allocation2 + $0x62] sm:$0xff]
        %v4687 = vld [vmem:[#allocation2 + $0x6a] sm:$0xff]
        %v4688 = vld [vmem:[#allocation2 + $0x72] sm:$0xff]
        %v4689 = vld [vmem:[#allocation2 + $0x7a] sm:$0xff]
        %v4690 = vld [vmem:[#allocation2 + $0x82] sm:$0xff]
        %v4691 = vld [vmem:[#allocation2 + $0x8a] sm:$0xff]
        %v4692 = vld [vmem:[#allocation2 + $0x92] sm:$0xff]
        %v4693 = vld [vmem:[#allocation2 + $0x9a] sm:$0xff]
        %v4694 = vld [vmem:[#allocation2 + $0xa2] sm:$0xff]
        %v4695 = vld [vmem:[#allocation2 + $0xaa] sm:$0xff]
        %v4696 = vld [vmem:[#allocation2 + $0xb2] sm:$0xff]
        %v4697 = vld [vmem:[#allocation2 + $0xba] sm:$0xff]
        %v4698 = vld [vmem:[#allocation2 + $0xc2] sm:$0xff]
        %v4699 = vld [vmem:[#allocation2 + $0xca] sm:$0xff]
        %v4700 = vld [vmem:[#allocation2 + $0xd2] sm:$0xff]
        %v4701 = vld [vmem:[#allocation2 + $0xda] sm:$0xff]
        %v4702 = vld [vmem:[#allocation2 + $0xe2] sm:$0xff]
        %v4703 = vld [vmem:[#allocation2 + $0xea] sm:$0xff]
        %v4704 = vld [vmem:[#allocation2 + $0xf2] sm:$0xff]
        %v4705 = vld [vmem:[#allocation2 + $0xfa] sm:$0xff]
        %v4706 = vld [vmem:[#allocation2 + $0x102] sm:$0xff]
        %v4707 = vld [vmem:[#allocation2 + $0x10a] sm:$0xff]
        %v4708 = vld [vmem:[#allocation2 + $0x112] sm:$0xff]
        %v4709 = vld [vmem:[#allocation2 + $0x11a] sm:$0xff]
        %v4710 = vld [vmem:[#allocation2 + $0x122] sm:$0xff]
        %v4711 = vld [vmem:[#allocation2 + $0x12a] sm:$0xff]
        %s4712 = scalar_lea.vmem %s8, 128
        %v4713 = vld [vmem:[%s4712] sm:$0xff]
        %v4714 = vld [vmem:[%s4712 + $0x8] sm:$0xff]
        %v4715 = vld [vmem:[%s4712 + $0x10] sm:$0xff]
        %v4716 = vld [vmem:[%s4712 + $0x18] sm:$0xff]
        %v4717 = vld [vmem:[%s4712 + $0x20] sm:$0xff]
        %v4718 = vld [vmem:[%s4712 + $0x28] sm:$0xff]
        %v4719 = vld [vmem:[%s4712 + $0x30] sm:$0xff]
        %v4720 = vld [vmem:[%s4712 + $0x38] sm:$0xff]
        %v4721 = vld [vmem:[%s4712 + $0x40] sm:$0xff]
        %v4722 = vld [vmem:[%s4712 + $0x48] sm:$0xff]
        %v4723 = vld [vmem:[%s4712 + $0x50] sm:$0xff]
        %v4724 = vld [vmem:[%s4712 + $0x58] sm:$0xff]
        %v4725 = vld [vmem:[%s4712 + $0x60] sm:$0xff]
        %v4726 = vld [vmem:[%s4712 + $0x68] sm:$0xff]
        %v4727 = vld [vmem:[%s4712 + $0x70] sm:$0xff]
        %v4728 = vld [vmem:[%s4712 + $0x78] sm:$0xff]
        %4729 = vmatprep.subr.mxu0 0.0
        %4730 = vmatpush1.msra.mxu0 %v4713
        %4731 = vmatprep.subr.mxu0 0.0
        %4732 = vmatpush1.msra.mxu0 %v4714
        %4733 = vmatprep.subr.mxu0 0.0
        %4734 = vmatpush1.msra.mxu0 %v4715
        %4735 = vmatprep.subr.mxu0 0.0
        %4736 = vmatpush1.msra.mxu0 %v4716
        %4737 = vmatprep.subr.mxu0 0.0
        %4738 = vmatpush1.msra.mxu0 %v4717
        %4739 = vmatprep.subr.mxu0 0.0
        %4740 = vmatpush1.msra.mxu0 %v4718
        %4741 = vmatprep.subr.mxu0 0.0
        %4742 = vmatpush1.msra.mxu0 %v4719
        %4743 = vmatprep.subr.mxu0 0.0
        %4744 = vmatpush1.msra.mxu0 %v4720
        %4745 = vmatprep.subr.mxu0 0.0
        %4746 = vmatpush1.msra.mxu0 %v4721
        %4747 = vmatprep.subr.mxu0 0.0
        %4748 = vmatpush1.msra.mxu0 %v4722
        %4749 = vmatprep.subr.mxu0 0.0
        %4750 = vmatpush1.msra.mxu0 %v4723
        %4751 = vmatprep.subr.mxu0 0.0
        %4752 = vmatpush1.msra.mxu0 %v4724
        %4753 = vmatprep.subr.mxu0 0.0
        %4754 = vmatpush1.msra.mxu0 %v4725
        %4755 = vmatprep.subr.mxu0 0.0
        %4756 = vmatpush1.msra.mxu0 %v4726
        %4757 = vmatprep.subr.mxu0 0.0
        %4758 = vmatpush1.msra.mxu0 %v4727
        %4759 = vmatprep.subr.mxu0 0.0
        %4760 = vmatpush1.msra.mxu0 %v4728
        %4761 = vmatprep.subr.mxu0 0.0
        %4762 = vmatpush1.msra.mxu0 0.0
        %4763 = vmatprep.subr.mxu0 0.0
        %4764 = vmatpush1.msra.mxu0 0.0
        %4765 = vmatprep.subr.mxu0 0.0
        %4766 = vmatpush1.msra.mxu0 0.0
        %4767 = vmatprep.subr.mxu0 0.0
        %4768 = vmatpush1.msra.mxu0 0.0
        %4769 = vmatprep.subr.mxu0 0.0
        %4770 = vmatpush1.msra.mxu0 0.0
        %4771 = vmatprep.subr.mxu0 0.0
        %4772 = vmatpush1.msra.mxu0 0.0
        %4773 = vmatprep.subr.mxu0 0.0
        %4774 = vmatpush1.msra.mxu0 0.0
        %4775 = vmatprep.subr.mxu0 0.0
        %4776 = vmatpush1.msra.mxu0 0.0
        %4777 = vmatprep.subr.mxu0 0.0
        %4778 = vmatpush1.msra.mxu0 0.0
        %4779 = vmatprep.subr.mxu0 0.0
        %4780 = vmatpush1.msra.mxu0 0.0
        %4781 = vmatprep.subr.mxu0 0.0
        %4782 = vmatpush1.msra.mxu0 0.0
        %4783 = vmatprep.subr.mxu0 0.0
        %4784 = vmatpush1.msra.mxu0 0.0
        %4785 = vmatprep.subr.mxu0 0.0
        %4786 = vmatpush1.msra.mxu0 0.0
        %4787 = vmatprep.subr.mxu0 0.0
        %4788 = vmatpush1.msra.mxu0 0.0
        %4789 = vmatprep.subr.mxu0 0.0
        %4790 = vmatpush1.msra.mxu0 0.0
        %4791 = vmatprep.subr.mxu0 0.0
        %4792 = vmatpush1.msra.mxu0 0.0
        %4793 = vmatprep.mubr.f32.mxu0 0.0
        %4794 = vmatmul.mubr.f32.gmra.mrb[0].mxu0 %v4676
        %v4795 = vpop.f32.mrb[0].mxu0
        %v4796 = vadd.f32 0.0, %v4795
        %v4797 = vpop.f32.mrb[0].mxu0
        %4798 = vmatprep.mubr.f32.mxu0 0.0
        %4799 = vmatmul.mubr.f32.gmra.mrb[0].mxu0 %v4677
        %v4800 = vpop.f32.mrb[0].mxu0
        %v4801 = vadd.f32 0.0, %v4800
        %v4802 = vpop.f32.mrb[0].mxu0
        %4803 = vmatprep.mubr.f32.mxu0 0.0
        %4804 = vmatmul.mubr.f32.gmra.mrb[0].mxu0 %v4678
        %v4805 = vpop.f32.mrb[0].mxu0
        %v4806 = vadd.f32 0.0, %v4805
        %v4807 = vpop.f32.mrb[0].mxu0
        %4808 = vmatprep.mubr.f32.mxu0 0.0
        %4809 = vmatmul.mubr.f32.gmra.mrb[0].mxu0 %v4679
        %v4810 = vpop.f32.mrb[0].mxu0
        %v4811 = vadd.f32 0.0, %v4810
        %v4812 = vpop.f32.mrb[0].mxu0
        %4813 = vmatprep.mubr.f32.mxu0 0.0
        %4814 = vmatmul.mubr.f32.gmra.mrb[0].mxu0 %v4680
        %v4815 = vpop.f32.mrb[0].mxu0
        %v4816 = vadd.f32 0.0, %v4815
        %v4817 = vpop.f32.mrb[0].mxu0
        %4818 = vmatprep.mubr.f32.mxu0 0.0
        %4819 = vmatmul.mubr.f32.gmra.mrb[0].mxu0 %v4681
        %v4820 = vpop.f32.mrb[0].mxu0
        %v4821 = vadd.f32 0.0, %v4820
        %v4822 = vpop.f32.mrb[0].mxu0
        %4823 = vmatprep.mubr.f32.mxu0 0.0
        %4824 = vmatmul.mubr.f32.gmra.mrb[0].mxu0 %v4682
        %v4825 = vpop.f32.mrb[0].mxu0
        %v4826 = vadd.f32 0.0, %v4825
        %v4827 = vpop.f32.mrb[0].mxu0
        %4828 = vmatprep.mubr.f32.mxu0 0.0
        %4829 = vmatmul.mubr.f32.gmra.mrb[0].mxu0 %v4683
        %v4830 = vpop.f32.mrb[0].mxu0
        %v4831 = vadd.f32 0.0, %v4830
        %v4832 = vpop.f32.mrb[0].mxu0
        %4833 = vmatprep.mubr.f32.mxu0 0.0
        %4834 = vmatmul.mubr.f32.gmra.mrb[0].mxu0 %v4684
        %v4835 = vpop.f32.mrb[0].mxu0
        %v4836 = vadd.f32 0.0, %v4835
        %v4837 = vpop.f32.mrb[0].mxu0
        %4838 = vmatprep.mubr.f32.mxu0 0.0
        %4839 = vmatmul.mubr.f32.gmra.mrb[0].mxu0 %v4685
        %v4840 = vpop.f32.mrb[0].mxu0
        %v4841 = vadd.f32 0.0, %v4840
        %v4842 = vpop.f32.mrb[0].mxu0
        %4843 = vmatprep.mubr.f32.mxu0 0.0
        %4844 = vmatmul.mubr.f32.gmra.mrb[0].mxu0 %v4686
        %v4845 = vpop.f32.mrb[0].mxu0
        %v4846 = vadd.f32 0.0, %v4845
        %v4847 = vpop.f32.mrb[0].mxu0
        %4848 = vmatprep.mubr.f32.mxu0 0.0
        %4849 = vmatmul.mubr.f32.gmra.mrb[0].mxu0 %v4687
        %v4850 = vpop.f32.mrb[0].mxu0
        %v4851 = vadd.f32 0.0, %v4850
        %v4852 = vpop.f32.mrb[0].mxu0
        %4853 = vmatprep.mubr.f32.mxu0 0.0
        %4854 = vmatmul.mubr.f32.gmra.mrb[0].mxu0 %v4688
        %v4855 = vpop.f32.mrb[0].mxu0
        %v4856 = vadd.f32 0.0, %v4855
        %v4857 = vpop.f32.mrb[0].mxu0
        %4858 = vmatprep.mubr.f32.mxu0 0.0
        %4859 = vmatmul.mubr.f32.gmra.mrb[0].mxu0 %v4689
        %v4860 = vpop.f32.mrb[0].mxu0
        %v4861 = vadd.f32 0.0, %v4860
        %v4862 = vpop.f32.mrb[0].mxu0
        %4863 = vmatprep.mubr.f32.mxu0 0.0
        %4864 = vmatmul.mubr.f32.gmra.mrb[0].mxu0 %v4690
        %v4865 = vpop.f32.mrb[0].mxu0
        %v4866 = vadd.f32 0.0, %v4865
        %v4867 = vpop.f32.mrb[0].mxu0
        %4868 = vmatprep.mubr.f32.mxu0 0.0
        %4869 = vmatmul.mubr.f32.gmra.mrb[0].mxu0 %v4691
        %v4870 = vpop.f32.mrb[0].mxu0
        %v4871 = vadd.f32 0.0, %v4870
        %v4872 = vpop.f32.mrb[0].mxu0
        %4873 = vmatprep.mubr.f32.mxu0 0.0
        %4874 = vmatmul.mubr.f32.gmra.mrb[0].mxu0 %v4692
        %v4875 = vpop.f32.mrb[0].mxu0
        %v4876 = vadd.f32 0.0, %v4875
        %v4877 = vpop.f32.mrb[0].mxu0
        %4878 = vmatprep.mubr.f32.mxu0 0.0
        %4879 = vmatmul.mubr.f32.gmra.mrb[0].mxu0 %v4693
        %v4880 = vpop.f32.mrb[0].mxu0
        %v4881 = vadd.f32 0.0, %v4880
        %v4882 = vpop.f32.mrb[0].mxu0
        %4883 = vmatprep.mubr.f32.mxu0 0.0
        %4884 = vmatmul.mubr.f32.gmra.mrb[0].mxu0 %v4694
        %v4885 = vpop.f32.mrb[0].mxu0
        %v4886 = vadd.f32 0.0, %v4885
        %v4887 = vpop.f32.mrb[0].mxu0
        %4888 = vmatprep.mubr.f32.mxu0 0.0
        %4889 = vmatmul.mubr.f32.gmra.mrb[0].mxu0 %v4695
        %v4890 = vpop.f32.mrb[0].mxu0
        %v4891 = vadd.f32 0.0, %v4890
        %v4892 = vpop.f32.mrb[0].mxu0
        %4893 = vmatprep.mubr.f32.mxu0 0.0
        %4894 = vmatmul.mubr.f32.gmra.mrb[0].mxu0 %v4696
        %v4895 = vpop.f32.mrb[0].mxu0
        %v4896 = vadd.f32 0.0, %v4895
        %v4897 = vpop.f32.mrb[0].mxu0
        %4898 = vmatprep.mubr.f32.mxu0 0.0
        %4899 = vmatmul.mubr.f32.gmra.mrb[0].mxu0 %v4697
        %v4900 = vpop.f32.mrb[0].mxu0
        %v4901 = vadd.f32 0.0, %v4900
        %v4902 = vpop.f32.mrb[0].mxu0
        %4903 = vmatprep.mubr.f32.mxu0 0.0
        %4904 = vmatmul.mubr.f32.gmra.mrb[0].mxu0 %v4698
        %v4905 = vpop.f32.mrb[0].mxu0
        %v4906 = vadd.f32 0.0, %v4905
        %v4907 = vpop.f32.mrb[0].mxu0
        %4908 = vmatprep.mubr.f32.mxu0 0.0
        %4909 = vmatmul.mubr.f32.gmra.mrb[0].mxu0 %v4699
        %v4910 = vpop.f32.mrb[0].mxu0
        %v4911 = vadd.f32 0.0, %v4910
        %v4912 = vpop.f32.mrb[0].mxu0
        %4913 = vmatprep.mubr.f32.mxu0 0.0
        %4914 = vmatmul.mubr.f32.gmra.mrb[0].mxu0 %v4700
        %v4915 = vpop.f32.mrb[0].mxu0
        %v4916 = vadd.f32 0.0, %v4915
        %v4917 = vpop.f32.mrb[0].mxu0
        %4918 = vmatprep.mubr.f32.mxu0 0.0
        %4919 = vmatmul.mubr.f32.gmra.mrb[0].mxu0 %v4701
        %v4920 = vpop.f32.mrb[0].mxu0
        %v4921 = vadd.f32 0.0, %v4920
        %v4922 = vpop.f32.mrb[0].mxu0
        %4923 = vmatprep.mubr.f32.mxu0 0.0
        %4924 = vmatmul.mubr.f32.gmra.mrb[0].mxu0 %v4702
        %v4925 = vpop.f32.mrb[0].mxu0
        %v4926 = vadd.f32 0.0, %v4925
        %v4927 = vpop.f32.mrb[0].mxu0
        %4928 = vmatprep.mubr.f32.mxu0 0.0
        %4929 = vmatmul.mubr.f32.gmra.mrb[0].mxu0 %v4703
        %v4930 = vpop.f32.mrb[0].mxu0
        %v4931 = vadd.f32 0.0, %v4930
        %v4932 = vpop.f32.mrb[0].mxu0
        %4933 = vmatprep.mubr.f32.mxu0 0.0
        %4934 = vmatmul.mubr.f32.gmra.mrb[0].mxu0 %v4704
        %v4935 = vpop.f32.mrb[0].mxu0
        %v4936 = vadd.f32 0.0, %v4935
        %v4937 = vpop.f32.mrb[0].mxu0
        %4938 = vmatprep.mubr.f32.mxu0 0.0
        %4939 = vmatmul.mubr.f32.gmra.mrb[0].mxu0 %v4705
        %v4940 = vpop.f32.mrb[0].mxu0
        %v4941 = vadd.f32 0.0, %v4940
        %v4942 = vpop.f32.mrb[0].mxu0
        %4943 = vmatprep.mubr.f32.mxu0 0.0
        %4944 = vmatmul.mubr.f32.gmra.mrb[0].mxu0 %v4706
        %v4945 = vpop.f32.mrb[0].mxu0
        %v4946 = vadd.f32 0.0, %v4945
        %v4947 = vpop.f32.mrb[0].mxu0
        %4948 = vmatprep.mubr.f32.mxu0 0.0
        %4949 = vmatmul.mubr.f32.gmra.mrb[0].mxu0 %v4707
        %v4950 = vpop.f32.mrb[0].mxu0
        %v4951 = vadd.f32 0.0, %v4950
        %v4952 = vpop.f32.mrb[0].mxu0
        %4953 = vmatprep.mubr.f32.mxu0 0.0
        %4954 = vmatmul.mubr.f32.gmra.mrb[0].mxu0 %v4708
        %v4955 = vpop.f32.mrb[0].mxu0
        %v4956 = vadd.f32 0.0, %v4955
        %v4957 = vpop.f32.mrb[0].mxu0
        %4958 = vmatprep.mubr.f32.mxu0 0.0
        %4959 = vmatmul.mubr.f32.gmra.mrb[0].mxu0 %v4709
        %v4960 = vpop.f32.mrb[0].mxu0
        %v4961 = vadd.f32 0.0, %v4960
        %v4962 = vpop.f32.mrb[0].mxu0
        %4963 = vmatprep.mubr.f32.mxu0 0.0
        %4964 = vmatmul.mubr.f32.gmra.mrb[0].mxu0 %v4710
        %v4965 = vpop.f32.mrb[0].mxu0
        %v4966 = vadd.f32 0.0, %v4965
        %v4967 = vpop.f32.mrb[0].mxu0
        %4968 = vmatprep.mubr.f32.mxu0 0.0
        %4969 = vmatmul.mubr.f32.gmra.mrb[0].mxu0 %v4711
        %v4970 = vpop.f32.mrb[0].mxu0
        %v4971 = vadd.f32 0.0, %v4970
        %v4972 = vpop.f32.mrb[0].mxu0
        %4973 = vdwg.mxu0
        %4974 = vmatprep.subr.mxu0 0.0
        %4975 = vmatpush1.msra.mxu0 %v4660
        %4976 = vmatprep.subr.mxu0 0.0
        %4977 = vmatpush1.msra.mxu0 %v4661
        %4978 = vmatprep.subr.mxu0 0.0
        %4979 = vmatpush1.msra.mxu0 %v4662
        %4980 = vmatprep.subr.mxu0 0.0
        %4981 = vmatpush1.msra.mxu0 %v4663
        %4982 = vmatprep.subr.mxu0 0.0
        %4983 = vmatpush1.msra.mxu0 %v4664
        %4984 = vmatprep.subr.mxu0 0.0
        %4985 = vmatpush1.msra.mxu0 %v4665
        %4986 = vmatprep.subr.mxu0 0.0
        %4987 = vmatpush1.msra.mxu0 %v4666
        %4988 = vmatprep.subr.mxu0 0.0
        %4989 = vmatpush1.msra.mxu0 %v4667
        %4990 = vmatprep.subr.mxu0 0.0
        %4991 = vmatpush1.msra.mxu0 %v4668
        %4992 = vmatprep.subr.mxu0 0.0
        %4993 = vmatpush1.msra.mxu0 %v4669
        %4994 = vmatprep.subr.mxu0 0.0
        %4995 = vmatpush1.msra.mxu0 %v4670
        %4996 = vmatprep.subr.mxu0 0.0
        %4997 = vmatpush1.msra.mxu0 %v4671
        %4998 = vmatprep.subr.mxu0 0.0
        %4999 = vmatpush1.msra.mxu0 %v4672
        %5000 = vmatprep.subr.mxu0 0.0
        %5001 = vmatpush1.msra.mxu0 %v4673
        %5002 = vmatprep.subr.mxu0 0.0
        %5003 = vmatpush1.msra.mxu0 %v4674
        %5004 = vmatprep.subr.mxu0 0.0
        %5005 = vmatpush1.msra.mxu0 %v4675
        %5006 = vmatprep.subr.mxu0 0.0
        %5007 = vmatpush1.msra.mxu0 0.0
        %5008 = vmatprep.subr.mxu0 0.0
        %5009 = vmatpush1.msra.mxu0 0.0
        %5010 = vmatprep.subr.mxu0 0.0
        %5011 = vmatpush1.msra.mxu0 0.0
        %5012 = vmatprep.subr.mxu0 0.0
        %5013 = vmatpush1.msra.mxu0 0.0
        %5014 = vmatprep.subr.mxu0 0.0
        %5015 = vmatpush1.msra.mxu0 0.0
        %5016 = vmatprep.subr.mxu0 0.0
        %5017 = vmatpush1.msra.mxu0 0.0
        %5018 = vmatprep.subr.mxu0 0.0
        %5019 = vmatpush1.msra.mxu0 0.0
        %5020 = vmatprep.subr.mxu0 0.0
        %5021 = vmatpush1.msra.mxu0 0.0
        %5022 = vmatprep.subr.mxu0 0.0
        %5023 = vmatpush1.msra.mxu0 0.0
        %5024 = vmatprep.subr.mxu0 0.0
        %5025 = vmatpush1.msra.mxu0 0.0
        %5026 = vmatprep.subr.mxu0 0.0
        %5027 = vmatpush1.msra.mxu0 0.0
        %5028 = vmatprep.subr.mxu0 0.0
        %5029 = vmatpush1.msra.mxu0 0.0
        %5030 = vmatprep.subr.mxu0 0.0
        %5031 = vmatpush1.msra.mxu0 0.0
        %5032 = vmatprep.subr.mxu0 0.0
        %5033 = vmatpush1.msra.mxu0 0.0
        %5034 = vmatprep.subr.mxu0 0.0
        %5035 = vmatpush1.msra.mxu0 0.0
        %5036 = vmatprep.subr.mxu0 0.0
        %5037 = vmatpush1.msra.mxu0 0.0
        %5038 = vmatprep.mubr.f32.mxu0 0.0
        %5039 = vmatmul.mubr.f32.gmra.mrb[0].mxu0 %v4624
        %v5040 = vpop.f32.mrb[0].mxu0
        %v5041 = vadd.f32 %v4796, %v5040
        %v5042 = vpop.f32.mrb[0].mxu0
        %5043 = vmatprep.mubr.f32.mxu0 0.0
        %5044 = vmatmul.mubr.f32.gmra.mrb[0].mxu0 %v4625
        %v5045 = vpop.f32.mrb[0].mxu0
        %v5046 = vadd.f32 %v4801, %v5045
        %v5047 = vpop.f32.mrb[0].mxu0
        %5048 = vmatprep.mubr.f32.mxu0 0.0
        %5049 = vmatmul.mubr.f32.gmra.mrb[0].mxu0 %v4626
        %v5050 = vpop.f32.mrb[0].mxu0
        %v5051 = vadd.f32 %v4806, %v5050
        %v5052 = vpop.f32.mrb[0].mxu0
        %5053 = vmatprep.mubr.f32.mxu0 0.0
        %5054 = vmatmul.mubr.f32.gmra.mrb[0].mxu0 %v4627
        %v5055 = vpop.f32.mrb[0].mxu0
        %v5056 = vadd.f32 %v4811, %v5055
        %v5057 = vpop.f32.mrb[0].mxu0
        %5058 = vmatprep.mubr.f32.mxu0 0.0
        %5059 = vmatmul.mubr.f32.gmra.mrb[0].mxu0 %v4628
        %v5060 = vpop.f32.mrb[0].mxu0
        %v5061 = vadd.f32 %v4816, %v5060
        %v5062 = vpop.f32.mrb[0].mxu0
        %5063 = vmatprep.mubr.f32.mxu0 0.0
        %5064 = vmatmul.mubr.f32.gmra.mrb[0].mxu0 %v4629
        %v5065 = vpop.f32.mrb[0].mxu0
        %v5066 = vadd.f32 %v4821, %v5065
        %v5067 = vpop.f32.mrb[0].mxu0
        %5068 = vmatprep.mubr.f32.mxu0 0.0
        %5069 = vmatmul.mubr.f32.gmra.mrb[0].mxu0 %v4630
        %v5070 = vpop.f32.mrb[0].mxu0
        %v5071 = vadd.f32 %v4826, %v5070
        %v5072 = vpop.f32.mrb[0].mxu0
        %5073 = vmatprep.mubr.f32.mxu0 0.0
        %5074 = vmatmul.mubr.f32.gmra.mrb[0].mxu0 %v4631
        %v5075 = vpop.f32.mrb[0].mxu0
        %v5076 = vadd.f32 %v4831, %v5075
        %v5077 = vpop.f32.mrb[0].mxu0
        %5078 = vmatprep.mubr.f32.mxu0 0.0
        %5079 = vmatmul.mubr.f32.gmra.mrb[0].mxu0 %v4632
        %v5080 = vpop.f32.mrb[0].mxu0
        %v5081 = vadd.f32 %v4836, %v5080
        %v5082 = vpop.f32.mrb[0].mxu0
        %5083 = vmatprep.mubr.f32.mxu0 0.0
        %5084 = vmatmul.mubr.f32.gmra.mrb[0].mxu0 %v4633
        %v5085 = vpop.f32.mrb[0].mxu0
        %v5086 = vadd.f32 %v4841, %v5085
        %v5087 = vpop.f32.mrb[0].mxu0
        %5088 = vmatprep.mubr.f32.mxu0 0.0
        %5089 = vmatmul.mubr.f32.gmra.mrb[0].mxu0 %v4634
        %v5090 = vpop.f32.mrb[0].mxu0
        %v5091 = vadd.f32 %v4846, %v5090
        %v5092 = vpop.f32.mrb[0].mxu0
        %5093 = vmatprep.mubr.f32.mxu0 0.0
        %5094 = vmatmul.mubr.f32.gmra.mrb[0].mxu0 %v4635
        %v5095 = vpop.f32.mrb[0].mxu0
        %v5096 = vadd.f32 %v4851, %v5095
        %v5097 = vpop.f32.mrb[0].mxu0
        %5098 = vmatprep.mubr.f32.mxu0 0.0
        %5099 = vmatmul.mubr.f32.gmra.mrb[0].mxu0 %v4636
        %v5100 = vpop.f32.mrb[0].mxu0
        %v5101 = vadd.f32 %v4856, %v5100
        %v5102 = vpop.f32.mrb[0].mxu0
        %5103 = vmatprep.mubr.f32.mxu0 0.0
        %5104 = vmatmul.mubr.f32.gmra.mrb[0].mxu0 %v4637
        %v5105 = vpop.f32.mrb[0].mxu0
        %v5106 = vadd.f32 %v4861, %v5105
        %v5107 = vpop.f32.mrb[0].mxu0
        %5108 = vmatprep.mubr.f32.mxu0 0.0
        %5109 = vmatmul.mubr.f32.gmra.mrb[0].mxu0 %v4638
        %v5110 = vpop.f32.mrb[0].mxu0
        %v5111 = vadd.f32 %v4866, %v5110
        %v5112 = vpop.f32.mrb[0].mxu0
        %5113 = vmatprep.mubr.f32.mxu0 0.0
        %5114 = vmatmul.mubr.f32.gmra.mrb[0].mxu0 %v4639
        %v5115 = vpop.f32.mrb[0].mxu0
        %v5116 = vadd.f32 %v4871, %v5115
        %v5117 = vpop.f32.mrb[0].mxu0
        %5118 = vmatprep.mubr.f32.mxu0 0.0
        %5119 = vmatmul.mubr.f32.gmra.mrb[0].mxu0 %v4640
        %v5120 = vpop.f32.mrb[0].mxu0
        %v5121 = vadd.f32 %v4876, %v5120
        %v5122 = vpop.f32.mrb[0].mxu0
        %5123 = vmatprep.mubr.f32.mxu0 0.0
        %5124 = vmatmul.mubr.f32.gmra.mrb[0].mxu0 %v4641
        %v5125 = vpop.f32.mrb[0].mxu0
        %v5126 = vadd.f32 %v4881, %v5125
        %v5127 = vpop.f32.mrb[0].mxu0
        %5128 = vmatprep.mubr.f32.mxu0 0.0
        %5129 = vmatmul.mubr.f32.gmra.mrb[0].mxu0 %v4642
        %v5130 = vpop.f32.mrb[0].mxu0
        %v5131 = vadd.f32 %v4886, %v5130
        %v5132 = vpop.f32.mrb[0].mxu0
        %5133 = vmatprep.mubr.f32.mxu0 0.0
        %5134 = vmatmul.mubr.f32.gmra.mrb[0].mxu0 %v4643
        %v5135 = vpop.f32.mrb[0].mxu0
        %v5136 = vadd.f32 %v4891, %v5135
        %v5137 = vpop.f32.mrb[0].mxu0
        %5138 = vmatprep.mubr.f32.mxu0 0.0
        %5139 = vmatmul.mubr.f32.gmra.mrb[0].mxu0 %v4644
        %v5140 = vpop.f32.mrb[0].mxu0
        %v5141 = vadd.f32 %v4896, %v5140
        %v5142 = vpop.f32.mrb[0].mxu0
        %5143 = vmatprep.mubr.f32.mxu0 0.0
        %5144 = vmatmul.mubr.f32.gmra.mrb[0].mxu0 %v4645
        %v5145 = vpop.f32.mrb[0].mxu0
        %v5146 = vadd.f32 %v4901, %v5145
        %v5147 = vpop.f32.mrb[0].mxu0
        %5148 = vmatprep.mubr.f32.mxu0 0.0
        %5149 = vmatmul.mubr.f32.gmra.mrb[0].mxu0 %v4646
        %v5150 = vpop.f32.mrb[0].mxu0
        %v5151 = vadd.f32 %v4906, %v5150
        %v5152 = vpop.f32.mrb[0].mxu0
        %5153 = vmatprep.mubr.f32.mxu0 0.0
        %5154 = vmatmul.mubr.f32.gmra.mrb[0].mxu0 %v4647
        %v5155 = vpop.f32.mrb[0].mxu0
        %v5156 = vadd.f32 %v4911, %v5155
        %v5157 = vpop.f32.mrb[0].mxu0
        %5158 = vmatprep.mubr.f32.mxu0 0.0
        %5159 = vmatmul.mubr.f32.gmra.mrb[0].mxu0 %v4648
        %v5160 = vpop.f32.mrb[0].mxu0
        %v5161 = vadd.f32 %v4916, %v5160
        %v5162 = vpop.f32.mrb[0].mxu0
        %5163 = vmatprep.mubr.f32.mxu0 0.0
        %5164 = vmatmul.mubr.f32.gmra.mrb[0].mxu0 %v4649
        %v5165 = vpop.f32.mrb[0].mxu0
        %v5166 = vadd.f32 %v4921, %v5165
        %v5167 = vpop.f32.mrb[0].mxu0
        %5168 = vmatprep.mubr.f32.mxu0 0.0
        %5169 = vmatmul.mubr.f32.gmra.mrb[0].mxu0 %v4650
        %v5170 = vpop.f32.mrb[0].mxu0
        %v5171 = vadd.f32 %v4926, %v5170
        %v5172 = vpop.f32.mrb[0].mxu0
        %5173 = vmatprep.mubr.f32.mxu0 0.0
        %5174 = vmatmul.mubr.f32.gmra.mrb[0].mxu0 %v4651
        %v5175 = vpop.f32.mrb[0].mxu0
        %v5176 = vadd.f32 %v4931, %v5175
        %v5177 = vpop.f32.mrb[0].mxu0
        %5178 = vmatprep.mubr.f32.mxu0 0.0
        %5179 = vmatmul.mubr.f32.gmra.mrb[0].mxu0 %v4652
        %v5180 = vpop.f32.mrb[0].mxu0
        %v5181 = vadd.f32 %v4936, %v5180
        %v5182 = vpop.f32.mrb[0].mxu0
        %5183 = vmatprep.mubr.f32.mxu0 0.0
        %5184 = vmatmul.mubr.f32.gmra.mrb[0].mxu0 %v4653
        %v5185 = vpop.f32.mrb[0].mxu0
        %v5186 = vadd.f32 %v4941, %v5185
        %v5187 = vpop.f32.mrb[0].mxu0
        %5188 = vmatprep.mubr.f32.mxu0 0.0
        %5189 = vmatmul.mubr.f32.gmra.mrb[0].mxu0 %v4654
        %v5190 = vpop.f32.mrb[0].mxu0
        %v5191 = vadd.f32 %v4946, %v5190
        %v5192 = vpop.f32.mrb[0].mxu0
        %5193 = vmatprep.mubr.f32.mxu0 0.0
        %5194 = vmatmul.mubr.f32.gmra.mrb[0].mxu0 %v4655
        %v5195 = vpop.f32.mrb[0].mxu0
        %v5196 = vadd.f32 %v4951, %v5195
        %v5197 = vpop.f32.mrb[0].mxu0
        %5198 = vmatprep.mubr.f32.mxu0 0.0
        %5199 = vmatmul.mubr.f32.gmra.mrb[0].mxu0 %v4656
        %v5200 = vpop.f32.mrb[0].mxu0
        %v5201 = vadd.f32 %v4956, %v5200
        %v5202 = vpop.f32.mrb[0].mxu0
        %5203 = vmatprep.mubr.f32.mxu0 0.0
        %5204 = vmatmul.mubr.f32.gmra.mrb[0].mxu0 %v4657
        %v5205 = vpop.f32.mrb[0].mxu0
        %v5206 = vadd.f32 %v4961, %v5205
        %v5207 = vpop.f32.mrb[0].mxu0
        %5208 = vmatprep.mubr.f32.mxu0 0.0
        %5209 = vmatmul.mubr.f32.gmra.mrb[0].mxu0 %v4658
        %v5210 = vpop.f32.mrb[0].mxu0
        %v5211 = vadd.f32 %v4966, %v5210
        %v5212 = vpop.f32.mrb[0].mxu0
        %5213 = vmatprep.mubr.f32.mxu0 0.0
        %5214 = vmatmul.mubr.f32.gmra.mrb[0].mxu0 %v4659
        %v5215 = vpop.f32.mrb[0].mxu0
        %v5216 = vadd.f32 %v4971, %v5215
        %v5217 = vpop.f32.mrb[0].mxu0
        %5218 = vdwg.mxu0
        %v5219 = vld [vmem:[#allocation2 + $0x13] sm:$0xff]
        %v5220 = vld [vmem:[#allocation2 + $0x1b] sm:$0xff]
        %v5221 = vld [vmem:[#allocation2 + $0x23] sm:$0xff]
        %v5222 = vld [vmem:[#allocation2 + $0x2b] sm:$0xff]
        %v5223 = vld [vmem:[#allocation2 + $0x33] sm:$0xff]
        %v5224 = vld [vmem:[#allocation2 + $0x3b] sm:$0xff]
        %v5225 = vld [vmem:[#allocation2 + $0x43] sm:$0xff]
        %v5226 = vld [vmem:[#allocation2 + $0x4b] sm:$0xff]
        %v5227 = vld [vmem:[#allocation2 + $0x53] sm:$0xff]
        %v5228 = vld [vmem:[#allocation2 + $0x5b] sm:$0xff]
        %v5229 = vld [vmem:[#allocation2 + $0x63] sm:$0xff]
        %v5230 = vld [vmem:[#allocation2 + $0x6b] sm:$0xff]
        %v5231 = vld [vmem:[#allocation2 + $0x73] sm:$0xff]
        %v5232 = vld [vmem:[#allocation2 + $0x7b] sm:$0xff]
        %v5233 = vld [vmem:[#allocation2 + $0x83] sm:$0xff]
        %v5234 = vld [vmem:[#allocation2 + $0x8b] sm:$0xff]
        %v5235 = vld [vmem:[#allocation2 + $0x93] sm:$0xff]
        %v5236 = vld [vmem:[#allocation2 + $0x9b] sm:$0xff]
        %v5237 = vld [vmem:[#allocation2 + $0xa3] sm:$0xff]
        %v5238 = vld [vmem:[#allocation2 + $0xab] sm:$0xff]
        %v5239 = vld [vmem:[#allocation2 + $0xb3] sm:$0xff]
        %v5240 = vld [vmem:[#allocation2 + $0xbb] sm:$0xff]
        %v5241 = vld [vmem:[#allocation2 + $0xc3] sm:$0xff]
        %v5242 = vld [vmem:[#allocation2 + $0xcb] sm:$0xff]
        %v5243 = vld [vmem:[#allocation2 + $0xd3] sm:$0xff]
        %v5244 = vld [vmem:[#allocation2 + $0xdb] sm:$0xff]
        %v5245 = vld [vmem:[#allocation2 + $0xe3] sm:$0xff]
        %v5246 = vld [vmem:[#allocation2 + $0xeb] sm:$0xff]
        %v5247 = vld [vmem:[#allocation2 + $0xf3] sm:$0xff]
        %v5248 = vld [vmem:[#allocation2 + $0xfb] sm:$0xff]
        %v5249 = vld [vmem:[#allocation2 + $0x103] sm:$0xff]
        %v5250 = vld [vmem:[#allocation2 + $0x10b] sm:$0xff]
        %v5251 = vld [vmem:[#allocation2 + $0x113] sm:$0xff]
        %v5252 = vld [vmem:[#allocation2 + $0x11b] sm:$0xff]
        %v5253 = vld [vmem:[#allocation2 + $0x123] sm:$0xff]
        %v5254 = vld [vmem:[#allocation2 + $0x12b] sm:$0xff]
        %s5255 = scalar_lea.vmem %s8, 256
        %v5256 = vld [vmem:[%s5255] sm:$0xff]
        %v5257 = vld [vmem:[%s5255 + $0x8] sm:$0xff]
        %v5258 = vld [vmem:[%s5255 + $0x10] sm:$0xff]
        %v5259 = vld [vmem:[%s5255 + $0x18] sm:$0xff]
        %v5260 = vld [vmem:[%s5255 + $0x20] sm:$0xff]
        %v5261 = vld [vmem:[%s5255 + $0x28] sm:$0xff]
        %v5262 = vld [vmem:[%s5255 + $0x30] sm:$0xff]
        %v5263 = vld [vmem:[%s5255 + $0x38] sm:$0xff]
        %v5264 = vld [vmem:[%s5255 + $0x40] sm:$0xff]
        %v5265 = vld [vmem:[%s5255 + $0x48] sm:$0xff]
        %v5266 = vld [vmem:[%s5255 + $0x50] sm:$0xff]
        %v5267 = vld [vmem:[%s5255 + $0x58] sm:$0xff]
        %v5268 = vld [vmem:[%s5255 + $0x60] sm:$0xff]
        %v5269 = vld [vmem:[%s5255 + $0x68] sm:$0xff]
        %v5270 = vld [vmem:[%s5255 + $0x70] sm:$0xff]
        %v5271 = vld [vmem:[%s5255 + $0x78] sm:$0xff]
        %5272 = vmatprep.subr.mxu0 0.0
        %5273 = vmatpush1.msra.mxu0 %v5256
        %5274 = vmatprep.subr.mxu0 0.0
        %5275 = vmatpush1.msra.mxu0 %v5257
        %5276 = vmatprep.subr.mxu0 0.0
        %5277 = vmatpush1.msra.mxu0 %v5258
        %5278 = vmatprep.subr.mxu0 0.0
        %5279 = vmatpush1.msra.mxu0 %v5259
        %5280 = vmatprep.subr.mxu0 0.0
        %5281 = vmatpush1.msra.mxu0 %v5260
        %5282 = vmatprep.subr.mxu0 0.0
        %5283 = vmatpush1.msra.mxu0 %v5261
        %5284 = vmatprep.subr.mxu0 0.0
        %5285 = vmatpush1.msra.mxu0 %v5262
        %5286 = vmatprep.subr.mxu0 0.0
        %5287 = vmatpush1.msra.mxu0 %v5263
        %5288 = vmatprep.subr.mxu0 0.0
        %5289 = vmatpush1.msra.mxu0 %v5264
        %5290 = vmatprep.subr.mxu0 0.0
        %5291 = vmatpush1.msra.mxu0 %v5265
        %5292 = vmatprep.subr.mxu0 0.0
        %5293 = vmatpush1.msra.mxu0 %v5266
        %5294 = vmatprep.subr.mxu0 0.0
        %5295 = vmatpush1.msra.mxu0 %v5267
        %5296 = vmatprep.subr.mxu0 0.0
        %5297 = vmatpush1.msra.mxu0 %v5268
        %5298 = vmatprep.subr.mxu0 0.0
        %5299 = vmatpush1.msra.mxu0 %v5269
        %5300 = vmatprep.subr.mxu0 0.0
        %5301 = vmatpush1.msra.mxu0 %v5270
        %5302 = vmatprep.subr.mxu0 0.0
        %5303 = vmatpush1.msra.mxu0 %v5271
        %5304 = vmatprep.subr.mxu0 0.0
        %5305 = vmatpush1.msra.mxu0 0.0
        %5306 = vmatprep.subr.mxu0 0.0
        %5307 = vmatpush1.msra.mxu0 0.0
        %5308 = vmatprep.subr.mxu0 0.0
        %5309 = vmatpush1.msra.mxu0 0.0
        %5310 = vmatprep.subr.mxu0 0.0
        %5311 = vmatpush1.msra.mxu0 0.0
        %5312 = vmatprep.subr.mxu0 0.0
        %5313 = vmatpush1.msra.mxu0 0.0
        %5314 = vmatprep.subr.mxu0 0.0
        %5315 = vmatpush1.msra.mxu0 0.0
        %5316 = vmatprep.subr.mxu0 0.0
        %5317 = vmatpush1.msra.mxu0 0.0
        %5318 = vmatprep.subr.mxu0 0.0
        %5319 = vmatpush1.msra.mxu0 0.0
        %5320 = vmatprep.subr.mxu0 0.0
        %5321 = vmatpush1.msra.mxu0 0.0
        %5322 = vmatprep.subr.mxu0 0.0
        %5323 = vmatpush1.msra.mxu0 0.0
        %5324 = vmatprep.subr.mxu0 0.0
        %5325 = vmatpush1.msra.mxu0 0.0
        %5326 = vmatprep.subr.mxu0 0.0
        %5327 = vmatpush1.msra.mxu0 0.0
        %5328 = vmatprep.subr.mxu0 0.0
        %5329 = vmatpush1.msra.mxu0 0.0
        %5330 = vmatprep.subr.mxu0 0.0
        %5331 = vmatpush1.msra.mxu0 0.0
        %5332 = vmatprep.subr.mxu0 0.0
        %5333 = vmatpush1.msra.mxu0 0.0
        %5334 = vmatprep.subr.mxu0 0.0
        %5335 = vmatpush1.msra.mxu0 0.0
        %5336 = vmatprep.mubr.f32.mxu0 0.0
        %5337 = vmatmul.mubr.f32.gmra.mrb[0].mxu0 %v5219
        %v5338 = vpop.f32.mrb[0].mxu0
        %v5339 = vadd.f32 0.0, %v5338
        %v5340 = vpop.f32.mrb[0].mxu0
        %5341 = vmatprep.mubr.f32.mxu0 0.0
        %5342 = vmatmul.mubr.f32.gmra.mrb[0].mxu0 %v5220
        %v5343 = vpop.f32.mrb[0].mxu0
        %v5344 = vadd.f32 0.0, %v5343
        %v5345 = vpop.f32.mrb[0].mxu0
        %5346 = vmatprep.mubr.f32.mxu0 0.0
        %5347 = vmatmul.mubr.f32.gmra.mrb[0].mxu0 %v5221
        %v5348 = vpop.f32.mrb[0].mxu0
        %v5349 = vadd.f32 0.0, %v5348
        %v5350 = vpop.f32.mrb[0].mxu0
        %5351 = vmatprep.mubr.f32.mxu0 0.0
        %5352 = vmatmul.mubr.f32.gmra.mrb[0].mxu0 %v5222
        %v5353 = vpop.f32.mrb[0].mxu0
        %v5354 = vadd.f32 0.0, %v5353
        %v5355 = vpop.f32.mrb[0].mxu0
        %5356 = vmatprep.mubr.f32.mxu0 0.0
        %5357 = vmatmul.mubr.f32.gmra.mrb[0].mxu0 %v5223
        %v5358 = vpop.f32.mrb[0].mxu0
        %v5359 = vadd.f32 0.0, %v5358
        %v5360 = vpop.f32.mrb[0].mxu0
        %5361 = vmatprep.mubr.f32.mxu0 0.0
        %5362 = vmatmul.mubr.f32.gmra.mrb[0].mxu0 %v5224
        %v5363 = vpop.f32.mrb[0].mxu0
        %v5364 = vadd.f32 0.0, %v5363
        %v5365 = vpop.f32.mrb[0].mxu0
        %5366 = vmatprep.mubr.f32.mxu0 0.0
        %5367 = vmatmul.mubr.f32.gmra.mrb[0].mxu0 %v5225
        %v5368 = vpop.f32.mrb[0].mxu0
        %v5369 = vadd.f32 0.0, %v5368
        %v5370 = vpop.f32.mrb[0].mxu0
        %5371 = vmatprep.mubr.f32.mxu0 0.0
        %5372 = vmatmul.mubr.f32.gmra.mrb[0].mxu0 %v5226
        %v5373 = vpop.f32.mrb[0].mxu0
        %v5374 = vadd.f32 0.0, %v5373
        %v5375 = vpop.f32.mrb[0].mxu0
        %5376 = vmatprep.mubr.f32.mxu0 0.0
        %5377 = vmatmul.mubr.f32.gmra.mrb[0].mxu0 %v5227
        %v5378 = vpop.f32.mrb[0].mxu0
        %v5379 = vadd.f32 0.0, %v5378
        %v5380 = vpop.f32.mrb[0].mxu0
        %5381 = vmatprep.mubr.f32.mxu0 0.0
        %5382 = vmatmul.mubr.f32.gmra.mrb[0].mxu0 %v5228
        %v5383 = vpop.f32.mrb[0].mxu0
        %v5384 = vadd.f32 0.0, %v5383
        %v5385 = vpop.f32.mrb[0].mxu0
        %5386 = vmatprep.mubr.f32.mxu0 0.0
        %5387 = vmatmul.mubr.f32.gmra.mrb[0].mxu0 %v5229
        %v5388 = vpop.f32.mrb[0].mxu0
        %v5389 = vadd.f32 0.0, %v5388
        %v5390 = vpop.f32.mrb[0].mxu0
        %5391 = vmatprep.mubr.f32.mxu0 0.0
        %5392 = vmatmul.mubr.f32.gmra.mrb[0].mxu0 %v5230
        %v5393 = vpop.f32.mrb[0].mxu0
        %v5394 = vadd.f32 0.0, %v5393
        %v5395 = vpop.f32.mrb[0].mxu0
        %5396 = vmatprep.mubr.f32.mxu0 0.0
        %5397 = vmatmul.mubr.f32.gmra.mrb[0].mxu0 %v5231
        %v5398 = vpop.f32.mrb[0].mxu0
        %v5399 = vadd.f32 0.0, %v5398
        %v5400 = vpop.f32.mrb[0].mxu0
        %5401 = vmatprep.mubr.f32.mxu0 0.0
        %5402 = vmatmul.mubr.f32.gmra.mrb[0].mxu0 %v5232
        %v5403 = vpop.f32.mrb[0].mxu0
        %v5404 = vadd.f32 0.0, %v5403
        %v5405 = vpop.f32.mrb[0].mxu0
        %5406 = vmatprep.mubr.f32.mxu0 0.0
        %5407 = vmatmul.mubr.f32.gmra.mrb[0].mxu0 %v5233
        %v5408 = vpop.f32.mrb[0].mxu0
        %v5409 = vadd.f32 0.0, %v5408
        %v5410 = vpop.f32.mrb[0].mxu0
        %5411 = vmatprep.mubr.f32.mxu0 0.0
        %5412 = vmatmul.mubr.f32.gmra.mrb[0].mxu0 %v5234
        %v5413 = vpop.f32.mrb[0].mxu0
        %v5414 = vadd.f32 0.0, %v5413
        %v5415 = vpop.f32.mrb[0].mxu0
        %5416 = vmatprep.mubr.f32.mxu0 0.0
        %5417 = vmatmul.mubr.f32.gmra.mrb[0].mxu0 %v5235
        %v5418 = vpop.f32.mrb[0].mxu0
        %v5419 = vadd.f32 0.0, %v5418
        %v5420 = vpop.f32.mrb[0].mxu0
        %5421 = vmatprep.mubr.f32.mxu0 0.0
        %5422 = vmatmul.mubr.f32.gmra.mrb[0].mxu0 %v5236
        %v5423 = vpop.f32.mrb[0].mxu0
        %v5424 = vadd.f32 0.0, %v5423
        %v5425 = vpop.f32.mrb[0].mxu0
        %5426 = vmatprep.mubr.f32.mxu0 0.0
        %5427 = vmatmul.mubr.f32.gmra.mrb[0].mxu0 %v5237
        %v5428 = vpop.f32.mrb[0].mxu0
        %v5429 = vadd.f32 0.0, %v5428
        %v5430 = vpop.f32.mrb[0].mxu0
        %5431 = vmatprep.mubr.f32.mxu0 0.0
        %5432 = vmatmul.mubr.f32.gmra.mrb[0].mxu0 %v5238
        %v5433 = vpop.f32.mrb[0].mxu0
        %v5434 = vadd.f32 0.0, %v5433
        %v5435 = vpop.f32.mrb[0].mxu0
        %5436 = vmatprep.mubr.f32.mxu0 0.0
        %5437 = vmatmul.mubr.f32.gmra.mrb[0].mxu0 %v5239
        %v5438 = vpop.f32.mrb[0].mxu0
        %v5439 = vadd.f32 0.0, %v5438
        %v5440 = vpop.f32.mrb[0].mxu0
        %5441 = vmatprep.mubr.f32.mxu0 0.0
        %5442 = vmatmul.mubr.f32.gmra.mrb[0].mxu0 %v5240
        %v5443 = vpop.f32.mrb[0].mxu0
        %v5444 = vadd.f32 0.0, %v5443
        %v5445 = vpop.f32.mrb[0].mxu0
        %5446 = vmatprep.mubr.f32.mxu0 0.0
        %5447 = vmatmul.mubr.f32.gmra.mrb[0].mxu0 %v5241
        %v5448 = vpop.f32.mrb[0].mxu0
        %v5449 = vadd.f32 0.0, %v5448
        %v5450 = vpop.f32.mrb[0].mxu0
        %5451 = vmatprep.mubr.f32.mxu0 0.0
        %5452 = vmatmul.mubr.f32.gmra.mrb[0].mxu0 %v5242
        %v5453 = vpop.f32.mrb[0].mxu0
        %v5454 = vadd.f32 0.0, %v5453
        %v5455 = vpop.f32.mrb[0].mxu0
        %5456 = vmatprep.mubr.f32.mxu0 0.0
        %5457 = vmatmul.mubr.f32.gmra.mrb[0].mxu0 %v5243
        %v5458 = vpop.f32.mrb[0].mxu0
        %v5459 = vadd.f32 0.0, %v5458
        %v5460 = vpop.f32.mrb[0].mxu0
        %5461 = vmatprep.mubr.f32.mxu0 0.0
        %5462 = vmatmul.mubr.f32.gmra.mrb[0].mxu0 %v5244
        %v5463 = vpop.f32.mrb[0].mxu0
        %v5464 = vadd.f32 0.0, %v5463
        %v5465 = vpop.f32.mrb[0].mxu0
        %5466 = vmatprep.mubr.f32.mxu0 0.0
        %5467 = vmatmul.mubr.f32.gmra.mrb[0].mxu0 %v5245
        %v5468 = vpop.f32.mrb[0].mxu0
        %v5469 = vadd.f32 0.0, %v5468
        %v5470 = vpop.f32.mrb[0].mxu0
        %5471 = vmatprep.mubr.f32.mxu0 0.0
        %5472 = vmatmul.mubr.f32.gmra.mrb[0].mxu0 %v5246
        %v5473 = vpop.f32.mrb[0].mxu0
        %v5474 = vadd.f32 0.0, %v5473
        %v5475 = vpop.f32.mrb[0].mxu0
        %5476 = vmatprep.mubr.f32.mxu0 0.0
        %5477 = vmatmul.mubr.f32.gmra.mrb[0].mxu0 %v5247
        %v5478 = vpop.f32.mrb[0].mxu0
        %v5479 = vadd.f32 0.0, %v5478
        %v5480 = vpop.f32.mrb[0].mxu0
        %5481 = vmatprep.mubr.f32.mxu0 0.0
        %5482 = vmatmul.mubr.f32.gmra.mrb[0].mxu0 %v5248
        %v5483 = vpop.f32.mrb[0].mxu0
        %v5484 = vadd.f32 0.0, %v5483
        %v5485 = vpop.f32.mrb[0].mxu0
        %5486 = vmatprep.mubr.f32.mxu0 0.0
        %5487 = vmatmul.mubr.f32.gmra.mrb[0].mxu0 %v5249
        %v5488 = vpop.f32.mrb[0].mxu0
        %v5489 = vadd.f32 0.0, %v5488
        %v5490 = vpop.f32.mrb[0].mxu0
        %5491 = vmatprep.mubr.f32.mxu0 0.0
        %5492 = vmatmul.mubr.f32.gmra.mrb[0].mxu0 %v5250
        %v5493 = vpop.f32.mrb[0].mxu0
        %v5494 = vadd.f32 0.0, %v5493
        %v5495 = vpop.f32.mrb[0].mxu0
        %5496 = vmatprep.mubr.f32.mxu0 0.0
        %5497 = vmatmul.mubr.f32.gmra.mrb[0].mxu0 %v5251
        %v5498 = vpop.f32.mrb[0].mxu0
        %v5499 = vadd.f32 0.0, %v5498
        %v5500 = vpop.f32.mrb[0].mxu0
        %5501 = vmatprep.mubr.f32.mxu0 0.0
        %5502 = vmatmul.mubr.f32.gmra.mrb[0].mxu0 %v5252
        %v5503 = vpop.f32.mrb[0].mxu0
        %v5504 = vadd.f32 0.0, %v5503
        %v5505 = vpop.f32.mrb[0].mxu0
        %5506 = vmatprep.mubr.f32.mxu0 0.0
        %5507 = vmatmul.mubr.f32.gmra.mrb[0].mxu0 %v5253
        %v5508 = vpop.f32.mrb[0].mxu0
        %v5509 = vadd.f32 0.0, %v5508
        %v5510 = vpop.f32.mrb[0].mxu0
        %5511 = vmatprep.mubr.f32.mxu0 0.0
        %5512 = vmatmul.mubr.f32.gmra.mrb[0].mxu0 %v5254
        %v5513 = vpop.f32.mrb[0].mxu0
        %v5514 = vadd.f32 0.0, %v5513
        %v5515 = vpop.f32.mrb[0].mxu0
        %5516 = vdwg.mxu0
        %v5517 = vadd.f32 %v5041, %v5339
        %v5518 = vadd.f32 %v5046, %v5344
        %v5519 = vadd.f32 %v5051, %v5349
        %v5520 = vadd.f32 %v5056, %v5354
        %v5521 = vadd.f32 %v5061, %v5359
        %v5522 = vadd.f32 %v5066, %v5364
        %v5523 = vadd.f32 %v5071, %v5369
        %v5524 = vadd.f32 %v5076, %v5374
        %v5525 = vadd.f32 %v5081, %v5379
        %v5526 = vadd.f32 %v5086, %v5384
        %v5527 = vadd.f32 %v5091, %v5389
        %v5528 = vadd.f32 %v5096, %v5394
        %v5529 = vadd.f32 %v5101, %v5399
        %v5530 = vadd.f32 %v5106, %v5404
        %v5531 = vadd.f32 %v5111, %v5409
        %v5532 = vadd.f32 %v5116, %v5414
        %v5533 = vadd.f32 %v5121, %v5419
        %v5534 = vadd.f32 %v5126, %v5424
        %v5535 = vadd.f32 %v5131, %v5429
        %v5536 = vadd.f32 %v5136, %v5434
        %v5537 = vadd.f32 %v5141, %v5439
        %v5538 = vadd.f32 %v5146, %v5444
        %v5539 = vadd.f32 %v5151, %v5449
        %v5540 = vadd.f32 %v5156, %v5454
        %v5541 = vadd.f32 %v5161, %v5459
        %v5542 = vadd.f32 %v5166, %v5464
        %v5543 = vadd.f32 %v5171, %v5469
        %v5544 = vadd.f32 %v5176, %v5474
        %v5545 = vadd.f32 %v5181, %v5479
        %v5546 = vadd.f32 %v5186, %v5484
        %v5547 = vadd.f32 %v5191, %v5489
        %v5548 = vadd.f32 %v5196, %v5494
        %v5549 = vadd.f32 %v5201, %v5499
        %v5550 = vadd.f32 %v5206, %v5504
        %v5551 = vadd.f32 %v5211, %v5509
        %v5552 = vadd.f32 %v5216, %v5514
        %v5553 = vld [vmem:[#allocation2 + $0x23] sm:$0xff]
        %v5554 = vld [vmem:[#allocation2 + $0x2b] sm:$0xff]
        %v5555 = vld [vmem:[#allocation2 + $0x33] sm:$0xff]
        %v5556 = vld [vmem:[#allocation2 + $0x3b] sm:$0xff]
        %v5557 = vld [vmem:[#allocation2 + $0x43] sm:$0xff]
        %v5558 = vld [vmem:[#allocation2 + $0x4b] sm:$0xff]
        %v5559 = vld [vmem:[#allocation2 + $0x53] sm:$0xff]
        %v5560 = vld [vmem:[#allocation2 + $0x5b] sm:$0xff]
        %v5561 = vld [vmem:[#allocation2 + $0x63] sm:$0xff]
        %v5562 = vld [vmem:[#allocation2 + $0x6b] sm:$0xff]
        %v5563 = vld [vmem:[#allocation2 + $0x73] sm:$0xff]
        %v5564 = vld [vmem:[#allocation2 + $0x7b] sm:$0xff]
        %v5565 = vld [vmem:[#allocation2 + $0x83] sm:$0xff]
        %v5566 = vld [vmem:[#allocation2 + $0x8b] sm:$0xff]
        %v5567 = vld [vmem:[#allocation2 + $0x93] sm:$0xff]
        %v5568 = vld [vmem:[#allocation2 + $0x9b] sm:$0xff]
        %v5569 = vld [vmem:[#allocation2 + $0xa3] sm:$0xff]
        %v5570 = vld [vmem:[#allocation2 + $0xab] sm:$0xff]
        %v5571 = vld [vmem:[#allocation2 + $0xb3] sm:$0xff]
        %v5572 = vld [vmem:[#allocation2 + $0xbb] sm:$0xff]
        %v5573 = vld [vmem:[#allocation2 + $0xc3] sm:$0xff]
        %v5574 = vld [vmem:[#allocation2 + $0xcb] sm:$0xff]
        %v5575 = vld [vmem:[#allocation2 + $0xd3] sm:$0xff]
        %v5576 = vld [vmem:[#allocation2 + $0xdb] sm:$0xff]
        %v5577 = vld [vmem:[#allocation2 + $0xe3] sm:$0xff]
        %v5578 = vld [vmem:[#allocation2 + $0xeb] sm:$0xff]
        %v5579 = vld [vmem:[#allocation2 + $0xf3] sm:$0xff]
        %v5580 = vld [vmem:[#allocation2 + $0xfb] sm:$0xff]
        %v5581 = vld [vmem:[#allocation2 + $0x103] sm:$0xff]
        %v5582 = vld [vmem:[#allocation2 + $0x10b] sm:$0xff]
        %v5583 = vld [vmem:[#allocation2 + $0x113] sm:$0xff]
        %v5584 = vld [vmem:[#allocation2 + $0x11b] sm:$0xff]
        %v5585 = vld [vmem:[#allocation2 + $0x123] sm:$0xff]
        %v5586 = vld [vmem:[#allocation2 + $0x12b] sm:$0xff]
        %v5587 = vld [vmem:[#allocation2 + $0x133] sm:$0xff]
        %v5588 = vld [vmem:[#allocation2 + $0x13b] sm:$0xff]
        %s5589 = scalar_lea.vmem %s8, 384
        %v5590 = vld [vmem:[%s5589] sm:$0xff]
        %v5591 = vld [vmem:[%s5589 + $0x8] sm:$0xff]
        %v5592 = vld [vmem:[%s5589 + $0x10] sm:$0xff]
        %v5593 = vld [vmem:[%s5589 + $0x18] sm:$0xff]
        %v5594 = vld [vmem:[%s5589 + $0x20] sm:$0xff]
        %v5595 = vld [vmem:[%s5589 + $0x28] sm:$0xff]
        %v5596 = vld [vmem:[%s5589 + $0x30] sm:$0xff]
        %v5597 = vld [vmem:[%s5589 + $0x38] sm:$0xff]
        %v5598 = vld [vmem:[%s5589 + $0x40] sm:$0xff]
        %v5599 = vld [vmem:[%s5589 + $0x48] sm:$0xff]
        %v5600 = vld [vmem:[%s5589 + $0x50] sm:$0xff]
        %v5601 = vld [vmem:[%s5589 + $0x58] sm:$0xff]
        %v5602 = vld [vmem:[%s5589 + $0x60] sm:$0xff]
        %v5603 = vld [vmem:[%s5589 + $0x68] sm:$0xff]
        %v5604 = vld [vmem:[%s5589 + $0x70] sm:$0xff]
        %v5605 = vld [vmem:[%s5589 + $0x78] sm:$0xff]
        %5606 = vmatprep.subr.mxu0 0.0
        %5607 = vmatpush1.msra.mxu0 %v5590
        %5608 = vmatprep.subr.mxu0 0.0
        %5609 = vmatpush1.msra.mxu0 %v5591
        %5610 = vmatprep.subr.mxu0 0.0
        %5611 = vmatpush1.msra.mxu0 %v5592
        %5612 = vmatprep.subr.mxu0 0.0
        %5613 = vmatpush1.msra.mxu0 %v5593
        %5614 = vmatprep.subr.mxu0 0.0
        %5615 = vmatpush1.msra.mxu0 %v5594
        %5616 = vmatprep.subr.mxu0 0.0
        %5617 = vmatpush1.msra.mxu0 %v5595
        %5618 = vmatprep.subr.mxu0 0.0
        %5619 = vmatpush1.msra.mxu0 %v5596
        %5620 = vmatprep.subr.mxu0 0.0
        %5621 = vmatpush1.msra.mxu0 %v5597
        %5622 = vmatprep.subr.mxu0 0.0
        %5623 = vmatpush1.msra.mxu0 %v5598
        %5624 = vmatprep.subr.mxu0 0.0
        %5625 = vmatpush1.msra.mxu0 %v5599
        %5626 = vmatprep.subr.mxu0 0.0
        %5627 = vmatpush1.msra.mxu0 %v5600
        %5628 = vmatprep.subr.mxu0 0.0
        %5629 = vmatpush1.msra.mxu0 %v5601
        %5630 = vmatprep.subr.mxu0 0.0
        %5631 = vmatpush1.msra.mxu0 %v5602
        %5632 = vmatprep.subr.mxu0 0.0
        %5633 = vmatpush1.msra.mxu0 %v5603
        %5634 = vmatprep.subr.mxu0 0.0
        %5635 = vmatpush1.msra.mxu0 %v5604
        %5636 = vmatprep.subr.mxu0 0.0
        %5637 = vmatpush1.msra.mxu0 %v5605
        %5638 = vmatprep.subr.mxu0 0.0
        %5639 = vmatpush1.msra.mxu0 0.0
        %5640 = vmatprep.subr.mxu0 0.0
        %5641 = vmatpush1.msra.mxu0 0.0
        %5642 = vmatprep.subr.mxu0 0.0
        %5643 = vmatpush1.msra.mxu0 0.0
        %5644 = vmatprep.subr.mxu0 0.0
        %5645 = vmatpush1.msra.mxu0 0.0
        %5646 = vmatprep.subr.mxu0 0.0
        %5647 = vmatpush1.msra.mxu0 0.0
        %5648 = vmatprep.subr.mxu0 0.0
        %5649 = vmatpush1.msra.mxu0 0.0
        %5650 = vmatprep.subr.mxu0 0.0
        %5651 = vmatpush1.msra.mxu0 0.0
        %5652 = vmatprep.subr.mxu0 0.0
        %5653 = vmatpush1.msra.mxu0 0.0
        %5654 = vmatprep.subr.mxu0 0.0
        %5655 = vmatpush1.msra.mxu0 0.0
        %5656 = vmatprep.subr.mxu0 0.0
        %5657 = vmatpush1.msra.mxu0 0.0
        %5658 = vmatprep.subr.mxu0 0.0
        %5659 = vmatpush1.msra.mxu0 0.0
        %5660 = vmatprep.subr.mxu0 0.0
        %5661 = vmatpush1.msra.mxu0 0.0
        %5662 = vmatprep.subr.mxu0 0.0
        %5663 = vmatpush1.msra.mxu0 0.0
        %5664 = vmatprep.subr.mxu0 0.0
        %5665 = vmatpush1.msra.mxu0 0.0
        %5666 = vmatprep.subr.mxu0 0.0
        %5667 = vmatpush1.msra.mxu0 0.0
        %5668 = vmatprep.subr.mxu0 0.0
        %5669 = vmatpush1.msra.mxu0 0.0
        %5670 = vmatprep.mubr.f32.mxu0 0.0
        %5671 = vmatmul.mubr.f32.gmra.mrb[0].mxu0 %v5553
        %v5672 = vpop.f32.mrb[0].mxu0
        %v5673 = vadd.f32 0.0, %v5672
        %v5674 = vpop.f32.mrb[0].mxu0
        %5675 = vmatprep.mubr.f32.mxu0 0.0
        %5676 = vmatmul.mubr.f32.gmra.mrb[0].mxu0 %v5554
        %v5677 = vpop.f32.mrb[0].mxu0
        %v5678 = vadd.f32 0.0, %v5677
        %v5679 = vpop.f32.mrb[0].mxu0
        %5680 = vmatprep.mubr.f32.mxu0 0.0
        %5681 = vmatmul.mubr.f32.gmra.mrb[0].mxu0 %v5555
        %v5682 = vpop.f32.mrb[0].mxu0
        %v5683 = vadd.f32 0.0, %v5682
        %v5684 = vpop.f32.mrb[0].mxu0
        %5685 = vmatprep.mubr.f32.mxu0 0.0
        %5686 = vmatmul.mubr.f32.gmra.mrb[0].mxu0 %v5556
        %v5687 = vpop.f32.mrb[0].mxu0
        %v5688 = vadd.f32 0.0, %v5687
        %v5689 = vpop.f32.mrb[0].mxu0
        %5690 = vmatprep.mubr.f32.mxu0 0.0
        %5691 = vmatmul.mubr.f32.gmra.mrb[0].mxu0 %v5557
        %v5692 = vpop.f32.mrb[0].mxu0
        %v5693 = vadd.f32 0.0, %v5692
        %v5694 = vpop.f32.mrb[0].mxu0
        %5695 = vmatprep.mubr.f32.mxu0 0.0
        %5696 = vmatmul.mubr.f32.gmra.mrb[0].mxu0 %v5558
        %v5697 = vpop.f32.mrb[0].mxu0
        %v5698 = vadd.f32 0.0, %v5697
        %v5699 = vpop.f32.mrb[0].mxu0
        %5700 = vmatprep.mubr.f32.mxu0 0.0
        %5701 = vmatmul.mubr.f32.gmra.mrb[0].mxu0 %v5559
        %v5702 = vpop.f32.mrb[0].mxu0
        %v5703 = vadd.f32 0.0, %v5702
        %v5704 = vpop.f32.mrb[0].mxu0
        %5705 = vmatprep.mubr.f32.mxu0 0.0
        %5706 = vmatmul.mubr.f32.gmra.mrb[0].mxu0 %v5560
        %v5707 = vpop.f32.mrb[0].mxu0
        %v5708 = vadd.f32 0.0, %v5707
        %v5709 = vpop.f32.mrb[0].mxu0
        %5710 = vmatprep.mubr.f32.mxu0 0.0
        %5711 = vmatmul.mubr.f32.gmra.mrb[0].mxu0 %v5561
        %v5712 = vpop.f32.mrb[0].mxu0
        %v5713 = vadd.f32 0.0, %v5712
        %v5714 = vpop.f32.mrb[0].mxu0
        %5715 = vmatprep.mubr.f32.mxu0 0.0
        %5716 = vmatmul.mubr.f32.gmra.mrb[0].mxu0 %v5562
        %v5717 = vpop.f32.mrb[0].mxu0
        %v5718 = vadd.f32 0.0, %v5717
        %v5719 = vpop.f32.mrb[0].mxu0
        %5720 = vmatprep.mubr.f32.mxu0 0.0
        %5721 = vmatmul.mubr.f32.gmra.mrb[0].mxu0 %v5563
        %v5722 = vpop.f32.mrb[0].mxu0
        %v5723 = vadd.f32 0.0, %v5722
        %v5724 = vpop.f32.mrb[0].mxu0
        %5725 = vmatprep.mubr.f32.mxu0 0.0
        %5726 = vmatmul.mubr.f32.gmra.mrb[0].mxu0 %v5564
        %v5727 = vpop.f32.mrb[0].mxu0
        %v5728 = vadd.f32 0.0, %v5727
        %v5729 = vpop.f32.mrb[0].mxu0
        %5730 = vmatprep.mubr.f32.mxu0 0.0
        %5731 = vmatmul.mubr.f32.gmra.mrb[0].mxu0 %v5565
        %v5732 = vpop.f32.mrb[0].mxu0
        %v5733 = vadd.f32 0.0, %v5732
        %v5734 = vpop.f32.mrb[0].mxu0
        %5735 = vmatprep.mubr.f32.mxu0 0.0
        %5736 = vmatmul.mubr.f32.gmra.mrb[0].mxu0 %v5566
        %v5737 = vpop.f32.mrb[0].mxu0
        %v5738 = vadd.f32 0.0, %v5737
        %v5739 = vpop.f32.mrb[0].mxu0
        %5740 = vmatprep.mubr.f32.mxu0 0.0
        %5741 = vmatmul.mubr.f32.gmra.mrb[0].mxu0 %v5567
        %v5742 = vpop.f32.mrb[0].mxu0
        %v5743 = vadd.f32 0.0, %v5742
        %v5744 = vpop.f32.mrb[0].mxu0
        %5745 = vmatprep.mubr.f32.mxu0 0.0
        %5746 = vmatmul.mubr.f32.gmra.mrb[0].mxu0 %v5568
        %v5747 = vpop.f32.mrb[0].mxu0
        %v5748 = vadd.f32 0.0, %v5747
        %v5749 = vpop.f32.mrb[0].mxu0
        %5750 = vmatprep.mubr.f32.mxu0 0.0
        %5751 = vmatmul.mubr.f32.gmra.mrb[0].mxu0 %v5569
        %v5752 = vpop.f32.mrb[0].mxu0
        %v5753 = vadd.f32 0.0, %v5752
        %v5754 = vpop.f32.mrb[0].mxu0
        %5755 = vmatprep.mubr.f32.mxu0 0.0
        %5756 = vmatmul.mubr.f32.gmra.mrb[0].mxu0 %v5570
        %v5757 = vpop.f32.mrb[0].mxu0
        %v5758 = vadd.f32 0.0, %v5757
        %v5759 = vpop.f32.mrb[0].mxu0
        %5760 = vmatprep.mubr.f32.mxu0 0.0
        %5761 = vmatmul.mubr.f32.gmra.mrb[0].mxu0 %v5571
        %v5762 = vpop.f32.mrb[0].mxu0
        %v5763 = vadd.f32 0.0, %v5762
        %v5764 = vpop.f32.mrb[0].mxu0
        %5765 = vmatprep.mubr.f32.mxu0 0.0
        %5766 = vmatmul.mubr.f32.gmra.mrb[0].mxu0 %v5572
        %v5767 = vpop.f32.mrb[0].mxu0
        %v5768 = vadd.f32 0.0, %v5767
        %v5769 = vpop.f32.mrb[0].mxu0
        %5770 = vmatprep.mubr.f32.mxu0 0.0
        %5771 = vmatmul.mubr.f32.gmra.mrb[0].mxu0 %v5573
        %v5772 = vpop.f32.mrb[0].mxu0
        %v5773 = vadd.f32 0.0, %v5772
        %v5774 = vpop.f32.mrb[0].mxu0
        %5775 = vmatprep.mubr.f32.mxu0 0.0
        %5776 = vmatmul.mubr.f32.gmra.mrb[0].mxu0 %v5574
        %v5777 = vpop.f32.mrb[0].mxu0
        %v5778 = vadd.f32 0.0, %v5777
        %v5779 = vpop.f32.mrb[0].mxu0
        %5780 = vmatprep.mubr.f32.mxu0 0.0
        %5781 = vmatmul.mubr.f32.gmra.mrb[0].mxu0 %v5575
        %v5782 = vpop.f32.mrb[0].mxu0
        %v5783 = vadd.f32 0.0, %v5782
        %v5784 = vpop.f32.mrb[0].mxu0
        %5785 = vmatprep.mubr.f32.mxu0 0.0
        %5786 = vmatmul.mubr.f32.gmra.mrb[0].mxu0 %v5576
        %v5787 = vpop.f32.mrb[0].mxu0
        %v5788 = vadd.f32 0.0, %v5787
        %v5789 = vpop.f32.mrb[0].mxu0
        %5790 = vmatprep.mubr.f32.mxu0 0.0
        %5791 = vmatmul.mubr.f32.gmra.mrb[0].mxu0 %v5577
        %v5792 = vpop.f32.mrb[0].mxu0
        %v5793 = vadd.f32 0.0, %v5792
        %v5794 = vpop.f32.mrb[0].mxu0
        %5795 = vmatprep.mubr.f32.mxu0 0.0
        %5796 = vmatmul.mubr.f32.gmra.mrb[0].mxu0 %v5578
        %v5797 = vpop.f32.mrb[0].mxu0
        %v5798 = vadd.f32 0.0, %v5797
        %v5799 = vpop.f32.mrb[0].mxu0
        %5800 = vmatprep.mubr.f32.mxu0 0.0
        %5801 = vmatmul.mubr.f32.gmra.mrb[0].mxu0 %v5579
        %v5802 = vpop.f32.mrb[0].mxu0
        %v5803 = vadd.f32 0.0, %v5802
        %v5804 = vpop.f32.mrb[0].mxu0
        %5805 = vmatprep.mubr.f32.mxu0 0.0
        %5806 = vmatmul.mubr.f32.gmra.mrb[0].mxu0 %v5580
        %v5807 = vpop.f32.mrb[0].mxu0
        %v5808 = vadd.f32 0.0, %v5807
        %v5809 = vpop.f32.mrb[0].mxu0
        %5810 = vmatprep.mubr.f32.mxu0 0.0
        %5811 = vmatmul.mubr.f32.gmra.mrb[0].mxu0 %v5581
        %v5812 = vpop.f32.mrb[0].mxu0
        %v5813 = vadd.f32 0.0, %v5812
        %v5814 = vpop.f32.mrb[0].mxu0
        %5815 = vmatprep.mubr.f32.mxu0 0.0
        %5816 = vmatmul.mubr.f32.gmra.mrb[0].mxu0 %v5582
        %v5817 = vpop.f32.mrb[0].mxu0
        %v5818 = vadd.f32 0.0, %v5817
        %v5819 = vpop.f32.mrb[0].mxu0
        %5820 = vmatprep.mubr.f32.mxu0 0.0
        %5821 = vmatmul.mubr.f32.gmra.mrb[0].mxu0 %v5583
        %v5822 = vpop.f32.mrb[0].mxu0
        %v5823 = vadd.f32 0.0, %v5822
        %v5824 = vpop.f32.mrb[0].mxu0
        %5825 = vmatprep.mubr.f32.mxu0 0.0
        %5826 = vmatmul.mubr.f32.gmra.mrb[0].mxu0 %v5584
        %v5827 = vpop.f32.mrb[0].mxu0
        %v5828 = vadd.f32 0.0, %v5827
        %v5829 = vpop.f32.mrb[0].mxu0
        %5830 = vmatprep.mubr.f32.mxu0 0.0
        %5831 = vmatmul.mubr.f32.gmra.mrb[0].mxu0 %v5585
        %v5832 = vpop.f32.mrb[0].mxu0
        %v5833 = vadd.f32 0.0, %v5832
        %v5834 = vpop.f32.mrb[0].mxu0
        %5835 = vmatprep.mubr.f32.mxu0 0.0
        %5836 = vmatmul.mubr.f32.gmra.mrb[0].mxu0 %v5586
        %v5837 = vpop.f32.mrb[0].mxu0
        %v5838 = vadd.f32 0.0, %v5837
        %v5839 = vpop.f32.mrb[0].mxu0
        %5840 = vmatprep.mubr.f32.mxu0 0.0
        %5841 = vmatmul.mubr.f32.gmra.mrb[0].mxu0 %v5587
        %v5842 = vpop.f32.mrb[0].mxu0
        %v5843 = vadd.f32 0.0, %v5842
        %v5844 = vpop.f32.mrb[0].mxu0
        %5845 = vmatprep.mubr.f32.mxu0 0.0
        %5846 = vmatmul.mubr.f32.gmra.mrb[0].mxu0 %v5588
        %v5847 = vpop.f32.mrb[0].mxu0
        %v5848 = vadd.f32 0.0, %v5847
        %v5849 = vpop.f32.mrb[0].mxu0
        %5850 = vdwg.mxu0
        %v5851 = vadd.f32 %v5517, %v5673
        %v5852 = vadd.f32 %v5518, %v5678
        %v5853 = vadd.f32 %v5519, %v5683
        %v5854 = vadd.f32 %v5520, %v5688
        %v5855 = vadd.f32 %v5521, %v5693
        %v5856 = vadd.f32 %v5522, %v5698
        %v5857 = vadd.f32 %v5523, %v5703
        %v5858 = vadd.f32 %v5524, %v5708
        %v5859 = vadd.f32 %v5525, %v5713
        %v5860 = vadd.f32 %v5526, %v5718
        %v5861 = vadd.f32 %v5527, %v5723
        %v5862 = vadd.f32 %v5528, %v5728
        %v5863 = vadd.f32 %v5529, %v5733
        %v5864 = vadd.f32 %v5530, %v5738
        %v5865 = vadd.f32 %v5531, %v5743
        %v5866 = vadd.f32 %v5532, %v5748
        %v5867 = vadd.f32 %v5533, %v5753
        %v5868 = vadd.f32 %v5534, %v5758
        %v5869 = vadd.f32 %v5535, %v5763
        %v5870 = vadd.f32 %v5536, %v5768
        %v5871 = vadd.f32 %v5537, %v5773
        %v5872 = vadd.f32 %v5538, %v5778
        %v5873 = vadd.f32 %v5539, %v5783
        %v5874 = vadd.f32 %v5540, %v5788
        %v5875 = vadd.f32 %v5541, %v5793
        %v5876 = vadd.f32 %v5542, %v5798
        %v5877 = vadd.f32 %v5543, %v5803
        %v5878 = vadd.f32 %v5544, %v5808
        %v5879 = vadd.f32 %v5545, %v5813
        %v5880 = vadd.f32 %v5546, %v5818
        %v5881 = vadd.f32 %v5547, %v5823
        %v5882 = vadd.f32 %v5548, %v5828
        %v5883 = vadd.f32 %v5549, %v5833
        %v5884 = vadd.f32 %v5550, %v5838
        %v5885 = vadd.f32 %v5551, %v5843
        %v5886 = vadd.f32 %v5552, %v5848
        %v5887 = vld [vmem:[#allocation2 + $0x24] sm:$0xff]
        %v5888 = vld [vmem:[#allocation2 + $0x2c] sm:$0xff]
        %v5889 = vld [vmem:[#allocation2 + $0x34] sm:$0xff]
        %v5890 = vld [vmem:[#allocation2 + $0x3c] sm:$0xff]
        %v5891 = vld [vmem:[#allocation2 + $0x44] sm:$0xff]
        %v5892 = vld [vmem:[#allocation2 + $0x4c] sm:$0xff]
        %v5893 = vld [vmem:[#allocation2 + $0x54] sm:$0xff]
        %v5894 = vld [vmem:[#allocation2 + $0x5c] sm:$0xff]
        %v5895 = vld [vmem:[#allocation2 + $0x64] sm:$0xff]
        %v5896 = vld [vmem:[#allocation2 + $0x6c] sm:$0xff]
        %v5897 = vld [vmem:[#allocation2 + $0x74] sm:$0xff]
        %v5898 = vld [vmem:[#allocation2 + $0x7c] sm:$0xff]
        %v5899 = vld [vmem:[#allocation2 + $0x84] sm:$0xff]
        %v5900 = vld [vmem:[#allocation2 + $0x8c] sm:$0xff]
        %v5901 = vld [vmem:[#allocation2 + $0x94] sm:$0xff]
        %v5902 = vld [vmem:[#allocation2 + $0x9c] sm:$0xff]
        %v5903 = vld [vmem:[#allocation2 + $0xa4] sm:$0xff]
        %v5904 = vld [vmem:[#allocation2 + $0xac] sm:$0xff]
        %v5905 = vld [vmem:[#allocation2 + $0xb4] sm:$0xff]
        %v5906 = vld [vmem:[#allocation2 + $0xbc] sm:$0xff]
        %v5907 = vld [vmem:[#allocation2 + $0xc4] sm:$0xff]
        %v5908 = vld [vmem:[#allocation2 + $0xcc] sm:$0xff]
        %v5909 = vld [vmem:[#allocation2 + $0xd4] sm:$0xff]
        %v5910 = vld [vmem:[#allocation2 + $0xdc] sm:$0xff]
        %v5911 = vld [vmem:[#allocation2 + $0xe4] sm:$0xff]
        %v5912 = vld [vmem:[#allocation2 + $0xec] sm:$0xff]
        %v5913 = vld [vmem:[#allocation2 + $0xf4] sm:$0xff]
        %v5914 = vld [vmem:[#allocation2 + $0xfc] sm:$0xff]
        %v5915 = vld [vmem:[#allocation2 + $0x104] sm:$0xff]
        %v5916 = vld [vmem:[#allocation2 + $0x10c] sm:$0xff]
        %v5917 = vld [vmem:[#allocation2 + $0x114] sm:$0xff]
        %v5918 = vld [vmem:[#allocation2 + $0x11c] sm:$0xff]
        %v5919 = vld [vmem:[#allocation2 + $0x124] sm:$0xff]
        %v5920 = vld [vmem:[#allocation2 + $0x12c] sm:$0xff]
        %v5921 = vld [vmem:[#allocation2 + $0x134] sm:$0xff]
        %v5922 = vld [vmem:[#allocation2 + $0x13c] sm:$0xff]
        %s5923 = scalar_lea.vmem %s8, 512
        %v5924 = vld [vmem:[%s5923] sm:$0xff]
        %v5925 = vld [vmem:[%s5923 + $0x8] sm:$0xff]
        %v5926 = vld [vmem:[%s5923 + $0x10] sm:$0xff]
        %v5927 = vld [vmem:[%s5923 + $0x18] sm:$0xff]
        %v5928 = vld [vmem:[%s5923 + $0x20] sm:$0xff]
        %v5929 = vld [vmem:[%s5923 + $0x28] sm:$0xff]
        %v5930 = vld [vmem:[%s5923 + $0x30] sm:$0xff]
        %v5931 = vld [vmem:[%s5923 + $0x38] sm:$0xff]
        %v5932 = vld [vmem:[%s5923 + $0x40] sm:$0xff]
        %v5933 = vld [vmem:[%s5923 + $0x48] sm:$0xff]
        %v5934 = vld [vmem:[%s5923 + $0x50] sm:$0xff]
        %v5935 = vld [vmem:[%s5923 + $0x58] sm:$0xff]
        %v5936 = vld [vmem:[%s5923 + $0x60] sm:$0xff]
        %v5937 = vld [vmem:[%s5923 + $0x68] sm:$0xff]
        %v5938 = vld [vmem:[%s5923 + $0x70] sm:$0xff]
        %v5939 = vld [vmem:[%s5923 + $0x78] sm:$0xff]
        %5940 = vmatprep.subr.mxu0 0.0
        %5941 = vmatpush1.msra.mxu0 %v5924
        %5942 = vmatprep.subr.mxu0 0.0
        %5943 = vmatpush1.msra.mxu0 %v5925
        %5944 = vmatprep.subr.mxu0 0.0
        %5945 = vmatpush1.msra.mxu0 %v5926
        %5946 = vmatprep.subr.mxu0 0.0
        %5947 = vmatpush1.msra.mxu0 %v5927
        %5948 = vmatprep.subr.mxu0 0.0
        %5949 = vmatpush1.msra.mxu0 %v5928
        %5950 = vmatprep.subr.mxu0 0.0
        %5951 = vmatpush1.msra.mxu0 %v5929
        %5952 = vmatprep.subr.mxu0 0.0
        %5953 = vmatpush1.msra.mxu0 %v5930
        %5954 = vmatprep.subr.mxu0 0.0
        %5955 = vmatpush1.msra.mxu0 %v5931
        %5956 = vmatprep.subr.mxu0 0.0
        %5957 = vmatpush1.msra.mxu0 %v5932
        %5958 = vmatprep.subr.mxu0 0.0
        %5959 = vmatpush1.msra.mxu0 %v5933
        %5960 = vmatprep.subr.mxu0 0.0
        %5961 = vmatpush1.msra.mxu0 %v5934
        %5962 = vmatprep.subr.mxu0 0.0
        %5963 = vmatpush1.msra.mxu0 %v5935
        %5964 = vmatprep.subr.mxu0 0.0
        %5965 = vmatpush1.msra.mxu0 %v5936
        %5966 = vmatprep.subr.mxu0 0.0
        %5967 = vmatpush1.msra.mxu0 %v5937
        %5968 = vmatprep.subr.mxu0 0.0
        %5969 = vmatpush1.msra.mxu0 %v5938
        %5970 = vmatprep.subr.mxu0 0.0
        %5971 = vmatpush1.msra.mxu0 %v5939
        %5972 = vmatprep.subr.mxu0 0.0
        %5973 = vmatpush1.msra.mxu0 0.0
        %5974 = vmatprep.subr.mxu0 0.0
        %5975 = vmatpush1.msra.mxu0 0.0
        %5976 = vmatprep.subr.mxu0 0.0
        %5977 = vmatpush1.msra.mxu0 0.0
        %5978 = vmatprep.subr.mxu0 0.0
        %5979 = vmatpush1.msra.mxu0 0.0
        %5980 = vmatprep.subr.mxu0 0.0
        %5981 = vmatpush1.msra.mxu0 0.0
        %5982 = vmatprep.subr.mxu0 0.0
        %5983 = vmatpush1.msra.mxu0 0.0
        %5984 = vmatprep.subr.mxu0 0.0
        %5985 = vmatpush1.msra.mxu0 0.0
        %5986 = vmatprep.subr.mxu0 0.0
        %5987 = vmatpush1.msra.mxu0 0.0
        %5988 = vmatprep.subr.mxu0 0.0
        %5989 = vmatpush1.msra.mxu0 0.0
        %5990 = vmatprep.subr.mxu0 0.0
        %5991 = vmatpush1.msra.mxu0 0.0
        %5992 = vmatprep.subr.mxu0 0.0
        %5993 = vmatpush1.msra.mxu0 0.0
        %5994 = vmatprep.subr.mxu0 0.0
        %5995 = vmatpush1.msra.mxu0 0.0
        %5996 = vmatprep.subr.mxu0 0.0
        %5997 = vmatpush1.msra.mxu0 0.0
        %5998 = vmatprep.subr.mxu0 0.0
        %5999 = vmatpush1.msra.mxu0 0.0
        %6000 = vmatprep.subr.mxu0 0.0
        %6001 = vmatpush1.msra.mxu0 0.0
        %6002 = vmatprep.subr.mxu0 0.0
        %6003 = vmatpush1.msra.mxu0 0.0
        %6004 = vmatprep.mubr.f32.mxu0 0.0
        %6005 = vmatmul.mubr.f32.gmra.mrb[0].mxu0 %v5887
        %v6006 = vpop.f32.mrb[0].mxu0
        %v6007 = vadd.f32 0.0, %v6006
        %v6008 = vpop.f32.mrb[0].mxu0
        %6009 = vmatprep.mubr.f32.mxu0 0.0
        %6010 = vmatmul.mubr.f32.gmra.mrb[0].mxu0 %v5888
        %v6011 = vpop.f32.mrb[0].mxu0
        %v6012 = vadd.f32 0.0, %v6011
        %v6013 = vpop.f32.mrb[0].mxu0
        %6014 = vmatprep.mubr.f32.mxu0 0.0
        %6015 = vmatmul.mubr.f32.gmra.mrb[0].mxu0 %v5889
        %v6016 = vpop.f32.mrb[0].mxu0
        %v6017 = vadd.f32 0.0, %v6016
        %v6018 = vpop.f32.mrb[0].mxu0
        %6019 = vmatprep.mubr.f32.mxu0 0.0
        %6020 = vmatmul.mubr.f32.gmra.mrb[0].mxu0 %v5890
        %v6021 = vpop.f32.mrb[0].mxu0
        %v6022 = vadd.f32 0.0, %v6021
        %v6023 = vpop.f32.mrb[0].mxu0
        %6024 = vmatprep.mubr.f32.mxu0 0.0
        %6025 = vmatmul.mubr.f32.gmra.mrb[0].mxu0 %v5891
        %v6026 = vpop.f32.mrb[0].mxu0
        %v6027 = vadd.f32 0.0, %v6026
        %v6028 = vpop.f32.mrb[0].mxu0
        %6029 = vmatprep.mubr.f32.mxu0 0.0
        %6030 = vmatmul.mubr.f32.gmra.mrb[0].mxu0 %v5892
        %v6031 = vpop.f32.mrb[0].mxu0
        %v6032 = vadd.f32 0.0, %v6031
        %v6033 = vpop.f32.mrb[0].mxu0
        %6034 = vmatprep.mubr.f32.mxu0 0.0
        %6035 = vmatmul.mubr.f32.gmra.mrb[0].mxu0 %v5893
        %v6036 = vpop.f32.mrb[0].mxu0
        %v6037 = vadd.f32 0.0, %v6036
        %v6038 = vpop.f32.mrb[0].mxu0
        %6039 = vmatprep.mubr.f32.mxu0 0.0
        %6040 = vmatmul.mubr.f32.gmra.mrb[0].mxu0 %v5894
        %v6041 = vpop.f32.mrb[0].mxu0
        %v6042 = vadd.f32 0.0, %v6041
        %v6043 = vpop.f32.mrb[0].mxu0
        %6044 = vmatprep.mubr.f32.mxu0 0.0
        %6045 = vmatmul.mubr.f32.gmra.mrb[0].mxu0 %v5895
        %v6046 = vpop.f32.mrb[0].mxu0
        %v6047 = vadd.f32 0.0, %v6046
        %v6048 = vpop.f32.mrb[0].mxu0
        %6049 = vmatprep.mubr.f32.mxu0 0.0
        %6050 = vmatmul.mubr.f32.gmra.mrb[0].mxu0 %v5896
        %v6051 = vpop.f32.mrb[0].mxu0
        %v6052 = vadd.f32 0.0, %v6051
        %v6053 = vpop.f32.mrb[0].mxu0
        %6054 = vmatprep.mubr.f32.mxu0 0.0
        %6055 = vmatmul.mubr.f32.gmra.mrb[0].mxu0 %v5897
        %v6056 = vpop.f32.mrb[0].mxu0
        %v6057 = vadd.f32 0.0, %v6056
        %v6058 = vpop.f32.mrb[0].mxu0
        %6059 = vmatprep.mubr.f32.mxu0 0.0
        %6060 = vmatmul.mubr.f32.gmra.mrb[0].mxu0 %v5898
        %v6061 = vpop.f32.mrb[0].mxu0
        %v6062 = vadd.f32 0.0, %v6061
        %v6063 = vpop.f32.mrb[0].mxu0
        %6064 = vmatprep.mubr.f32.mxu0 0.0
        %6065 = vmatmul.mubr.f32.gmra.mrb[0].mxu0 %v5899
        %v6066 = vpop.f32.mrb[0].mxu0
        %v6067 = vadd.f32 0.0, %v6066
        %v6068 = vpop.f32.mrb[0].mxu0
        %6069 = vmatprep.mubr.f32.mxu0 0.0
        %6070 = vmatmul.mubr.f32.gmra.mrb[0].mxu0 %v5900
        %v6071 = vpop.f32.mrb[0].mxu0
        %v6072 = vadd.f32 0.0, %v6071
        %v6073 = vpop.f32.mrb[0].mxu0
        %6074 = vmatprep.mubr.f32.mxu0 0.0
        %6075 = vmatmul.mubr.f32.gmra.mrb[0].mxu0 %v5901
        %v6076 = vpop.f32.mrb[0].mxu0
        %v6077 = vadd.f32 0.0, %v6076
        %v6078 = vpop.f32.mrb[0].mxu0
        %6079 = vmatprep.mubr.f32.mxu0 0.0
        %6080 = vmatmul.mubr.f32.gmra.mrb[0].mxu0 %v5902
        %v6081 = vpop.f32.mrb[0].mxu0
        %v6082 = vadd.f32 0.0, %v6081
        %v6083 = vpop.f32.mrb[0].mxu0
        %6084 = vmatprep.mubr.f32.mxu0 0.0
        %6085 = vmatmul.mubr.f32.gmra.mrb[0].mxu0 %v5903
        %v6086 = vpop.f32.mrb[0].mxu0
        %v6087 = vadd.f32 0.0, %v6086
        %v6088 = vpop.f32.mrb[0].mxu0
        %6089 = vmatprep.mubr.f32.mxu0 0.0
        %6090 = vmatmul.mubr.f32.gmra.mrb[0].mxu0 %v5904
        %v6091 = vpop.f32.mrb[0].mxu0
        %v6092 = vadd.f32 0.0, %v6091
        %v6093 = vpop.f32.mrb[0].mxu0
        %6094 = vmatprep.mubr.f32.mxu0 0.0
        %6095 = vmatmul.mubr.f32.gmra.mrb[0].mxu0 %v5905
        %v6096 = vpop.f32.mrb[0].mxu0
        %v6097 = vadd.f32 0.0, %v6096
        %v6098 = vpop.f32.mrb[0].mxu0
        %6099 = vmatprep.mubr.f32.mxu0 0.0
        %6100 = vmatmul.mubr.f32.gmra.mrb[0].mxu0 %v5906
        %v6101 = vpop.f32.mrb[0].mxu0
        %v6102 = vadd.f32 0.0, %v6101
        %v6103 = vpop.f32.mrb[0].mxu0
        %6104 = vmatprep.mubr.f32.mxu0 0.0
        %6105 = vmatmul.mubr.f32.gmra.mrb[0].mxu0 %v5907
        %v6106 = vpop.f32.mrb[0].mxu0
        %v6107 = vadd.f32 0.0, %v6106
        %v6108 = vpop.f32.mrb[0].mxu0
        %6109 = vmatprep.mubr.f32.mxu0 0.0
        %6110 = vmatmul.mubr.f32.gmra.mrb[0].mxu0 %v5908
        %v6111 = vpop.f32.mrb[0].mxu0
        %v6112 = vadd.f32 0.0, %v6111
        %v6113 = vpop.f32.mrb[0].mxu0
        %6114 = vmatprep.mubr.f32.mxu0 0.0
        %6115 = vmatmul.mubr.f32.gmra.mrb[0].mxu0 %v5909
        %v6116 = vpop.f32.mrb[0].mxu0
        %v6117 = vadd.f32 0.0, %v6116
        %v6118 = vpop.f32.mrb[0].mxu0
        %6119 = vmatprep.mubr.f32.mxu0 0.0
        %6120 = vmatmul.mubr.f32.gmra.mrb[0].mxu0 %v5910
        %v6121 = vpop.f32.mrb[0].mxu0
        %v6122 = vadd.f32 0.0, %v6121
        %v6123 = vpop.f32.mrb[0].mxu0
        %6124 = vmatprep.mubr.f32.mxu0 0.0
        %6125 = vmatmul.mubr.f32.gmra.mrb[0].mxu0 %v5911
        %v6126 = vpop.f32.mrb[0].mxu0
        %v6127 = vadd.f32 0.0, %v6126
        %v6128 = vpop.f32.mrb[0].mxu0
        %6129 = vmatprep.mubr.f32.mxu0 0.0
        %6130 = vmatmul.mubr.f32.gmra.mrb[0].mxu0 %v5912
        %v6131 = vpop.f32.mrb[0].mxu0
        %v6132 = vadd.f32 0.0, %v6131
        %v6133 = vpop.f32.mrb[0].mxu0
        %6134 = vmatprep.mubr.f32.mxu0 0.0
        %6135 = vmatmul.mubr.f32.gmra.mrb[0].mxu0 %v5913
        %v6136 = vpop.f32.mrb[0].mxu0
        %v6137 = vadd.f32 0.0, %v6136
        %v6138 = vpop.f32.mrb[0].mxu0
        %6139 = vmatprep.mubr.f32.mxu0 0.0
        %6140 = vmatmul.mubr.f32.gmra.mrb[0].mxu0 %v5914
        %v6141 = vpop.f32.mrb[0].mxu0
        %v6142 = vadd.f32 0.0, %v6141
        %v6143 = vpop.f32.mrb[0].mxu0
        %6144 = vmatprep.mubr.f32.mxu0 0.0
        %6145 = vmatmul.mubr.f32.gmra.mrb[0].mxu0 %v5915
        %v6146 = vpop.f32.mrb[0].mxu0
        %v6147 = vadd.f32 0.0, %v6146
        %v6148 = vpop.f32.mrb[0].mxu0
        %6149 = vmatprep.mubr.f32.mxu0 0.0
        %6150 = vmatmul.mubr.f32.gmra.mrb[0].mxu0 %v5916
        %v6151 = vpop.f32.mrb[0].mxu0
        %v6152 = vadd.f32 0.0, %v6151
        %v6153 = vpop.f32.mrb[0].mxu0
        %6154 = vmatprep.mubr.f32.mxu0 0.0
        %6155 = vmatmul.mubr.f32.gmra.mrb[0].mxu0 %v5917
        %v6156 = vpop.f32.mrb[0].mxu0
        %v6157 = vadd.f32 0.0, %v6156
        %v6158 = vpop.f32.mrb[0].mxu0
        %6159 = vmatprep.mubr.f32.mxu0 0.0
        %6160 = vmatmul.mubr.f32.gmra.mrb[0].mxu0 %v5918
        %v6161 = vpop.f32.mrb[0].mxu0
        %v6162 = vadd.f32 0.0, %v6161
        %v6163 = vpop.f32.mrb[0].mxu0
        %6164 = vmatprep.mubr.f32.mxu0 0.0
        %6165 = vmatmul.mubr.f32.gmra.mrb[0].mxu0 %v5919
        %v6166 = vpop.f32.mrb[0].mxu0
        %v6167 = vadd.f32 0.0, %v6166
        %v6168 = vpop.f32.mrb[0].mxu0
        %6169 = vmatprep.mubr.f32.mxu0 0.0
        %6170 = vmatmul.mubr.f32.gmra.mrb[0].mxu0 %v5920
        %v6171 = vpop.f32.mrb[0].mxu0
        %v6172 = vadd.f32 0.0, %v6171
        %v6173 = vpop.f32.mrb[0].mxu0
        %6174 = vmatprep.mubr.f32.mxu0 0.0
        %6175 = vmatmul.mubr.f32.gmra.mrb[0].mxu0 %v5921
        %v6176 = vpop.f32.mrb[0].mxu0
        %v6177 = vadd.f32 0.0, %v6176
        %v6178 = vpop.f32.mrb[0].mxu0
        %6179 = vmatprep.mubr.f32.mxu0 0.0
        %6180 = vmatmul.mubr.f32.gmra.mrb[0].mxu0 %v5922
        %v6181 = vpop.f32.mrb[0].mxu0
        %v6182 = vadd.f32 0.0, %v6181
        %v6183 = vpop.f32.mrb[0].mxu0
        %6184 = vdwg.mxu0
        %v6185 = vadd.f32 %v5851, %v6007
        %v6186 = vadd.f32 %v5852, %v6012
        %v6187 = vadd.f32 %v5853, %v6017
        %v6188 = vadd.f32 %v5854, %v6022
        %v6189 = vadd.f32 %v5855, %v6027
        %v6190 = vadd.f32 %v5856, %v6032
        %v6191 = vadd.f32 %v5857, %v6037
        %v6192 = vadd.f32 %v5858, %v6042
        %v6193 = vadd.f32 %v5859, %v6047
        %v6194 = vadd.f32 %v5860, %v6052
        %v6195 = vadd.f32 %v5861, %v6057
        %v6196 = vadd.f32 %v5862, %v6062
        %v6197 = vadd.f32 %v5863, %v6067
        %v6198 = vadd.f32 %v5864, %v6072
        %v6199 = vadd.f32 %v5865, %v6077
        %v6200 = vadd.f32 %v5866, %v6082
        %v6201 = vadd.f32 %v5867, %v6087
        %v6202 = vadd.f32 %v5868, %v6092
        %v6203 = vadd.f32 %v5869, %v6097
        %v6204 = vadd.f32 %v5870, %v6102
        %v6205 = vadd.f32 %v5871, %v6107
        %v6206 = vadd.f32 %v5872, %v6112
        %v6207 = vadd.f32 %v5873, %v6117
        %v6208 = vadd.f32 %v5874, %v6122
        %v6209 = vadd.f32 %v5875, %v6127
        %v6210 = vadd.f32 %v5876, %v6132
        %v6211 = vadd.f32 %v5877, %v6137
        %v6212 = vadd.f32 %v5878, %v6142
        %v6213 = vadd.f32 %v5879, %v6147
        %v6214 = vadd.f32 %v5880, %v6152
        %v6215 = vadd.f32 %v5881, %v6157
        %v6216 = vadd.f32 %v5882, %v6162
        %v6217 = vadd.f32 %v5883, %v6167
        %v6218 = vadd.f32 %v5884, %v6172
        %v6219 = vadd.f32 %v5885, %v6177
        %v6220 = vadd.f32 %v5886, %v6182
        %v6221 = vld [vmem:[#allocation2 + $0x25] sm:$0xff]
        %v6222 = vld [vmem:[#allocation2 + $0x2d] sm:$0xff]
        %v6223 = vld [vmem:[#allocation2 + $0x35] sm:$0xff]
        %v6224 = vld [vmem:[#allocation2 + $0x3d] sm:$0xff]
        %v6225 = vld [vmem:[#allocation2 + $0x45] sm:$0xff]
        %v6226 = vld [vmem:[#allocation2 + $0x4d] sm:$0xff]
        %v6227 = vld [vmem:[#allocation2 + $0x55] sm:$0xff]
        %v6228 = vld [vmem:[#allocation2 + $0x5d] sm:$0xff]
        %v6229 = vld [vmem:[#allocation2 + $0x65] sm:$0xff]
        %v6230 = vld [vmem:[#allocation2 + $0x6d] sm:$0xff]
        %v6231 = vld [vmem:[#allocation2 + $0x75] sm:$0xff]
        %v6232 = vld [vmem:[#allocation2 + $0x7d] sm:$0xff]
        %v6233 = vld [vmem:[#allocation2 + $0x85] sm:$0xff]
        %v6234 = vld [vmem:[#allocation2 + $0x8d] sm:$0xff]
        %v6235 = vld [vmem:[#allocation2 + $0x95] sm:$0xff]
        %v6236 = vld [vmem:[#allocation2 + $0x9d] sm:$0xff]
        %v6237 = vld [vmem:[#allocation2 + $0xa5] sm:$0xff]
        %v6238 = vld [vmem:[#allocation2 + $0xad] sm:$0xff]
        %v6239 = vld [vmem:[#allocation2 + $0xb5] sm:$0xff]
        %v6240 = vld [vmem:[#allocation2 + $0xbd] sm:$0xff]
        %v6241 = vld [vmem:[#allocation2 + $0xc5] sm:$0xff]
        %v6242 = vld [vmem:[#allocation2 + $0xcd] sm:$0xff]
        %v6243 = vld [vmem:[#allocation2 + $0xd5] sm:$0xff]
        %v6244 = vld [vmem:[#allocation2 + $0xdd] sm:$0xff]
        %v6245 = vld [vmem:[#allocation2 + $0xe5] sm:$0xff]
        %v6246 = vld [vmem:[#allocation2 + $0xed] sm:$0xff]
        %v6247 = vld [vmem:[#allocation2 + $0xf5] sm:$0xff]
        %v6248 = vld [vmem:[#allocation2 + $0xfd] sm:$0xff]
        %v6249 = vld [vmem:[#allocation2 + $0x105] sm:$0xff]
        %v6250 = vld [vmem:[#allocation2 + $0x10d] sm:$0xff]
        %v6251 = vld [vmem:[#allocation2 + $0x115] sm:$0xff]
        %v6252 = vld [vmem:[#allocation2 + $0x11d] sm:$0xff]
        %v6253 = vld [vmem:[#allocation2 + $0x125] sm:$0xff]
        %v6254 = vld [vmem:[#allocation2 + $0x12d] sm:$0xff]
        %v6255 = vld [vmem:[#allocation2 + $0x135] sm:$0xff]
        %v6256 = vld [vmem:[#allocation2 + $0x13d] sm:$0xff]
        %s6257 = scalar_lea.vmem %s8, 640
        %v6258 = vld [vmem:[%s6257] sm:$0xff]
        %v6259 = vld [vmem:[%s6257 + $0x8] sm:$0xff]
        %v6260 = vld [vmem:[%s6257 + $0x10] sm:$0xff]
        %v6261 = vld [vmem:[%s6257 + $0x18] sm:$0xff]
        %v6262 = vld [vmem:[%s6257 + $0x20] sm:$0xff]
        %v6263 = vld [vmem:[%s6257 + $0x28] sm:$0xff]
        %v6264 = vld [vmem:[%s6257 + $0x30] sm:$0xff]
        %v6265 = vld [vmem:[%s6257 + $0x38] sm:$0xff]
        %v6266 = vld [vmem:[%s6257 + $0x40] sm:$0xff]
        %v6267 = vld [vmem:[%s6257 + $0x48] sm:$0xff]
        %v6268 = vld [vmem:[%s6257 + $0x50] sm:$0xff]
        %v6269 = vld [vmem:[%s6257 + $0x58] sm:$0xff]
        %v6270 = vld [vmem:[%s6257 + $0x60] sm:$0xff]
        %v6271 = vld [vmem:[%s6257 + $0x68] sm:$0xff]
        %v6272 = vld [vmem:[%s6257 + $0x70] sm:$0xff]
        %v6273 = vld [vmem:[%s6257 + $0x78] sm:$0xff]
        %6274 = vmatprep.subr.mxu0 0.0
        %6275 = vmatpush1.msra.mxu0 %v6258
        %6276 = vmatprep.subr.mxu0 0.0
        %6277 = vmatpush1.msra.mxu0 %v6259
        %6278 = vmatprep.subr.mxu0 0.0
        %6279 = vmatpush1.msra.mxu0 %v6260
        %6280 = vmatprep.subr.mxu0 0.0
        %6281 = vmatpush1.msra.mxu0 %v6261
        %6282 = vmatprep.subr.mxu0 0.0
        %6283 = vmatpush1.msra.mxu0 %v6262
        %6284 = vmatprep.subr.mxu0 0.0
        %6285 = vmatpush1.msra.mxu0 %v6263
        %6286 = vmatprep.subr.mxu0 0.0
        %6287 = vmatpush1.msra.mxu0 %v6264
        %6288 = vmatprep.subr.mxu0 0.0
        %6289 = vmatpush1.msra.mxu0 %v6265
        %6290 = vmatprep.subr.mxu0 0.0
        %6291 = vmatpush1.msra.mxu0 %v6266
        %6292 = vmatprep.subr.mxu0 0.0
        %6293 = vmatpush1.msra.mxu0 %v6267
        %6294 = vmatprep.subr.mxu0 0.0
        %6295 = vmatpush1.msra.mxu0 %v6268
        %6296 = vmatprep.subr.mxu0 0.0
        %6297 = vmatpush1.msra.mxu0 %v6269
        %6298 = vmatprep.subr.mxu0 0.0
        %6299 = vmatpush1.msra.mxu0 %v6270
        %6300 = vmatprep.subr.mxu0 0.0
        %6301 = vmatpush1.msra.mxu0 %v6271
        %6302 = vmatprep.subr.mxu0 0.0
        %6303 = vmatpush1.msra.mxu0 %v6272
        %6304 = vmatprep.subr.mxu0 0.0
        %6305 = vmatpush1.msra.mxu0 %v6273
        %6306 = vmatprep.subr.mxu0 0.0
        %6307 = vmatpush1.msra.mxu0 0.0
        %6308 = vmatprep.subr.mxu0 0.0
        %6309 = vmatpush1.msra.mxu0 0.0
        %6310 = vmatprep.subr.mxu0 0.0
        %6311 = vmatpush1.msra.mxu0 0.0
        %6312 = vmatprep.subr.mxu0 0.0
        %6313 = vmatpush1.msra.mxu0 0.0
        %6314 = vmatprep.subr.mxu0 0.0
        %6315 = vmatpush1.msra.mxu0 0.0
        %6316 = vmatprep.subr.mxu0 0.0
        %6317 = vmatpush1.msra.mxu0 0.0
        %6318 = vmatprep.subr.mxu0 0.0
        %6319 = vmatpush1.msra.mxu0 0.0
        %6320 = vmatprep.subr.mxu0 0.0
        %6321 = vmatpush1.msra.mxu0 0.0
        %6322 = vmatprep.subr.mxu0 0.0
        %6323 = vmatpush1.msra.mxu0 0.0
        %6324 = vmatprep.subr.mxu0 0.0
        %6325 = vmatpush1.msra.mxu0 0.0
        %6326 = vmatprep.subr.mxu0 0.0
        %6327 = vmatpush1.msra.mxu0 0.0
        %6328 = vmatprep.subr.mxu0 0.0
        %6329 = vmatpush1.msra.mxu0 0.0
        %6330 = vmatprep.subr.mxu0 0.0
        %6331 = vmatpush1.msra.mxu0 0.0
        %6332 = vmatprep.subr.mxu0 0.0
        %6333 = vmatpush1.msra.mxu0 0.0
        %6334 = vmatprep.subr.mxu0 0.0
        %6335 = vmatpush1.msra.mxu0 0.0
        %6336 = vmatprep.subr.mxu0 0.0
        %6337 = vmatpush1.msra.mxu0 0.0
        %6338 = vmatprep.mubr.f32.mxu0 0.0
        %6339 = vmatmul.mubr.f32.gmra.mrb[0].mxu0 %v6221
        %v6340 = vpop.f32.mrb[0].mxu0
        %v6341 = vadd.f32 0.0, %v6340
        %v6342 = vpop.f32.mrb[0].mxu0
        %6343 = vmatprep.mubr.f32.mxu0 0.0
        %6344 = vmatmul.mubr.f32.gmra.mrb[0].mxu0 %v6222
        %v6345 = vpop.f32.mrb[0].mxu0
        %v6346 = vadd.f32 0.0, %v6345
        %v6347 = vpop.f32.mrb[0].mxu0
        %6348 = vmatprep.mubr.f32.mxu0 0.0
        %6349 = vmatmul.mubr.f32.gmra.mrb[0].mxu0 %v6223
        %v6350 = vpop.f32.mrb[0].mxu0
        %v6351 = vadd.f32 0.0, %v6350
        %v6352 = vpop.f32.mrb[0].mxu0
        %6353 = vmatprep.mubr.f32.mxu0 0.0
        %6354 = vmatmul.mubr.f32.gmra.mrb[0].mxu0 %v6224
        %v6355 = vpop.f32.mrb[0].mxu0
        %v6356 = vadd.f32 0.0, %v6355
        %v6357 = vpop.f32.mrb[0].mxu0
        %6358 = vmatprep.mubr.f32.mxu0 0.0
        %6359 = vmatmul.mubr.f32.gmra.mrb[0].mxu0 %v6225
        %v6360 = vpop.f32.mrb[0].mxu0
        %v6361 = vadd.f32 0.0, %v6360
        %v6362 = vpop.f32.mrb[0].mxu0
        %6363 = vmatprep.mubr.f32.mxu0 0.0
        %6364 = vmatmul.mubr.f32.gmra.mrb[0].mxu0 %v6226
        %v6365 = vpop.f32.mrb[0].mxu0
        %v6366 = vadd.f32 0.0, %v6365
        %v6367 = vpop.f32.mrb[0].mxu0
        %6368 = vmatprep.mubr.f32.mxu0 0.0
        %6369 = vmatmul.mubr.f32.gmra.mrb[0].mxu0 %v6227
        %v6370 = vpop.f32.mrb[0].mxu0
        %v6371 = vadd.f32 0.0, %v6370
        %v6372 = vpop.f32.mrb[0].mxu0
        %6373 = vmatprep.mubr.f32.mxu0 0.0
        %6374 = vmatmul.mubr.f32.gmra.mrb[0].mxu0 %v6228
        %v6375 = vpop.f32.mrb[0].mxu0
        %v6376 = vadd.f32 0.0, %v6375
        %v6377 = vpop.f32.mrb[0].mxu0
        %6378 = vmatprep.mubr.f32.mxu0 0.0
        %6379 = vmatmul.mubr.f32.gmra.mrb[0].mxu0 %v6229
        %v6380 = vpop.f32.mrb[0].mxu0
        %v6381 = vadd.f32 0.0, %v6380
        %v6382 = vpop.f32.mrb[0].mxu0
        %6383 = vmatprep.mubr.f32.mxu0 0.0
        %6384 = vmatmul.mubr.f32.gmra.mrb[0].mxu0 %v6230
        %v6385 = vpop.f32.mrb[0].mxu0
        %v6386 = vadd.f32 0.0, %v6385
        %v6387 = vpop.f32.mrb[0].mxu0
        %6388 = vmatprep.mubr.f32.mxu0 0.0
        %6389 = vmatmul.mubr.f32.gmra.mrb[0].mxu0 %v6231
        %v6390 = vpop.f32.mrb[0].mxu0
        %v6391 = vadd.f32 0.0, %v6390
        %v6392 = vpop.f32.mrb[0].mxu0
        %6393 = vmatprep.mubr.f32.mxu0 0.0
        %6394 = vmatmul.mubr.f32.gmra.mrb[0].mxu0 %v6232
        %v6395 = vpop.f32.mrb[0].mxu0
        %v6396 = vadd.f32 0.0, %v6395
        %v6397 = vpop.f32.mrb[0].mxu0
        %6398 = vmatprep.mubr.f32.mxu0 0.0
        %6399 = vmatmul.mubr.f32.gmra.mrb[0].mxu0 %v6233
        %v6400 = vpop.f32.mrb[0].mxu0
        %v6401 = vadd.f32 0.0, %v6400
        %v6402 = vpop.f32.mrb[0].mxu0
        %6403 = vmatprep.mubr.f32.mxu0 0.0
        %6404 = vmatmul.mubr.f32.gmra.mrb[0].mxu0 %v6234
        %v6405 = vpop.f32.mrb[0].mxu0
        %v6406 = vadd.f32 0.0, %v6405
        %v6407 = vpop.f32.mrb[0].mxu0
        %6408 = vmatprep.mubr.f32.mxu0 0.0
        %6409 = vmatmul.mubr.f32.gmra.mrb[0].mxu0 %v6235
        %v6410 = vpop.f32.mrb[0].mxu0
        %v6411 = vadd.f32 0.0, %v6410
        %v6412 = vpop.f32.mrb[0].mxu0
        %6413 = vmatprep.mubr.f32.mxu0 0.0
        %6414 = vmatmul.mubr.f32.gmra.mrb[0].mxu0 %v6236
        %v6415 = vpop.f32.mrb[0].mxu0
        %v6416 = vadd.f32 0.0, %v6415
        %v6417 = vpop.f32.mrb[0].mxu0
        %6418 = vmatprep.mubr.f32.mxu0 0.0
        %6419 = vmatmul.mubr.f32.gmra.mrb[0].mxu0 %v6237
        %v6420 = vpop.f32.mrb[0].mxu0
        %v6421 = vadd.f32 0.0, %v6420
        %v6422 = vpop.f32.mrb[0].mxu0
        %6423 = vmatprep.mubr.f32.mxu0 0.0
        %6424 = vmatmul.mubr.f32.gmra.mrb[0].mxu0 %v6238
        %v6425 = vpop.f32.mrb[0].mxu0
        %v6426 = vadd.f32 0.0, %v6425
        %v6427 = vpop.f32.mrb[0].mxu0
        %6428 = vmatprep.mubr.f32.mxu0 0.0
        %6429 = vmatmul.mubr.f32.gmra.mrb[0].mxu0 %v6239
        %v6430 = vpop.f32.mrb[0].mxu0
        %v6431 = vadd.f32 0.0, %v6430
        %v6432 = vpop.f32.mrb[0].mxu0
        %6433 = vmatprep.mubr.f32.mxu0 0.0
        %6434 = vmatmul.mubr.f32.gmra.mrb[0].mxu0 %v6240
        %v6435 = vpop.f32.mrb[0].mxu0
        %v6436 = vadd.f32 0.0, %v6435
        %v6437 = vpop.f32.mrb[0].mxu0
        %6438 = vmatprep.mubr.f32.mxu0 0.0
        %6439 = vmatmul.mubr.f32.gmra.mrb[0].mxu0 %v6241
        %v6440 = vpop.f32.mrb[0].mxu0
        %v6441 = vadd.f32 0.0, %v6440
        %v6442 = vpop.f32.mrb[0].mxu0
        %6443 = vmatprep.mubr.f32.mxu0 0.0
        %6444 = vmatmul.mubr.f32.gmra.mrb[0].mxu0 %v6242
        %v6445 = vpop.f32.mrb[0].mxu0
        %v6446 = vadd.f32 0.0, %v6445
        %v6447 = vpop.f32.mrb[0].mxu0
        %6448 = vmatprep.mubr.f32.mxu0 0.0
        %6449 = vmatmul.mubr.f32.gmra.mrb[0].mxu0 %v6243
        %v6450 = vpop.f32.mrb[0].mxu0
        %v6451 = vadd.f32 0.0, %v6450
        %v6452 = vpop.f32.mrb[0].mxu0
        %6453 = vmatprep.mubr.f32.mxu0 0.0
        %6454 = vmatmul.mubr.f32.gmra.mrb[0].mxu0 %v6244
        %v6455 = vpop.f32.mrb[0].mxu0
        %v6456 = vadd.f32 0.0, %v6455
        %v6457 = vpop.f32.mrb[0].mxu0
        %6458 = vmatprep.mubr.f32.mxu0 0.0
        %6459 = vmatmul.mubr.f32.gmra.mrb[0].mxu0 %v6245
        %v6460 = vpop.f32.mrb[0].mxu0
        %v6461 = vadd.f32 0.0, %v6460
        %v6462 = vpop.f32.mrb[0].mxu0
        %6463 = vmatprep.mubr.f32.mxu0 0.0
        %6464 = vmatmul.mubr.f32.gmra.mrb[0].mxu0 %v6246
        %v6465 = vpop.f32.mrb[0].mxu0
        %v6466 = vadd.f32 0.0, %v6465
        %v6467 = vpop.f32.mrb[0].mxu0
        %6468 = vmatprep.mubr.f32.mxu0 0.0
        %6469 = vmatmul.mubr.f32.gmra.mrb[0].mxu0 %v6247
        %v6470 = vpop.f32.mrb[0].mxu0
        %v6471 = vadd.f32 0.0, %v6470
        %v6472 = vpop.f32.mrb[0].mxu0
        %6473 = vmatprep.mubr.f32.mxu0 0.0
        %6474 = vmatmul.mubr.f32.gmra.mrb[0].mxu0 %v6248
        %v6475 = vpop.f32.mrb[0].mxu0
        %v6476 = vadd.f32 0.0, %v6475
        %v6477 = vpop.f32.mrb[0].mxu0
        %6478 = vmatprep.mubr.f32.mxu0 0.0
        %6479 = vmatmul.mubr.f32.gmra.mrb[0].mxu0 %v6249
        %v6480 = vpop.f32.mrb[0].mxu0
        %v6481 = vadd.f32 0.0, %v6480
        %v6482 = vpop.f32.mrb[0].mxu0
        %6483 = vmatprep.mubr.f32.mxu0 0.0
        %6484 = vmatmul.mubr.f32.gmra.mrb[0].mxu0 %v6250
        %v6485 = vpop.f32.mrb[0].mxu0
        %v6486 = vadd.f32 0.0, %v6485
        %v6487 = vpop.f32.mrb[0].mxu0
        %6488 = vmatprep.mubr.f32.mxu0 0.0
        %6489 = vmatmul.mubr.f32.gmra.mrb[0].mxu0 %v6251
        %v6490 = vpop.f32.mrb[0].mxu0
        %v6491 = vadd.f32 0.0, %v6490
        %v6492 = vpop.f32.mrb[0].mxu0
        %6493 = vmatprep.mubr.f32.mxu0 0.0
        %6494 = vmatmul.mubr.f32.gmra.mrb[0].mxu0 %v6252
        %v6495 = vpop.f32.mrb[0].mxu0
        %v6496 = vadd.f32 0.0, %v6495
        %v6497 = vpop.f32.mrb[0].mxu0
        %6498 = vmatprep.mubr.f32.mxu0 0.0
        %6499 = vmatmul.mubr.f32.gmra.mrb[0].mxu0 %v6253
        %v6500 = vpop.f32.mrb[0].mxu0
        %v6501 = vadd.f32 0.0, %v6500
        %v6502 = vpop.f32.mrb[0].mxu0
        %6503 = vmatprep.mubr.f32.mxu0 0.0
        %6504 = vmatmul.mubr.f32.gmra.mrb[0].mxu0 %v6254
        %v6505 = vpop.f32.mrb[0].mxu0
        %v6506 = vadd.f32 0.0, %v6505
        %v6507 = vpop.f32.mrb[0].mxu0
        %6508 = vmatprep.mubr.f32.mxu0 0.0
        %6509 = vmatmul.mubr.f32.gmra.mrb[0].mxu0 %v6255
        %v6510 = vpop.f32.mrb[0].mxu0
        %v6511 = vadd.f32 0.0, %v6510
        %v6512 = vpop.f32.mrb[0].mxu0
        %6513 = vmatprep.mubr.f32.mxu0 0.0
        %6514 = vmatmul.mubr.f32.gmra.mrb[0].mxu0 %v6256
        %v6515 = vpop.f32.mrb[0].mxu0
        %v6516 = vadd.f32 0.0, %v6515
        %v6517 = vpop.f32.mrb[0].mxu0
        %6518 = vdwg.mxu0
        %v6519 = vadd.f32 %v6185, %v6341
        %v6520 = vadd.f32 %v6186, %v6346
        %v6521 = vadd.f32 %v6187, %v6351
        %v6522 = vadd.f32 %v6188, %v6356
        %v6523 = vadd.f32 %v6189, %v6361
        %v6524 = vadd.f32 %v6190, %v6366
        %v6525 = vadd.f32 %v6191, %v6371
        %v6526 = vadd.f32 %v6192, %v6376
        %v6527 = vadd.f32 %v6193, %v6381
        %v6528 = vadd.f32 %v6194, %v6386
        %v6529 = vadd.f32 %v6195, %v6391
        %v6530 = vadd.f32 %v6196, %v6396
        %v6531 = vadd.f32 %v6197, %v6401
        %v6532 = vadd.f32 %v6198, %v6406
        %v6533 = vadd.f32 %v6199, %v6411
        %v6534 = vadd.f32 %v6200, %v6416
        %v6535 = vadd.f32 %v6201, %v6421
        %v6536 = vadd.f32 %v6202, %v6426
        %v6537 = vadd.f32 %v6203, %v6431
        %v6538 = vadd.f32 %v6204, %v6436
        %v6539 = vadd.f32 %v6205, %v6441
        %v6540 = vadd.f32 %v6206, %v6446
        %v6541 = vadd.f32 %v6207, %v6451
        %v6542 = vadd.f32 %v6208, %v6456
        %v6543 = vadd.f32 %v6209, %v6461
        %v6544 = vadd.f32 %v6210, %v6466
        %v6545 = vadd.f32 %v6211, %v6471
        %v6546 = vadd.f32 %v6212, %v6476
        %v6547 = vadd.f32 %v6213, %v6481
        %v6548 = vadd.f32 %v6214, %v6486
        %v6549 = vadd.f32 %v6215, %v6491
        %v6550 = vadd.f32 %v6216, %v6496
        %v6551 = vadd.f32 %v6217, %v6501
        %v6552 = vadd.f32 %v6218, %v6506
        %v6553 = vadd.f32 %v6219, %v6511
        %v6554 = vadd.f32 %v6220, %v6516
        %v6555 = vld [vmem:[#allocation2 + $0x35] sm:$0xff]
        %v6556 = vld [vmem:[#allocation2 + $0x3d] sm:$0xff]
        %v6557 = vld [vmem:[#allocation2 + $0x45] sm:$0xff]
        %v6558 = vld [vmem:[#allocation2 + $0x4d] sm:$0xff]
        %v6559 = vld [vmem:[#allocation2 + $0x55] sm:$0xff]
        %v6560 = vld [vmem:[#allocation2 + $0x5d] sm:$0xff]
        %v6561 = vld [vmem:[#allocation2 + $0x65] sm:$0xff]
        %v6562 = vld [vmem:[#allocation2 + $0x6d] sm:$0xff]
        %v6563 = vld [vmem:[#allocation2 + $0x75] sm:$0xff]
        %v6564 = vld [vmem:[#allocation2 + $0x7d] sm:$0xff]
        %v6565 = vld [vmem:[#allocation2 + $0x85] sm:$0xff]
        %v6566 = vld [vmem:[#allocation2 + $0x8d] sm:$0xff]
        %v6567 = vld [vmem:[#allocation2 + $0x95] sm:$0xff]
        %v6568 = vld [vmem:[#allocation2 + $0x9d] sm:$0xff]
        %v6569 = vld [vmem:[#allocation2 + $0xa5] sm:$0xff]
        %v6570 = vld [vmem:[#allocation2 + $0xad] sm:$0xff]
        %v6571 = vld [vmem:[#allocation2 + $0xb5] sm:$0xff]
        %v6572 = vld [vmem:[#allocation2 + $0xbd] sm:$0xff]
        %v6573 = vld [vmem:[#allocation2 + $0xc5] sm:$0xff]
        %v6574 = vld [vmem:[#allocation2 + $0xcd] sm:$0xff]
        %v6575 = vld [vmem:[#allocation2 + $0xd5] sm:$0xff]
        %v6576 = vld [vmem:[#allocation2 + $0xdd] sm:$0xff]
        %v6577 = vld [vmem:[#allocation2 + $0xe5] sm:$0xff]
        %v6578 = vld [vmem:[#allocation2 + $0xed] sm:$0xff]
        %v6579 = vld [vmem:[#allocation2 + $0xf5] sm:$0xff]
        %v6580 = vld [vmem:[#allocation2 + $0xfd] sm:$0xff]
        %v6581 = vld [vmem:[#allocation2 + $0x105] sm:$0xff]
        %v6582 = vld [vmem:[#allocation2 + $0x10d] sm:$0xff]
        %v6583 = vld [vmem:[#allocation2 + $0x115] sm:$0xff]
        %v6584 = vld [vmem:[#allocation2 + $0x11d] sm:$0xff]
        %v6585 = vld [vmem:[#allocation2 + $0x125] sm:$0xff]
        %v6586 = vld [vmem:[#allocation2 + $0x12d] sm:$0xff]
        %v6587 = vld [vmem:[#allocation2 + $0x135] sm:$0xff]
        %v6588 = vld [vmem:[#allocation2 + $0x13d] sm:$0xff]
        %v6589 = vld [vmem:[#allocation2 + $0x145] sm:$0xff]
        %v6590 = vld [vmem:[#allocation2 + $0x14d] sm:$0xff]
        %s6591 = scalar_lea.vmem %s8, 768
        %v6592 = vld [vmem:[%s6591] sm:$0xff]
        %v6593 = vld [vmem:[%s6591 + $0x8] sm:$0xff]
        %v6594 = vld [vmem:[%s6591 + $0x10] sm:$0xff]
        %v6595 = vld [vmem:[%s6591 + $0x18] sm:$0xff]
        %v6596 = vld [vmem:[%s6591 + $0x20] sm:$0xff]
        %v6597 = vld [vmem:[%s6591 + $0x28] sm:$0xff]
        %v6598 = vld [vmem:[%s6591 + $0x30] sm:$0xff]
        %v6599 = vld [vmem:[%s6591 + $0x38] sm:$0xff]
        %v6600 = vld [vmem:[%s6591 + $0x40] sm:$0xff]
        %v6601 = vld [vmem:[%s6591 + $0x48] sm:$0xff]
        %v6602 = vld [vmem:[%s6591 + $0x50] sm:$0xff]
        %v6603 = vld [vmem:[%s6591 + $0x58] sm:$0xff]
        %v6604 = vld [vmem:[%s6591 + $0x60] sm:$0xff]
        %v6605 = vld [vmem:[%s6591 + $0x68] sm:$0xff]
        %v6606 = vld [vmem:[%s6591 + $0x70] sm:$0xff]
        %v6607 = vld [vmem:[%s6591 + $0x78] sm:$0xff]
        %6608 = vmatprep.subr.mxu0 0.0
        %6609 = vmatpush1.msra.mxu0 %v6592
        %6610 = vmatprep.subr.mxu0 0.0
        %6611 = vmatpush1.msra.mxu0 %v6593
        %6612 = vmatprep.subr.mxu0 0.0
        %6613 = vmatpush1.msra.mxu0 %v6594
        %6614 = vmatprep.subr.mxu0 0.0
        %6615 = vmatpush1.msra.mxu0 %v6595
        %6616 = vmatprep.subr.mxu0 0.0
        %6617 = vmatpush1.msra.mxu0 %v6596
        %6618 = vmatprep.subr.mxu0 0.0
        %6619 = vmatpush1.msra.mxu0 %v6597
        %6620 = vmatprep.subr.mxu0 0.0
        %6621 = vmatpush1.msra.mxu0 %v6598
        %6622 = vmatprep.subr.mxu0 0.0
        %6623 = vmatpush1.msra.mxu0 %v6599
        %6624 = vmatprep.subr.mxu0 0.0
        %6625 = vmatpush1.msra.mxu0 %v6600
        %6626 = vmatprep.subr.mxu0 0.0
        %6627 = vmatpush1.msra.mxu0 %v6601
        %6628 = vmatprep.subr.mxu0 0.0
        %6629 = vmatpush1.msra.mxu0 %v6602
        %6630 = vmatprep.subr.mxu0 0.0
        %6631 = vmatpush1.msra.mxu0 %v6603
        %6632 = vmatprep.subr.mxu0 0.0
        %6633 = vmatpush1.msra.mxu0 %v6604
        %6634 = vmatprep.subr.mxu0 0.0
        %6635 = vmatpush1.msra.mxu0 %v6605
        %6636 = vmatprep.subr.mxu0 0.0
        %6637 = vmatpush1.msra.mxu0 %v6606
        %6638 = vmatprep.subr.mxu0 0.0
        %6639 = vmatpush1.msra.mxu0 %v6607
        %6640 = vmatprep.subr.mxu0 0.0
        %6641 = vmatpush1.msra.mxu0 0.0
        %6642 = vmatprep.subr.mxu0 0.0
        %6643 = vmatpush1.msra.mxu0 0.0
        %6644 = vmatprep.subr.mxu0 0.0
        %6645 = vmatpush1.msra.mxu0 0.0
        %6646 = vmatprep.subr.mxu0 0.0
        %6647 = vmatpush1.msra.mxu0 0.0
        %6648 = vmatprep.subr.mxu0 0.0
        %6649 = vmatpush1.msra.mxu0 0.0
        %6650 = vmatprep.subr.mxu0 0.0
        %6651 = vmatpush1.msra.mxu0 0.0
        %6652 = vmatprep.subr.mxu0 0.0
        %6653 = vmatpush1.msra.mxu0 0.0
        %6654 = vmatprep.subr.mxu0 0.0
        %6655 = vmatpush1.msra.mxu0 0.0
        %6656 = vmatprep.subr.mxu0 0.0
        %6657 = vmatpush1.msra.mxu0 0.0
        %6658 = vmatprep.subr.mxu0 0.0
        %6659 = vmatpush1.msra.mxu0 0.0
        %6660 = vmatprep.subr.mxu0 0.0
        %6661 = vmatpush1.msra.mxu0 0.0
        %6662 = vmatprep.subr.mxu0 0.0
        %6663 = vmatpush1.msra.mxu0 0.0
        %6664 = vmatprep.subr.mxu0 0.0
        %6665 = vmatpush1.msra.mxu0 0.0
        %6666 = vmatprep.subr.mxu0 0.0
        %6667 = vmatpush1.msra.mxu0 0.0
        %6668 = vmatprep.subr.mxu0 0.0
        %6669 = vmatpush1.msra.mxu0 0.0
        %6670 = vmatprep.subr.mxu0 0.0
        %6671 = vmatpush1.msra.mxu0 0.0
        %6672 = vmatprep.mubr.f32.mxu0 0.0
        %6673 = vmatmul.mubr.f32.gmra.mrb[0].mxu0 %v6555
        %v6674 = vpop.f32.mrb[0].mxu0
        %v6675 = vadd.f32 0.0, %v6674
        %v6676 = vpop.f32.mrb[0].mxu0
        %6677 = vmatprep.mubr.f32.mxu0 0.0
        %6678 = vmatmul.mubr.f32.gmra.mrb[0].mxu0 %v6556
        %v6679 = vpop.f32.mrb[0].mxu0
        %v6680 = vadd.f32 0.0, %v6679
        %v6681 = vpop.f32.mrb[0].mxu0
        %6682 = vmatprep.mubr.f32.mxu0 0.0
        %6683 = vmatmul.mubr.f32.gmra.mrb[0].mxu0 %v6557
        %v6684 = vpop.f32.mrb[0].mxu0
        %v6685 = vadd.f32 0.0, %v6684
        %v6686 = vpop.f32.mrb[0].mxu0
        %6687 = vmatprep.mubr.f32.mxu0 0.0
        %6688 = vmatmul.mubr.f32.gmra.mrb[0].mxu0 %v6558
        %v6689 = vpop.f32.mrb[0].mxu0
        %v6690 = vadd.f32 0.0, %v6689
        %v6691 = vpop.f32.mrb[0].mxu0
        %6692 = vmatprep.mubr.f32.mxu0 0.0
        %6693 = vmatmul.mubr.f32.gmra.mrb[0].mxu0 %v6559
        %v6694 = vpop.f32.mrb[0].mxu0
        %v6695 = vadd.f32 0.0, %v6694
        %v6696 = vpop.f32.mrb[0].mxu0
        %6697 = vmatprep.mubr.f32.mxu0 0.0
        %6698 = vmatmul.mubr.f32.gmra.mrb[0].mxu0 %v6560
        %v6699 = vpop.f32.mrb[0].mxu0
        %v6700 = vadd.f32 0.0, %v6699
        %v6701 = vpop.f32.mrb[0].mxu0
        %6702 = vmatprep.mubr.f32.mxu0 0.0
        %6703 = vmatmul.mubr.f32.gmra.mrb[0].mxu0 %v6561
        %v6704 = vpop.f32.mrb[0].mxu0
        %v6705 = vadd.f32 0.0, %v6704
        %v6706 = vpop.f32.mrb[0].mxu0
        %6707 = vmatprep.mubr.f32.mxu0 0.0
        %6708 = vmatmul.mubr.f32.gmra.mrb[0].mxu0 %v6562
        %v6709 = vpop.f32.mrb[0].mxu0
        %v6710 = vadd.f32 0.0, %v6709
        %v6711 = vpop.f32.mrb[0].mxu0
        %6712 = vmatprep.mubr.f32.mxu0 0.0
        %6713 = vmatmul.mubr.f32.gmra.mrb[0].mxu0 %v6563
        %v6714 = vpop.f32.mrb[0].mxu0
        %v6715 = vadd.f32 0.0, %v6714
        %v6716 = vpop.f32.mrb[0].mxu0
        %6717 = vmatprep.mubr.f32.mxu0 0.0
        %6718 = vmatmul.mubr.f32.gmra.mrb[0].mxu0 %v6564
        %v6719 = vpop.f32.mrb[0].mxu0
        %v6720 = vadd.f32 0.0, %v6719
        %v6721 = vpop.f32.mrb[0].mxu0
        %6722 = vmatprep.mubr.f32.mxu0 0.0
        %6723 = vmatmul.mubr.f32.gmra.mrb[0].mxu0 %v6565
        %v6724 = vpop.f32.mrb[0].mxu0
        %v6725 = vadd.f32 0.0, %v6724
        %v6726 = vpop.f32.mrb[0].mxu0
        %6727 = vmatprep.mubr.f32.mxu0 0.0
        %6728 = vmatmul.mubr.f32.gmra.mrb[0].mxu0 %v6566
        %v6729 = vpop.f32.mrb[0].mxu0
        %v6730 = vadd.f32 0.0, %v6729
        %v6731 = vpop.f32.mrb[0].mxu0
        %6732 = vmatprep.mubr.f32.mxu0 0.0
        %6733 = vmatmul.mubr.f32.gmra.mrb[0].mxu0 %v6567
        %v6734 = vpop.f32.mrb[0].mxu0
        %v6735 = vadd.f32 0.0, %v6734
        %v6736 = vpop.f32.mrb[0].mxu0
        %6737 = vmatprep.mubr.f32.mxu0 0.0
        %6738 = vmatmul.mubr.f32.gmra.mrb[0].mxu0 %v6568
        %v6739 = vpop.f32.mrb[0].mxu0
        %v6740 = vadd.f32 0.0, %v6739
        %v6741 = vpop.f32.mrb[0].mxu0
        %6742 = vmatprep.mubr.f32.mxu0 0.0
        %6743 = vmatmul.mubr.f32.gmra.mrb[0].mxu0 %v6569
        %v6744 = vpop.f32.mrb[0].mxu0
        %v6745 = vadd.f32 0.0, %v6744
        %v6746 = vpop.f32.mrb[0].mxu0
        %6747 = vmatprep.mubr.f32.mxu0 0.0
        %6748 = vmatmul.mubr.f32.gmra.mrb[0].mxu0 %v6570
        %v6749 = vpop.f32.mrb[0].mxu0
        %v6750 = vadd.f32 0.0, %v6749
        %v6751 = vpop.f32.mrb[0].mxu0
        %6752 = vmatprep.mubr.f32.mxu0 0.0
        %6753 = vmatmul.mubr.f32.gmra.mrb[0].mxu0 %v6571
        %v6754 = vpop.f32.mrb[0].mxu0
        %v6755 = vadd.f32 0.0, %v6754
        %v6756 = vpop.f32.mrb[0].mxu0
        %6757 = vmatprep.mubr.f32.mxu0 0.0
        %6758 = vmatmul.mubr.f32.gmra.mrb[0].mxu0 %v6572
        %v6759 = vpop.f32.mrb[0].mxu0
        %v6760 = vadd.f32 0.0, %v6759
        %v6761 = vpop.f32.mrb[0].mxu0
        %6762 = vmatprep.mubr.f32.mxu0 0.0
        %6763 = vmatmul.mubr.f32.gmra.mrb[0].mxu0 %v6573
        %v6764 = vpop.f32.mrb[0].mxu0
        %v6765 = vadd.f32 0.0, %v6764
        %v6766 = vpop.f32.mrb[0].mxu0
        %6767 = vmatprep.mubr.f32.mxu0 0.0
        %6768 = vmatmul.mubr.f32.gmra.mrb[0].mxu0 %v6574
        %v6769 = vpop.f32.mrb[0].mxu0
        %v6770 = vadd.f32 0.0, %v6769
        %v6771 = vpop.f32.mrb[0].mxu0
        %6772 = vmatprep.mubr.f32.mxu0 0.0
        %6773 = vmatmul.mubr.f32.gmra.mrb[0].mxu0 %v6575
        %v6774 = vpop.f32.mrb[0].mxu0
        %v6775 = vadd.f32 0.0, %v6774
        %v6776 = vpop.f32.mrb[0].mxu0
        %6777 = vmatprep.mubr.f32.mxu0 0.0
        %6778 = vmatmul.mubr.f32.gmra.mrb[0].mxu0 %v6576
        %v6779 = vpop.f32.mrb[0].mxu0
        %v6780 = vadd.f32 0.0, %v6779
        %v6781 = vpop.f32.mrb[0].mxu0
        %6782 = vmatprep.mubr.f32.mxu0 0.0
        %6783 = vmatmul.mubr.f32.gmra.mrb[0].mxu0 %v6577
        %v6784 = vpop.f32.mrb[0].mxu0
        %v6785 = vadd.f32 0.0, %v6784
        %v6786 = vpop.f32.mrb[0].mxu0
        %6787 = vmatprep.mubr.f32.mxu0 0.0
        %6788 = vmatmul.mubr.f32.gmra.mrb[0].mxu0 %v6578
        %v6789 = vpop.f32.mrb[0].mxu0
        %v6790 = vadd.f32 0.0, %v6789
        %v6791 = vpop.f32.mrb[0].mxu0
        %6792 = vmatprep.mubr.f32.mxu0 0.0
        %6793 = vmatmul.mubr.f32.gmra.mrb[0].mxu0 %v6579
        %v6794 = vpop.f32.mrb[0].mxu0
        %v6795 = vadd.f32 0.0, %v6794
        %v6796 = vpop.f32.mrb[0].mxu0
        %6797 = vmatprep.mubr.f32.mxu0 0.0
        %6798 = vmatmul.mubr.f32.gmra.mrb[0].mxu0 %v6580
        %v6799 = vpop.f32.mrb[0].mxu0
        %v6800 = vadd.f32 0.0, %v6799
        %v6801 = vpop.f32.mrb[0].mxu0
        %6802 = vmatprep.mubr.f32.mxu0 0.0
        %6803 = vmatmul.mubr.f32.gmra.mrb[0].mxu0 %v6581
        %v6804 = vpop.f32.mrb[0].mxu0
        %v6805 = vadd.f32 0.0, %v6804
        %v6806 = vpop.f32.mrb[0].mxu0
        %6807 = vmatprep.mubr.f32.mxu0 0.0
        %6808 = vmatmul.mubr.f32.gmra.mrb[0].mxu0 %v6582
        %v6809 = vpop.f32.mrb[0].mxu0
        %v6810 = vadd.f32 0.0, %v6809
        %v6811 = vpop.f32.mrb[0].mxu0
        %6812 = vmatprep.mubr.f32.mxu0 0.0
        %6813 = vmatmul.mubr.f32.gmra.mrb[0].mxu0 %v6583
        %v6814 = vpop.f32.mrb[0].mxu0
        %v6815 = vadd.f32 0.0, %v6814
        %v6816 = vpop.f32.mrb[0].mxu0
        %6817 = vmatprep.mubr.f32.mxu0 0.0
        %6818 = vmatmul.mubr.f32.gmra.mrb[0].mxu0 %v6584
        %v6819 = vpop.f32.mrb[0].mxu0
        %v6820 = vadd.f32 0.0, %v6819
        %v6821 = vpop.f32.mrb[0].mxu0
        %6822 = vmatprep.mubr.f32.mxu0 0.0
        %6823 = vmatmul.mubr.f32.gmra.mrb[0].mxu0 %v6585
        %v6824 = vpop.f32.mrb[0].mxu0
        %v6825 = vadd.f32 0.0, %v6824
        %v6826 = vpop.f32.mrb[0].mxu0
        %6827 = vmatprep.mubr.f32.mxu0 0.0
        %6828 = vmatmul.mubr.f32.gmra.mrb[0].mxu0 %v6586
        %v6829 = vpop.f32.mrb[0].mxu0
        %v6830 = vadd.f32 0.0, %v6829
        %v6831 = vpop.f32.mrb[0].mxu0
        %6832 = vmatprep.mubr.f32.mxu0 0.0
        %6833 = vmatmul.mubr.f32.gmra.mrb[0].mxu0 %v6587
        %v6834 = vpop.f32.mrb[0].mxu0
        %v6835 = vadd.f32 0.0, %v6834
        %v6836 = vpop.f32.mrb[0].mxu0
        %6837 = vmatprep.mubr.f32.mxu0 0.0
        %6838 = vmatmul.mubr.f32.gmra.mrb[0].mxu0 %v6588
        %v6839 = vpop.f32.mrb[0].mxu0
        %v6840 = vadd.f32 0.0, %v6839
        %v6841 = vpop.f32.mrb[0].mxu0
        %6842 = vmatprep.mubr.f32.mxu0 0.0
        %6843 = vmatmul.mubr.f32.gmra.mrb[0].mxu0 %v6589
        %v6844 = vpop.f32.mrb[0].mxu0
        %v6845 = vadd.f32 0.0, %v6844
        %v6846 = vpop.f32.mrb[0].mxu0
        %6847 = vmatprep.mubr.f32.mxu0 0.0
        %6848 = vmatmul.mubr.f32.gmra.mrb[0].mxu0 %v6590
        %v6849 = vpop.f32.mrb[0].mxu0
        %v6850 = vadd.f32 0.0, %v6849
        %v6851 = vpop.f32.mrb[0].mxu0
        %6852 = vdwg.mxu0
        %v6853 = vadd.f32 %v6519, %v6675
        %v6854 = vadd.f32 %v6520, %v6680
        %v6855 = vadd.f32 %v6521, %v6685
        %v6856 = vadd.f32 %v6522, %v6690
        %v6857 = vadd.f32 %v6523, %v6695
        %v6858 = vadd.f32 %v6524, %v6700
        %v6859 = vadd.f32 %v6525, %v6705
        %v6860 = vadd.f32 %v6526, %v6710
        %v6861 = vadd.f32 %v6527, %v6715
        %v6862 = vadd.f32 %v6528, %v6720
        %v6863 = vadd.f32 %v6529, %v6725
        %v6864 = vadd.f32 %v6530, %v6730
        %v6865 = vadd.f32 %v6531, %v6735
        %v6866 = vadd.f32 %v6532, %v6740
        %v6867 = vadd.f32 %v6533, %v6745
        %v6868 = vadd.f32 %v6534, %v6750
        %v6869 = vadd.f32 %v6535, %v6755
        %v6870 = vadd.f32 %v6536, %v6760
        %v6871 = vadd.f32 %v6537, %v6765
        %v6872 = vadd.f32 %v6538, %v6770
        %v6873 = vadd.f32 %v6539, %v6775
        %v6874 = vadd.f32 %v6540, %v6780
        %v6875 = vadd.f32 %v6541, %v6785
        %v6876 = vadd.f32 %v6542, %v6790
        %v6877 = vadd.f32 %v6543, %v6795
        %v6878 = vadd.f32 %v6544, %v6800
        %v6879 = vadd.f32 %v6545, %v6805
        %v6880 = vadd.f32 %v6546, %v6810
        %v6881 = vadd.f32 %v6547, %v6815
        %v6882 = vadd.f32 %v6548, %v6820
        %v6883 = vadd.f32 %v6549, %v6825
        %v6884 = vadd.f32 %v6550, %v6830
        %v6885 = vadd.f32 %v6551, %v6835
        %v6886 = vadd.f32 %v6552, %v6840
        %v6887 = vadd.f32 %v6553, %v6845
        %v6888 = vadd.f32 %v6554, %v6850
        %v6889 = vld [vmem:[#allocation2 + $0x36] sm:$0xff]
        %v6890 = vld [vmem:[#allocation2 + $0x3e] sm:$0xff]
        %v6891 = vld [vmem:[#allocation2 + $0x46] sm:$0xff]
        %v6892 = vld [vmem:[#allocation2 + $0x4e] sm:$0xff]
        %v6893 = vld [vmem:[#allocation2 + $0x56] sm:$0xff]
        %v6894 = vld [vmem:[#allocation2 + $0x5e] sm:$0xff]
        %v6895 = vld [vmem:[#allocation2 + $0x66] sm:$0xff]
        %v6896 = vld [vmem:[#allocation2 + $0x6e] sm:$0xff]
        %v6897 = vld [vmem:[#allocation2 + $0x76] sm:$0xff]
        %v6898 = vld [vmem:[#allocation2 + $0x7e] sm:$0xff]
        %v6899 = vld [vmem:[#allocation2 + $0x86] sm:$0xff]
        %v6900 = vld [vmem:[#allocation2 + $0x8e] sm:$0xff]
        %v6901 = vld [vmem:[#allocation2 + $0x96] sm:$0xff]
        %v6902 = vld [vmem:[#allocation2 + $0x9e] sm:$0xff]
        %v6903 = vld [vmem:[#allocation2 + $0xa6] sm:$0xff]
        %v6904 = vld [vmem:[#allocation2 + $0xae] sm:$0xff]
        %v6905 = vld [vmem:[#allocation2 + $0xb6] sm:$0xff]
        %v6906 = vld [vmem:[#allocation2 + $0xbe] sm:$0xff]
        %v6907 = vld [vmem:[#allocation2 + $0xc6] sm:$0xff]
        %v6908 = vld [vmem:[#allocation2 + $0xce] sm:$0xff]
        %v6909 = vld [vmem:[#allocation2 + $0xd6] sm:$0xff]
        %v6910 = vld [vmem:[#allocation2 + $0xde] sm:$0xff]
        %v6911 = vld [vmem:[#allocation2 + $0xe6] sm:$0xff]
        %v6912 = vld [vmem:[#allocation2 + $0xee] sm:$0xff]
        %v6913 = vld [vmem:[#allocation2 + $0xf6] sm:$0xff]
        %v6914 = vld [vmem:[#allocation2 + $0xfe] sm:$0xff]
        %v6915 = vld [vmem:[#allocation2 + $0x106] sm:$0xff]
        %v6916 = vld [vmem:[#allocation2 + $0x10e] sm:$0xff]
        %v6917 = vld [vmem:[#allocation2 + $0x116] sm:$0xff]
        %v6918 = vld [vmem:[#allocation2 + $0x11e] sm:$0xff]
        %v6919 = vld [vmem:[#allocation2 + $0x126] sm:$0xff]
        %v6920 = vld [vmem:[#allocation2 + $0x12e] sm:$0xff]
        %v6921 = vld [vmem:[#allocation2 + $0x136] sm:$0xff]
        %v6922 = vld [vmem:[#allocation2 + $0x13e] sm:$0xff]
        %v6923 = vld [vmem:[#allocation2 + $0x146] sm:$0xff]
        %v6924 = vld [vmem:[#allocation2 + $0x14e] sm:$0xff]
        %s6925 = scalar_lea.vmem %s8, 896
        %v6926 = vld [vmem:[%s6925] sm:$0xff]
        %v6927 = vld [vmem:[%s6925 + $0x8] sm:$0xff]
        %v6928 = vld [vmem:[%s6925 + $0x10] sm:$0xff]
        %v6929 = vld [vmem:[%s6925 + $0x18] sm:$0xff]
        %v6930 = vld [vmem:[%s6925 + $0x20] sm:$0xff]
        %v6931 = vld [vmem:[%s6925 + $0x28] sm:$0xff]
        %v6932 = vld [vmem:[%s6925 + $0x30] sm:$0xff]
        %v6933 = vld [vmem:[%s6925 + $0x38] sm:$0xff]
        %v6934 = vld [vmem:[%s6925 + $0x40] sm:$0xff]
        %v6935 = vld [vmem:[%s6925 + $0x48] sm:$0xff]
        %v6936 = vld [vmem:[%s6925 + $0x50] sm:$0xff]
        %v6937 = vld [vmem:[%s6925 + $0x58] sm:$0xff]
        %v6938 = vld [vmem:[%s6925 + $0x60] sm:$0xff]
        %v6939 = vld [vmem:[%s6925 + $0x68] sm:$0xff]
        %v6940 = vld [vmem:[%s6925 + $0x70] sm:$0xff]
        %v6941 = vld [vmem:[%s6925 + $0x78] sm:$0xff]
        %6942 = vmatprep.subr.mxu0 0.0
        %6943 = vmatpush1.msra.mxu0 %v6926
        %6944 = vmatprep.subr.mxu0 0.0
        %6945 = vmatpush1.msra.mxu0 %v6927
        %6946 = vmatprep.subr.mxu0 0.0
        %6947 = vmatpush1.msra.mxu0 %v6928
        %6948 = vmatprep.subr.mxu0 0.0
        %6949 = vmatpush1.msra.mxu0 %v6929
        %6950 = vmatprep.subr.mxu0 0.0
        %6951 = vmatpush1.msra.mxu0 %v6930
        %6952 = vmatprep.subr.mxu0 0.0
        %6953 = vmatpush1.msra.mxu0 %v6931
        %6954 = vmatprep.subr.mxu0 0.0
        %6955 = vmatpush1.msra.mxu0 %v6932
        %6956 = vmatprep.subr.mxu0 0.0
        %6957 = vmatpush1.msra.mxu0 %v6933
        %6958 = vmatprep.subr.mxu0 0.0
        %6959 = vmatpush1.msra.mxu0 %v6934
        %6960 = vmatprep.subr.mxu0 0.0
        %6961 = vmatpush1.msra.mxu0 %v6935
        %6962 = vmatprep.subr.mxu0 0.0
        %6963 = vmatpush1.msra.mxu0 %v6936
        %6964 = vmatprep.subr.mxu0 0.0
        %6965 = vmatpush1.msra.mxu0 %v6937
        %6966 = vmatprep.subr.mxu0 0.0
        %6967 = vmatpush1.msra.mxu0 %v6938
        %6968 = vmatprep.subr.mxu0 0.0
        %6969 = vmatpush1.msra.mxu0 %v6939
        %6970 = vmatprep.subr.mxu0 0.0
        %6971 = vmatpush1.msra.mxu0 %v6940
        %6972 = vmatprep.subr.mxu0 0.0
        %6973 = vmatpush1.msra.mxu0 %v6941
        %6974 = vmatprep.subr.mxu0 0.0
        %6975 = vmatpush1.msra.mxu0 0.0
        %6976 = vmatprep.subr.mxu0 0.0
        %6977 = vmatpush1.msra.mxu0 0.0
        %6978 = vmatprep.subr.mxu0 0.0
        %6979 = vmatpush1.msra.mxu0 0.0
        %6980 = vmatprep.subr.mxu0 0.0
        %6981 = vmatpush1.msra.mxu0 0.0
        %6982 = vmatprep.subr.mxu0 0.0
        %6983 = vmatpush1.msra.mxu0 0.0
        %6984 = vmatprep.subr.mxu0 0.0
        %6985 = vmatpush1.msra.mxu0 0.0
        %6986 = vmatprep.subr.mxu0 0.0
        %6987 = vmatpush1.msra.mxu0 0.0
        %6988 = vmatprep.subr.mxu0 0.0
        %6989 = vmatpush1.msra.mxu0 0.0
        %6990 = vmatprep.subr.mxu0 0.0
        %6991 = vmatpush1.msra.mxu0 0.0
        %6992 = vmatprep.subr.mxu0 0.0
        %6993 = vmatpush1.msra.mxu0 0.0
        %6994 = vmatprep.subr.mxu0 0.0
        %6995 = vmatpush1.msra.mxu0 0.0
        %6996 = vmatprep.subr.mxu0 0.0
        %6997 = vmatpush1.msra.mxu0 0.0
        %6998 = vmatprep.subr.mxu0 0.0
        %6999 = vmatpush1.msra.mxu0 0.0
        %7000 = vmatprep.subr.mxu0 0.0
        %7001 = vmatpush1.msra.mxu0 0.0
        %7002 = vmatprep.subr.mxu0 0.0
        %7003 = vmatpush1.msra.mxu0 0.0
        %7004 = vmatprep.subr.mxu0 0.0
        %7005 = vmatpush1.msra.mxu0 0.0
        %7006 = vmatprep.mubr.f32.mxu0 0.0
        %7007 = vmatmul.mubr.f32.gmra.mrb[0].mxu0 %v6889
        %v7008 = vpop.f32.mrb[0].mxu0
        %v7009 = vadd.f32 0.0, %v7008
        %v7010 = vpop.f32.mrb[0].mxu0
        %7011 = vmatprep.mubr.f32.mxu0 0.0
        %7012 = vmatmul.mubr.f32.gmra.mrb[0].mxu0 %v6890
        %v7013 = vpop.f32.mrb[0].mxu0
        %v7014 = vadd.f32 0.0, %v7013
        %v7015 = vpop.f32.mrb[0].mxu0
        %7016 = vmatprep.mubr.f32.mxu0 0.0
        %7017 = vmatmul.mubr.f32.gmra.mrb[0].mxu0 %v6891
        %v7018 = vpop.f32.mrb[0].mxu0
        %v7019 = vadd.f32 0.0, %v7018
        %v7020 = vpop.f32.mrb[0].mxu0
        %7021 = vmatprep.mubr.f32.mxu0 0.0
        %7022 = vmatmul.mubr.f32.gmra.mrb[0].mxu0 %v6892
        %v7023 = vpop.f32.mrb[0].mxu0
        %v7024 = vadd.f32 0.0, %v7023
        %v7025 = vpop.f32.mrb[0].mxu0
        %7026 = vmatprep.mubr.f32.mxu0 0.0
        %7027 = vmatmul.mubr.f32.gmra.mrb[0].mxu0 %v6893
        %v7028 = vpop.f32.mrb[0].mxu0
        %v7029 = vadd.f32 0.0, %v7028
        %v7030 = vpop.f32.mrb[0].mxu0
        %7031 = vmatprep.mubr.f32.mxu0 0.0
        %7032 = vmatmul.mubr.f32.gmra.mrb[0].mxu0 %v6894
        %v7033 = vpop.f32.mrb[0].mxu0
        %v7034 = vadd.f32 0.0, %v7033
        %v7035 = vpop.f32.mrb[0].mxu0
        %7036 = vmatprep.mubr.f32.mxu0 0.0
        %7037 = vmatmul.mubr.f32.gmra.mrb[0].mxu0 %v6895
        %v7038 = vpop.f32.mrb[0].mxu0
        %v7039 = vadd.f32 0.0, %v7038
        %v7040 = vpop.f32.mrb[0].mxu0
        %7041 = vmatprep.mubr.f32.mxu0 0.0
        %7042 = vmatmul.mubr.f32.gmra.mrb[0].mxu0 %v6896
        %v7043 = vpop.f32.mrb[0].mxu0
        %v7044 = vadd.f32 0.0, %v7043
        %v7045 = vpop.f32.mrb[0].mxu0
        %7046 = vmatprep.mubr.f32.mxu0 0.0
        %7047 = vmatmul.mubr.f32.gmra.mrb[0].mxu0 %v6897
        %v7048 = vpop.f32.mrb[0].mxu0
        %v7049 = vadd.f32 0.0, %v7048
        %v7050 = vpop.f32.mrb[0].mxu0
        %7051 = vmatprep.mubr.f32.mxu0 0.0
        %7052 = vmatmul.mubr.f32.gmra.mrb[0].mxu0 %v6898
        %v7053 = vpop.f32.mrb[0].mxu0
        %v7054 = vadd.f32 0.0, %v7053
        %v7055 = vpop.f32.mrb[0].mxu0
        %7056 = vmatprep.mubr.f32.mxu0 0.0
        %7057 = vmatmul.mubr.f32.gmra.mrb[0].mxu0 %v6899
        %v7058 = vpop.f32.mrb[0].mxu0
        %v7059 = vadd.f32 0.0, %v7058
        %v7060 = vpop.f32.mrb[0].mxu0
        %7061 = vmatprep.mubr.f32.mxu0 0.0
        %7062 = vmatmul.mubr.f32.gmra.mrb[0].mxu0 %v6900
        %v7063 = vpop.f32.mrb[0].mxu0
        %v7064 = vadd.f32 0.0, %v7063
        %v7065 = vpop.f32.mrb[0].mxu0
        %7066 = vmatprep.mubr.f32.mxu0 0.0
        %7067 = vmatmul.mubr.f32.gmra.mrb[0].mxu0 %v6901
        %v7068 = vpop.f32.mrb[0].mxu0
        %v7069 = vadd.f32 0.0, %v7068
        %v7070 = vpop.f32.mrb[0].mxu0
        %7071 = vmatprep.mubr.f32.mxu0 0.0
        %7072 = vmatmul.mubr.f32.gmra.mrb[0].mxu0 %v6902
        %v7073 = vpop.f32.mrb[0].mxu0
        %v7074 = vadd.f32 0.0, %v7073
        %v7075 = vpop.f32.mrb[0].mxu0
        %7076 = vmatprep.mubr.f32.mxu0 0.0
        %7077 = vmatmul.mubr.f32.gmra.mrb[0].mxu0 %v6903
        %v7078 = vpop.f32.mrb[0].mxu0
        %v7079 = vadd.f32 0.0, %v7078
        %v7080 = vpop.f32.mrb[0].mxu0
        %7081 = vmatprep.mubr.f32.mxu0 0.0
        %7082 = vmatmul.mubr.f32.gmra.mrb[0].mxu0 %v6904
        %v7083 = vpop.f32.mrb[0].mxu0
        %v7084 = vadd.f32 0.0, %v7083
        %v7085 = vpop.f32.mrb[0].mxu0
        %7086 = vmatprep.mubr.f32.mxu0 0.0
        %7087 = vmatmul.mubr.f32.gmra.mrb[0].mxu0 %v6905
        %v7088 = vpop.f32.mrb[0].mxu0
        %v7089 = vadd.f32 0.0, %v7088
        %v7090 = vpop.f32.mrb[0].mxu0
        %7091 = vmatprep.mubr.f32.mxu0 0.0
        %7092 = vmatmul.mubr.f32.gmra.mrb[0].mxu0 %v6906
        %v7093 = vpop.f32.mrb[0].mxu0
        %v7094 = vadd.f32 0.0, %v7093
        %v7095 = vpop.f32.mrb[0].mxu0
        %7096 = vmatprep.mubr.f32.mxu0 0.0
        %7097 = vmatmul.mubr.f32.gmra.mrb[0].mxu0 %v6907
        %v7098 = vpop.f32.mrb[0].mxu0
        %v7099 = vadd.f32 0.0, %v7098
        %v7100 = vpop.f32.mrb[0].mxu0
        %7101 = vmatprep.mubr.f32.mxu0 0.0
        %7102 = vmatmul.mubr.f32.gmra.mrb[0].mxu0 %v6908
        %v7103 = vpop.f32.mrb[0].mxu0
        %v7104 = vadd.f32 0.0, %v7103
        %v7105 = vpop.f32.mrb[0].mxu0
        %7106 = vmatprep.mubr.f32.mxu0 0.0
        %7107 = vmatmul.mubr.f32.gmra.mrb[0].mxu0 %v6909
        %v7108 = vpop.f32.mrb[0].mxu0
        %v7109 = vadd.f32 0.0, %v7108
        %v7110 = vpop.f32.mrb[0].mxu0
        %7111 = vmatprep.mubr.f32.mxu0 0.0
        %7112 = vmatmul.mubr.f32.gmra.mrb[0].mxu0 %v6910
        %v7113 = vpop.f32.mrb[0].mxu0
        %v7114 = vadd.f32 0.0, %v7113
        %v7115 = vpop.f32.mrb[0].mxu0
        %7116 = vmatprep.mubr.f32.mxu0 0.0
        %7117 = vmatmul.mubr.f32.gmra.mrb[0].mxu0 %v6911
        %v7118 = vpop.f32.mrb[0].mxu0
        %v7119 = vadd.f32 0.0, %v7118
        %v7120 = vpop.f32.mrb[0].mxu0
        %7121 = vmatprep.mubr.f32.mxu0 0.0
        %7122 = vmatmul.mubr.f32.gmra.mrb[0].mxu0 %v6912
        %v7123 = vpop.f32.mrb[0].mxu0
        %v7124 = vadd.f32 0.0, %v7123
        %v7125 = vpop.f32.mrb[0].mxu0
        %7126 = vmatprep.mubr.f32.mxu0 0.0
        %7127 = vmatmul.mubr.f32.gmra.mrb[0].mxu0 %v6913
        %v7128 = vpop.f32.mrb[0].mxu0
        %v7129 = vadd.f32 0.0, %v7128
        %v7130 = vpop.f32.mrb[0].mxu0
        %7131 = vmatprep.mubr.f32.mxu0 0.0
        %7132 = vmatmul.mubr.f32.gmra.mrb[0].mxu0 %v6914
        %v7133 = vpop.f32.mrb[0].mxu0
        %v7134 = vadd.f32 0.0, %v7133
        %v7135 = vpop.f32.mrb[0].mxu0
        %7136 = vmatprep.mubr.f32.mxu0 0.0
        %7137 = vmatmul.mubr.f32.gmra.mrb[0].mxu0 %v6915
        %v7138 = vpop.f32.mrb[0].mxu0
        %v7139 = vadd.f32 0.0, %v7138
        %v7140 = vpop.f32.mrb[0].mxu0
        %7141 = vmatprep.mubr.f32.mxu0 0.0
        %7142 = vmatmul.mubr.f32.gmra.mrb[0].mxu0 %v6916
        %v7143 = vpop.f32.mrb[0].mxu0
        %v7144 = vadd.f32 0.0, %v7143
        %v7145 = vpop.f32.mrb[0].mxu0
        %7146 = vmatprep.mubr.f32.mxu0 0.0
        %7147 = vmatmul.mubr.f32.gmra.mrb[0].mxu0 %v6917
        %v7148 = vpop.f32.mrb[0].mxu0
        %v7149 = vadd.f32 0.0, %v7148
        %v7150 = vpop.f32.mrb[0].mxu0
        %7151 = vmatprep.mubr.f32.mxu0 0.0
        %7152 = vmatmul.mubr.f32.gmra.mrb[0].mxu0 %v6918
        %v7153 = vpop.f32.mrb[0].mxu0
        %v7154 = vadd.f32 0.0, %v7153
        %v7155 = vpop.f32.mrb[0].mxu0
        %7156 = vmatprep.mubr.f32.mxu0 0.0
        %7157 = vmatmul.mubr.f32.gmra.mrb[0].mxu0 %v6919
        %v7158 = vpop.f32.mrb[0].mxu0
        %v7159 = vadd.f32 0.0, %v7158
        %v7160 = vpop.f32.mrb[0].mxu0
        %7161 = vmatprep.mubr.f32.mxu0 0.0
        %7162 = vmatmul.mubr.f32.gmra.mrb[0].mxu0 %v6920
        %v7163 = vpop.f32.mrb[0].mxu0
        %v7164 = vadd.f32 0.0, %v7163
        %v7165 = vpop.f32.mrb[0].mxu0
        %7166 = vmatprep.mubr.f32.mxu0 0.0
        %7167 = vmatmul.mubr.f32.gmra.mrb[0].mxu0 %v6921
        %v7168 = vpop.f32.mrb[0].mxu0
        %v7169 = vadd.f32 0.0, %v7168
        %v7170 = vpop.f32.mrb[0].mxu0
        %7171 = vmatprep.mubr.f32.mxu0 0.0
        %7172 = vmatmul.mubr.f32.gmra.mrb[0].mxu0 %v6922
        %v7173 = vpop.f32.mrb[0].mxu0
        %v7174 = vadd.f32 0.0, %v7173
        %v7175 = vpop.f32.mrb[0].mxu0
        %7176 = vmatprep.mubr.f32.mxu0 0.0
        %7177 = vmatmul.mubr.f32.gmra.mrb[0].mxu0 %v6923
        %v7178 = vpop.f32.mrb[0].mxu0
        %v7179 = vadd.f32 0.0, %v7178
        %v7180 = vpop.f32.mrb[0].mxu0
        %7181 = vmatprep.mubr.f32.mxu0 0.0
        %7182 = vmatmul.mubr.f32.gmra.mrb[0].mxu0 %v6924
        %v7183 = vpop.f32.mrb[0].mxu0
        %v7184 = vadd.f32 0.0, %v7183
        %v7185 = vpop.f32.mrb[0].mxu0
        %7186 = vdwg.mxu0
        %v7187 = vadd.f32 %v6853, %v7009
        %v7188 = vadd.f32 %v6854, %v7014
        %v7189 = vadd.f32 %v6855, %v7019
        %v7190 = vadd.f32 %v6856, %v7024
        %v7191 = vadd.f32 %v6857, %v7029
        %v7192 = vadd.f32 %v6858, %v7034
        %v7193 = vadd.f32 %v6859, %v7039
        %v7194 = vadd.f32 %v6860, %v7044
        %v7195 = vadd.f32 %v6861, %v7049
        %v7196 = vadd.f32 %v6862, %v7054
        %v7197 = vadd.f32 %v6863, %v7059
        %v7198 = vadd.f32 %v6864, %v7064
        %v7199 = vadd.f32 %v6865, %v7069
        %v7200 = vadd.f32 %v6866, %v7074
        %v7201 = vadd.f32 %v6867, %v7079
        %v7202 = vadd.f32 %v6868, %v7084
        %v7203 = vadd.f32 %v6869, %v7089
        %v7204 = vadd.f32 %v6870, %v7094
        %v7205 = vadd.f32 %v6871, %v7099
        %v7206 = vadd.f32 %v6872, %v7104
        %v7207 = vadd.f32 %v6873, %v7109
        %v7208 = vadd.f32 %v6874, %v7114
        %v7209 = vadd.f32 %v6875, %v7119
        %v7210 = vadd.f32 %v6876, %v7124
        %v7211 = vadd.f32 %v6877, %v7129
        %v7212 = vadd.f32 %v6878, %v7134
        %v7213 = vadd.f32 %v6879, %v7139
        %v7214 = vadd.f32 %v6880, %v7144
        %v7215 = vadd.f32 %v6881, %v7149
        %v7216 = vadd.f32 %v6882, %v7154
        %v7217 = vadd.f32 %v6883, %v7159
        %v7218 = vadd.f32 %v6884, %v7164
        %v7219 = vadd.f32 %v6885, %v7169
        %v7220 = vadd.f32 %v6886, %v7174
        %v7221 = vadd.f32 %v6887, %v7179
        %v7222 = vadd.f32 %v6888, %v7184
        %v7223 = vld [vmem:[#allocation2 + $0x37] sm:$0xff]
        %v7224 = vld [vmem:[#allocation2 + $0x3f] sm:$0xff]
        %v7225 = vld [vmem:[#allocation2 + $0x47] sm:$0xff]
        %v7226 = vld [vmem:[#allocation2 + $0x4f] sm:$0xff]
        %v7227 = vld [vmem:[#allocation2 + $0x57] sm:$0xff]
        %v7228 = vld [vmem:[#allocation2 + $0x5f] sm:$0xff]
        %v7229 = vld [vmem:[#allocation2 + $0x67] sm:$0xff]
        %v7230 = vld [vmem:[#allocation2 + $0x6f] sm:$0xff]
        %v7231 = vld [vmem:[#allocation2 + $0x77] sm:$0xff]
        %v7232 = vld [vmem:[#allocation2 + $0x7f] sm:$0xff]
        %v7233 = vld [vmem:[#allocation2 + $0x87] sm:$0xff]
        %v7234 = vld [vmem:[#allocation2 + $0x8f] sm:$0xff]
        %v7235 = vld [vmem:[#allocation2 + $0x97] sm:$0xff]
        %v7236 = vld [vmem:[#allocation2 + $0x9f] sm:$0xff]
        %v7237 = vld [vmem:[#allocation2 + $0xa7] sm:$0xff]
        %v7238 = vld [vmem:[#allocation2 + $0xaf] sm:$0xff]
        %v7239 = vld [vmem:[#allocation2 + $0xb7] sm:$0xff]
        %v7240 = vld [vmem:[#allocation2 + $0xbf] sm:$0xff]
        %v7241 = vld [vmem:[#allocation2 + $0xc7] sm:$0xff]
        %v7242 = vld [vmem:[#allocation2 + $0xcf] sm:$0xff]
        %v7243 = vld [vmem:[#allocation2 + $0xd7] sm:$0xff]
        %v7244 = vld [vmem:[#allocation2 + $0xdf] sm:$0xff]
        %v7245 = vld [vmem:[#allocation2 + $0xe7] sm:$0xff]
        %v7246 = vld [vmem:[#allocation2 + $0xef] sm:$0xff]
        %v7247 = vld [vmem:[#allocation2 + $0xf7] sm:$0xff]
        %v7248 = vld [vmem:[#allocation2 + $0xff] sm:$0xff]
        %v7249 = vld [vmem:[#allocation2 + $0x107] sm:$0xff]
        %v7250 = vld [vmem:[#allocation2 + $0x10f] sm:$0xff]
        %v7251 = vld [vmem:[#allocation2 + $0x117] sm:$0xff]
        %v7252 = vld [vmem:[#allocation2 + $0x11f] sm:$0xff]
        %v7253 = vld [vmem:[#allocation2 + $0x127] sm:$0xff]
        %v7254 = vld [vmem:[#allocation2 + $0x12f] sm:$0xff]
        %v7255 = vld [vmem:[#allocation2 + $0x137] sm:$0xff]
        %v7256 = vld [vmem:[#allocation2 + $0x13f] sm:$0xff]
        %v7257 = vld [vmem:[#allocation2 + $0x147] sm:$0xff]
        %v7258 = vld [vmem:[#allocation2 + $0x14f] sm:$0xff]
        %s7259 = scalar_lea.vmem %s8, 1024
        %v7260 = vld [vmem:[%s7259] sm:$0xff]
        %v7261 = vld [vmem:[%s7259 + $0x8] sm:$0xff]
        %v7262 = vld [vmem:[%s7259 + $0x10] sm:$0xff]
        %v7263 = vld [vmem:[%s7259 + $0x18] sm:$0xff]
        %v7264 = vld [vmem:[%s7259 + $0x20] sm:$0xff]
        %v7265 = vld [vmem:[%s7259 + $0x28] sm:$0xff]
        %v7266 = vld [vmem:[%s7259 + $0x30] sm:$0xff]
        %v7267 = vld [vmem:[%s7259 + $0x38] sm:$0xff]
        %v7268 = vld [vmem:[%s7259 + $0x40] sm:$0xff]
        %v7269 = vld [vmem:[%s7259 + $0x48] sm:$0xff]
        %v7270 = vld [vmem:[%s7259 + $0x50] sm:$0xff]
        %v7271 = vld [vmem:[%s7259 + $0x58] sm:$0xff]
        %v7272 = vld [vmem:[%s7259 + $0x60] sm:$0xff]
        %v7273 = vld [vmem:[%s7259 + $0x68] sm:$0xff]
        %v7274 = vld [vmem:[%s7259 + $0x70] sm:$0xff]
        %v7275 = vld [vmem:[%s7259 + $0x78] sm:$0xff]
        %7276 = vmatprep.subr.mxu0 0.0
        %7277 = vmatpush1.msra.mxu0 %v7260
        %7278 = vmatprep.subr.mxu0 0.0
        %7279 = vmatpush1.msra.mxu0 %v7261
        %7280 = vmatprep.subr.mxu0 0.0
        %7281 = vmatpush1.msra.mxu0 %v7262
        %7282 = vmatprep.subr.mxu0 0.0
        %7283 = vmatpush1.msra.mxu0 %v7263
        %7284 = vmatprep.subr.mxu0 0.0
        %7285 = vmatpush1.msra.mxu0 %v7264
        %7286 = vmatprep.subr.mxu0 0.0
        %7287 = vmatpush1.msra.mxu0 %v7265
        %7288 = vmatprep.subr.mxu0 0.0
        %7289 = vmatpush1.msra.mxu0 %v7266
        %7290 = vmatprep.subr.mxu0 0.0
        %7291 = vmatpush1.msra.mxu0 %v7267
        %7292 = vmatprep.subr.mxu0 0.0
        %7293 = vmatpush1.msra.mxu0 %v7268
        %7294 = vmatprep.subr.mxu0 0.0
        %7295 = vmatpush1.msra.mxu0 %v7269
        %7296 = vmatprep.subr.mxu0 0.0
        %7297 = vmatpush1.msra.mxu0 %v7270
        %7298 = vmatprep.subr.mxu0 0.0
        %7299 = vmatpush1.msra.mxu0 %v7271
        %7300 = vmatprep.subr.mxu0 0.0
        %7301 = vmatpush1.msra.mxu0 %v7272
        %7302 = vmatprep.subr.mxu0 0.0
        %7303 = vmatpush1.msra.mxu0 %v7273
        %7304 = vmatprep.subr.mxu0 0.0
        %7305 = vmatpush1.msra.mxu0 %v7274
        %7306 = vmatprep.subr.mxu0 0.0
        %7307 = vmatpush1.msra.mxu0 %v7275
        %7308 = vmatprep.subr.mxu0 0.0
        %7309 = vmatpush1.msra.mxu0 0.0
        %7310 = vmatprep.subr.mxu0 0.0
        %7311 = vmatpush1.msra.mxu0 0.0
        %7312 = vmatprep.subr.mxu0 0.0
        %7313 = vmatpush1.msra.mxu0 0.0
        %7314 = vmatprep.subr.mxu0 0.0
        %7315 = vmatpush1.msra.mxu0 0.0
        %7316 = vmatprep.subr.mxu0 0.0
        %7317 = vmatpush1.msra.mxu0 0.0
        %7318 = vmatprep.subr.mxu0 0.0
        %7319 = vmatpush1.msra.mxu0 0.0
        %7320 = vmatprep.subr.mxu0 0.0
        %7321 = vmatpush1.msra.mxu0 0.0
        %7322 = vmatprep.subr.mxu0 0.0
        %7323 = vmatpush1.msra.mxu0 0.0
        %7324 = vmatprep.subr.mxu0 0.0
        %7325 = vmatpush1.msra.mxu0 0.0
        %7326 = vmatprep.subr.mxu0 0.0
        %7327 = vmatpush1.msra.mxu0 0.0
        %7328 = vmatprep.subr.mxu0 0.0
        %7329 = vmatpush1.msra.mxu0 0.0
        %7330 = vmatprep.subr.mxu0 0.0
        %7331 = vmatpush1.msra.mxu0 0.0
        %7332 = vmatprep.subr.mxu0 0.0
        %7333 = vmatpush1.msra.mxu0 0.0
        %7334 = vmatprep.subr.mxu0 0.0
        %7335 = vmatpush1.msra.mxu0 0.0
        %7336 = vmatprep.subr.mxu0 0.0
        %7337 = vmatpush1.msra.mxu0 0.0
        %7338 = vmatprep.subr.mxu0 0.0
        %7339 = vmatpush1.msra.mxu0 0.0
        %7340 = vmatprep.mubr.f32.mxu0 0.0
        %7341 = vmatmul.mubr.f32.gmra.mrb[0].mxu0 %v7223
        %v7342 = vpop.f32.mrb[0].mxu0
        %v7343 = vadd.f32 0.0, %v7342
        %v7344 = vpop.f32.mrb[0].mxu0
        %7345 = vmatprep.mubr.f32.mxu0 0.0
        %7346 = vmatmul.mubr.f32.gmra.mrb[0].mxu0 %v7224
        %v7347 = vpop.f32.mrb[0].mxu0
        %v7348 = vadd.f32 0.0, %v7347
        %v7349 = vpop.f32.mrb[0].mxu0
        %7350 = vmatprep.mubr.f32.mxu0 0.0
        %7351 = vmatmul.mubr.f32.gmra.mrb[0].mxu0 %v7225
        %v7352 = vpop.f32.mrb[0].mxu0
        %v7353 = vadd.f32 0.0, %v7352
        %v7354 = vpop.f32.mrb[0].mxu0
        %7355 = vmatprep.mubr.f32.mxu0 0.0
        %7356 = vmatmul.mubr.f32.gmra.mrb[0].mxu0 %v7226
        %v7357 = vpop.f32.mrb[0].mxu0
        %v7358 = vadd.f32 0.0, %v7357
        %v7359 = vpop.f32.mrb[0].mxu0
        %7360 = vmatprep.mubr.f32.mxu0 0.0
        %7361 = vmatmul.mubr.f32.gmra.mrb[0].mxu0 %v7227
        %v7362 = vpop.f32.mrb[0].mxu0
        %v7363 = vadd.f32 0.0, %v7362
        %v7364 = vpop.f32.mrb[0].mxu0
        %7365 = vmatprep.mubr.f32.mxu0 0.0
        %7366 = vmatmul.mubr.f32.gmra.mrb[0].mxu0 %v7228
        %v7367 = vpop.f32.mrb[0].mxu0
        %v7368 = vadd.f32 0.0, %v7367
        %v7369 = vpop.f32.mrb[0].mxu0
        %7370 = vmatprep.mubr.f32.mxu0 0.0
        %7371 = vmatmul.mubr.f32.gmra.mrb[0].mxu0 %v7229
        %v7372 = vpop.f32.mrb[0].mxu0
        %v7373 = vadd.f32 0.0, %v7372
        %v7374 = vpop.f32.mrb[0].mxu0
        %7375 = vmatprep.mubr.f32.mxu0 0.0
        %7376 = vmatmul.mubr.f32.gmra.mrb[0].mxu0 %v7230
        %v7377 = vpop.f32.mrb[0].mxu0
        %v7378 = vadd.f32 0.0, %v7377
        %v7379 = vpop.f32.mrb[0].mxu0
        %7380 = vmatprep.mubr.f32.mxu0 0.0
        %7381 = vmatmul.mubr.f32.gmra.mrb[0].mxu0 %v7231
        %v7382 = vpop.f32.mrb[0].mxu0
        %v7383 = vadd.f32 0.0, %v7382
        %v7384 = vpop.f32.mrb[0].mxu0
        %7385 = vmatprep.mubr.f32.mxu0 0.0
        %7386 = vmatmul.mubr.f32.gmra.mrb[0].mxu0 %v7232
        %v7387 = vpop.f32.mrb[0].mxu0
        %v7388 = vadd.f32 0.0, %v7387
        %v7389 = vpop.f32.mrb[0].mxu0
        %7390 = vmatprep.mubr.f32.mxu0 0.0
        %7391 = vmatmul.mubr.f32.gmra.mrb[0].mxu0 %v7233
        %v7392 = vpop.f32.mrb[0].mxu0
        %v7393 = vadd.f32 0.0, %v7392
        %v7394 = vpop.f32.mrb[0].mxu0
        %7395 = vmatprep.mubr.f32.mxu0 0.0
        %7396 = vmatmul.mubr.f32.gmra.mrb[0].mxu0 %v7234
        %v7397 = vpop.f32.mrb[0].mxu0
        %v7398 = vadd.f32 0.0, %v7397
        %v7399 = vpop.f32.mrb[0].mxu0
        %7400 = vmatprep.mubr.f32.mxu0 0.0
        %7401 = vmatmul.mubr.f32.gmra.mrb[0].mxu0 %v7235
        %v7402 = vpop.f32.mrb[0].mxu0
        %v7403 = vadd.f32 0.0, %v7402
        %v7404 = vpop.f32.mrb[0].mxu0
        %7405 = vmatprep.mubr.f32.mxu0 0.0
        %7406 = vmatmul.mubr.f32.gmra.mrb[0].mxu0 %v7236
        %v7407 = vpop.f32.mrb[0].mxu0
        %v7408 = vadd.f32 0.0, %v7407
        %v7409 = vpop.f32.mrb[0].mxu0
        %7410 = vmatprep.mubr.f32.mxu0 0.0
        %7411 = vmatmul.mubr.f32.gmra.mrb[0].mxu0 %v7237
        %v7412 = vpop.f32.mrb[0].mxu0
        %v7413 = vadd.f32 0.0, %v7412
        %v7414 = vpop.f32.mrb[0].mxu0
        %7415 = vmatprep.mubr.f32.mxu0 0.0
        %7416 = vmatmul.mubr.f32.gmra.mrb[0].mxu0 %v7238
        %v7417 = vpop.f32.mrb[0].mxu0
        %v7418 = vadd.f32 0.0, %v7417
        %v7419 = vpop.f32.mrb[0].mxu0
        %7420 = vmatprep.mubr.f32.mxu0 0.0
        %7421 = vmatmul.mubr.f32.gmra.mrb[0].mxu0 %v7239
        %v7422 = vpop.f32.mrb[0].mxu0
        %v7423 = vadd.f32 0.0, %v7422
        %v7424 = vpop.f32.mrb[0].mxu0
        %7425 = vmatprep.mubr.f32.mxu0 0.0
        %7426 = vmatmul.mubr.f32.gmra.mrb[0].mxu0 %v7240
        %v7427 = vpop.f32.mrb[0].mxu0
        %v7428 = vadd.f32 0.0, %v7427
        %v7429 = vpop.f32.mrb[0].mxu0
        %7430 = vmatprep.mubr.f32.mxu0 0.0
        %7431 = vmatmul.mubr.f32.gmra.mrb[0].mxu0 %v7241
        %v7432 = vpop.f32.mrb[0].mxu0
        %v7433 = vadd.f32 0.0, %v7432
        %v7434 = vpop.f32.mrb[0].mxu0
        %7435 = vmatprep.mubr.f32.mxu0 0.0
        %7436 = vmatmul.mubr.f32.gmra.mrb[0].mxu0 %v7242
        %v7437 = vpop.f32.mrb[0].mxu0
        %v7438 = vadd.f32 0.0, %v7437
        %v7439 = vpop.f32.mrb[0].mxu0
        %7440 = vmatprep.mubr.f32.mxu0 0.0
        %7441 = vmatmul.mubr.f32.gmra.mrb[0].mxu0 %v7243
        %v7442 = vpop.f32.mrb[0].mxu0
        %v7443 = vadd.f32 0.0, %v7442
        %v7444 = vpop.f32.mrb[0].mxu0
        %7445 = vmatprep.mubr.f32.mxu0 0.0
        %7446 = vmatmul.mubr.f32.gmra.mrb[0].mxu0 %v7244
        %v7447 = vpop.f32.mrb[0].mxu0
        %v7448 = vadd.f32 0.0, %v7447
        %v7449 = vpop.f32.mrb[0].mxu0
        %7450 = vmatprep.mubr.f32.mxu0 0.0
        %7451 = vmatmul.mubr.f32.gmra.mrb[0].mxu0 %v7245
        %v7452 = vpop.f32.mrb[0].mxu0
        %v7453 = vadd.f32 0.0, %v7452
        %v7454 = vpop.f32.mrb[0].mxu0
        %7455 = vmatprep.mubr.f32.mxu0 0.0
        %7456 = vmatmul.mubr.f32.gmra.mrb[0].mxu0 %v7246
        %v7457 = vpop.f32.mrb[0].mxu0
        %v7458 = vadd.f32 0.0, %v7457
        %v7459 = vpop.f32.mrb[0].mxu0
        %7460 = vmatprep.mubr.f32.mxu0 0.0
        %7461 = vmatmul.mubr.f32.gmra.mrb[0].mxu0 %v7247
        %v7462 = vpop.f32.mrb[0].mxu0
        %v7463 = vadd.f32 0.0, %v7462
        %v7464 = vpop.f32.mrb[0].mxu0
        %7465 = vmatprep.mubr.f32.mxu0 0.0
        %7466 = vmatmul.mubr.f32.gmra.mrb[0].mxu0 %v7248
        %v7467 = vpop.f32.mrb[0].mxu0
        %v7468 = vadd.f32 0.0, %v7467
        %v7469 = vpop.f32.mrb[0].mxu0
        %7470 = vmatprep.mubr.f32.mxu0 0.0
        %7471 = vmatmul.mubr.f32.gmra.mrb[0].mxu0 %v7249
        %v7472 = vpop.f32.mrb[0].mxu0
        %v7473 = vadd.f32 0.0, %v7472
        %v7474 = vpop.f32.mrb[0].mxu0
        %7475 = vmatprep.mubr.f32.mxu0 0.0
        %7476 = vmatmul.mubr.f32.gmra.mrb[0].mxu0 %v7250
        %v7477 = vpop.f32.mrb[0].mxu0
        %v7478 = vadd.f32 0.0, %v7477
        %v7479 = vpop.f32.mrb[0].mxu0
        %7480 = vmatprep.mubr.f32.mxu0 0.0
        %7481 = vmatmul.mubr.f32.gmra.mrb[0].mxu0 %v7251
        %v7482 = vpop.f32.mrb[0].mxu0
        %v7483 = vadd.f32 0.0, %v7482
        %v7484 = vpop.f32.mrb[0].mxu0
        %7485 = vmatprep.mubr.f32.mxu0 0.0
        %7486 = vmatmul.mubr.f32.gmra.mrb[0].mxu0 %v7252
        %v7487 = vpop.f32.mrb[0].mxu0
        %v7488 = vadd.f32 0.0, %v7487
        %v7489 = vpop.f32.mrb[0].mxu0
        %7490 = vmatprep.mubr.f32.mxu0 0.0
        %7491 = vmatmul.mubr.f32.gmra.mrb[0].mxu0 %v7253
        %v7492 = vpop.f32.mrb[0].mxu0
        %v7493 = vadd.f32 0.0, %v7492
        %v7494 = vpop.f32.mrb[0].mxu0
        %7495 = vmatprep.mubr.f32.mxu0 0.0
        %7496 = vmatmul.mubr.f32.gmra.mrb[0].mxu0 %v7254
        %v7497 = vpop.f32.mrb[0].mxu0
        %v7498 = vadd.f32 0.0, %v7497
        %v7499 = vpop.f32.mrb[0].mxu0
        %7500 = vmatprep.mubr.f32.mxu0 0.0
        %7501 = vmatmul.mubr.f32.gmra.mrb[0].mxu0 %v7255
        %v7502 = vpop.f32.mrb[0].mxu0
        %v7503 = vadd.f32 0.0, %v7502
        %v7504 = vpop.f32.mrb[0].mxu0
        %7505 = vmatprep.mubr.f32.mxu0 0.0
        %7506 = vmatmul.mubr.f32.gmra.mrb[0].mxu0 %v7256
        %v7507 = vpop.f32.mrb[0].mxu0
        %v7508 = vadd.f32 0.0, %v7507
        %v7509 = vpop.f32.mrb[0].mxu0
        %7510 = vmatprep.mubr.f32.mxu0 0.0
        %7511 = vmatmul.mubr.f32.gmra.mrb[0].mxu0 %v7257
        %v7512 = vpop.f32.mrb[0].mxu0
        %v7513 = vadd.f32 0.0, %v7512
        %v7514 = vpop.f32.mrb[0].mxu0
        %7515 = vmatprep.mubr.f32.mxu0 0.0
        %7516 = vmatmul.mubr.f32.gmra.mrb[0].mxu0 %v7258
        %v7517 = vpop.f32.mrb[0].mxu0
        %v7518 = vadd.f32 0.0, %v7517
        %v7519 = vpop.f32.mrb[0].mxu0
        %7520 = vdwg.mxu0
        %v7521 = vadd.f32 %v7187, %v7343
        %v7522 = vadd.f32 %v7188, %v7348
        %v7523 = vadd.f32 %v7189, %v7353
        %v7524 = vadd.f32 %v7190, %v7358
        %v7525 = vadd.f32 %v7191, %v7363
        %v7526 = vadd.f32 %v7192, %v7368
        %v7527 = vadd.f32 %v7193, %v7373
        %v7528 = vadd.f32 %v7194, %v7378
        %v7529 = vadd.f32 %v7195, %v7383
        %v7530 = vadd.f32 %v7196, %v7388
        %v7531 = vadd.f32 %v7197, %v7393
        %v7532 = vadd.f32 %v7198, %v7398
        %v7533 = vadd.f32 %v7199, %v7403
        %v7534 = vadd.f32 %v7200, %v7408
        %v7535 = vadd.f32 %v7201, %v7413
        %v7536 = vadd.f32 %v7202, %v7418
        %v7537 = vadd.f32 %v7203, %v7423
        %v7538 = vadd.f32 %v7204, %v7428
        %v7539 = vadd.f32 %v7205, %v7433
        %v7540 = vadd.f32 %v7206, %v7438
        %v7541 = vadd.f32 %v7207, %v7443
        %v7542 = vadd.f32 %v7208, %v7448
        %v7543 = vadd.f32 %v7209, %v7453
        %v7544 = vadd.f32 %v7210, %v7458
        %v7545 = vadd.f32 %v7211, %v7463
        %v7546 = vadd.f32 %v7212, %v7468
        %v7547 = vadd.f32 %v7213, %v7473
        %v7548 = vadd.f32 %v7214, %v7478
        %v7549 = vadd.f32 %v7215, %v7483
        %v7550 = vadd.f32 %v7216, %v7488
        %v7551 = vadd.f32 %v7217, %v7493
        %v7552 = vadd.f32 %v7218, %v7498
        %v7553 = vadd.f32 %v7219, %v7503
        %v7554 = vadd.f32 %v7220, %v7508
        %v7555 = vadd.f32 %v7221, %v7513
        %v7556 = vadd.f32 %v7222, %v7518
        %v7557 = vld [vmem:[%s9] sm:$0x1]
        %v7559 = vlaneseq
        %v7560 = vshrl.u32 %v7559, 7
        %v7561 = vsub.s32 0, %v7560
        %v7562 = vrot.slane %v7557, %v7561
        %v7564 = vadd.f32 %v7521, %v7562
        %v7565 = vadd.f32 %v7522, %v7562
        %v7566 = vadd.f32 %v7523, %v7562
        %v7567 = vadd.f32 %v7524, %v7562
        %v7568 = vadd.f32 %v7525, %v7562
        %v7569 = vadd.f32 %v7526, %v7562
        %v7570 = vadd.f32 %v7527, %v7562
        %v7571 = vadd.f32 %v7528, %v7562
        %v7572 = vadd.f32 %v7529, %v7562
        %v7573 = vadd.f32 %v7530, %v7562
        %v7574 = vadd.f32 %v7531, %v7562
        %v7575 = vadd.f32 %v7532, %v7562
        %v7576 = vadd.f32 %v7533, %v7562
        %v7577 = vadd.f32 %v7534, %v7562
        %v7578 = vadd.f32 %v7535, %v7562
        %v7579 = vadd.f32 %v7536, %v7562
        %v7580 = vadd.f32 %v7537, %v7562
        %v7581 = vadd.f32 %v7538, %v7562
        %v7582 = vadd.f32 %v7539, %v7562
        %v7583 = vadd.f32 %v7540, %v7562
        %v7584 = vadd.f32 %v7541, %v7562
        %v7585 = vadd.f32 %v7542, %v7562
        %v7586 = vadd.f32 %v7543, %v7562
        %v7587 = vadd.f32 %v7544, %v7562
        %v7588 = vadd.f32 %v7545, %v7562
        %v7589 = vadd.f32 %v7546, %v7562
        %v7590 = vadd.f32 %v7547, %v7562
        %v7591 = vadd.f32 %v7548, %v7562
        %v7592 = vadd.f32 %v7549, %v7562
        %v7593 = vadd.f32 %v7550, %v7562
        %v7594 = vadd.f32 %v7551, %v7562
        %v7595 = vadd.f32 %v7552, %v7562
        %v7596 = vadd.f32 %v7553, %v7562
        %v7597 = vadd.f32 %v7554, %v7562
        %v7598 = vadd.f32 %v7555, %v7562
        %v7599 = vadd.f32 %v7556, %v7562
        %v7600 = vadd.f32 %v358, %v7564
        %v7601 = vadd.f32 %v359, %v7565
        %v7602 = vadd.f32 %v360, %v7566
        %v7603 = vadd.f32 %v361, %v7567
        %v7604 = vadd.f32 %v362, %v7568
        %v7605 = vadd.f32 %v363, %v7569
        %v7606 = vadd.f32 %v364, %v7570
        %v7607 = vadd.f32 %v365, %v7571
        %v7608 = vadd.f32 %v366, %v7572
        %v7609 = vadd.f32 %v367, %v7573
        %v7610 = vadd.f32 %v368, %v7574
        %v7611 = vadd.f32 %v369, %v7575
        %v7612 = vadd.f32 %v370, %v7576
        %v7613 = vadd.f32 %v371, %v7577
        %v7614 = vadd.f32 %v372, %v7578
        %v7615 = vadd.f32 %v373, %v7579
        %v7616 = vadd.f32 %v374, %v7580
        %v7617 = vadd.f32 %v375, %v7581
        %v7618 = vadd.f32 %v376, %v7582
        %v7619 = vadd.f32 %v377, %v7583
        %v7620 = vadd.f32 %v378, %v7584
        %v7621 = vadd.f32 %v379, %v7585
        %v7622 = vadd.f32 %v380, %v7586
        %v7623 = vadd.f32 %v381, %v7587
        %v7624 = vadd.f32 %v382, %v7588
        %v7625 = vadd.f32 %v383, %v7589
        %v7626 = vadd.f32 %v384, %v7590
        %v7627 = vadd.f32 %v385, %v7591
        %v7628 = vadd.f32 %v386, %v7592
        %v7629 = vadd.f32 %v387, %v7593
        %v7630 = vadd.f32 %v388, %v7594
        %v7631 = vadd.f32 %v389, %v7595
        %v7632 = vadd.f32 %v390, %v7596
        %v7633 = vadd.f32 %v391, %v7597
        %v7634 = vadd.f32 %v392, %v7598
        %v7635 = vadd.f32 %v393, %v7599
        %v7636 = vmul.f32 %v7600, 0.70710677
        %v7637 = vmul.f32 %v7601, 0.70710677
        %v7638 = vmul.f32 %v7602, 0.70710677
        %v7639 = vmul.f32 %v7603, 0.70710677
        %v7640 = vmul.f32 %v7604, 0.70710677
        %v7641 = vmul.f32 %v7605, 0.70710677
        %v7642 = vmul.f32 %v7606, 0.70710677
        %v7643 = vmul.f32 %v7607, 0.70710677
        %v7644 = vmul.f32 %v7608, 0.70710677
        %v7645 = vmul.f32 %v7609, 0.70710677
        %v7646 = vmul.f32 %v7610, 0.70710677
        %v7647 = vmul.f32 %v7611, 0.70710677
        %v7648 = vmul.f32 %v7612, 0.70710677
        %v7649 = vmul.f32 %v7613, 0.70710677
        %v7650 = vmul.f32 %v7614, 0.70710677
        %v7651 = vmul.f32 %v7615, 0.70710677
        %v7652 = vmul.f32 %v7616, 0.70710677
        %v7653 = vmul.f32 %v7617, 0.70710677
        %v7654 = vmul.f32 %v7618, 0.70710677
        %v7655 = vmul.f32 %v7619, 0.70710677
        %v7656 = vmul.f32 %v7620, 0.70710677
        %v7657 = vmul.f32 %v7621, 0.70710677
        %v7658 = vmul.f32 %v7622, 0.70710677
        %v7659 = vmul.f32 %v7623, 0.70710677
        %v7660 = vmul.f32 %v7624, 0.70710677
        %v7661 = vmul.f32 %v7625, 0.70710677
        %v7662 = vmul.f32 %v7626, 0.70710677
        %v7663 = vmul.f32 %v7627, 0.70710677
        %v7664 = vmul.f32 %v7628, 0.70710677
        %v7665 = vmul.f32 %v7629, 0.70710677
        %v7666 = vmul.f32 %v7630, 0.70710677
        %v7667 = vmul.f32 %v7631, 0.70710677
        %v7668 = vmul.f32 %v7632, 0.70710677
        %v7669 = vmul.f32 %v7633, 0.70710677
        %v7670 = vmul.f32 %v7634, 0.70710677
        %v7671 = vmul.f32 %v7635, 0.70710677
        %v7708 = vcombine.high %v7636, %v7636
        %v7710 = vunpack.c.l.s4 1983009808
        %v7711 = vunpack.c.0.s8 %v7710
        %v7712 = vlaneseq
        %v7713 = vshrl.u32 %v7712, 7
        %v7714 = vsub.s32 %v7711, %v7713
        %v7715 = vrot.slane %v7636, %v7714
        %v7717 = vunpack.c.l.s4 1983009808
        %v7718 = vunpack.c.0.s8 %v7717
        %v7719 = vlaneseq
        %v7720 = vshrl.u32 %v7719, 7
        %v7721 = vsub.s32 %v7718, %v7720
        %v7722 = vrot.slane %v7708, %v7721
        %v7723 = vcombine.high %v7715, %v7715
        %v7724 = vcombine.high %v7722, %v7722
        %v7725 = vcombine.high %v7637, %v7637
        %v7727 = vunpack.c.l.s4 1983009808
        %v7728 = vunpack.c.0.s8 %v7727
        %v7729 = vlaneseq
        %v7730 = vshrl.u32 %v7729, 7
        %v7731 = vsub.s32 %v7728, %v7730
        %v7732 = vrot.slane %v7637, %v7731
        %v7734 = vunpack.c.l.s4 1983009808
        %v7735 = vunpack.c.0.s8 %v7734
        %v7736 = vlaneseq
        %v7737 = vshrl.u32 %v7736, 7
        %v7738 = vsub.s32 %v7735, %v7737
        %v7739 = vrot.slane %v7725, %v7738
        %v7740 = vcombine.high %v7732, %v7732
        %v7741 = vcombine.high %v7739, %v7739
        %v7742 = vcombine.high %v7638, %v7638
        %v7744 = vunpack.c.l.s4 1983009808
        %v7745 = vunpack.c.0.s8 %v7744
        %v7746 = vlaneseq
        %v7747 = vshrl.u32 %v7746, 7
        %v7748 = vsub.s32 %v7745, %v7747
        %v7749 = vrot.slane %v7638, %v7748
        %v7751 = vunpack.c.l.s4 1983009808
        %v7752 = vunpack.c.0.s8 %v7751
        %v7753 = vlaneseq
        %v7754 = vshrl.u32 %v7753, 7
        %v7755 = vsub.s32 %v7752, %v7754
        %v7756 = vrot.slane %v7742, %v7755
        %v7757 = vcombine.high %v7749, %v7749
        %v7758 = vcombine.high %v7756, %v7756
        %v7759 = vcombine.high %v7639, %v7639
        %v7761 = vunpack.c.l.s4 1983009808
        %v7762 = vunpack.c.0.s8 %v7761
        %v7763 = vlaneseq
        %v7764 = vshrl.u32 %v7763, 7
        %v7765 = vsub.s32 %v7762, %v7764
        %v7766 = vrot.slane %v7639, %v7765
        %v7768 = vunpack.c.l.s4 1983009808
        %v7769 = vunpack.c.0.s8 %v7768
        %v7770 = vlaneseq
        %v7771 = vshrl.u32 %v7770, 7
        %v7772 = vsub.s32 %v7769, %v7771
        %v7773 = vrot.slane %v7759, %v7772
        %v7774 = vcombine.high %v7766, %v7766
        %v7775 = vcombine.high %v7773, %v7773
        %v7776 = vcombine.high %v7640, %v7640
        %v7778 = vunpack.c.l.s4 1983009808
        %v7779 = vunpack.c.0.s8 %v7778
        %v7780 = vlaneseq
        %v7781 = vshrl.u32 %v7780, 7
        %v7782 = vsub.s32 %v7779, %v7781
        %v7783 = vrot.slane %v7640, %v7782
        %v7785 = vunpack.c.l.s4 1983009808
        %v7786 = vunpack.c.0.s8 %v7785
        %v7787 = vlaneseq
        %v7788 = vshrl.u32 %v7787, 7
        %v7789 = vsub.s32 %v7786, %v7788
        %v7790 = vrot.slane %v7776, %v7789
        %v7791 = vcombine.high %v7783, %v7783
        %v7792 = vcombine.high %v7790, %v7790
        %v7793 = vcombine.high %v7641, %v7641
        %v7795 = vunpack.c.l.s4 1983009808
        %v7796 = vunpack.c.0.s8 %v7795
        %v7797 = vlaneseq
        %v7798 = vshrl.u32 %v7797, 7
        %v7799 = vsub.s32 %v7796, %v7798
        %v7800 = vrot.slane %v7641, %v7799
        %v7802 = vunpack.c.l.s4 1983009808
        %v7803 = vunpack.c.0.s8 %v7802
        %v7804 = vlaneseq
        %v7805 = vshrl.u32 %v7804, 7
        %v7806 = vsub.s32 %v7803, %v7805
        %v7807 = vrot.slane %v7793, %v7806
        %v7808 = vcombine.high %v7800, %v7800
        %v7809 = vcombine.high %v7807, %v7807
        %v7810 = vcombine.high %v7642, %v7642
        %v7812 = vunpack.c.l.s4 1983009808
        %v7813 = vunpack.c.0.s8 %v7812
        %v7814 = vlaneseq
        %v7815 = vshrl.u32 %v7814, 7
        %v7816 = vsub.s32 %v7813, %v7815
        %v7817 = vrot.slane %v7642, %v7816
        %v7819 = vunpack.c.l.s4 1983009808
        %v7820 = vunpack.c.0.s8 %v7819
        %v7821 = vlaneseq
        %v7822 = vshrl.u32 %v7821, 7
        %v7823 = vsub.s32 %v7820, %v7822
        %v7824 = vrot.slane %v7810, %v7823
        %v7825 = vcombine.high %v7817, %v7817
        %v7826 = vcombine.high %v7824, %v7824
        %v7827 = vcombine.high %v7643, %v7643
        %v7829 = vunpack.c.l.s4 1983009808
        %v7830 = vunpack.c.0.s8 %v7829
        %v7831 = vlaneseq
        %v7832 = vshrl.u32 %v7831, 7
        %v7833 = vsub.s32 %v7830, %v7832
        %v7834 = vrot.slane %v7643, %v7833
        %v7836 = vunpack.c.l.s4 1983009808
        %v7837 = vunpack.c.0.s8 %v7836
        %v7838 = vlaneseq
        %v7839 = vshrl.u32 %v7838, 7
        %v7840 = vsub.s32 %v7837, %v7839
        %v7841 = vrot.slane %v7827, %v7840
        %v7842 = vcombine.high %v7834, %v7834
        %v7843 = vcombine.high %v7841, %v7841
        %v7844 = vcombine.high %v7644, %v7644
        %v7846 = vunpack.c.l.s4 1983009808
        %v7847 = vunpack.c.0.s8 %v7846
        %v7848 = vlaneseq
        %v7849 = vshrl.u32 %v7848, 7
        %v7850 = vsub.s32 %v7847, %v7849
        %v7851 = vrot.slane %v7644, %v7850
        %v7853 = vunpack.c.l.s4 1983009808
        %v7854 = vunpack.c.0.s8 %v7853
        %v7855 = vlaneseq
        %v7856 = vshrl.u32 %v7855, 7
        %v7857 = vsub.s32 %v7854, %v7856
        %v7858 = vrot.slane %v7844, %v7857
        %v7859 = vcombine.high %v7851, %v7851
        %v7860 = vcombine.high %v7858, %v7858
        %v7861 = vcombine.high %v7645, %v7645
        %v7863 = vunpack.c.l.s4 1983009808
        %v7864 = vunpack.c.0.s8 %v7863
        %v7865 = vlaneseq
        %v7866 = vshrl.u32 %v7865, 7
        %v7867 = vsub.s32 %v7864, %v7866
        %v7868 = vrot.slane %v7645, %v7867
        %v7870 = vunpack.c.l.s4 1983009808
        %v7871 = vunpack.c.0.s8 %v7870
        %v7872 = vlaneseq
        %v7873 = vshrl.u32 %v7872, 7
        %v7874 = vsub.s32 %v7871, %v7873
        %v7875 = vrot.slane %v7861, %v7874
        %v7876 = vcombine.high %v7868, %v7868
        %v7877 = vcombine.high %v7875, %v7875
        %v7878 = vcombine.high %v7646, %v7646
        %v7880 = vunpack.c.l.s4 1983009808
        %v7881 = vunpack.c.0.s8 %v7880
        %v7882 = vlaneseq
        %v7883 = vshrl.u32 %v7882, 7
        %v7884 = vsub.s32 %v7881, %v7883
        %v7885 = vrot.slane %v7646, %v7884
        %v7887 = vunpack.c.l.s4 1983009808
        %v7888 = vunpack.c.0.s8 %v7887
        %v7889 = vlaneseq
        %v7890 = vshrl.u32 %v7889, 7
        %v7891 = vsub.s32 %v7888, %v7890
        %v7892 = vrot.slane %v7878, %v7891
        %v7893 = vcombine.high %v7885, %v7885
        %v7894 = vcombine.high %v7892, %v7892
        %v7895 = vcombine.high %v7647, %v7647
        %v7897 = vunpack.c.l.s4 1983009808
        %v7898 = vunpack.c.0.s8 %v7897
        %v7899 = vlaneseq
        %v7900 = vshrl.u32 %v7899, 7
        %v7901 = vsub.s32 %v7898, %v7900
        %v7902 = vrot.slane %v7647, %v7901
        %v7904 = vunpack.c.l.s4 1983009808
        %v7905 = vunpack.c.0.s8 %v7904
        %v7906 = vlaneseq
        %v7907 = vshrl.u32 %v7906, 7
        %v7908 = vsub.s32 %v7905, %v7907
        %v7909 = vrot.slane %v7895, %v7908
        %v7910 = vcombine.high %v7902, %v7902
        %v7911 = vcombine.high %v7909, %v7909
        %v7912 = vcombine.high %v7648, %v7648
        %v7914 = vunpack.c.l.s4 1983009808
        %v7915 = vunpack.c.0.s8 %v7914
        %v7916 = vlaneseq
        %v7917 = vshrl.u32 %v7916, 7
        %v7918 = vsub.s32 %v7915, %v7917
        %v7919 = vrot.slane %v7648, %v7918
        %v7921 = vunpack.c.l.s4 1983009808
        %v7922 = vunpack.c.0.s8 %v7921
        %v7923 = vlaneseq
        %v7924 = vshrl.u32 %v7923, 7
        %v7925 = vsub.s32 %v7922, %v7924
        %v7926 = vrot.slane %v7912, %v7925
        %v7927 = vcombine.high %v7919, %v7919
        %v7928 = vcombine.high %v7926, %v7926
        %v7929 = vcombine.high %v7649, %v7649
        %v7931 = vunpack.c.l.s4 1983009808
        %v7932 = vunpack.c.0.s8 %v7931
        %v7933 = vlaneseq
        %v7934 = vshrl.u32 %v7933, 7
        %v7935 = vsub.s32 %v7932, %v7934
        %v7936 = vrot.slane %v7649, %v7935
        %v7938 = vunpack.c.l.s4 1983009808
        %v7939 = vunpack.c.0.s8 %v7938
        %v7940 = vlaneseq
        %v7941 = vshrl.u32 %v7940, 7
        %v7942 = vsub.s32 %v7939, %v7941
        %v7943 = vrot.slane %v7929, %v7942
        %v7944 = vcombine.high %v7936, %v7936
        %v7945 = vcombine.high %v7943, %v7943
        %v7946 = vcombine.high %v7650, %v7650
        %v7948 = vunpack.c.l.s4 1983009808
        %v7949 = vunpack.c.0.s8 %v7948
        %v7950 = vlaneseq
        %v7951 = vshrl.u32 %v7950, 7
        %v7952 = vsub.s32 %v7949, %v7951
        %v7953 = vrot.slane %v7650, %v7952
        %v7955 = vunpack.c.l.s4 1983009808
        %v7956 = vunpack.c.0.s8 %v7955
        %v7957 = vlaneseq
        %v7958 = vshrl.u32 %v7957, 7
        %v7959 = vsub.s32 %v7956, %v7958
        %v7960 = vrot.slane %v7946, %v7959
        %v7961 = vcombine.high %v7953, %v7953
        %v7962 = vcombine.high %v7960, %v7960
        %v7963 = vcombine.high %v7651, %v7651
        %v7965 = vunpack.c.l.s4 1983009808
        %v7966 = vunpack.c.0.s8 %v7965
        %v7967 = vlaneseq
        %v7968 = vshrl.u32 %v7967, 7
        %v7969 = vsub.s32 %v7966, %v7968
        %v7970 = vrot.slane %v7651, %v7969
        %v7972 = vunpack.c.l.s4 1983009808
        %v7973 = vunpack.c.0.s8 %v7972
        %v7974 = vlaneseq
        %v7975 = vshrl.u32 %v7974, 7
        %v7976 = vsub.s32 %v7973, %v7975
        %v7977 = vrot.slane %v7963, %v7976
        %v7978 = vcombine.high %v7970, %v7970
        %v7979 = vcombine.high %v7977, %v7977
        %v7980 = vcombine.high %v7652, %v7652
        %v7982 = vunpack.c.l.s4 1983009808
        %v7983 = vunpack.c.0.s8 %v7982
        %v7984 = vlaneseq
        %v7985 = vshrl.u32 %v7984, 7
        %v7986 = vsub.s32 %v7983, %v7985
        %v7987 = vrot.slane %v7652, %v7986
        %v7989 = vunpack.c.l.s4 1983009808
        %v7990 = vunpack.c.0.s8 %v7989
        %v7991 = vlaneseq
        %v7992 = vshrl.u32 %v7991, 7
        %v7993 = vsub.s32 %v7990, %v7992
        %v7994 = vrot.slane %v7980, %v7993
        %v7995 = vcombine.high %v7987, %v7987
        %v7996 = vcombine.high %v7994, %v7994
        %v7997 = vcombine.high %v7653, %v7653
        %v7999 = vunpack.c.l.s4 1983009808
        %v8000 = vunpack.c.0.s8 %v7999
        %v8001 = vlaneseq
        %v8002 = vshrl.u32 %v8001, 7
        %v8003 = vsub.s32 %v8000, %v8002
        %v8004 = vrot.slane %v7653, %v8003
        %v8006 = vunpack.c.l.s4 1983009808
        %v8007 = vunpack.c.0.s8 %v8006
        %v8008 = vlaneseq
        %v8009 = vshrl.u32 %v8008, 7
        %v8010 = vsub.s32 %v8007, %v8009
        %v8011 = vrot.slane %v7997, %v8010
        %v8012 = vcombine.high %v8004, %v8004
        %v8013 = vcombine.high %v8011, %v8011
        %v8014 = vcombine.high %v7654, %v7654
        %v8016 = vunpack.c.l.s4 1983009808
        %v8017 = vunpack.c.0.s8 %v8016
        %v8018 = vlaneseq
        %v8019 = vshrl.u32 %v8018, 7
        %v8020 = vsub.s32 %v8017, %v8019
        %v8021 = vrot.slane %v7654, %v8020
        %v8023 = vunpack.c.l.s4 1983009808
        %v8024 = vunpack.c.0.s8 %v8023
        %v8025 = vlaneseq
        %v8026 = vshrl.u32 %v8025, 7
        %v8027 = vsub.s32 %v8024, %v8026
        %v8028 = vrot.slane %v8014, %v8027
        %v8029 = vcombine.high %v8021, %v8021
        %v8030 = vcombine.high %v8028, %v8028
        %v8031 = vcombine.high %v7655, %v7655
        %v8033 = vunpack.c.l.s4 1983009808
        %v8034 = vunpack.c.0.s8 %v8033
        %v8035 = vlaneseq
        %v8036 = vshrl.u32 %v8035, 7
        %v8037 = vsub.s32 %v8034, %v8036
        %v8038 = vrot.slane %v7655, %v8037
        %v8040 = vunpack.c.l.s4 1983009808
        %v8041 = vunpack.c.0.s8 %v8040
        %v8042 = vlaneseq
        %v8043 = vshrl.u32 %v8042, 7
        %v8044 = vsub.s32 %v8041, %v8043
        %v8045 = vrot.slane %v8031, %v8044
        %v8046 = vcombine.high %v8038, %v8038
        %v8047 = vcombine.high %v8045, %v8045
        %v8048 = vcombine.high %v7656, %v7656
        %v8050 = vunpack.c.l.s4 1983009808
        %v8051 = vunpack.c.0.s8 %v8050
        %v8052 = vlaneseq
        %v8053 = vshrl.u32 %v8052, 7
        %v8054 = vsub.s32 %v8051, %v8053
        %v8055 = vrot.slane %v7656, %v8054
        %v8057 = vunpack.c.l.s4 1983009808
        %v8058 = vunpack.c.0.s8 %v8057
        %v8059 = vlaneseq
        %v8060 = vshrl.u32 %v8059, 7
        %v8061 = vsub.s32 %v8058, %v8060
        %v8062 = vrot.slane %v8048, %v8061
        %v8063 = vcombine.high %v8055, %v8055
        %v8064 = vcombine.high %v8062, %v8062
        %v8065 = vcombine.high %v7657, %v7657
        %v8067 = vunpack.c.l.s4 1983009808
        %v8068 = vunpack.c.0.s8 %v8067
        %v8069 = vlaneseq
        %v8070 = vshrl.u32 %v8069, 7
        %v8071 = vsub.s32 %v8068, %v8070
        %v8072 = vrot.slane %v7657, %v8071
        %v8074 = vunpack.c.l.s4 1983009808
        %v8075 = vunpack.c.0.s8 %v8074
        %v8076 = vlaneseq
        %v8077 = vshrl.u32 %v8076, 7
        %v8078 = vsub.s32 %v8075, %v8077
        %v8079 = vrot.slane %v8065, %v8078
        %v8080 = vcombine.high %v8072, %v8072
        %v8081 = vcombine.high %v8079, %v8079
        %v8082 = vcombine.high %v7658, %v7658
        %v8084 = vunpack.c.l.s4 1983009808
        %v8085 = vunpack.c.0.s8 %v8084
        %v8086 = vlaneseq
        %v8087 = vshrl.u32 %v8086, 7
        %v8088 = vsub.s32 %v8085, %v8087
        %v8089 = vrot.slane %v7658, %v8088
        %v8091 = vunpack.c.l.s4 1983009808
        %v8092 = vunpack.c.0.s8 %v8091
        %v8093 = vlaneseq
        %v8094 = vshrl.u32 %v8093, 7
        %v8095 = vsub.s32 %v8092, %v8094
        %v8096 = vrot.slane %v8082, %v8095
        %v8097 = vcombine.high %v8089, %v8089
        %v8098 = vcombine.high %v8096, %v8096
        %v8099 = vcombine.high %v7659, %v7659
        %v8101 = vunpack.c.l.s4 1983009808
        %v8102 = vunpack.c.0.s8 %v8101
        %v8103 = vlaneseq
        %v8104 = vshrl.u32 %v8103, 7
        %v8105 = vsub.s32 %v8102, %v8104
        %v8106 = vrot.slane %v7659, %v8105
        %v8108 = vunpack.c.l.s4 1983009808
        %v8109 = vunpack.c.0.s8 %v8108
        %v8110 = vlaneseq
        %v8111 = vshrl.u32 %v8110, 7
        %v8112 = vsub.s32 %v8109, %v8111
        %v8113 = vrot.slane %v8099, %v8112
        %v8114 = vcombine.high %v8106, %v8106
        %v8115 = vcombine.high %v8113, %v8113
        %v8116 = vcombine.high %v7660, %v7660
        %v8118 = vunpack.c.l.s4 1983009808
        %v8119 = vunpack.c.0.s8 %v8118
        %v8120 = vlaneseq
        %v8121 = vshrl.u32 %v8120, 7
        %v8122 = vsub.s32 %v8119, %v8121
        %v8123 = vrot.slane %v7660, %v8122
        %v8125 = vunpack.c.l.s4 1983009808
        %v8126 = vunpack.c.0.s8 %v8125
        %v8127 = vlaneseq
        %v8128 = vshrl.u32 %v8127, 7
        %v8129 = vsub.s32 %v8126, %v8128
        %v8130 = vrot.slane %v8116, %v8129
        %v8131 = vcombine.high %v8123, %v8123
        %v8132 = vcombine.high %v8130, %v8130
        %v8133 = vcombine.high %v7661, %v7661
        %v8135 = vunpack.c.l.s4 1983009808
        %v8136 = vunpack.c.0.s8 %v8135
        %v8137 = vlaneseq
        %v8138 = vshrl.u32 %v8137, 7
        %v8139 = vsub.s32 %v8136, %v8138
        %v8140 = vrot.slane %v7661, %v8139
        %v8142 = vunpack.c.l.s4 1983009808
        %v8143 = vunpack.c.0.s8 %v8142
        %v8144 = vlaneseq
        %v8145 = vshrl.u32 %v8144, 7
        %v8146 = vsub.s32 %v8143, %v8145
        %v8147 = vrot.slane %v8133, %v8146
        %v8148 = vcombine.high %v8140, %v8140
        %v8149 = vcombine.high %v8147, %v8147
        %v8150 = vcombine.high %v7662, %v7662
        %v8152 = vunpack.c.l.s4 1983009808
        %v8153 = vunpack.c.0.s8 %v8152
        %v8154 = vlaneseq
        %v8155 = vshrl.u32 %v8154, 7
        %v8156 = vsub.s32 %v8153, %v8155
        %v8157 = vrot.slane %v7662, %v8156
        %v8159 = vunpack.c.l.s4 1983009808
        %v8160 = vunpack.c.0.s8 %v8159
        %v8161 = vlaneseq
        %v8162 = vshrl.u32 %v8161, 7
        %v8163 = vsub.s32 %v8160, %v8162
        %v8164 = vrot.slane %v8150, %v8163
        %v8165 = vcombine.high %v8157, %v8157
        %v8166 = vcombine.high %v8164, %v8164
        %v8167 = vcombine.high %v7663, %v7663
        %v8169 = vunpack.c.l.s4 1983009808
        %v8170 = vunpack.c.0.s8 %v8169
        %v8171 = vlaneseq
        %v8172 = vshrl.u32 %v8171, 7
        %v8173 = vsub.s32 %v8170, %v8172
        %v8174 = vrot.slane %v7663, %v8173
        %v8176 = vunpack.c.l.s4 1983009808
        %v8177 = vunpack.c.0.s8 %v8176
        %v8178 = vlaneseq
        %v8179 = vshrl.u32 %v8178, 7
        %v8180 = vsub.s32 %v8177, %v8179
        %v8181 = vrot.slane %v8167, %v8180
        %v8182 = vcombine.high %v8174, %v8174
        %v8183 = vcombine.high %v8181, %v8181
        %v8184 = vcombine.high %v7664, %v7664
        %v8186 = vunpack.c.l.s4 1983009808
        %v8187 = vunpack.c.0.s8 %v8186
        %v8188 = vlaneseq
        %v8189 = vshrl.u32 %v8188, 7
        %v8190 = vsub.s32 %v8187, %v8189
        %v8191 = vrot.slane %v7664, %v8190
        %v8193 = vunpack.c.l.s4 1983009808
        %v8194 = vunpack.c.0.s8 %v8193
        %v8195 = vlaneseq
        %v8196 = vshrl.u32 %v8195, 7
        %v8197 = vsub.s32 %v8194, %v8196
        %v8198 = vrot.slane %v8184, %v8197
        %v8199 = vcombine.high %v8191, %v8191
        %v8200 = vcombine.high %v8198, %v8198
        %v8201 = vcombine.high %v7665, %v7665
        %v8203 = vunpack.c.l.s4 1983009808
        %v8204 = vunpack.c.0.s8 %v8203
        %v8205 = vlaneseq
        %v8206 = vshrl.u32 %v8205, 7
        %v8207 = vsub.s32 %v8204, %v8206
        %v8208 = vrot.slane %v7665, %v8207
        %v8210 = vunpack.c.l.s4 1983009808
        %v8211 = vunpack.c.0.s8 %v8210
        %v8212 = vlaneseq
        %v8213 = vshrl.u32 %v8212, 7
        %v8214 = vsub.s32 %v8211, %v8213
        %v8215 = vrot.slane %v8201, %v8214
        %v8216 = vcombine.high %v8208, %v8208
        %v8217 = vcombine.high %v8215, %v8215
        %v8218 = vcombine.high %v7666, %v7666
        %v8220 = vunpack.c.l.s4 1983009808
        %v8221 = vunpack.c.0.s8 %v8220
        %v8222 = vlaneseq
        %v8223 = vshrl.u32 %v8222, 7
        %v8224 = vsub.s32 %v8221, %v8223
        %v8225 = vrot.slane %v7666, %v8224
        %v8227 = vunpack.c.l.s4 1983009808
        %v8228 = vunpack.c.0.s8 %v8227
        %v8229 = vlaneseq
        %v8230 = vshrl.u32 %v8229, 7
        %v8231 = vsub.s32 %v8228, %v8230
        %v8232 = vrot.slane %v8218, %v8231
        %v8233 = vcombine.high %v8225, %v8225
        %v8234 = vcombine.high %v8232, %v8232
        %v8235 = vcombine.high %v7667, %v7667
        %v8237 = vunpack.c.l.s4 1983009808
        %v8238 = vunpack.c.0.s8 %v8237
        %v8239 = vlaneseq
        %v8240 = vshrl.u32 %v8239, 7
        %v8241 = vsub.s32 %v8238, %v8240
        %v8242 = vrot.slane %v7667, %v8241
        %v8244 = vunpack.c.l.s4 1983009808
        %v8245 = vunpack.c.0.s8 %v8244
        %v8246 = vlaneseq
        %v8247 = vshrl.u32 %v8246, 7
        %v8248 = vsub.s32 %v8245, %v8247
        %v8249 = vrot.slane %v8235, %v8248
        %v8250 = vcombine.high %v8242, %v8242
        %v8251 = vcombine.high %v8249, %v8249
        %v8252 = vcombine.high %v7668, %v7668
        %v8254 = vunpack.c.l.s4 1983009808
        %v8255 = vunpack.c.0.s8 %v8254
        %v8256 = vlaneseq
        %v8257 = vshrl.u32 %v8256, 7
        %v8258 = vsub.s32 %v8255, %v8257
        %v8259 = vrot.slane %v7668, %v8258
        %v8261 = vunpack.c.l.s4 1983009808
        %v8262 = vunpack.c.0.s8 %v8261
        %v8263 = vlaneseq
        %v8264 = vshrl.u32 %v8263, 7
        %v8265 = vsub.s32 %v8262, %v8264
        %v8266 = vrot.slane %v8252, %v8265
        %v8267 = vcombine.high %v8259, %v8259
        %v8268 = vcombine.high %v8266, %v8266
        %v8269 = vcombine.high %v7669, %v7669
        %v8271 = vunpack.c.l.s4 1983009808
        %v8272 = vunpack.c.0.s8 %v8271
        %v8273 = vlaneseq
        %v8274 = vshrl.u32 %v8273, 7
        %v8275 = vsub.s32 %v8272, %v8274
        %v8276 = vrot.slane %v7669, %v8275
        %v8278 = vunpack.c.l.s4 1983009808
        %v8279 = vunpack.c.0.s8 %v8278
        %v8280 = vlaneseq
        %v8281 = vshrl.u32 %v8280, 7
        %v8282 = vsub.s32 %v8279, %v8281
        %v8283 = vrot.slane %v8269, %v8282
        %v8284 = vcombine.high %v8276, %v8276
        %v8285 = vcombine.high %v8283, %v8283
        %v8286 = vcombine.high %v7670, %v7670
        %v8288 = vunpack.c.l.s4 1983009808
        %v8289 = vunpack.c.0.s8 %v8288
        %v8290 = vlaneseq
        %v8291 = vshrl.u32 %v8290, 7
        %v8292 = vsub.s32 %v8289, %v8291
        %v8293 = vrot.slane %v7670, %v8292
        %v8295 = vunpack.c.l.s4 1983009808
        %v8296 = vunpack.c.0.s8 %v8295
        %v8297 = vlaneseq
        %v8298 = vshrl.u32 %v8297, 7
        %v8299 = vsub.s32 %v8296, %v8298
        %v8300 = vrot.slane %v8286, %v8299
        %v8301 = vcombine.high %v8293, %v8293
        %v8302 = vcombine.high %v8300, %v8300
        %v8303 = vcombine.high %v7671, %v7671
        %v8305 = vunpack.c.l.s4 1983009808
        %v8306 = vunpack.c.0.s8 %v8305
        %v8307 = vlaneseq
        %v8308 = vshrl.u32 %v8307, 7
        %v8309 = vsub.s32 %v8306, %v8308
        %v8310 = vrot.slane %v7671, %v8309
        %v8312 = vunpack.c.l.s4 1983009808
        %v8313 = vunpack.c.0.s8 %v8312
        %v8314 = vlaneseq
        %v8315 = vshrl.u32 %v8314, 7
        %v8316 = vsub.s32 %v8313, %v8315
        %v8317 = vrot.slane %v8303, %v8316
        %v8318 = vcombine.high %v8310, %v8310
        %v8319 = vcombine.high %v8317, %v8317
        %v8320 = vcombine.low %v7715, %v7723
        %v8321 = vcombine.low %v7722, %v7724
        %v8323 = vunpack.c.l.s4 1983009808
        %v8324 = vunpack.c.0.s8 %v8323
        %v8325 = vlaneseq
        %v8326 = vshrl.u32 %v8325, 7
        %v8327 = vsub.s32 %v8324, %v8326
        %v8328 = vrot.slane %v8320, %v8327
        %v8330 = vunpack.c.l.s4 1983009808
        %v8331 = vunpack.c.0.s8 %v8330
        %v8332 = vlaneseq
        %v8333 = vshrl.u32 %v8332, 7
        %v8334 = vsub.s32 %v8331, %v8333
        %v8335 = vrot.slane %v8321, %v8334
        %v8336 = vcombine.low %v8328, %v8335
        %v8337 = vcombine.low %v7732, %v7740
        %v8338 = vcombine.low %v7739, %v7741
        %v8340 = vunpack.c.l.s4 1983009808
        %v8341 = vunpack.c.0.s8 %v8340
        %v8342 = vlaneseq
        %v8343 = vshrl.u32 %v8342, 7
        %v8344 = vsub.s32 %v8341, %v8343
        %v8345 = vrot.slane %v8337, %v8344
        %v8347 = vunpack.c.l.s4 1983009808
        %v8348 = vunpack.c.0.s8 %v8347
        %v8349 = vlaneseq
        %v8350 = vshrl.u32 %v8349, 7
        %v8351 = vsub.s32 %v8348, %v8350
        %v8352 = vrot.slane %v8338, %v8351
        %v8353 = vcombine.low %v8345, %v8352
        %v8355 = vunpack.c.l.s4 1983009808
        %v8356 = vunpack.c.0.s8 %v8355
        %v8357 = vlaneseq
        %v8358 = vshrl.u32 %v8357, 7
        %v8359 = vsub.s32 %v8356, %v8358
        %v8360 = vrot.slane %v7749, %v8359
        %v8361 = vcombine.low %v7757, %v7756
        %v8362 = vcombine.low %v7758, %v7766
        %v8364 = vunpack.c.l.s4 1983009808
        %v8365 = vunpack.c.0.s8 %v8364
        %v8366 = vlaneseq
        %v8367 = vshrl.u32 %v8366, 7
        %v8368 = vsub.s32 %v8365, %v8367
        %v8369 = vrot.slane %v8361, %v8368
        %v8371 = vunpack.c.l.s4 1983009808
        %v8372 = vunpack.c.0.s8 %v8371
        %v8373 = vlaneseq
        %v8374 = vshrl.u32 %v8373, 7
        %v8375 = vsub.s32 %v8372, %v8374
        %v8376 = vrot.slane %v8362, %v8375
        %v8377 = vcombine.low %v8369, %v8376
        %v8378 = vcombine.low %v7774, %v7773
        %v8379 = vcombine.low %v7775, %v7783
        %v8381 = vunpack.c.l.s4 1983009808
        %v8382 = vunpack.c.0.s8 %v8381
        %v8383 = vlaneseq
        %v8384 = vshrl.u32 %v8383, 7
        %v8385 = vsub.s32 %v8382, %v8384
        %v8386 = vrot.slane %v8378, %v8385
        %v8388 = vunpack.c.l.s4 1983009808
        %v8389 = vunpack.c.0.s8 %v8388
        %v8390 = vlaneseq
        %v8391 = vshrl.u32 %v8390, 7
        %v8392 = vsub.s32 %v8389, %v8391
        %v8393 = vrot.slane %v8379, %v8392
        %v8394 = vcombine.low %v8386, %v8393
        %v8396 = vunpack.c.l.s4 1983009808
        %v8397 = vunpack.c.0.s8 %v8396
        %v8398 = vlaneseq
        %v8399 = vshrl.u32 %v8398, 7
        %v8400 = vsub.s32 %v8397, %v8399
        %v8401 = vrot.slane %v7791, %v8400
        %v8402 = vcombine.low %v7790, %v7792
        %v8403 = vcombine.low %v7800, %v7808
        %v8405 = vunpack.c.l.s4 1983009808
        %v8406 = vunpack.c.0.s8 %v8405
        %v8407 = vlaneseq
        %v8408 = vshrl.u32 %v8407, 7
        %v8409 = vsub.s32 %v8406, %v8408
        %v8410 = vrot.slane %v8402, %v8409
        %v8412 = vunpack.c.l.s4 1983009808
        %v8413 = vunpack.c.0.s8 %v8412
        %v8414 = vlaneseq
        %v8415 = vshrl.u32 %v8414, 7
        %v8416 = vsub.s32 %v8413, %v8415
        %v8417 = vrot.slane %v8403, %v8416
        %v8418 = vcombine.low %v8410, %v8417
        %v8419 = vcombine.low %v7807, %v7809
        %v8420 = vcombine.low %v7817, %v7825
        %v8422 = vunpack.c.l.s4 1983009808
        %v8423 = vunpack.c.0.s8 %v8422
        %v8424 = vlaneseq
        %v8425 = vshrl.u32 %v8424, 7
        %v8426 = vsub.s32 %v8423, %v8425
        %v8427 = vrot.slane %v8419, %v8426
        %v8429 = vunpack.c.l.s4 1983009808
        %v8430 = vunpack.c.0.s8 %v8429
        %v8431 = vlaneseq
        %v8432 = vshrl.u32 %v8431, 7
        %v8433 = vsub.s32 %v8430, %v8432
        %v8434 = vrot.slane %v8420, %v8433
        %v8435 = vcombine.low %v8427, %v8434
        %v8437 = vunpack.c.l.s4 1983009808
        %v8438 = vunpack.c.0.s8 %v8437
        %v8439 = vlaneseq
        %v8440 = vshrl.u32 %v8439, 7
        %v8441 = vsub.s32 %v8438, %v8440
        %v8442 = vrot.slane %v7824, %v8441
        %v8443 = vcombine.low %v7826, %v7834
        %v8444 = vcombine.low %v7842, %v7841
        %v8446 = vunpack.c.l.s4 1983009808
        %v8447 = vunpack.c.0.s8 %v8446
        %v8448 = vlaneseq
        %v8449 = vshrl.u32 %v8448, 7
        %v8450 = vsub.s32 %v8447, %v8449
        %v8451 = vrot.slane %v8443, %v8450
        %v8453 = vunpack.c.l.s4 1983009808
        %v8454 = vunpack.c.0.s8 %v8453
        %v8455 = vlaneseq
        %v8456 = vshrl.u32 %v8455, 7
        %v8457 = vsub.s32 %v8454, %v8456
        %v8458 = vrot.slane %v8444, %v8457
        %v8459 = vcombine.low %v8451, %v8458
        %v8460 = vcombine.low %v7843, %v7851
        %v8461 = vcombine.low %v7859, %v7858
        %v8463 = vunpack.c.l.s4 1983009808
        %v8464 = vunpack.c.0.s8 %v8463
        %v8465 = vlaneseq
        %v8466 = vshrl.u32 %v8465, 7
        %v8467 = vsub.s32 %v8464, %v8466
        %v8468 = vrot.slane %v8460, %v8467
        %v8470 = vunpack.c.l.s4 1983009808
        %v8471 = vunpack.c.0.s8 %v8470
        %v8472 = vlaneseq
        %v8473 = vshrl.u32 %v8472, 7
        %v8474 = vsub.s32 %v8471, %v8473
        %v8475 = vrot.slane %v8461, %v8474
        %v8476 = vcombine.low %v8468, %v8475
        %v8478 = vunpack.c.l.s4 1983009808
        %v8479 = vunpack.c.0.s8 %v8478
        %v8480 = vlaneseq
        %v8481 = vshrl.u32 %v8480, 7
        %v8482 = vsub.s32 %v8479, %v8481
        %v8483 = vrot.slane %v7860, %v8482
        %v8484 = vcombine.low %v7868, %v7876
        %v8485 = vcombine.low %v7875, %v7877
        %v8487 = vunpack.c.l.s4 1983009808
        %v8488 = vunpack.c.0.s8 %v8487
        %v8489 = vlaneseq
        %v8490 = vshrl.u32 %v8489, 7
        %v8491 = vsub.s32 %v8488, %v8490
        %v8492 = vrot.slane %v8484, %v8491
        %v8494 = vunpack.c.l.s4 1983009808
        %v8495 = vunpack.c.0.s8 %v8494
        %v8496 = vlaneseq
        %v8497 = vshrl.u32 %v8496, 7
        %v8498 = vsub.s32 %v8495, %v8497
        %v8499 = vrot.slane %v8485, %v8498
        %v8500 = vcombine.low %v8492, %v8499
        %v8501 = vcombine.low %v7885, %v7893
        %v8502 = vcombine.low %v7892, %v7894
        %v8504 = vunpack.c.l.s4 1983009808
        %v8505 = vunpack.c.0.s8 %v8504
        %v8506 = vlaneseq
        %v8507 = vshrl.u32 %v8506, 7
        %v8508 = vsub.s32 %v8505, %v8507
        %v8509 = vrot.slane %v8501, %v8508
        %v8511 = vunpack.c.l.s4 1983009808
        %v8512 = vunpack.c.0.s8 %v8511
        %v8513 = vlaneseq
        %v8514 = vshrl.u32 %v8513, 7
        %v8515 = vsub.s32 %v8512, %v8514
        %v8516 = vrot.slane %v8502, %v8515
        %v8517 = vcombine.low %v8509, %v8516
        %v8519 = vunpack.c.l.s4 1983009808
        %v8520 = vunpack.c.0.s8 %v8519
        %v8521 = vlaneseq
        %v8522 = vshrl.u32 %v8521, 7
        %v8523 = vsub.s32 %v8520, %v8522
        %v8524 = vrot.slane %v7902, %v8523
        %v8525 = vcombine.low %v7910, %v7909
        %v8526 = vcombine.low %v7911, %v7919
        %v8528 = vunpack.c.l.s4 1983009808
        %v8529 = vunpack.c.0.s8 %v8528
        %v8530 = vlaneseq
        %v8531 = vshrl.u32 %v8530, 7
        %v8532 = vsub.s32 %v8529, %v8531
        %v8533 = vrot.slane %v8525, %v8532
        %v8535 = vunpack.c.l.s4 1983009808
        %v8536 = vunpack.c.0.s8 %v8535
        %v8537 = vlaneseq
        %v8538 = vshrl.u32 %v8537, 7
        %v8539 = vsub.s32 %v8536, %v8538
        %v8540 = vrot.slane %v8526, %v8539
        %v8541 = vcombine.low %v8533, %v8540
        %v8542 = vcombine.low %v7927, %v7926
        %v8543 = vcombine.low %v7928, %v7936
        %v8545 = vunpack.c.l.s4 1983009808
        %v8546 = vunpack.c.0.s8 %v8545
        %v8547 = vlaneseq
        %v8548 = vshrl.u32 %v8547, 7
        %v8549 = vsub.s32 %v8546, %v8548
        %v8550 = vrot.slane %v8542, %v8549
        %v8552 = vunpack.c.l.s4 1983009808
        %v8553 = vunpack.c.0.s8 %v8552
        %v8554 = vlaneseq
        %v8555 = vshrl.u32 %v8554, 7
        %v8556 = vsub.s32 %v8553, %v8555
        %v8557 = vrot.slane %v8543, %v8556
        %v8558 = vcombine.low %v8550, %v8557
        %v8560 = vunpack.c.l.s4 1983009808
        %v8561 = vunpack.c.0.s8 %v8560
        %v8562 = vlaneseq
        %v8563 = vshrl.u32 %v8562, 7
        %v8564 = vsub.s32 %v8561, %v8563
        %v8565 = vrot.slane %v7944, %v8564
        %v8566 = vcombine.low %v7943, %v7945
        %v8567 = vcombine.low %v7953, %v7961
        %v8569 = vunpack.c.l.s4 1983009808
        %v8570 = vunpack.c.0.s8 %v8569
        %v8571 = vlaneseq
        %v8572 = vshrl.u32 %v8571, 7
        %v8573 = vsub.s32 %v8570, %v8572
        %v8574 = vrot.slane %v8566, %v8573
        %v8576 = vunpack.c.l.s4 1983009808
        %v8577 = vunpack.c.0.s8 %v8576
        %v8578 = vlaneseq
        %v8579 = vshrl.u32 %v8578, 7
        %v8580 = vsub.s32 %v8577, %v8579
        %v8581 = vrot.slane %v8567, %v8580
        %v8582 = vcombine.low %v8574, %v8581
        %v8583 = vcombine.low %v7960, %v7962
        %v8584 = vcombine.low %v7970, %v7978
        %v8586 = vunpack.c.l.s4 1983009808
        %v8587 = vunpack.c.0.s8 %v8586
        %v8588 = vlaneseq
        %v8589 = vshrl.u32 %v8588, 7
        %v8590 = vsub.s32 %v8587, %v8589
        %v8591 = vrot.slane %v8583, %v8590
        %v8593 = vunpack.c.l.s4 1983009808
        %v8594 = vunpack.c.0.s8 %v8593
        %v8595 = vlaneseq
        %v8596 = vshrl.u32 %v8595, 7
        %v8597 = vsub.s32 %v8594, %v8596
        %v8598 = vrot.slane %v8584, %v8597
        %v8599 = vcombine.low %v8591, %v8598
        %v8601 = vunpack.c.l.s4 1983009808
        %v8602 = vunpack.c.0.s8 %v8601
        %v8603 = vlaneseq
        %v8604 = vshrl.u32 %v8603, 7
        %v8605 = vsub.s32 %v8602, %v8604
        %v8606 = vrot.slane %v7977, %v8605
        %v8607 = vcombine.low %v7979, %v7987
        %v8608 = vcombine.low %v7995, %v7994
        %v8610 = vunpack.c.l.s4 1983009808
        %v8611 = vunpack.c.0.s8 %v8610
        %v8612 = vlaneseq
        %v8613 = vshrl.u32 %v8612, 7
        %v8614 = vsub.s32 %v8611, %v8613
        %v8615 = vrot.slane %v8607, %v8614
        %v8617 = vunpack.c.l.s4 1983009808
        %v8618 = vunpack.c.0.s8 %v8617
        %v8619 = vlaneseq
        %v8620 = vshrl.u32 %v8619, 7
        %v8621 = vsub.s32 %v8618, %v8620
        %v8622 = vrot.slane %v8608, %v8621
        %v8623 = vcombine.low %v8615, %v8622
        %v8624 = vcombine.low %v7996, %v8004
        %v8625 = vcombine.low %v8012, %v8011
        %v8627 = vunpack.c.l.s4 1983009808
        %v8628 = vunpack.c.0.s8 %v8627
        %v8629 = vlaneseq
        %v8630 = vshrl.u32 %v8629, 7
        %v8631 = vsub.s32 %v8628, %v8630
        %v8632 = vrot.slane %v8624, %v8631
        %v8634 = vunpack.c.l.s4 1983009808
        %v8635 = vunpack.c.0.s8 %v8634
        %v8636 = vlaneseq
        %v8637 = vshrl.u32 %v8636, 7
        %v8638 = vsub.s32 %v8635, %v8637
        %v8639 = vrot.slane %v8625, %v8638
        %v8640 = vcombine.low %v8632, %v8639
        %v8642 = vunpack.c.l.s4 1983009808
        %v8643 = vunpack.c.0.s8 %v8642
        %v8644 = vlaneseq
        %v8645 = vshrl.u32 %v8644, 7
        %v8646 = vsub.s32 %v8643, %v8645
        %v8647 = vrot.slane %v8013, %v8646
        %v8648 = vcombine.low %v8021, %v8029
        %v8649 = vcombine.low %v8028, %v8030
        %v8651 = vunpack.c.l.s4 1983009808
        %v8652 = vunpack.c.0.s8 %v8651
        %v8653 = vlaneseq
        %v8654 = vshrl.u32 %v8653, 7
        %v8655 = vsub.s32 %v8652, %v8654
        %v8656 = vrot.slane %v8648, %v8655
        %v8658 = vunpack.c.l.s4 1983009808
        %v8659 = vunpack.c.0.s8 %v8658
        %v8660 = vlaneseq
        %v8661 = vshrl.u32 %v8660, 7
        %v8662 = vsub.s32 %v8659, %v8661
        %v8663 = vrot.slane %v8649, %v8662
        %v8664 = vcombine.low %v8656, %v8663
        %v8665 = vcombine.low %v8038, %v8046
        %v8666 = vcombine.low %v8045, %v8047
        %v8668 = vunpack.c.l.s4 1983009808
        %v8669 = vunpack.c.0.s8 %v8668
        %v8670 = vlaneseq
        %v8671 = vshrl.u32 %v8670, 7
        %v8672 = vsub.s32 %v8669, %v8671
        %v8673 = vrot.slane %v8665, %v8672
        %v8675 = vunpack.c.l.s4 1983009808
        %v8676 = vunpack.c.0.s8 %v8675
        %v8677 = vlaneseq
        %v8678 = vshrl.u32 %v8677, 7
        %v8679 = vsub.s32 %v8676, %v8678
        %v8680 = vrot.slane %v8666, %v8679
        %v8681 = vcombine.low %v8673, %v8680
        %v8683 = vunpack.c.l.s4 1983009808
        %v8684 = vunpack.c.0.s8 %v8683
        %v8685 = vlaneseq
        %v8686 = vshrl.u32 %v8685, 7
        %v8687 = vsub.s32 %v8684, %v8686
        %v8688 = vrot.slane %v8055, %v8687
        %v8689 = vcombine.low %v8063, %v8062
        %v8690 = vcombine.low %v8064, %v8072
        %v8692 = vunpack.c.l.s4 1983009808
        %v8693 = vunpack.c.0.s8 %v8692
        %v8694 = vlaneseq
        %v8695 = vshrl.u32 %v8694, 7
        %v8696 = vsub.s32 %v8693, %v8695
        %v8697 = vrot.slane %v8689, %v8696
        %v8699 = vunpack.c.l.s4 1983009808
        %v8700 = vunpack.c.0.s8 %v8699
        %v8701 = vlaneseq
        %v8702 = vshrl.u32 %v8701, 7
        %v8703 = vsub.s32 %v8700, %v8702
        %v8704 = vrot.slane %v8690, %v8703
        %v8705 = vcombine.low %v8697, %v8704
        %v8706 = vcombine.low %v8080, %v8079
        %v8707 = vcombine.low %v8081, %v8089
        %v8709 = vunpack.c.l.s4 1983009808
        %v8710 = vunpack.c.0.s8 %v8709
        %v8711 = vlaneseq
        %v8712 = vshrl.u32 %v8711, 7
        %v8713 = vsub.s32 %v8710, %v8712
        %v8714 = vrot.slane %v8706, %v8713
        %v8716 = vunpack.c.l.s4 1983009808
        %v8717 = vunpack.c.0.s8 %v8716
        %v8718 = vlaneseq
        %v8719 = vshrl.u32 %v8718, 7
        %v8720 = vsub.s32 %v8717, %v8719
        %v8721 = vrot.slane %v8707, %v8720
        %v8722 = vcombine.low %v8714, %v8721
        %v8724 = vunpack.c.l.s4 1983009808
        %v8725 = vunpack.c.0.s8 %v8724
        %v8726 = vlaneseq
        %v8727 = vshrl.u32 %v8726, 7
        %v8728 = vsub.s32 %v8725, %v8727
        %v8729 = vrot.slane %v8097, %v8728
        %v8730 = vcombine.low %v8096, %v8098
        %v8731 = vcombine.low %v8106, %v8114
        %v8733 = vunpack.c.l.s4 1983009808
        %v8734 = vunpack.c.0.s8 %v8733
        %v8735 = vlaneseq
        %v8736 = vshrl.u32 %v8735, 7
        %v8737 = vsub.s32 %v8734, %v8736
        %v8738 = vrot.slane %v8730, %v8737
        %v8740 = vunpack.c.l.s4 1983009808
        %v8741 = vunpack.c.0.s8 %v8740
        %v8742 = vlaneseq
        %v8743 = vshrl.u32 %v8742, 7
        %v8744 = vsub.s32 %v8741, %v8743
        %v8745 = vrot.slane %v8731, %v8744
        %v8746 = vcombine.low %v8738, %v8745
        %v8747 = vcombine.low %v8113, %v8115
        %v8748 = vcombine.low %v8123, %v8131
        %v8750 = vunpack.c.l.s4 1983009808
        %v8751 = vunpack.c.0.s8 %v8750
        %v8752 = vlaneseq
        %v8753 = vshrl.u32 %v8752, 7
        %v8754 = vsub.s32 %v8751, %v8753
        %v8755 = vrot.slane %v8747, %v8754
        %v8757 = vunpack.c.l.s4 1983009808
        %v8758 = vunpack.c.0.s8 %v8757
        %v8759 = vlaneseq
        %v8760 = vshrl.u32 %v8759, 7
        %v8761 = vsub.s32 %v8758, %v8760
        %v8762 = vrot.slane %v8748, %v8761
        %v8763 = vcombine.low %v8755, %v8762
        %v8765 = vunpack.c.l.s4 1983009808
        %v8766 = vunpack.c.0.s8 %v8765
        %v8767 = vlaneseq
        %v8768 = vshrl.u32 %v8767, 7
        %v8769 = vsub.s32 %v8766, %v8768
        %v8770 = vrot.slane %v8130, %v8769
        %v8771 = vcombine.low %v8132, %v8140
        %v8772 = vcombine.low %v8148, %v8147
        %v8774 = vunpack.c.l.s4 1983009808
        %v8775 = vunpack.c.0.s8 %v8774
        %v8776 = vlaneseq
        %v8777 = vshrl.u32 %v8776, 7
        %v8778 = vsub.s32 %v8775, %v8777
        %v8779 = vrot.slane %v8771, %v8778
        %v8781 = vunpack.c.l.s4 1983009808
        %v8782 = vunpack.c.0.s8 %v8781
        %v8783 = vlaneseq
        %v8784 = vshrl.u32 %v8783, 7
        %v8785 = vsub.s32 %v8782, %v8784
        %v8786 = vrot.slane %v8772, %v8785
        %v8787 = vcombine.low %v8779, %v8786
        %v8788 = vcombine.low %v8149, %v8157
        %v8789 = vcombine.low %v8165, %v8164
        %v8791 = vunpack.c.l.s4 1983009808
        %v8792 = vunpack.c.0.s8 %v8791
        %v8793 = vlaneseq
        %v8794 = vshrl.u32 %v8793, 7
        %v8795 = vsub.s32 %v8792, %v8794
        %v8796 = vrot.slane %v8788, %v8795
        %v8798 = vunpack.c.l.s4 1983009808
        %v8799 = vunpack.c.0.s8 %v8798
        %v8800 = vlaneseq
        %v8801 = vshrl.u32 %v8800, 7
        %v8802 = vsub.s32 %v8799, %v8801
        %v8803 = vrot.slane %v8789, %v8802
        %v8804 = vcombine.low %v8796, %v8803
        %v8806 = vunpack.c.l.s4 1983009808
        %v8807 = vunpack.c.0.s8 %v8806
        %v8808 = vlaneseq
        %v8809 = vshrl.u32 %v8808, 7
        %v8810 = vsub.s32 %v8807, %v8809
        %v8811 = vrot.slane %v8166, %v8810
        %v8812 = vcombine.low %v8174, %v8182
        %v8813 = vcombine.low %v8181, %v8183
        %v8815 = vunpack.c.l.s4 1983009808
        %v8816 = vunpack.c.0.s8 %v8815
        %v8817 = vlaneseq
        %v8818 = vshrl.u32 %v8817, 7
        %v8819 = vsub.s32 %v8816, %v8818
        %v8820 = vrot.slane %v8812, %v8819
        %v8822 = vunpack.c.l.s4 1983009808
        %v8823 = vunpack.c.0.s8 %v8822
        %v8824 = vlaneseq
        %v8825 = vshrl.u32 %v8824, 7
        %v8826 = vsub.s32 %v8823, %v8825
        %v8827 = vrot.slane %v8813, %v8826
        %v8828 = vcombine.low %v8820, %v8827
        %v8829 = vcombine.low %v8191, %v8199
        %v8830 = vcombine.low %v8198, %v8200
        %v8832 = vunpack.c.l.s4 1983009808
        %v8833 = vunpack.c.0.s8 %v8832
        %v8834 = vlaneseq
        %v8835 = vshrl.u32 %v8834, 7
        %v8836 = vsub.s32 %v8833, %v8835
        %v8837 = vrot.slane %v8829, %v8836
        %v8839 = vunpack.c.l.s4 1983009808
        %v8840 = vunpack.c.0.s8 %v8839
        %v8841 = vlaneseq
        %v8842 = vshrl.u32 %v8841, 7
        %v8843 = vsub.s32 %v8840, %v8842
        %v8844 = vrot.slane %v8830, %v8843
        %v8845 = vcombine.low %v8837, %v8844
        %v8847 = vunpack.c.l.s4 1983009808
        %v8848 = vunpack.c.0.s8 %v8847
        %v8849 = vlaneseq
        %v8850 = vshrl.u32 %v8849, 7
        %v8851 = vsub.s32 %v8848, %v8850
        %v8852 = vrot.slane %v8208, %v8851
        %v8853 = vcombine.low %v8216, %v8215
        %v8854 = vcombine.low %v8217, %v8225
        %v8856 = vunpack.c.l.s4 1983009808
        %v8857 = vunpack.c.0.s8 %v8856
        %v8858 = vlaneseq
        %v8859 = vshrl.u32 %v8858, 7
        %v8860 = vsub.s32 %v8857, %v8859
        %v8861 = vrot.slane %v8853, %v8860
        %v8863 = vunpack.c.l.s4 1983009808
        %v8864 = vunpack.c.0.s8 %v8863
        %v8865 = vlaneseq
        %v8866 = vshrl.u32 %v8865, 7
        %v8867 = vsub.s32 %v8864, %v8866
        %v8868 = vrot.slane %v8854, %v8867
        %v8869 = vcombine.low %v8861, %v8868
        %v8870 = vcombine.low %v8233, %v8232
        %v8871 = vcombine.low %v8234, %v8242
        %v8873 = vunpack.c.l.s4 1983009808
        %v8874 = vunpack.c.0.s8 %v8873
        %v8875 = vlaneseq
        %v8876 = vshrl.u32 %v8875, 7
        %v8877 = vsub.s32 %v8874, %v8876
        %v8878 = vrot.slane %v8870, %v8877
        %v8880 = vunpack.c.l.s4 1983009808
        %v8881 = vunpack.c.0.s8 %v8880
        %v8882 = vlaneseq
        %v8883 = vshrl.u32 %v8882, 7
        %v8884 = vsub.s32 %v8881, %v8883
        %v8885 = vrot.slane %v8871, %v8884
        %v8886 = vcombine.low %v8878, %v8885
        %v8888 = vunpack.c.l.s4 1983009808
        %v8889 = vunpack.c.0.s8 %v8888
        %v8890 = vlaneseq
        %v8891 = vshrl.u32 %v8890, 7
        %v8892 = vsub.s32 %v8889, %v8891
        %v8893 = vrot.slane %v8250, %v8892
        %v8894 = vcombine.low %v8249, %v8251
        %v8895 = vcombine.low %v8259, %v8267
        %v8897 = vunpack.c.l.s4 1983009808
        %v8898 = vunpack.c.0.s8 %v8897
        %v8899 = vlaneseq
        %v8900 = vshrl.u32 %v8899, 7
        %v8901 = vsub.s32 %v8898, %v8900
        %v8902 = vrot.slane %v8894, %v8901
        %v8904 = vunpack.c.l.s4 1983009808
        %v8905 = vunpack.c.0.s8 %v8904
        %v8906 = vlaneseq
        %v8907 = vshrl.u32 %v8906, 7
        %v8908 = vsub.s32 %v8905, %v8907
        %v8909 = vrot.slane %v8895, %v8908
        %v8910 = vcombine.low %v8902, %v8909
        %v8911 = vcombine.low %v8266, %v8268
        %v8912 = vcombine.low %v8276, %v8284
        %v8914 = vunpack.c.l.s4 1983009808
        %v8915 = vunpack.c.0.s8 %v8914
        %v8916 = vlaneseq
        %v8917 = vshrl.u32 %v8916, 7
        %v8918 = vsub.s32 %v8915, %v8917
        %v8919 = vrot.slane %v8911, %v8918
        %v8921 = vunpack.c.l.s4 1983009808
        %v8922 = vunpack.c.0.s8 %v8921
        %v8923 = vlaneseq
        %v8924 = vshrl.u32 %v8923, 7
        %v8925 = vsub.s32 %v8922, %v8924
        %v8926 = vrot.slane %v8912, %v8925
        %v8927 = vcombine.low %v8919, %v8926
        %v8929 = vunpack.c.l.s4 1983009808
        %v8930 = vunpack.c.0.s8 %v8929
        %v8931 = vlaneseq
        %v8932 = vshrl.u32 %v8931, 7
        %v8933 = vsub.s32 %v8930, %v8932
        %v8934 = vrot.slane %v8283, %v8933
        %v8935 = vcombine.low %v8285, %v8293
        %v8936 = vcombine.low %v8301, %v8300
        %v8938 = vunpack.c.l.s4 1983009808
        %v8939 = vunpack.c.0.s8 %v8938
        %v8940 = vlaneseq
        %v8941 = vshrl.u32 %v8940, 7
        %v8942 = vsub.s32 %v8939, %v8941
        %v8943 = vrot.slane %v8935, %v8942
        %v8945 = vunpack.c.l.s4 1983009808
        %v8946 = vunpack.c.0.s8 %v8945
        %v8947 = vlaneseq
        %v8948 = vshrl.u32 %v8947, 7
        %v8949 = vsub.s32 %v8946, %v8948
        %v8950 = vrot.slane %v8936, %v8949
        %v8951 = vcombine.low %v8943, %v8950
        %v8952 = vcombine.low %v8302, %v8310
        %v8953 = vcombine.low %v8318, %v8317
        %v8955 = vunpack.c.l.s4 1983009808
        %v8956 = vunpack.c.0.s8 %v8955
        %v8957 = vlaneseq
        %v8958 = vshrl.u32 %v8957, 7
        %v8959 = vsub.s32 %v8956, %v8958
        %v8960 = vrot.slane %v8952, %v8959
        %v8962 = vunpack.c.l.s4 1983009808
        %v8963 = vunpack.c.0.s8 %v8962
        %v8964 = vlaneseq
        %v8965 = vshrl.u32 %v8964, 7
        %v8966 = vsub.s32 %v8963, %v8965
        %v8967 = vrot.slane %v8953, %v8966
        %v8968 = vcombine.low %v8960, %v8967
        %v8970 = vunpack.c.l.s4 1983009808
        %v8971 = vunpack.c.0.s8 %v8970
        %v8972 = vlaneseq
        %v8973 = vshrl.u32 %v8972, 7
        %v8974 = vsub.s32 %v8971, %v8973
        %v8975 = vrot.slane %v8319, %v8974
        %9024 = vst [vmem:[%s352 - $0x1] sm:$0xfe] %v8336
        %9025 = vst [vmem:[%s352 + $0x7] sm:$0xff] %v8353
        %9026 = vst [vmem:[%s352 + $0xf] sm:$0x1] %v8360
        %9027 = vst [vmem:[%s352 + $0xf] sm:$0xfe] %v8377
        %9028 = vst [vmem:[%s352 + $0x17] sm:$0xff] %v8394
        %9029 = vst [vmem:[%s352 + $0x1f] sm:$0x1] %v8401
        %9030 = vst [vmem:[%s352 + $0x1f] sm:$0xfe] %v8418
        %9031 = vst [vmem:[%s352 + $0x27] sm:$0xff] %v8435
        %9032 = vst [vmem:[%s352 + $0x2f] sm:$0x1] %v8442
        %9033 = vst [vmem:[%s352 + $0x2f] sm:$0xfe] %v8459
        %9034 = vst [vmem:[%s352 + $0x37] sm:$0xff] %v8476
        %9035 = vst [vmem:[%s352 + $0x3f] sm:$0x1] %v8483
        %9036 = vst [vmem:[%s352 + $0x3f] sm:$0xfe] %v8500
        %9037 = vst [vmem:[%s352 + $0x47] sm:$0xff] %v8517
        %9038 = vst [vmem:[%s352 + $0x4f] sm:$0x1] %v8524
        %9039 = vst [vmem:[%s352 + $0x4f] sm:$0xfe] %v8541
        %9040 = vst [vmem:[%s352 + $0x57] sm:$0xff] %v8558
        %9041 = vst [vmem:[%s352 + $0x5f] sm:$0x1] %v8565
        %9042 = vst [vmem:[%s352 + $0x5f] sm:$0xfe] %v8582
        %9043 = vst [vmem:[%s352 + $0x67] sm:$0xff] %v8599
        %9044 = vst [vmem:[%s352 + $0x6f] sm:$0x1] %v8606
        %9045 = vst [vmem:[%s352 + $0x6f] sm:$0xfe] %v8623
        %9046 = vst [vmem:[%s352 + $0x77] sm:$0xff] %v8640
        %9047 = vst [vmem:[%s352 + $0x7f] sm:$0x1] %v8647
        %9048 = vst [vmem:[%s352 + $0x7f] sm:$0xfe] %v8664
        %9049 = vst [vmem:[%s352 + $0x87] sm:$0xff] %v8681
        %9050 = vst [vmem:[%s352 + $0x8f] sm:$0x1] %v8688
        %9051 = vst [vmem:[%s352 + $0x8f] sm:$0xfe] %v8705
        %9052 = vst [vmem:[%s352 + $0x97] sm:$0xff] %v8722
        %9053 = vst [vmem:[%s352 + $0x9f] sm:$0x1] %v8729
        %9054 = vst [vmem:[%s352 + $0x9f] sm:$0xfe] %v8746
        %9055 = vst [vmem:[%s352 + $0xa7] sm:$0xff] %v8763
        %9056 = vst [vmem:[%s352 + $0xaf] sm:$0x1] %v8770
        %9057 = vst [vmem:[%s352 + $0xaf] sm:$0xfe] %v8787
        %9058 = vst [vmem:[%s352 + $0xb7] sm:$0xff] %v8804
        %9059 = vst [vmem:[%s352 + $0xbf] sm:$0x1] %v8811
        %9060 = vst [vmem:[%s352 + $0xbf] sm:$0xfe] %v8828
        %9061 = vst [vmem:[%s352 + $0xc7] sm:$0xff] %v8845
        %9062 = vst [vmem:[%s352 + $0xcf] sm:$0x1] %v8852
        %9063 = vst [vmem:[%s352 + $0xcf] sm:$0xfe] %v8869
        %9064 = vst [vmem:[%s352 + $0xd7] sm:$0xff] %v8886
        %9065 = vst [vmem:[%s352 + $0xdf] sm:$0x1] %v8893
        %9066 = vst [vmem:[%s352 + $0xdf] sm:$0xfe] %v8910
        %9067 = vst [vmem:[%s352 + $0xe7] sm:$0xff] %v8927
        %9068 = vst [vmem:[%s352 + $0xef] sm:$0x1] %v8934
        %9069 = vst [vmem:[%s352 + $0xef] sm:$0xfe] %v8951
        %9070 = vst [vmem:[%s352 + $0xf7] sm:$0xff] %v8968
        %9071 = vst [vmem:[%s352 + $0xff] sm:$0x1] %v8975
        %s9072 = sand.u32 %s247, 1
        %s9073 = scalar_lea.sflag [#allocation4], %s9072
        %s9074 = sand.u32 %s247, 1
        %s9075 = smul.addr %s9074, 256
        %s9076 = scalar_lea.vmem [#allocation3], %s9075
        // Predicated region
        $region61: #{res_blk_forward.1} parent=59 // pred_check
          %p9077 = pneg %p257
        $region62: #{res_blk_forward.1} parent=59 // pred_check_branch
          %9079 = sbr.rel (%p9077) target = $region64
        $region63: #{res_blk_forward.1} parent=59 // pred_region
          %s9081 = ssub.s32 4096, 4096
          %9082 = vsyncadd %s9073, %s9081
          %s9083 = smul.addr %s24, 32
          %s9084 = smul.addr %s9083, 128
          %s9085 = scalar_lea.hbm %s10, %s9084
          %s9086 = sshll.u32 %s9076, 4
          %s9087 = int_to_ptr.vmem [resolvable:$true] %s9086
          %9092 = dma.vmem_to_hbm [thread:$0]  %s9087, 4096, %s9085, %s9073, 128, 128, 8
        $region64: #{res_blk_forward.1} parent=59 // pred_fallthru
          _
      $region60: #{res_blk_forward.1} parent=5 // pred_fallthru
        _
      %p9093 = scmp.le.s32.totalorder 2, %s19
      // Predicated region
      $region65: #{res_blk_forward.1} parent=5 // pred_check
        %p9094 = pneg %p9093
      $region66: #{res_blk_forward.1} parent=5 // pred_check_branch
        %9096 = sbr.rel (%p9094) target = $region68
      $region67: #{res_blk_forward.1} parent=5 // pred_region
        %s9097 = ssub.s32 %s19, 2
        // Predicated region
        $region69: #{res_blk_forward.1} parent=67 // pred_check
          %p9098 = pneg %p263
        $region70: #{res_blk_forward.1} parent=67 // pred_check_branch
          %9100 = sbr.rel (%p9098) target = $region72
        $region71: #{res_blk_forward.1} parent=67 // pred_region
          %s9101 = sand.u32 %s248, 1
          %s9102 = scalar_lea.sflag [#allocation4], %s9101
          %s9103 = sand.u32 %s248, 1
          %s9104 = smul.addr %s9103, 256
          %s9105 = scalar_lea.vmem [#allocation3], %s9104
          %9106 = dma.done %s9102, 4096
        $region72: #{res_blk_forward.1} parent=67 // pred_fallthru
          _
      $region68: #{res_blk_forward.1} parent=5 // pred_fallthru
        _
    $region6: #{res_blk_forward.1} parent=1 // loop_footer
      %s23 = sadd.s32 1, %s19
    $region7: #{res_blk_forward.1} parent=1 // loop_footer_branch
      %18 = sbr.rel target = $region3
    $region8: #{res_blk_forward.1} parent=1 // loop_exit
      _
    %9107 = vsyncpa [#allocation4], 1
    %s9108 = scalar_lea.sflag [#allocation4], 1
    %9109 = vsyncpa %s9108, 1

</llo_original>
